<compile_context>
chip_gen: v6e
topology: v6e:2x2x1
jax: 0.10.0
libtpu: 0.0.40
codegen_flags: <defaults>
</compile_context>

<pallas_src>
import jax
import jax.numpy as jnp
from jax import lax
from jax.experimental import pallas as pl
from jax.experimental.pallas import tpu as pltpu


def _round_up(x, m):
    return ((x + m - 1) // m) * m


def _cdiv(a, b):
    return -(-a // b)


def _duc_kernel(x_ref, w_ref, bias_ref, o_ref, lhs_ref):
    """Fused 3x3 conv (single big-K MXU matmul) + folded BN bias + ReLU for one
    (row-tile, Cout-tile) block.

    x_ref:    (H_p+2, W+2, Cin_p)  bf16 whole padded image of one batch element
    w_ref:    (9*Cin_p, TN)        bf16 conv weights * BN scale, k = kw*3*Cin_p + kh*Cin_p + c
    bias_ref: (1, TN)              f32  folded BN bias = beta - mean * scale
    o_ref:    (TH, W, TN)          bf16 conv+bn+relu output row tile
    lhs_ref:  (TH, W, 9*Cin_p)     bf16 im2col scratch (one-pass build)
    """
    TH, W, K9 = lhs_ref.shape
    cin = K9 // 9
    tn = o_ref.shape[-1]
    row0 = pl.program_id(2) * TH          # row-tile axis is the innermost grid axis

    # One-pass im2col: write the 9 (kh, kw) overlapping windows straight into scratch.
    # Column order k = kw*(3*Cin_p) + kh*Cin_p + c matches the weight reshape below.
    for dx in range(3):
        for dy in range(3):
            k = dx * 3 + dy
            lhs_ref[:, :, k * cin:(k + 1) * cin] = x_ref[pl.ds(row0 + dy, TH), dx:dx + W, :]

    lhs = lhs_ref[...].reshape(TH * W, K9)

    # Single MXU matmul with K = 9*Cin_p, f32 accumulation (BN scale already folded in).
    acc = jnp.dot(lhs, w_ref[...], preferred_element_type=jnp.float32)   # (TH*W, TN)

    y = jnp.maximum(acc + bias_ref[...], 0.0)                            # BN bias + ReLU
    o_ref[...] = y.reshape(TH, W, tn).astype(o_ref.dtype)


def duc_forward(x_nchw, conv_w, gamma, beta, running_mean, running_var,
                upscale_factor=2, eps=1e-5, target_m=512, cout_tile=512):
    """Full DUC forward. x_nchw: (N, Cin, H, W). Returns (N, Cout//r^2, H*r, W*r) f32."""
    N, Cin, H, W = x_nchw.shape
    Cout = conv_w.shape[0]
    r = upscale_factor
    assert Cout % (r * r) == 0
    C_ps = Cout // (r * r)

    LANES, SUBLANES = 128, 8
    Cin_p = _round_up(max(Cin, 1), SUBLANES)     # pad Cin -> multiple of 8 (sublanes)
    Cout_p = _round_up(Cout, LANES)              # pad Cout -> multiple of 128 (lane dense)

    # ---- Cout tile (bounds per-step weight VMEM; lane-aligned) ---------------------------
    if Cout_p <= cout_tile:
        TN = Cout_p
    else:
        TN = next(c for c in (512, 384, 256, 128) if Cout_p % c == 0)
    nCout = Cout_p // TN

    # ---- Row tile: MXU-friendly M = TH*W; pad H up instead of shrinking TH ---------------
    t0 = max(1, min(H, _cdiv(target_m, W)))
    nTH = _cdiv(H, t0)
    TH = _cdiv(H, nTH)
    H_p = TH * nTH

    compute_dtype = jnp.bfloat16

    # ---- input prep: NCHW -> NHWC bf16, one combined pad (conv halo + row pad + chan pad) -
    # TODO(synk): accept NHWC directly / fuse this transpose+pad into the producer to drop
    #             one HBM pass over the activations.
    x = jnp.transpose(x_nchw, (0, 2, 3, 1)).astype(compute_dtype)
    x = jnp.pad(x, ((0, 0), (1, 1 + H_p - H), (1, 1), (0, Cin_p - Cin)))   # (N,H_p+2,W+2,Cin_p)

    # ---- weight / BN prep: fold BN scale into the weights --------------------------------
    scale = gamma / jnp.sqrt(running_var + eps)                            # (Cout,)
    bias = beta - running_mean * scale                                     # (Cout,)
    w = conv_w.astype(jnp.float32) * scale[:, None, None, None]            # (Cout,Cin,3,3)
    w = jnp.pad(w, ((0, Cout_p - Cout), (0, Cin_p - Cin), (0, 0), (0, 0)))
    # row order k = kw*(3*Cin_p) + kh*Cin_p + c matches the kernel's im2col columns
    w_taps = jnp.transpose(w, (3, 2, 1, 0)).reshape(9 * Cin_p, Cout_p).astype(compute_dtype)
    bias_p = jnp.pad(bias, (0, Cout_p - Cout)).reshape(1, Cout_p).astype(jnp.float32)

    # ---- VMEM budget (re-derived per generation) ------------------------------------------
    in_b = (H_p + 2) * (W + 2) * Cin_p * 2          # one padded image, bf16
    out_b = TH * W * TN * 2                         # one output tile, bf16
    w_b = 9 * Cin_p * TN * 2                        # one weight tile, bf16
    lhs_b = TH * W * 9 * Cin_p * 2                  # im2col scratch, bf16
    need = 2 * in_b + 2 * out_b + 2 * w_b + lhs_b + (1 << 20)
    try:
        vmem_cap = pltpu.get_tpu_info().vmem_capacity_bytes
    except Exception:
        vmem_cap = 64 * 1024 * 1024                 # conservative (v7x-sized) fallback
    vmem_limit = int(min(0.75 * vmem_cap, max(32 * 1024 * 1024, 2 * need)))

    flops = 2 * N * H_p * W * 9 * Cin_p * Cout_p
    bytes_accessed = (x.size * 2 + N * w_taps.size * 2
                      + N * H_p * W * Cout_p * 2 + Cout_p * 4)

    grid = (N, nCout, nTH)                          # row tiles innermost: weights/input reused
    single_buffer_invariants = (nCout == 1)         # weight/bias grid-invariant -> 1 buffer

    def _build(single_buf):
        def inv_spec(shape, imap):
            if single_buf:
                return pl.BlockSpec(shape, imap, pipeline_mode=pl.Buffered(1))
            return pl.BlockSpec(shape, imap)

        return pl.pallas_call(
            _duc_kernel,
            out_shape=jax.ShapeDtypeStruct((N, H_p, W, Cout_p), compute_dtype),
            grid_spec=pltpu.PrefetchScalarGridSpec(
                num_scalar_prefetch=0,
                grid=grid,
                in_specs=[
                    # whole padded image of one batch element; index_map ignores (co, t)
                    # so Pallas skips redundant copies -> input DMA'd once per batch elem.
                    pl.BlockSpec((None, H_p + 2, W + 2, Cin_p),
                                 lambda n, co, t: (n, 0, 0, 0)),
                    inv_spec((9 * Cin_p, TN), lambda n, co, t: (0, co)),
                    inv_spec((1, TN), lambda n, co, t: (0, co)),
                ],
                out_specs=pl.BlockSpec((None, TH, W, TN),
                                       lambda n, co, t: (n, t, 0, co)),
                scratch_shapes=[pltpu.VMEM((TH, W, 9 * Cin_p), compute_dtype)],
            ),
            compiler_params=pltpu.CompilerParams(
                dimension_semantics=("parallel", "parallel", "parallel"),
                vmem_limit_bytes=vmem_limit),
            cost_estimate=pl.CostEstimate(flops=flops, transcendentals=0,
                                          bytes_accessed=bytes_accessed),
        )

    try:
        y_nhwc = jax.block_until_ready(_build(single_buffer_invariants)(x, w_taps, bias_p))
    except Exception:
        # Fallback if single-buffered (Buffered(1)) operands are rejected by this jax build.
        if not single_buffer_invariants:
            raise
        y_nhwc = _build(False)(x, w_taps, bias_p)

    # ---- PixelShuffle(r): single transpose pass on the lane-dense bf16 NHWC output --------
    y = y_nhwc[:, :H, :, :Cout]                     # drop H / Cout padding
    y = y.reshape(N, H, W, C_ps, r, r)              # cout = c*r*r + i*r + j
    y = jnp.transpose(y, (0, 3, 1, 4, 2, 5))        # (N, C_ps, H, r, W, r)
    y = y.reshape(N, C_ps, H * r, W * r)
    return y.astype(jnp.float32)                    # f32 only at the very end


def _reference_forward(x_nchw, conv_w, gamma, beta, mean, var,
                       upscale_factor=2, eps=1e-5):
    """Pure-JAX reference (lax conv) applying the same bf16 rounding as the kernel
    (bf16 inputs, bf16 scale-folded weights, f32 accumulation)."""
    scale = gamma / jnp.sqrt(var + eps)
    bias = (beta - mean * scale).reshape(1, -1, 1, 1)
    xb = x_nchw.astype(jnp.bfloat16).astype(jnp.float32)
    wb = (conv_w * scale[:, None, None, None]).astype(jnp.bfloat16).astype(jnp.float32)
    y = lax.conv_general_dilated(
        xb, wb, window_strides=(1, 1), padding=((1, 1), (1, 1)),
        dimension_numbers=("NCHW", "OIHW", "NCHW"),
        precision=lax.Precision.HIGHEST)
    y = jnp.maximum(y + bias, 0.0)
    N, C, H, W = y.shape
    r = upscale_factor
    y = y.reshape(N, C // (r * r), r, r, H, W)
    y = jnp.transpose(y, (0, 1, 4, 2, 5, 3)).reshape(N, C // (r * r), H * r, W * r)
    return y


if __name__ == "__main__":
    # Small deterministic config: inplanes=4, planes=16, upscale_factor=2
    N, Cin, H, W = 2, 4, 16, 16
    planes = 16
    r = 2

    key = jax.random.PRNGKey(0)
    k_x, k_w, k_g, k_b, k_m, k_v = jax.random.split(key, 6)

    x = jax.random.normal(k_x, (N, Cin, H, W), dtype=jnp.float32)
    conv_w = jax.random.normal(k_w, (planes, Cin, 3, 3), dtype=jnp.float32) * 0.1
    gamma = jax.random.normal(k_g, (planes,), dtype=jnp.float32) * 0.1 + 1.0
    beta = jax.random.normal(k_b, (planes,), dtype=jnp.float32) * 0.1
    running_mean = jax.random.normal(k_m, (planes,), dtype=jnp.float32) * 0.1
    running_var = jax.random.uniform(k_v, (planes,), dtype=jnp.float32,
                                     minval=0.5, maxval=1.5)

    out = duc_forward(x, conv_w, gamma, beta, running_mean, running_var,
                      upscale_factor=r)
    out = jax.block_until_ready(out)

    ref = _reference_forward(x, conv_w, gamma, beta, running_mean, running_var,
                             upscale_factor=r)
    assert out.shape == (N, planes // (r * r), H * r, W * r), out.shape
    assert out.dtype == jnp.float32
    max_err = float(jnp.max(jnp.abs(out - ref)))
    # bf16 output store -> tolerance sized for bf16 rounding of O(1) post-ReLU values
    assert jnp.allclose(out, ref, atol=1e-2, rtol=1e-2), f"mismatch vs reference ({max_err})"

    print("KERNEL_OK")
</pallas_src>

<mosaic_0001>
module attributes {stable_mosaic.version = 11 : i64} {
  func.func @_duc_kernel(%arg0: i32, %arg1: i32, %arg2: i32, %arg3: memref<1x18x18x8xbf16, #tpu.memory_space<vmem>>, %arg4: memref<72x128xbf16, #tpu.memory_space<vmem>>, %arg5: memref<1x128xf32, #tpu.memory_space<vmem>>, %arg6: memref<1x16x16x128xbf16, #tpu.memory_space<vmem>>, %arg7: memref<16x16x72xbf16, #tpu.memory_space<vmem>>) attributes {dimension_semantics = [#tpu.dimension_semantics<parallel>, #tpu.dimension_semantics<parallel>, #tpu.dimension_semantics<parallel>], iteration_bounds = array<i64: 2, 1, 1>, scalar_prefetch = 0 : i64, scratch_operands = 1 : i64, tpu.core_type = #tpu.core_type<tc>, window_params = [{transform_indices = @transform_0, window_bounds = array<i64: 1, 18, 18, 8>}, {pipeline_mode = #tpu.pipeline_mode<synchronous>, transform_indices = @transform_1, window_bounds = array<i64: 72, 128>}, {pipeline_mode = #tpu.pipeline_mode<synchronous>, transform_indices = @transform_2, window_bounds = array<i64: 1, 128>}, {transform_indices = @transform_3, window_bounds = array<i64: 1, 16, 16, 128>}]} {
    %c16_i32 = arith.constant 16 : i32
    %0 = arith.muli %arg2, %c16_i32 : i32
    %c0_i32 = arith.constant 0 : i32
    %1 = arith.addi %0, %c0_i32 : i32
    %c0 = arith.constant 0 : index
    %2 = arith.index_cast %1 : i32 to index
    %c0_0 = arith.constant 0 : index
    %c0_1 = arith.constant 0 : index
    %3 = vector.load %arg3[%c0, %2, %c0_0, %c0_1] : memref<1x18x18x8xbf16, #tpu.memory_space<vmem>>, vector<1x16x16x8xbf16>
    %4 = vector.shape_cast %3 : vector<1x16x16x8xbf16> to vector<16x16x8xbf16>
    %c0_2 = arith.constant 0 : index
    %c0_3 = arith.constant 0 : index
    %c0_4 = arith.constant 0 : index
    %5 = vector.load %arg7[%c0_2, %c0_3, %c0_4] : memref<16x16x72xbf16, #tpu.memory_space<vmem>>, vector<16x16x8xbf16>
    tpu.vector_store %arg7[%c0_2, %c0_3, %c0_4], %4 {strides = array<i32>} : memref<16x16x72xbf16, #tpu.memory_space<vmem>>, vector<16x16x8xbf16>,
    %c1_i32 = arith.constant 1 : i32
    %6 = arith.addi %0, %c1_i32 : i32
    %c0_5 = arith.constant 0 : index
    %7 = arith.index_cast %6 : i32 to index
    %c0_6 = arith.constant 0 : index
    %c0_7 = arith.constant 0 : index
    %8 = vector.load %arg3[%c0_5, %7, %c0_6, %c0_7] : memref<1x18x18x8xbf16, #tpu.memory_space<vmem>>, vector<1x16x16x8xbf16>
    %9 = vector.shape_cast %8 : vector<1x16x16x8xbf16> to vector<16x16x8xbf16>
    %c0_8 = arith.constant 0 : index
    %c0_9 = arith.constant 0 : index
    %c8 = arith.constant 8 : index
    %10 = vector.load %arg7[%c0_8, %c0_9, %c8] : memref<16x16x72xbf16, #tpu.memory_space<vmem>>, vector<16x16x8xbf16>
    tpu.vector_store %arg7[%c0_8, %c0_9, %c8], %9 {strides = array<i32>} : memref<16x16x72xbf16, #tpu.memory_space<vmem>>, vector<16x16x8xbf16>,
    %c2_i32 = arith.constant 2 : i32
    %11 = arith.addi %0, %c2_i32 : i32
    %c0_10 = arith.constant 0 : index
    %12 = arith.index_cast %11 : i32 to index
    %c0_11 = arith.constant 0 : index
    %c0_12 = arith.constant 0 : index
    %13 = vector.load %arg3[%c0_10, %12, %c0_11, %c0_12] : memref<1x18x18x8xbf16, #tpu.memory_space<vmem>>, vector<1x16x16x8xbf16>
    %14 = vector.shape_cast %13 : vector<1x16x16x8xbf16> to vector<16x16x8xbf16>
    %c0_13 = arith.constant 0 : index
    %c0_14 = arith.constant 0 : index
    %c16 = arith.constant 16 : index
    %15 = vector.load %arg7[%c0_13, %c0_14, %c16] : memref<16x16x72xbf16, #tpu.memory_space<vmem>>, vector<16x16x8xbf16>
    tpu.vector_store %arg7[%c0_13, %c0_14, %c16], %14 {strides = array<i32>} : memref<16x16x72xbf16, #tpu.memory_space<vmem>>, vector<16x16x8xbf16>,
    %c0_i32_15 = arith.constant 0 : i32
    %16 = arith.addi %0, %c0_i32_15 : i32
    %c0_16 = arith.constant 0 : index
    %17 = arith.index_cast %16 : i32 to index
    %c1 = arith.constant 1 : index
    %c0_17 = arith.constant 0 : index
    %18 = vector.load %arg3[%c0_16, %17, %c1, %c0_17] : memref<1x18x18x8xbf16, #tpu.memory_space<vmem>>, vector<1x16x16x8xbf16>
    %19 = vector.shape_cast %18 : vector<1x16x16x8xbf16> to vector<16x16x8xbf16>
    %c0_18 = arith.constant 0 : index
    %c0_19 = arith.constant 0 : index
    %c24 = arith.constant 24 : index
    %20 = vector.load %arg7[%c0_18, %c0_19, %c24] : memref<16x16x72xbf16, #tpu.memory_space<vmem>>, vector<16x16x8xbf16>
    tpu.vector_store %arg7[%c0_18, %c0_19, %c24], %19 {strides = array<i32>} : memref<16x16x72xbf16, #tpu.memory_space<vmem>>, vector<16x16x8xbf16>,
    %c1_i32_20 = arith.constant 1 : i32
    %21 = arith.addi %0, %c1_i32_20 : i32
    %c0_21 = arith.constant 0 : index
    %22 = arith.index_cast %21 : i32 to index
    %c1_22 = arith.constant 1 : index
    %c0_23 = arith.constant 0 : index
    %23 = vector.load %arg3[%c0_21, %22, %c1_22, %c0_23] : memref<1x18x18x8xbf16, #tpu.memory_space<vmem>>, vector<1x16x16x8xbf16>
    %24 = vector.shape_cast %23 : vector<1x16x16x8xbf16> to vector<16x16x8xbf16>
    %c0_24 = arith.constant 0 : index
    %c0_25 = arith.constant 0 : index
    %c32 = arith.constant 32 : index
    %25 = vector.load %arg7[%c0_24, %c0_25, %c32] : memref<16x16x72xbf16, #tpu.memory_space<vmem>>, vector<16x16x8xbf16>
    tpu.vector_store %arg7[%c0_24, %c0_25, %c32], %24 {strides = array<i32>} : memref<16x16x72xbf16, #tpu.memory_space<vmem>>, vector<16x16x8xbf16>,
    %c2_i32_26 = arith.constant 2 : i32
    %26 = arith.addi %0, %c2_i32_26 : i32
    %c0_27 = arith.constant 0 : index
    %27 = arith.index_cast %26 : i32 to index
    %c1_28 = arith.constant 1 : index
    %c0_29 = arith.constant 0 : index
    %28 = vector.load %arg3[%c0_27, %27, %c1_28, %c0_29] : memref<1x18x18x8xbf16, #tpu.memory_space<vmem>>, vector<1x16x16x8xbf16>
    %29 = vector.shape_cast %28 : vector<1x16x16x8xbf16> to vector<16x16x8xbf16>
    %c0_30 = arith.constant 0 : index
    %c0_31 = arith.constant 0 : index
    %c40 = arith.constant 40 : index
    %30 = vector.load %arg7[%c0_30, %c0_31, %c40] : memref<16x16x72xbf16, #tpu.memory_space<vmem>>, vector<16x16x8xbf16>
    tpu.vector_store %arg7[%c0_30, %c0_31, %c40], %29 {strides = array<i32>} : memref<16x16x72xbf16, #tpu.memory_space<vmem>>, vector<16x16x8xbf16>,
    %c0_i32_32 = arith.constant 0 : i32
    %31 = arith.addi %0, %c0_i32_32 : i32
    %c0_33 = arith.constant 0 : index
    %32 = arith.index_cast %31 : i32 to index
    %c2 = arith.constant 2 : index
    %c0_34 = arith.constant 0 : index
    %33 = vector.load %arg3[%c0_33, %32, %c2, %c0_34] : memref<1x18x18x8xbf16, #tpu.memory_space<vmem>>, vector<1x16x16x8xbf16>
    %34 = vector.shape_cast %33 : vector<1x16x16x8xbf16> to vector<16x16x8xbf16>
    %c0_35 = arith.constant 0 : index
    %c0_36 = arith.constant 0 : index
    %c48 = arith.constant 48 : index
    %35 = vector.load %arg7[%c0_35, %c0_36, %c48] : memref<16x16x72xbf16, #tpu.memory_space<vmem>>, vector<16x16x8xbf16>
    tpu.vector_store %arg7[%c0_35, %c0_36, %c48], %34 {strides = array<i32>} : memref<16x16x72xbf16, #tpu.memory_space<vmem>>, vector<16x16x8xbf16>,
    %c1_i32_37 = arith.constant 1 : i32
    %36 = arith.addi %0, %c1_i32_37 : i32
    %c0_38 = arith.constant 0 : index
    %37 = arith.index_cast %36 : i32 to index
    %c2_39 = arith.constant 2 : index
    %c0_40 = arith.constant 0 : index
    %38 = vector.load %arg3[%c0_38, %37, %c2_39, %c0_40] : memref<1x18x18x8xbf16, #tpu.memory_space<vmem>>, vector<1x16x16x8xbf16>
    %39 = vector.shape_cast %38 : vector<1x16x16x8xbf16> to vector<16x16x8xbf16>
    %c0_41 = arith.constant 0 : index
    %c0_42 = arith.constant 0 : index
    %c56 = arith.constant 56 : index
    %40 = vector.load %arg7[%c0_41, %c0_42, %c56] : memref<16x16x72xbf16, #tpu.memory_space<vmem>>, vector<16x16x8xbf16>
    tpu.vector_store %arg7[%c0_41, %c0_42, %c56], %39 {strides = array<i32>} : memref<16x16x72xbf16, #tpu.memory_space<vmem>>, vector<16x16x8xbf16>,
    %c2_i32_43 = arith.constant 2 : i32
    %41 = arith.addi %0, %c2_i32_43 : i32
    %c0_44 = arith.constant 0 : index
    %42 = arith.index_cast %41 : i32 to index
    %c2_45 = arith.constant 2 : index
    %c0_46 = arith.constant 0 : index
    %43 = vector.load %arg3[%c0_44, %42, %c2_45, %c0_46] : memref<1x18x18x8xbf16, #tpu.memory_space<vmem>>, vector<1x16x16x8xbf16>
    %44 = vector.shape_cast %43 : vector<1x16x16x8xbf16> to vector<16x16x8xbf16>
    %c0_47 = arith.constant 0 : index
    %c0_48 = arith.constant 0 : index
    %c64 = arith.constant 64 : index
    %45 = vector.load %arg7[%c0_47, %c0_48, %c64] : memref<16x16x72xbf16, #tpu.memory_space<vmem>>, vector<16x16x8xbf16>
    tpu.vector_store %arg7[%c0_47, %c0_48, %c64], %44 {strides = array<i32>} : memref<16x16x72xbf16, #tpu.memory_space<vmem>>, vector<16x16x8xbf16>,
    %c0_49 = arith.constant 0 : index
    %c0_50 = arith.constant 0 : index
    %c0_51 = arith.constant 0 : index
    %46 = vector.load %arg7[%c0_49, %c0_50, %c0_51] : memref<16x16x72xbf16, #tpu.memory_space<vmem>>, vector<16x16x72xbf16>
    %47 = vector.shape_cast %46 : vector<16x16x72xbf16> to vector<256x72xbf16>
    %c0_52 = arith.constant 0 : index
    %c0_53 = arith.constant 0 : index
    %48 = vector.load %arg4[%c0_52, %c0_53] : memref<72x128xbf16, #tpu.memory_space<vmem>>, vector<72x128xbf16>
    %cst = arith.constant dense<0.000000e+00> : vector<256x128xf32>
    %49 = tpu.matmul %47, %48, %cst {dimension_numbers = #tpu.dot_dimension_numbers<[1], [0], [0], [1], [0, 0, 1, 1], [], []>} : vector<256x72xbf16>, vector<72x128xbf16>, vector<256x128xf32> -> vector<256x128xf32>
    %c0_54 = arith.constant 0 : index
    %c0_55 = arith.constant 0 : index
    %50 = vector.load %arg5[%c0_54, %c0_55] : memref<1x128xf32, #tpu.memory_space<vmem>>, vector<1x128xf32>
    %51 = vector.broadcast %50 : vector<1x128xf32> to vector<256x128xf32>
    %52 = arith.addf %49, %51 : vector<256x128xf32>
    %cst_56 = arith.constant 0.000000e+00 : f32
    %53 = vector.broadcast %cst_56 : f32 to vector<256x128xf32>
    %54 = arith.maximumf %52, %53 : vector<256x128xf32>
    %55 = vector.shape_cast %54 : vector<256x128xf32> to vector<16x16x128xf32>
    %56 = arith.truncf %55 : vector<16x16x128xf32> to vector<16x16x128xbf16>
    %c0_57 = arith.constant 0 : index
    %c0_58 = arith.constant 0 : index
    %c0_59 = arith.constant 0 : index
    %c0_60 = arith.constant 0 : index
    %57 = vector.load %arg6[%c0_57, %c0_58, %c0_59, %c0_60] : memref<1x16x16x128xbf16, #tpu.memory_space<vmem>>, vector<1x16x16x128xbf16>
    %58 = vector.shape_cast %57 : vector<1x16x16x128xbf16> to vector<16x16x128xbf16>
    %59 = vector.shape_cast %56 : vector<16x16x128xbf16> to vector<1x16x16x128xbf16>
    tpu.vector_store %arg6[%c0_57, %c0_58, %c0_59, %c0_60], %59 {strides = array<i32>} : memref<1x16x16x128xbf16, #tpu.memory_space<vmem>>, vector<1x16x16x128xbf16>,
    return
  }
  func.func @transform_0(%arg0: i32, %arg1: i32, %arg2: i32) -> (i32, i32, i32, i32) {
    %c0_i32 = arith.constant 0 : i32
    %c0_i32_0 = arith.constant 0 : i32
    %c0_i32_1 = arith.constant 0 : i32
    %c0_i32_2 = arith.constant 0 : i32
    return %arg0, %c0_i32, %c0_i32_0, %c0_i32_1 : i32, i32, i32, i32
  }
  func.func @transform_1(%arg0: i32, %arg1: i32, %arg2: i32) -> (i32, i32) {
    %c0_i32 = arith.constant 0 : i32
    %c0_i32_0 = arith.constant 0 : i32
    return %c0_i32, %arg1 : i32, i32
  }
  func.func @transform_2(%arg0: i32, %arg1: i32, %arg2: i32) -> (i32, i32) {
    %c0_i32 = arith.constant 0 : i32
    %c0_i32_0 = arith.constant 0 : i32
    return %c0_i32, %arg1 : i32, i32
  }
  func.func @transform_3(%arg0: i32, %arg1: i32, %arg2: i32) -> (i32, i32, i32, i32) {
    %c0_i32 = arith.constant 0 : i32
    %c0_i32_0 = arith.constant 0 : i32
    return %arg0, %arg2, %c0_i32, %arg1 : i32, i32, i32, i32
  }
}

module attributes {stable_mosaic.version = 11 : i64} {
  func.func @_duc_kernel(%arg0: i32, %arg1: i32, %arg2: i32, %arg3: memref<1x18x18x8xbf16, #tpu.memory_space<vmem>>, %arg4: memref<72x128xbf16, #tpu.memory_space<vmem>>, %arg5: memref<1x128xf32, #tpu.memory_space<vmem>>, %arg6: memref<1x16x16x128xbf16, #tpu.memory_space<vmem>>, %arg7: memref<16x16x72xbf16, #tpu.memory_space<vmem>>) attributes {dimension_semantics = [#tpu.dimension_semantics<parallel>, #tpu.dimension_semantics<parallel>, #tpu.dimension_semantics<parallel>], iteration_bounds = array<i64: 2, 1, 1>, scalar_prefetch = 0 : i64, scratch_operands = 1 : i64, tpu.core_type = #tpu.core_type<tc>, window_params = [{transform_indices = @transform_0, window_bounds = array<i64: 1, 18, 18, 8>}, {transform_indices = @transform_1, window_bounds = array<i64: 72, 128>}, {transform_indices = @transform_2, window_bounds = array<i64: 1, 128>}, {transform_indices = @transform_3, window_bounds = array<i64: 1, 16, 16, 128>}]} {
    %c16_i32 = arith.constant 16 : i32
    %0 = arith.muli %arg2, %c16_i32 : i32
    %c0_i32 = arith.constant 0 : i32
    %1 = arith.addi %0, %c0_i32 : i32
    %c0 = arith.constant 0 : index
    %2 = arith.index_cast %1 : i32 to index
    %c0_0 = arith.constant 0 : index
    %c0_1 = arith.constant 0 : index
    %3 = vector.load %arg3[%c0, %2, %c0_0, %c0_1] : memref<1x18x18x8xbf16, #tpu.memory_space<vmem>>, vector<1x16x16x8xbf16>
    %4 = vector.shape_cast %3 : vector<1x16x16x8xbf16> to vector<16x16x8xbf16>
    %c0_2 = arith.constant 0 : index
    %c0_3 = arith.constant 0 : index
    %c0_4 = arith.constant 0 : index
    %5 = vector.load %arg7[%c0_2, %c0_3, %c0_4] : memref<16x16x72xbf16, #tpu.memory_space<vmem>>, vector<16x16x8xbf16>
    tpu.vector_store %arg7[%c0_2, %c0_3, %c0_4], %4 {strides = array<i32>} : memref<16x16x72xbf16, #tpu.memory_space<vmem>>, vector<16x16x8xbf16>,
    %c1_i32 = arith.constant 1 : i32
    %6 = arith.addi %0, %c1_i32 : i32
    %c0_5 = arith.constant 0 : index
    %7 = arith.index_cast %6 : i32 to index
    %c0_6 = arith.constant 0 : index
    %c0_7 = arith.constant 0 : index
    %8 = vector.load %arg3[%c0_5, %7, %c0_6, %c0_7] : memref<1x18x18x8xbf16, #tpu.memory_space<vmem>>, vector<1x16x16x8xbf16>
    %9 = vector.shape_cast %8 : vector<1x16x16x8xbf16> to vector<16x16x8xbf16>
    %c0_8 = arith.constant 0 : index
    %c0_9 = arith.constant 0 : index
    %c8 = arith.constant 8 : index
    %10 = vector.load %arg7[%c0_8, %c0_9, %c8] : memref<16x16x72xbf16, #tpu.memory_space<vmem>>, vector<16x16x8xbf16>
    tpu.vector_store %arg7[%c0_8, %c0_9, %c8], %9 {strides = array<i32>} : memref<16x16x72xbf16, #tpu.memory_space<vmem>>, vector<16x16x8xbf16>,
    %c2_i32 = arith.constant 2 : i32
    %11 = arith.addi %0, %c2_i32 : i32
    %c0_10 = arith.constant 0 : index
    %12 = arith.index_cast %11 : i32 to index
    %c0_11 = arith.constant 0 : index
    %c0_12 = arith.constant 0 : index
    %13 = vector.load %arg3[%c0_10, %12, %c0_11, %c0_12] : memref<1x18x18x8xbf16, #tpu.memory_space<vmem>>, vector<1x16x16x8xbf16>
    %14 = vector.shape_cast %13 : vector<1x16x16x8xbf16> to vector<16x16x8xbf16>
    %c0_13 = arith.constant 0 : index
    %c0_14 = arith.constant 0 : index
    %c16 = arith.constant 16 : index
    %15 = vector.load %arg7[%c0_13, %c0_14, %c16] : memref<16x16x72xbf16, #tpu.memory_space<vmem>>, vector<16x16x8xbf16>
    tpu.vector_store %arg7[%c0_13, %c0_14, %c16], %14 {strides = array<i32>} : memref<16x16x72xbf16, #tpu.memory_space<vmem>>, vector<16x16x8xbf16>,
    %c0_i32_15 = arith.constant 0 : i32
    %16 = arith.addi %0, %c0_i32_15 : i32
    %c0_16 = arith.constant 0 : index
    %17 = arith.index_cast %16 : i32 to index
    %c1 = arith.constant 1 : index
    %c0_17 = arith.constant 0 : index
    %18 = vector.load %arg3[%c0_16, %17, %c1, %c0_17] : memref<1x18x18x8xbf16, #tpu.memory_space<vmem>>, vector<1x16x16x8xbf16>
    %19 = vector.shape_cast %18 : vector<1x16x16x8xbf16> to vector<16x16x8xbf16>
    %c0_18 = arith.constant 0 : index
    %c0_19 = arith.constant 0 : index
    %c24 = arith.constant 24 : index
    %20 = vector.load %arg7[%c0_18, %c0_19, %c24] : memref<16x16x72xbf16, #tpu.memory_space<vmem>>, vector<16x16x8xbf16>
    tpu.vector_store %arg7[%c0_18, %c0_19, %c24], %19 {strides = array<i32>} : memref<16x16x72xbf16, #tpu.memory_space<vmem>>, vector<16x16x8xbf16>,
    %c1_i32_20 = arith.constant 1 : i32
    %21 = arith.addi %0, %c1_i32_20 : i32
    %c0_21 = arith.constant 0 : index
    %22 = arith.index_cast %21 : i32 to index
    %c1_22 = arith.constant 1 : index
    %c0_23 = arith.constant 0 : index
    %23 = vector.load %arg3[%c0_21, %22, %c1_22, %c0_23] : memref<1x18x18x8xbf16, #tpu.memory_space<vmem>>, vector<1x16x16x8xbf16>
    %24 = vector.shape_cast %23 : vector<1x16x16x8xbf16> to vector<16x16x8xbf16>
    %c0_24 = arith.constant 0 : index
    %c0_25 = arith.constant 0 : index
    %c32 = arith.constant 32 : index
    %25 = vector.load %arg7[%c0_24, %c0_25, %c32] : memref<16x16x72xbf16, #tpu.memory_space<vmem>>, vector<16x16x8xbf16>
    tpu.vector_store %arg7[%c0_24, %c0_25, %c32], %24 {strides = array<i32>} : memref<16x16x72xbf16, #tpu.memory_space<vmem>>, vector<16x16x8xbf16>,
    %c2_i32_26 = arith.constant 2 : i32
    %26 = arith.addi %0, %c2_i32_26 : i32
    %c0_27 = arith.constant 0 : index
    %27 = arith.index_cast %26 : i32 to index
    %c1_28 = arith.constant 1 : index
    %c0_29 = arith.constant 0 : index
    %28 = vector.load %arg3[%c0_27, %27, %c1_28, %c0_29] : memref<1x18x18x8xbf16, #tpu.memory_space<vmem>>, vector<1x16x16x8xbf16>
    %29 = vector.shape_cast %28 : vector<1x16x16x8xbf16> to vector<16x16x8xbf16>
    %c0_30 = arith.constant 0 : index
    %c0_31 = arith.constant 0 : index
    %c40 = arith.constant 40 : index
    %30 = vector.load %arg7[%c0_30, %c0_31, %c40] : memref<16x16x72xbf16, #tpu.memory_space<vmem>>, vector<16x16x8xbf16>
    tpu.vector_store %arg7[%c0_30, %c0_31, %c40], %29 {strides = array<i32>} : memref<16x16x72xbf16, #tpu.memory_space<vmem>>, vector<16x16x8xbf16>,
    %c0_i32_32 = arith.constant 0 : i32
    %31 = arith.addi %0, %c0_i32_32 : i32
    %c0_33 = arith.constant 0 : index
    %32 = arith.index_cast %31 : i32 to index
    %c2 = arith.constant 2 : index
    %c0_34 = arith.constant 0 : index
    %33 = vector.load %arg3[%c0_33, %32, %c2, %c0_34] : memref<1x18x18x8xbf16, #tpu.memory_space<vmem>>, vector<1x16x16x8xbf16>
    %34 = vector.shape_cast %33 : vector<1x16x16x8xbf16> to vector<16x16x8xbf16>
    %c0_35 = arith.constant 0 : index
    %c0_36 = arith.constant 0 : index
    %c48 = arith.constant 48 : index
    %35 = vector.load %arg7[%c0_35, %c0_36, %c48] : memref<16x16x72xbf16, #tpu.memory_space<vmem>>, vector<16x16x8xbf16>
    tpu.vector_store %arg7[%c0_35, %c0_36, %c48], %34 {strides = array<i32>} : memref<16x16x72xbf16, #tpu.memory_space<vmem>>, vector<16x16x8xbf16>,
    %c1_i32_37 = arith.constant 1 : i32
    %36 = arith.addi %0, %c1_i32_37 : i32
    %c0_38 = arith.constant 0 : index
    %37 = arith.index_cast %36 : i32 to index
    %c2_39 = arith.constant 2 : index
    %c0_40 = arith.constant 0 : index
    %38 = vector.load %arg3[%c0_38, %37, %c2_39, %c0_40] : memref<1x18x18x8xbf16, #tpu.memory_space<vmem>>, vector<1x16x16x8xbf16>
    %39 = vector.shape_cast %38 : vector<1x16x16x8xbf16> to vector<16x16x8xbf16>
    %c0_41 = arith.constant 0 : index
    %c0_42 = arith.constant 0 : index
    %c56 = arith.constant 56 : index
    %40 = vector.load %arg7[%c0_41, %c0_42, %c56] : memref<16x16x72xbf16, #tpu.memory_space<vmem>>, vector<16x16x8xbf16>
    tpu.vector_store %arg7[%c0_41, %c0_42, %c56], %39 {strides = array<i32>} : memref<16x16x72xbf16, #tpu.memory_space<vmem>>, vector<16x16x8xbf16>,
    %c2_i32_43 = arith.constant 2 : i32
    %41 = arith.addi %0, %c2_i32_43 : i32
    %c0_44 = arith.constant 0 : index
    %42 = arith.index_cast %41 : i32 to index
    %c2_45 = arith.constant 2 : index
    %c0_46 = arith.constant 0 : index
    %43 = vector.load %arg3[%c0_44, %42, %c2_45, %c0_46] : memref<1x18x18x8xbf16, #tpu.memory_space<vmem>>, vector<1x16x16x8xbf16>
    %44 = vector.shape_cast %43 : vector<1x16x16x8xbf16> to vector<16x16x8xbf16>
    %c0_47 = arith.constant 0 : index
    %c0_48 = arith.constant 0 : index
    %c64 = arith.constant 64 : index
    %45 = vector.load %arg7[%c0_47, %c0_48, %c64] : memref<16x16x72xbf16, #tpu.memory_space<vmem>>, vector<16x16x8xbf16>
    tpu.vector_store %arg7[%c0_47, %c0_48, %c64], %44 {strides = array<i32>} : memref<16x16x72xbf16, #tpu.memory_space<vmem>>, vector<16x16x8xbf16>,
    %c0_49 = arith.constant 0 : index
    %c0_50 = arith.constant 0 : index
    %c0_51 = arith.constant 0 : index
    %46 = vector.load %arg7[%c0_49, %c0_50, %c0_51] : memref<16x16x72xbf16, #tpu.memory_space<vmem>>, vector<16x16x72xbf16>
    %47 = vector.shape_cast %46 : vector<16x16x72xbf16> to vector<256x72xbf16>
    %c0_52 = arith.constant 0 : index
    %c0_53 = arith.constant 0 : index
    %48 = vector.load %arg4[%c0_52, %c0_53] : memref<72x128xbf16, #tpu.memory_space<vmem>>, vector<72x128xbf16>
    %cst = arith.constant dense<0.000000e+00> : vector<256x128xf32>
    %49 = tpu.matmul %47, %48, %cst {dimension_numbers = #tpu.dot_dimension_numbers<[1], [0], [0], [1], [0, 0, 1, 1], [], []>} : vector<256x72xbf16>, vector<72x128xbf16>, vector<256x128xf32> -> vector<256x128xf32>
    %c0_54 = arith.constant 0 : index
    %c0_55 = arith.constant 0 : index
    %50 = vector.load %arg5[%c0_54, %c0_55] : memref<1x128xf32, #tpu.memory_space<vmem>>, vector<1x128xf32>
    %51 = vector.broadcast %50 : vector<1x128xf32> to vector<256x128xf32>
    %52 = arith.addf %49, %51 : vector<256x128xf32>
    %cst_56 = arith.constant 0.000000e+00 : f32
    %53 = vector.broadcast %cst_56 : f32 to vector<256x128xf32>
    %54 = arith.maximumf %52, %53 : vector<256x128xf32>
    %55 = vector.shape_cast %54 : vector<256x128xf32> to vector<16x16x128xf32>
    %56 = arith.truncf %55 : vector<16x16x128xf32> to vector<16x16x128xbf16>
    %c0_57 = arith.constant 0 : index
    %c0_58 = arith.constant 0 : index
    %c0_59 = arith.constant 0 : index
    %c0_60 = arith.constant 0 : index
    %57 = vector.load %arg6[%c0_57, %c0_58, %c0_59, %c0_60] : memref<1x16x16x128xbf16, #tpu.memory_space<vmem>>, vector<1x16x16x128xbf16>
    %58 = vector.shape_cast %57 : vector<1x16x16x128xbf16> to vector<16x16x128xbf16>
    %59 = vector.shape_cast %56 : vector<16x16x128xbf16> to vector<1x16x16x128xbf16>
    tpu.vector_store %arg6[%c0_57, %c0_58, %c0_59, %c0_60], %59 {strides = array<i32>} : memref<1x16x16x128xbf16, #tpu.memory_space<vmem>>, vector<1x16x16x128xbf16>,
    return
  }
  func.func @transform_0(%arg0: i32, %arg1: i32, %arg2: i32) -> (i32, i32, i32, i32) {
    %c0_i32 = arith.constant 0 : i32
    %c0_i32_0 = arith.constant 0 : i32
    %c0_i32_1 = arith.constant 0 : i32
    %c0_i32_2 = arith.constant 0 : i32
    return %arg0, %c0_i32, %c0_i32_0, %c0_i32_1 : i32, i32, i32, i32
  }
  func.func @transform_1(%arg0: i32, %arg1: i32, %arg2: i32) -> (i32, i32) {
    %c0_i32 = arith.constant 0 : i32
    %c0_i32_0 = arith.constant 0 : i32
    return %c0_i32, %arg1 : i32, i32
  }
  func.func @transform_2(%arg0: i32, %arg1: i32, %arg2: i32) -> (i32, i32) {
    %c0_i32 = arith.constant 0 : i32
    %c0_i32_0 = arith.constant 0 : i32
    return %c0_i32, %arg1 : i32, i32
  }
  func.func @transform_3(%arg0: i32, %arg1: i32, %arg2: i32) -> (i32, i32, i32, i32) {
    %c0_i32 = arith.constant 0 : i32
    %c0_i32_0 = arith.constant 0 : i32
    return %arg0, %arg2, %c0_i32, %arg1 : i32, i32, i32, i32
  }
}

</mosaic_0001>

<llo_original>
// kernel: tpu_custom_call.1
$region0: #{tpu_custom_call.1}
  #allocation0 [shape = 'u32[]', space=smem, size = 0x4, offset = 0x4, fixed_abs, tag = 'smem constant byte address 0x4 - core index']
  #allocation1 [shape = 'u32[144,128]{1,0:T(1,128)}', space=vmem, size = 0x12000, scoped, tag = 'internal scratch']
  #allocation2 [shape = 'bf16[16,16,72]{2,1,0:T(8,128)(2,1)}', space=vmem, size = 0x10000, scoped, tag = 'scratch operand']
  %s0 = inlined_call_operand.vmem [shape: bf16[2,18,18,8], index: 0, kind: input, shape index: {}]
  %s1 = inlined_call_operand.vmem [shape: bf16[72,128], index: 1, kind: input, shape index: {}]
  %s2 = inlined_call_operand.vmem [shape: f32[1,128], index: 2, kind: input, shape index: {}]
  %s3 = inlined_call_operand.hbm [shape: bf16[2,16,16,128], index: 3, kind: output, shape index: {}]
  %s4 = sld [smem:[#allocation0]]
  $region45: #{tpu_custom_call.1} parent=0
    _
  %s6 = ssub.s32 1, %s4
  %s7 = scalar_select 0, %s6, %s4
  $region1: #{tpu_custom_call.1} parent=0
    #allocation3 [shape = 'u8[131072]{0}', space=vmem, size = 0x20000, scoped, tag = 'output window, operand 0']
    #allocation4 [shape = 's32[2]{0}', space=sflag, size = 0x8, scoped, tag = 'scoped memory for tpu_custom_call.1']
    %8 = vsyncpa [#allocation4], 0
    %s9 = scalar_lea.sflag [#allocation4], 1
    %10 = vsyncpa %s9, 0
    loop: start=0, step=1, limit=4
    $region2: #{tpu_custom_call.1} parent=1 // loop_pre_header
      _
    $region3: #{tpu_custom_call.1} parent=1 // loop_header
      %s12 = sphi 0, %s16
      %p13 = scmp.ge.s32.totalorder %s12, 4
      %s19 = sphi 0, %s38
      %s20 = sphi 0, %s34
      %s21 = sphi 0, %s30
      %s22 = sphi 0, %s19
      %s23 = sphi 0, %s20
      %s24 = sphi 0, %s21
      %s25 = sphi 0, %s22
      %s26 = sphi 0, %s23
      %s27 = sphi 0, %s24
      %s41 = sphi 0, %s43
      %s44 = sphi 0, %s41
      %s45 = sphi 0, %s44
      %s61 = sphi 0, %s45
      %s67 = sphi 0, %s69
      %s70 = sphi 0, %s67
      %s71 = sphi 0, %s70
      %s87 = sphi 0, %s71
      %s93 = sphi 0, %s95
      %s96 = sphi 0, %s93
      %s97 = sphi 0, %s96
      %s113 = sphi 0, %s97
      %s123 = sphi 0, %s125
      %s126 = sphi 0, %s123
      %s127 = sphi 0, %s126
      %s143 = sphi 0, %s127
    $region4: #{tpu_custom_call.1} parent=1 // loop_header_branch
      %15 = sbr.rel (%p13) target = $region8
    $region5: #{tpu_custom_call.1} parent=1 // loop_body
      %s17 = ssub.s32 %s12, 1
      %s18 = ssub.s32 %s12, 2
      %s28 = sadd.s32 1, %s21
      %p29 = scmp.ge.s32.totalorder %s28, 1
      %s30 = scalar_select %p29, 0, %s28
      %s31 = sadd.s32 1, %s20
      %s32 = scalar_select %p29, %s31, %s20
      %p33 = scmp.ge.s32.totalorder %s32, 1
      %s34 = scalar_select %p33, 0, %s32
      %s35 = sadd.s32 1, %s19
      %s36 = scalar_select %p33, %s35, %s19
      %p37 = scmp.ge.s32.totalorder %s36, 2
      %s38 = scalar_select %p37, 0, %s36
      %s39 = ssub.s32 %s19, %s38
      %p40 = scmp.eq.s32.totalorder %s39, 0
      %s42 = sadd.s32 %s41, 1
      %s43 = scalar_select %p40, %s41, %s42
      %p46 = pneg %p40
      %p47 = scmp.eq.s32.totalorder %s12, 1
      %p48 = por %p46, %p47
      %p49 = scmp.ne.s32.totalorder %s41, %s44
      %p50 = scmp.eq.s32.totalorder %s12, 0
      %p51 = por %p49, %p50
      %p52 = scmp.ne.s32.totalorder %s41, %s44
      %p53 = scmp.eq.s32.totalorder %s17, 1
      %p54 = por %p52, %p53
      %p55 = scmp.ne.s32.totalorder %s44, %s45
      %p56 = scmp.eq.s32.totalorder %s17, 0
      %p57 = por %p55, %p56
      %p58 = scmp.ne.s32.totalorder %s44, %s45
      %p59 = scmp.eq.s32.totalorder %s18, 1
      %p60 = por %p58, %p59
      %p62 = scmp.ne.s32.totalorder %s45, %s61
      %p63 = scmp.eq.s32.totalorder %s18, 0
      %p64 = por %p62, %p63
      %s65 = ssub.s32 %s20, %s34
      %p66 = scmp.eq.s32.totalorder %s65, 0
      %s68 = sadd.s32 %s67, 1
      %s69 = scalar_select %p66, %s67, %s68
      %p72 = pneg %p66
      %p73 = scmp.eq.s32.totalorder %s12, 1
      %p74 = por %p72, %p73
      %p75 = scmp.ne.s32.totalorder %s67, %s70
      %p76 = scmp.eq.s32.totalorder %s12, 0
      %p77 = por %p75, %p76
      %p78 = scmp.ne.s32.totalorder %s67, %s70
      %p79 = scmp.eq.s32.totalorder %s17, 1
      %p80 = por %p78, %p79
      %p81 = scmp.ne.s32.totalorder %s70, %s71
      %p82 = scmp.eq.s32.totalorder %s17, 0
      %p83 = por %p81, %p82
      %p84 = scmp.ne.s32.totalorder %s70, %s71
      %p85 = scmp.eq.s32.totalorder %s18, 1
      %p86 = por %p84, %p85
      %p88 = scmp.ne.s32.totalorder %s71, %s87
      %p89 = scmp.eq.s32.totalorder %s18, 0
      %p90 = por %p88, %p89
      %s91 = ssub.s32 %s20, %s34
      %p92 = scmp.eq.s32.totalorder %s91, 0
      %s94 = sadd.s32 %s93, 1
      %s95 = scalar_select %p92, %s93, %s94
      %p98 = pneg %p92
      %p99 = scmp.eq.s32.totalorder %s12, 1
      %p100 = por %p98, %p99
      %p101 = scmp.ne.s32.totalorder %s93, %s96
      %p102 = scmp.eq.s32.totalorder %s12, 0
      %p103 = por %p101, %p102
      %p104 = scmp.ne.s32.totalorder %s93, %s96
      %p105 = scmp.eq.s32.totalorder %s17, 1
      %p106 = por %p104, %p105
      %p107 = scmp.ne.s32.totalorder %s96, %s97
      %p108 = scmp.eq.s32.totalorder %s17, 0
      %p109 = por %p107, %p108
      %p110 = scmp.ne.s32.totalorder %s96, %s97
      %p111 = scmp.eq.s32.totalorder %s18, 1
      %p112 = por %p110, %p111
      %p114 = scmp.ne.s32.totalorder %s97, %s113
      %p115 = scmp.eq.s32.totalorder %s18, 0
      %p116 = por %p114, %p115
      %s117 = ssub.s32 %s19, %s38
      %s118 = ssub.s32 %s21, %s30
      %s119 = sor.u32 %s117, %s118
      %s120 = ssub.s32 %s20, %s34
      %s121 = sor.u32 %s119, %s120
      %p122 = scmp.eq.s32.totalorder %s121, 0
      %s124 = sadd.s32 %s123, 1
      %s125 = scalar_select %p122, %s123, %s124
      %p128 = pneg %p122
      %p129 = scmp.eq.s32.totalorder %s12, 1
      %p130 = por %p128, %p129
      %p131 = scmp.ne.s32.totalorder %s123, %s126
      %p132 = scmp.eq.s32.totalorder %s12, 0
      %p133 = por %p131, %p132
      %p134 = scmp.ne.s32.totalorder %s123, %s126
      %p135 = scmp.eq.s32.totalorder %s17, 1
      %p136 = por %p134, %p135
      %p137 = scmp.ne.s32.totalorder %s126, %s127
      %p138 = scmp.eq.s32.totalorder %s17, 0
      %p139 = por %p137, %p138
      %p140 = scmp.ne.s32.totalorder %s126, %s127
      %p141 = scmp.eq.s32.totalorder %s18, 1
      %p142 = por %p140, %p141
      %p144 = scmp.ne.s32.totalorder %s127, %s143
      %p145 = scmp.eq.s32.totalorder %s18, 0
      %p146 = por %p144, %p145
      %p147 = scmp.le.s32.totalorder 1, %s12
      %p148 = scmp.lt.s32.totalorder %s12, 3
      %p149 = pnand %p147, %p148
      %p150 = pneg %p149
      // Predicated region
      $region9: #{tpu_custom_call.1} parent=5 // pred_check
        _
      $region10: #{tpu_custom_call.1} parent=5 // pred_check_branch
        %152 = sbr.rel (%p149) target = $region12
      $region11: #{tpu_custom_call.1} parent=5 // pred_region
        %s153 = ssub.s32 %s12, 1
        // Predicated region
        $region13: #{tpu_custom_call.1} parent=11 // pred_check
          %p154 = pneg %p83
        $region14: #{tpu_custom_call.1} parent=11 // pred_check_branch
          %156 = sbr.rel (%p154) target = $region16
        $region15: #{tpu_custom_call.1} parent=11 // pred_region
          %p157 = scmp.lt.s32.totalorder %s23, 0
          %s158 = scalar_select %p157, %s23, 0
          %s159 = smul.addr %s158, 4
          %s160 = scalar_lea.vmem %s1, %s159
        $region16: #{tpu_custom_call.1} parent=11 // pred_fallthru
          _
        // Predicated region
        $region17: #{tpu_custom_call.1} parent=11 // pred_check
          %p161 = pneg %p109
        $region18: #{tpu_custom_call.1} parent=11 // pred_check_branch
          %163 = sbr.rel (%p161) target = $region20
        $region19: #{tpu_custom_call.1} parent=11 // pred_region
          %p164 = scmp.lt.s32.totalorder %s23, 0
          %s165 = scalar_select %p164, %s23, 0
          %s166 = scalar_lea.vmem %s2, %s165
        $region20: #{tpu_custom_call.1} parent=11 // pred_fallthru
          _
      $region12: #{tpu_custom_call.1} parent=5 // pred_fallthru
        _
      %p167 = scmp.lt.s32.totalorder %s12, 2
      // Predicated region
      $region21: #{tpu_custom_call.1} parent=5 // pred_check
        %p168 = pneg %p167
      $region22: #{tpu_custom_call.1} parent=5 // pred_check_branch
        %170 = sbr.rel (%p168) target = $region24
      $region23: #{tpu_custom_call.1} parent=5 // pred_region
        // Predicated region
        $region25: #{tpu_custom_call.1} parent=23 // pred_check
          %p171 = pneg %p51
        $region26: #{tpu_custom_call.1} parent=23 // pred_check_branch
          %173 = sbr.rel (%p171) target = $region28
        $region27: #{tpu_custom_call.1} parent=23 // pred_region
          %p174 = scmp.lt.s32.totalorder %s19, 1
          %s175 = scalar_select %p174, %s19, 1
          %s176 = smul.addr %s175, 54
          %s177 = smul.addr %s176, 4
          %s178 = scalar_lea.vmem %s0, %s177
        $region28: #{tpu_custom_call.1} parent=23 // pred_fallthru
          _
      $region24: #{tpu_custom_call.1} parent=5 // pred_fallthru
        _
      %p179 = scmp.le.s32.totalorder 1, %s12
      %p180 = scmp.lt.s32.totalorder %s12, 3
      %p181 = pnand %p179, %p180
      %p182 = pneg %p181
      // Predicated region
      $region29: #{tpu_custom_call.1} parent=5 // pred_check
        _
      $region30: #{tpu_custom_call.1} parent=5 // pred_check_branch
        %184 = sbr.rel (%p181) target = $region32
      $region31: #{tpu_custom_call.1} parent=5 // pred_region
        %s185 = ssub.s32 %s12, 1
        %p186 = scmp.lt.s32.totalorder %s22, 1
        %s187 = scalar_select %p186, %s22, 1
        %s188 = smul.addr %s187, 54
        %s189 = smul.addr %s188, 4
        %s190 = scalar_lea.vmem %s0, %s189
        %p191 = pneg %p57
        %p192 = pneg %p54
        %p193 = scmp.lt.s32.totalorder %s23, 0
        %s194 = scalar_select %p193, %s23, 0
        %s195 = smul.addr %s194, 4
        %s196 = scalar_lea.vmem %s1, %s195
        %p197 = pneg %p83
        %p198 = pneg %p80
        %p199 = scmp.lt.s32.totalorder %s23, 0
        %s200 = scalar_select %p199, %s23, 0
        %s201 = scalar_lea.vmem %s2, %s200
        %p202 = pneg %p109
        %p203 = pneg %p106
        %p204 = pneg %p139
        %p205 = pneg %p136
        %s206 = sand.u32 %s126, 1
        %s207 = scalar_lea.sflag [#allocation4], %s206
        %s208 = sand.u32 %s126, 1
        %s209 = smul.addr %s208, 128
        %s210 = scalar_lea.vmem [#allocation3], %s209
        %p211 = scmp.lt.s32.totalorder %s22, 1
        %s212 = scalar_select %p211, %s22, 1
        %s213 = smul.addr %s212, 54
        %s214 = smul.addr %s213, 4
        %s215 = scalar_lea.vmem %s0, %s214
        %p216 = scmp.lt.s32.totalorder %s23, 0
        %s217 = scalar_select %p216, %s23, 0
        %s218 = smul.addr %s217, 4
        %s219 = scalar_lea.vmem %s1, %s218
        %p220 = scmp.lt.s32.totalorder %s23, 0
        %s221 = scalar_select %p220, %s23, 0
        %s222 = scalar_lea.vmem %s2, %s221
        %s223 = smul.u32 16, %s24
        %s225 = smul.u32 %s24, 16
        %s226 = smul.u32 %s225, 3
        %s227 = smul.addr %s226, 4
        %s228 = scalar_lea.vmem %s215, %s227
        %v229 = vld [vmem:[%s228] sm:$0xf]
        %v230 = vld [vmem:[%s228 + $0x4] sm:$0xf]
        %v231 = vld [vmem:[%s228 + $0xc] sm:$0xf]
        %v232 = vld [vmem:[%s228 + $0x10] sm:$0xf]
        %v233 = vld [vmem:[%s228 + $0x18] sm:$0xf]
        %v234 = vld [vmem:[%s228 + $0x1c] sm:$0xf]
        %v235 = vld [vmem:[%s228 + $0x24] sm:$0xf]
        %v236 = vld [vmem:[%s228 + $0x28] sm:$0xf]
        %v237 = vld [vmem:[%s228 + $0x30] sm:$0xf]
        %v238 = vld [vmem:[%s228 + $0x34] sm:$0xf]
        %v239 = vld [vmem:[%s228 + $0x3c] sm:$0xf]
        %v240 = vld [vmem:[%s228 + $0x40] sm:$0xf]
        %v241 = vld [vmem:[%s228 + $0x48] sm:$0xf]
        %v242 = vld [vmem:[%s228 + $0x4c] sm:$0xf]
        %v243 = vld [vmem:[%s228 + $0x54] sm:$0xf]
        %v244 = vld [vmem:[%s228 + $0x58] sm:$0xf]
        %v245 = vld [vmem:[%s228 + $0x60] sm:$0xf]
        %v246 = vld [vmem:[%s228 + $0x64] sm:$0xf]
        %v247 = vld [vmem:[%s228 + $0x6c] sm:$0xf]
        %v248 = vld [vmem:[%s228 + $0x70] sm:$0xf]
        %v249 = vld [vmem:[%s228 + $0x78] sm:$0xf]
        %v250 = vld [vmem:[%s228 + $0x7c] sm:$0xf]
        %v251 = vld [vmem:[%s228 + $0x84] sm:$0xf]
        %v252 = vld [vmem:[%s228 + $0x88] sm:$0xf]
        %v253 = vld [vmem:[%s228 + $0x90] sm:$0xf]
        %v254 = vld [vmem:[%s228 + $0x94] sm:$0xf]
        %v255 = vld [vmem:[%s228 + $0x9c] sm:$0xf]
        %v256 = vld [vmem:[%s228 + $0xa0] sm:$0xf]
        %v257 = vld [vmem:[%s228 + $0xa8] sm:$0xf]
        %v258 = vld [vmem:[%s228 + $0xac] sm:$0xf]
        %v259 = vld [vmem:[%s228 + $0xb4] sm:$0xf]
        %v260 = vld [vmem:[%s228 + $0xb8] sm:$0xf]
        %vm261 = vcmask 60416
        %262 = vst.msk [vmem:[#allocation2] sm:$0xf] %vm261, %v229
        %263 = vst.msk [vmem:[#allocation2 + $0x4] sm:$0xf] %vm261, %v230
        %264 = vst.msk [vmem:[#allocation2 + $0x8] sm:$0xf] %vm261, %v231
        %265 = vst.msk [vmem:[#allocation2 + $0xc] sm:$0xf] %vm261, %v232
        %266 = vst.msk [vmem:[#allocation2 + $0x10] sm:$0xf] %vm261, %v233
        %267 = vst.msk [vmem:[#allocation2 + $0x14] sm:$0xf] %vm261, %v234
        %268 = vst.msk [vmem:[#allocation2 + $0x18] sm:$0xf] %vm261, %v235
        %269 = vst.msk [vmem:[#allocation2 + $0x1c] sm:$0xf] %vm261, %v236
        %270 = vst.msk [vmem:[#allocation2 + $0x20] sm:$0xf] %vm261, %v237
        %271 = vst.msk [vmem:[#allocation2 + $0x24] sm:$0xf] %vm261, %v238
        %272 = vst.msk [vmem:[#allocation2 + $0x28] sm:$0xf] %vm261, %v239
        %273 = vst.msk [vmem:[#allocation2 + $0x2c] sm:$0xf] %vm261, %v240
        %274 = vst.msk [vmem:[#allocation2 + $0x30] sm:$0xf] %vm261, %v241
        %275 = vst.msk [vmem:[#allocation2 + $0x34] sm:$0xf] %vm261, %v242
        %276 = vst.msk [vmem:[#allocation2 + $0x38] sm:$0xf] %vm261, %v243
        %277 = vst.msk [vmem:[#allocation2 + $0x3c] sm:$0xf] %vm261, %v244
        %278 = vst.msk [vmem:[#allocation2 + $0x40] sm:$0xf] %vm261, %v245
        %279 = vst.msk [vmem:[#allocation2 + $0x44] sm:$0xf] %vm261, %v246
        %280 = vst.msk [vmem:[#allocation2 + $0x48] sm:$0xf] %vm261, %v247
        %281 = vst.msk [vmem:[#allocation2 + $0x4c] sm:$0xf] %vm261, %v248
        %282 = vst.msk [vmem:[#allocation2 + $0x50] sm:$0xf] %vm261, %v249
        %283 = vst.msk [vmem:[#allocation2 + $0x54] sm:$0xf] %vm261, %v250
        %284 = vst.msk [vmem:[#allocation2 + $0x58] sm:$0xf] %vm261, %v251
        %285 = vst.msk [vmem:[#allocation2 + $0x5c] sm:$0xf] %vm261, %v252
        %286 = vst.msk [vmem:[#allocation2 + $0x60] sm:$0xf] %vm261, %v253
        %287 = vst.msk [vmem:[#allocation2 + $0x64] sm:$0xf] %vm261, %v254
        %288 = vst.msk [vmem:[#allocation2 + $0x68] sm:$0xf] %vm261, %v255
        %289 = vst.msk [vmem:[#allocation2 + $0x6c] sm:$0xf] %vm261, %v256
        %290 = vst.msk [vmem:[#allocation2 + $0x70] sm:$0xf] %vm261, %v257
        %291 = vst.msk [vmem:[#allocation2 + $0x74] sm:$0xf] %vm261, %v258
        %292 = vst.msk [vmem:[#allocation2 + $0x78] sm:$0xf] %vm261, %v259
        %293 = vst.msk [vmem:[#allocation2 + $0x7c] sm:$0xf] %vm261, %v260
        %s294 = sadd.s32 %s225, 1
        %s295 = smul.u32 %s294, 3
        %s296 = smul.addr %s295, 4
        %s297 = scalar_lea.vmem %s215, %s296
        %v298 = vld [vmem:[%s297] sm:$0xf]
        %v299 = vld [vmem:[%s297 + $0x4] sm:$0xf]
        %v300 = vld [vmem:[%s297 + $0xc] sm:$0xf]
        %v301 = vld [vmem:[%s297 + $0x10] sm:$0xf]
        %v302 = vld [vmem:[%s297 + $0x18] sm:$0xf]
        %v303 = vld [vmem:[%s297 + $0x1c] sm:$0xf]
        %v304 = vld [vmem:[%s297 + $0x24] sm:$0xf]
        %v305 = vld [vmem:[%s297 + $0x28] sm:$0xf]
        %v306 = vld [vmem:[%s297 + $0x30] sm:$0xf]
        %v307 = vld [vmem:[%s297 + $0x34] sm:$0xf]
        %v308 = vld [vmem:[%s297 + $0x3c] sm:$0xf]
        %v309 = vld [vmem:[%s297 + $0x40] sm:$0xf]
        %v310 = vld [vmem:[%s297 + $0x48] sm:$0xf]
        %v311 = vld [vmem:[%s297 + $0x4c] sm:$0xf]
        %v312 = vld [vmem:[%s297 + $0x54] sm:$0xf]
        %v313 = vld [vmem:[%s297 + $0x58] sm:$0xf]
        %v314 = vld [vmem:[%s297 + $0x60] sm:$0xf]
        %v315 = vld [vmem:[%s297 + $0x64] sm:$0xf]
        %v316 = vld [vmem:[%s297 + $0x6c] sm:$0xf]
        %v317 = vld [vmem:[%s297 + $0x70] sm:$0xf]
        %v318 = vld [vmem:[%s297 + $0x78] sm:$0xf]
        %v319 = vld [vmem:[%s297 + $0x7c] sm:$0xf]
        %v320 = vld [vmem:[%s297 + $0x84] sm:$0xf]
        %v321 = vld [vmem:[%s297 + $0x88] sm:$0xf]
        %v322 = vld [vmem:[%s297 + $0x90] sm:$0xf]
        %v323 = vld [vmem:[%s297 + $0x94] sm:$0xf]
        %v324 = vld [vmem:[%s297 + $0x9c] sm:$0xf]
        %v325 = vld [vmem:[%s297 + $0xa0] sm:$0xf]
        %v326 = vld [vmem:[%s297 + $0xa8] sm:$0xf]
        %v327 = vld [vmem:[%s297 + $0xac] sm:$0xf]
        %v328 = vld [vmem:[%s297 + $0xb4] sm:$0xf]
        %v329 = vld [vmem:[%s297 + $0xb8] sm:$0xf]
        %362 = vrot.lane.b32.xlu0 %v298, 8
        %v363 = vpop.permute.xlu0 %362
        %364 = vrot.lane.b32.xlu0 %v299, 8
        %v365 = vpop.permute.xlu0 %364
        %366 = vrot.lane.b32.xlu0 %v300, 8
        %v367 = vpop.permute.xlu0 %366
        %368 = vrot.lane.b32.xlu0 %v301, 8
        %v369 = vpop.permute.xlu0 %368
        %370 = vrot.lane.b32.xlu0 %v302, 8
        %v371 = vpop.permute.xlu0 %370
        %372 = vrot.lane.b32.xlu0 %v303, 8
        %v373 = vpop.permute.xlu0 %372
        %374 = vrot.lane.b32.xlu0 %v304, 8
        %v375 = vpop.permute.xlu0 %374
        %376 = vrot.lane.b32.xlu0 %v305, 8
        %v377 = vpop.permute.xlu0 %376
        %378 = vrot.lane.b32.xlu0 %v306, 8
        %v379 = vpop.permute.xlu0 %378
        %380 = vrot.lane.b32.xlu0 %v307, 8
        %v381 = vpop.permute.xlu0 %380
        %382 = vrot.lane.b32.xlu0 %v308, 8
        %v383 = vpop.permute.xlu0 %382
        %384 = vrot.lane.b32.xlu0 %v309, 8
        %v385 = vpop.permute.xlu0 %384
        %386 = vrot.lane.b32.xlu0 %v310, 8
        %v387 = vpop.permute.xlu0 %386
        %388 = vrot.lane.b32.xlu0 %v311, 8
        %v389 = vpop.permute.xlu0 %388
        %390 = vrot.lane.b32.xlu0 %v312, 8
        %v391 = vpop.permute.xlu0 %390
        %392 = vrot.lane.b32.xlu0 %v313, 8
        %v393 = vpop.permute.xlu0 %392
        %394 = vrot.lane.b32.xlu0 %v314, 8
        %v395 = vpop.permute.xlu0 %394
        %396 = vrot.lane.b32.xlu0 %v315, 8
        %v397 = vpop.permute.xlu0 %396
        %398 = vrot.lane.b32.xlu0 %v316, 8
        %v399 = vpop.permute.xlu0 %398
        %400 = vrot.lane.b32.xlu0 %v317, 8
        %v401 = vpop.permute.xlu0 %400
        %402 = vrot.lane.b32.xlu0 %v318, 8
        %v403 = vpop.permute.xlu0 %402
        %404 = vrot.lane.b32.xlu0 %v319, 8
        %v405 = vpop.permute.xlu0 %404
        %406 = vrot.lane.b32.xlu0 %v320, 8
        %v407 = vpop.permute.xlu0 %406
        %408 = vrot.lane.b32.xlu0 %v321, 8
        %v409 = vpop.permute.xlu0 %408
        %410 = vrot.lane.b32.xlu0 %v322, 8
        %v411 = vpop.permute.xlu0 %410
        %412 = vrot.lane.b32.xlu0 %v323, 8
        %v413 = vpop.permute.xlu0 %412
        %414 = vrot.lane.b32.xlu0 %v324, 8
        %v415 = vpop.permute.xlu0 %414
        %416 = vrot.lane.b32.xlu0 %v325, 8
        %v417 = vpop.permute.xlu0 %416
        %418 = vrot.lane.b32.xlu0 %v326, 8
        %v419 = vpop.permute.xlu0 %418
        %420 = vrot.lane.b32.xlu0 %v327, 8
        %v421 = vpop.permute.xlu0 %420
        %422 = vrot.lane.b32.xlu0 %v328, 8
        %v423 = vpop.permute.xlu0 %422
        %424 = vrot.lane.b32.xlu0 %v329, 8
        %v425 = vpop.permute.xlu0 %424
        %vm458 = vcmask 126016
        %459 = vst.msk [vmem:[#allocation2] sm:$0xf] %vm458, %v363
        %460 = vst.msk [vmem:[#allocation2 + $0x4] sm:$0xf] %vm458, %v365
        %461 = vst.msk [vmem:[#allocation2 + $0x8] sm:$0xf] %vm458, %v367
        %462 = vst.msk [vmem:[#allocation2 + $0xc] sm:$0xf] %vm458, %v369
        %463 = vst.msk [vmem:[#allocation2 + $0x10] sm:$0xf] %vm458, %v371
        %464 = vst.msk [vmem:[#allocation2 + $0x14] sm:$0xf] %vm458, %v373
        %465 = vst.msk [vmem:[#allocation2 + $0x18] sm:$0xf] %vm458, %v375
        %466 = vst.msk [vmem:[#allocation2 + $0x1c] sm:$0xf] %vm458, %v377
        %467 = vst.msk [vmem:[#allocation2 + $0x20] sm:$0xf] %vm458, %v379
        %468 = vst.msk [vmem:[#allocation2 + $0x24] sm:$0xf] %vm458, %v381
        %469 = vst.msk [vmem:[#allocation2 + $0x28] sm:$0xf] %vm458, %v383
        %470 = vst.msk [vmem:[#allocation2 + $0x2c] sm:$0xf] %vm458, %v385
        %471 = vst.msk [vmem:[#allocation2 + $0x30] sm:$0xf] %vm458, %v387
        %472 = vst.msk [vmem:[#allocation2 + $0x34] sm:$0xf] %vm458, %v389
        %473 = vst.msk [vmem:[#allocation2 + $0x38] sm:$0xf] %vm458, %v391
        %474 = vst.msk [vmem:[#allocation2 + $0x3c] sm:$0xf] %vm458, %v393
        %475 = vst.msk [vmem:[#allocation2 + $0x40] sm:$0xf] %vm458, %v395
        %476 = vst.msk [vmem:[#allocation2 + $0x44] sm:$0xf] %vm458, %v397
        %477 = vst.msk [vmem:[#allocation2 + $0x48] sm:$0xf] %vm458, %v399
        %478 = vst.msk [vmem:[#allocation2 + $0x4c] sm:$0xf] %vm458, %v401
        %479 = vst.msk [vmem:[#allocation2 + $0x50] sm:$0xf] %vm458, %v403
        %480 = vst.msk [vmem:[#allocation2 + $0x54] sm:$0xf] %vm458, %v405
        %481 = vst.msk [vmem:[#allocation2 + $0x58] sm:$0xf] %vm458, %v407
        %482 = vst.msk [vmem:[#allocation2 + $0x5c] sm:$0xf] %vm458, %v409
        %483 = vst.msk [vmem:[#allocation2 + $0x60] sm:$0xf] %vm458, %v411
        %484 = vst.msk [vmem:[#allocation2 + $0x64] sm:$0xf] %vm458, %v413
        %485 = vst.msk [vmem:[#allocation2 + $0x68] sm:$0xf] %vm458, %v415
        %486 = vst.msk [vmem:[#allocation2 + $0x6c] sm:$0xf] %vm458, %v417
        %487 = vst.msk [vmem:[#allocation2 + $0x70] sm:$0xf] %vm458, %v419
        %488 = vst.msk [vmem:[#allocation2 + $0x74] sm:$0xf] %vm458, %v421
        %489 = vst.msk [vmem:[#allocation2 + $0x78] sm:$0xf] %vm458, %v423
        %490 = vst.msk [vmem:[#allocation2 + $0x7c] sm:$0xf] %vm458, %v425
        %s491 = sadd.s32 %s225, 2
        %s492 = smul.u32 %s491, 3
        %s493 = smul.addr %s492, 4
        %s494 = scalar_lea.vmem %s215, %s493
        %v495 = vld [vmem:[%s494] sm:$0xf]
        %v496 = vld [vmem:[%s494 + $0x4] sm:$0xf]
        %v497 = vld [vmem:[%s494 + $0xc] sm:$0xf]
        %v498 = vld [vmem:[%s494 + $0x10] sm:$0xf]
        %v499 = vld [vmem:[%s494 + $0x18] sm:$0xf]
        %v500 = vld [vmem:[%s494 + $0x1c] sm:$0xf]
        %v501 = vld [vmem:[%s494 + $0x24] sm:$0xf]
        %v502 = vld [vmem:[%s494 + $0x28] sm:$0xf]
        %v503 = vld [vmem:[%s494 + $0x30] sm:$0xf]
        %v504 = vld [vmem:[%s494 + $0x34] sm:$0xf]
        %v505 = vld [vmem:[%s494 + $0x3c] sm:$0xf]
        %v506 = vld [vmem:[%s494 + $0x40] sm:$0xf]
        %v507 = vld [vmem:[%s494 + $0x48] sm:$0xf]
        %v508 = vld [vmem:[%s494 + $0x4c] sm:$0xf]
        %v509 = vld [vmem:[%s494 + $0x54] sm:$0xf]
        %v510 = vld [vmem:[%s494 + $0x58] sm:$0xf]
        %v511 = vld [vmem:[%s494 + $0x60] sm:$0xf]
        %v512 = vld [vmem:[%s494 + $0x64] sm:$0xf]
        %v513 = vld [vmem:[%s494 + $0x6c] sm:$0xf]
        %v514 = vld [vmem:[%s494 + $0x70] sm:$0xf]
        %v515 = vld [vmem:[%s494 + $0x78] sm:$0xf]
        %v516 = vld [vmem:[%s494 + $0x7c] sm:$0xf]
        %v517 = vld [vmem:[%s494 + $0x84] sm:$0xf]
        %v518 = vld [vmem:[%s494 + $0x88] sm:$0xf]
        %v519 = vld [vmem:[%s494 + $0x90] sm:$0xf]
        %v520 = vld [vmem:[%s494 + $0x94] sm:$0xf]
        %v521 = vld [vmem:[%s494 + $0x9c] sm:$0xf]
        %v522 = vld [vmem:[%s494 + $0xa0] sm:$0xf]
        %v523 = vld [vmem:[%s494 + $0xa8] sm:$0xf]
        %v524 = vld [vmem:[%s494 + $0xac] sm:$0xf]
        %v525 = vld [vmem:[%s494 + $0xb4] sm:$0xf]
        %v526 = vld [vmem:[%s494 + $0xb8] sm:$0xf]
        %559 = vrot.lane.b32.xlu0 %v495, 16
        %v560 = vpop.permute.xlu0 %559
        %561 = vrot.lane.b32.xlu0 %v496, 16
        %v562 = vpop.permute.xlu0 %561
        %563 = vrot.lane.b32.xlu0 %v497, 16
        %v564 = vpop.permute.xlu0 %563
        %565 = vrot.lane.b32.xlu0 %v498, 16
        %v566 = vpop.permute.xlu0 %565
        %567 = vrot.lane.b32.xlu0 %v499, 16
        %v568 = vpop.permute.xlu0 %567
        %569 = vrot.lane.b32.xlu0 %v500, 16
        %v570 = vpop.permute.xlu0 %569
        %571 = vrot.lane.b32.xlu0 %v501, 16
        %v572 = vpop.permute.xlu0 %571
        %573 = vrot.lane.b32.xlu0 %v502, 16
        %v574 = vpop.permute.xlu0 %573
        %575 = vrot.lane.b32.xlu0 %v503, 16
        %v576 = vpop.permute.xlu0 %575
        %577 = vrot.lane.b32.xlu0 %v504, 16
        %v578 = vpop.permute.xlu0 %577
        %579 = vrot.lane.b32.xlu0 %v505, 16
        %v580 = vpop.permute.xlu0 %579
        %581 = vrot.lane.b32.xlu0 %v506, 16
        %v582 = vpop.permute.xlu0 %581
        %583 = vrot.lane.b32.xlu0 %v507, 16
        %v584 = vpop.permute.xlu0 %583
        %585 = vrot.lane.b32.xlu0 %v508, 16
        %v586 = vpop.permute.xlu0 %585
        %587 = vrot.lane.b32.xlu0 %v509, 16
        %v588 = vpop.permute.xlu0 %587
        %589 = vrot.lane.b32.xlu0 %v510, 16
        %v590 = vpop.permute.xlu0 %589
        %591 = vrot.lane.b32.xlu0 %v511, 16
        %v592 = vpop.permute.xlu0 %591
        %593 = vrot.lane.b32.xlu0 %v512, 16
        %v594 = vpop.permute.xlu0 %593
        %595 = vrot.lane.b32.xlu0 %v513, 16
        %v596 = vpop.permute.xlu0 %595
        %597 = vrot.lane.b32.xlu0 %v514, 16
        %v598 = vpop.permute.xlu0 %597
        %599 = vrot.lane.b32.xlu0 %v515, 16
        %v600 = vpop.permute.xlu0 %599
        %601 = vrot.lane.b32.xlu0 %v516, 16
        %v602 = vpop.permute.xlu0 %601
        %603 = vrot.lane.b32.xlu0 %v517, 16
        %v604 = vpop.permute.xlu0 %603
        %605 = vrot.lane.b32.xlu0 %v518, 16
        %v606 = vpop.permute.xlu0 %605
        %607 = vrot.lane.b32.xlu0 %v519, 16
        %v608 = vpop.permute.xlu0 %607
        %609 = vrot.lane.b32.xlu0 %v520, 16
        %v610 = vpop.permute.xlu0 %609
        %611 = vrot.lane.b32.xlu0 %v521, 16
        %v612 = vpop.permute.xlu0 %611
        %613 = vrot.lane.b32.xlu0 %v522, 16
        %v614 = vpop.permute.xlu0 %613
        %615 = vrot.lane.b32.xlu0 %v523, 16
        %v616 = vpop.permute.xlu0 %615
        %617 = vrot.lane.b32.xlu0 %v524, 16
        %v618 = vpop.permute.xlu0 %617
        %619 = vrot.lane.b32.xlu0 %v525, 16
        %v620 = vpop.permute.xlu0 %619
        %621 = vrot.lane.b32.xlu0 %v526, 16
        %v622 = vpop.permute.xlu0 %621
        %vm655 = vcmask 191616
        %656 = vst.msk [vmem:[#allocation2] sm:$0xf] %vm655, %v560
        %657 = vst.msk [vmem:[#allocation2 + $0x4] sm:$0xf] %vm655, %v562
        %658 = vst.msk [vmem:[#allocation2 + $0x8] sm:$0xf] %vm655, %v564
        %659 = vst.msk [vmem:[#allocation2 + $0xc] sm:$0xf] %vm655, %v566
        %660 = vst.msk [vmem:[#allocation2 + $0x10] sm:$0xf] %vm655, %v568
        %661 = vst.msk [vmem:[#allocation2 + $0x14] sm:$0xf] %vm655, %v570
        %662 = vst.msk [vmem:[#allocation2 + $0x18] sm:$0xf] %vm655, %v572
        %663 = vst.msk [vmem:[#allocation2 + $0x1c] sm:$0xf] %vm655, %v574
        %664 = vst.msk [vmem:[#allocation2 + $0x20] sm:$0xf] %vm655, %v576
        %665 = vst.msk [vmem:[#allocation2 + $0x24] sm:$0xf] %vm655, %v578
        %666 = vst.msk [vmem:[#allocation2 + $0x28] sm:$0xf] %vm655, %v580
        %667 = vst.msk [vmem:[#allocation2 + $0x2c] sm:$0xf] %vm655, %v582
        %668 = vst.msk [vmem:[#allocation2 + $0x30] sm:$0xf] %vm655, %v584
        %669 = vst.msk [vmem:[#allocation2 + $0x34] sm:$0xf] %vm655, %v586
        %670 = vst.msk [vmem:[#allocation2 + $0x38] sm:$0xf] %vm655, %v588
        %671 = vst.msk [vmem:[#allocation2 + $0x3c] sm:$0xf] %vm655, %v590
        %672 = vst.msk [vmem:[#allocation2 + $0x40] sm:$0xf] %vm655, %v592
        %673 = vst.msk [vmem:[#allocation2 + $0x44] sm:$0xf] %vm655, %v594
        %674 = vst.msk [vmem:[#allocation2 + $0x48] sm:$0xf] %vm655, %v596
        %675 = vst.msk [vmem:[#allocation2 + $0x4c] sm:$0xf] %vm655, %v598
        %676 = vst.msk [vmem:[#allocation2 + $0x50] sm:$0xf] %vm655, %v600
        %677 = vst.msk [vmem:[#allocation2 + $0x54] sm:$0xf] %vm655, %v602
        %678 = vst.msk [vmem:[#allocation2 + $0x58] sm:$0xf] %vm655, %v604
        %679 = vst.msk [vmem:[#allocation2 + $0x5c] sm:$0xf] %vm655, %v606
        %680 = vst.msk [vmem:[#allocation2 + $0x60] sm:$0xf] %vm655, %v608
        %681 = vst.msk [vmem:[#allocation2 + $0x64] sm:$0xf] %vm655, %v610
        %682 = vst.msk [vmem:[#allocation2 + $0x68] sm:$0xf] %vm655, %v612
        %683 = vst.msk [vmem:[#allocation2 + $0x6c] sm:$0xf] %vm655, %v614
        %684 = vst.msk [vmem:[#allocation2 + $0x70] sm:$0xf] %vm655, %v616
        %685 = vst.msk [vmem:[#allocation2 + $0x74] sm:$0xf] %vm655, %v618
        %686 = vst.msk [vmem:[#allocation2 + $0x78] sm:$0xf] %vm655, %v620
        %687 = vst.msk [vmem:[#allocation2 + $0x7c] sm:$0xf] %vm655, %v622
        %v688 = vld [vmem:[%s228] sm:$0xf]
        %v689 = vld [vmem:[%s228 + $0x4] sm:$0xf]
        %v690 = vld [vmem:[%s228 + $0x8] sm:$0x1]
        %v691 = vld [vmem:[%s228 + $0xc] sm:$0xf]
        %v692 = vld [vmem:[%s228 + $0x10] sm:$0xf]
        %v693 = vld [vmem:[%s228 + $0x14] sm:$0x1]
        %v694 = vld [vmem:[%s228 + $0x18] sm:$0xf]
        %v695 = vld [vmem:[%s228 + $0x1c] sm:$0xf]
        %v696 = vld [vmem:[%s228 + $0x20] sm:$0x1]
        %v697 = vld [vmem:[%s228 + $0x24] sm:$0xf]
        %v698 = vld [vmem:[%s228 + $0x28] sm:$0xf]
        %v699 = vld [vmem:[%s228 + $0x2c] sm:$0x1]
        %v700 = vld [vmem:[%s228 + $0x30] sm:$0xf]
        %v701 = vld [vmem:[%s228 + $0x34] sm:$0xf]
        %v702 = vld [vmem:[%s228 + $0x38] sm:$0x1]
        %v703 = vld [vmem:[%s228 + $0x3c] sm:$0xf]
        %v704 = vld [vmem:[%s228 + $0x40] sm:$0xf]
        %v705 = vld [vmem:[%s228 + $0x44] sm:$0x1]
        %v706 = vld [vmem:[%s228 + $0x48] sm:$0xf]
        %v707 = vld [vmem:[%s228 + $0x4c] sm:$0xf]
        %v708 = vld [vmem:[%s228 + $0x50] sm:$0x1]
        %v709 = vld [vmem:[%s228 + $0x54] sm:$0xf]
        %v710 = vld [vmem:[%s228 + $0x58] sm:$0xf]
        %v711 = vld [vmem:[%s228 + $0x5c] sm:$0x1]
        %v712 = vld [vmem:[%s228 + $0x60] sm:$0xf]
        %v713 = vld [vmem:[%s228 + $0x64] sm:$0xf]
        %v714 = vld [vmem:[%s228 + $0x68] sm:$0x1]
        %v715 = vld [vmem:[%s228 + $0x6c] sm:$0xf]
        %v716 = vld [vmem:[%s228 + $0x70] sm:$0xf]
        %v717 = vld [vmem:[%s228 + $0x74] sm:$0x1]
        %v718 = vld [vmem:[%s228 + $0x78] sm:$0xf]
        %v719 = vld [vmem:[%s228 + $0x7c] sm:$0xf]
        %v720 = vld [vmem:[%s228 + $0x80] sm:$0x1]
        %v721 = vld [vmem:[%s228 + $0x84] sm:$0xf]
        %v722 = vld [vmem:[%s228 + $0x88] sm:$0xf]
        %v723 = vld [vmem:[%s228 + $0x8c] sm:$0x1]
        %v724 = vld [vmem:[%s228 + $0x90] sm:$0xf]
        %v725 = vld [vmem:[%s228 + $0x94] sm:$0xf]
        %v726 = vld [vmem:[%s228 + $0x98] sm:$0x1]
        %v727 = vld [vmem:[%s228 + $0x9c] sm:$0xf]
        %v728 = vld [vmem:[%s228 + $0xa0] sm:$0xf]
        %v729 = vld [vmem:[%s228 + $0xa4] sm:$0x1]
        %v730 = vld [vmem:[%s228 + $0xa8] sm:$0xf]
        %v731 = vld [vmem:[%s228 + $0xac] sm:$0xf]
        %v732 = vld [vmem:[%s228 + $0xb0] sm:$0x1]
        %v733 = vld [vmem:[%s228 + $0xb4] sm:$0xf]
        %v734 = vld [vmem:[%s228 + $0xb8] sm:$0xf]
        %v735 = vld [vmem:[%s228 + $0xbc] sm:$0x1]
        %vm736 = vsmask.f32 3328
        %vm737 = vsmask.f32 7440
        %vm738 = vmor %vm736, %vm737
        %v740 = vshrl.u32 %v688, 16
        %v742 = vrot.slane %v740, 4
        %v743 = vshll.u32 %v688, 16
        %v745 = vrot.slane %v743, 5
        %v746 = vor.u32 %v742, %v745
        %v747 = vrot.slane %v746, 4
        %v749 = vshll.u32 %v689, 16
        %v751 = vrot.slane %v749, 5
        %v752 = vsel %vm738, %v747, %v751
        %v753 = vshrl.u32 %v689, 16
        %v755 = vrot.slane %v753, 4
        %v756 = vor.u32 %v755, %v751
        %v757 = vrot.slane %v756, 4
        %v759 = vshll.u32 %v690, 16
        %v761 = vrot.slane %v759, 5
        %v762 = vsel %vm738, %v757, %v761
        %v764 = vshrl.u32 %v691, 16
        %v766 = vrot.slane %v764, 4
        %v767 = vshll.u32 %v691, 16
        %v769 = vrot.slane %v767, 5
        %v770 = vor.u32 %v766, %v769
        %v771 = vrot.slane %v770, 4
        %v773 = vshll.u32 %v692, 16
        %v775 = vrot.slane %v773, 5
        %v776 = vsel %vm738, %v771, %v775
        %v777 = vshrl.u32 %v692, 16
        %v779 = vrot.slane %v777, 4
        %v780 = vor.u32 %v779, %v775
        %v781 = vrot.slane %v780, 4
        %v783 = vshll.u32 %v693, 16
        %v785 = vrot.slane %v783, 5
        %v786 = vsel %vm738, %v781, %v785
        %v788 = vshrl.u32 %v694, 16
        %v790 = vrot.slane %v788, 4
        %v791 = vshll.u32 %v694, 16
        %v793 = vrot.slane %v791, 5
        %v794 = vor.u32 %v790, %v793
        %v795 = vrot.slane %v794, 4
        %v797 = vshll.u32 %v695, 16
        %v799 = vrot.slane %v797, 5
        %v800 = vsel %vm738, %v795, %v799
        %v801 = vshrl.u32 %v695, 16
        %v803 = vrot.slane %v801, 4
        %v804 = vor.u32 %v803, %v799
        %v805 = vrot.slane %v804, 4
        %v807 = vshll.u32 %v696, 16
        %v809 = vrot.slane %v807, 5
        %v810 = vsel %vm738, %v805, %v809
        %v812 = vshrl.u32 %v697, 16
        %v814 = vrot.slane %v812, 4
        %v815 = vshll.u32 %v697, 16
        %v817 = vrot.slane %v815, 5
        %v818 = vor.u32 %v814, %v817
        %v819 = vrot.slane %v818, 4
        %v821 = vshll.u32 %v698, 16
        %v823 = vrot.slane %v821, 5
        %v824 = vsel %vm738, %v819, %v823
        %v825 = vshrl.u32 %v698, 16
        %v827 = vrot.slane %v825, 4
        %v828 = vor.u32 %v827, %v823
        %v829 = vrot.slane %v828, 4
        %v831 = vshll.u32 %v699, 16
        %v833 = vrot.slane %v831, 5
        %v834 = vsel %vm738, %v829, %v833
        %v836 = vshrl.u32 %v700, 16
        %v838 = vrot.slane %v836, 4
        %v839 = vshll.u32 %v700, 16
        %v841 = vrot.slane %v839, 5
        %v842 = vor.u32 %v838, %v841
        %v843 = vrot.slane %v842, 4
        %v845 = vshll.u32 %v701, 16
        %v847 = vrot.slane %v845, 5
        %v848 = vsel %vm738, %v843, %v847
        %v849 = vshrl.u32 %v701, 16
        %v851 = vrot.slane %v849, 4
        %v852 = vor.u32 %v851, %v847
        %v853 = vrot.slane %v852, 4
        %v855 = vshll.u32 %v702, 16
        %v857 = vrot.slane %v855, 5
        %v858 = vsel %vm738, %v853, %v857
        %v860 = vshrl.u32 %v703, 16
        %v862 = vrot.slane %v860, 4
        %v863 = vshll.u32 %v703, 16
        %v865 = vrot.slane %v863, 5
        %v866 = vor.u32 %v862, %v865
        %v867 = vrot.slane %v866, 4
        %v869 = vshll.u32 %v704, 16
        %v871 = vrot.slane %v869, 5
        %v872 = vsel %vm738, %v867, %v871
        %v873 = vshrl.u32 %v704, 16
        %v875 = vrot.slane %v873, 4
        %v876 = vor.u32 %v875, %v871
        %v877 = vrot.slane %v876, 4
        %v879 = vshll.u32 %v705, 16
        %v881 = vrot.slane %v879, 5
        %v882 = vsel %vm738, %v877, %v881
        %v884 = vshrl.u32 %v706, 16
        %v886 = vrot.slane %v884, 4
        %v887 = vshll.u32 %v706, 16
        %v889 = vrot.slane %v887, 5
        %v890 = vor.u32 %v886, %v889
        %v891 = vrot.slane %v890, 4
        %v893 = vshll.u32 %v707, 16
        %v895 = vrot.slane %v893, 5
        %v896 = vsel %vm738, %v891, %v895
        %v897 = vshrl.u32 %v707, 16
        %v899 = vrot.slane %v897, 4
        %v900 = vor.u32 %v899, %v895
        %v901 = vrot.slane %v900, 4
        %v903 = vshll.u32 %v708, 16
        %v905 = vrot.slane %v903, 5
        %v906 = vsel %vm738, %v901, %v905
        %v908 = vshrl.u32 %v709, 16
        %v910 = vrot.slane %v908, 4
        %v911 = vshll.u32 %v709, 16
        %v913 = vrot.slane %v911, 5
        %v914 = vor.u32 %v910, %v913
        %v915 = vrot.slane %v914, 4
        %v917 = vshll.u32 %v710, 16
        %v919 = vrot.slane %v917, 5
        %v920 = vsel %vm738, %v915, %v919
        %v921 = vshrl.u32 %v710, 16
        %v923 = vrot.slane %v921, 4
        %v924 = vor.u32 %v923, %v919
        %v925 = vrot.slane %v924, 4
        %v927 = vshll.u32 %v711, 16
        %v929 = vrot.slane %v927, 5
        %v930 = vsel %vm738, %v925, %v929
        %v932 = vshrl.u32 %v712, 16
        %v934 = vrot.slane %v932, 4
        %v935 = vshll.u32 %v712, 16
        %v937 = vrot.slane %v935, 5
        %v938 = vor.u32 %v934, %v937
        %v939 = vrot.slane %v938, 4
        %v941 = vshll.u32 %v713, 16
        %v943 = vrot.slane %v941, 5
        %v944 = vsel %vm738, %v939, %v943
        %v945 = vshrl.u32 %v713, 16
        %v947 = vrot.slane %v945, 4
        %v948 = vor.u32 %v947, %v943
        %v949 = vrot.slane %v948, 4
        %v951 = vshll.u32 %v714, 16
        %v953 = vrot.slane %v951, 5
        %v954 = vsel %vm738, %v949, %v953
        %v956 = vshrl.u32 %v715, 16
        %v958 = vrot.slane %v956, 4
        %v959 = vshll.u32 %v715, 16
        %v961 = vrot.slane %v959, 5
        %v962 = vor.u32 %v958, %v961
        %v963 = vrot.slane %v962, 4
        %v965 = vshll.u32 %v716, 16
        %v967 = vrot.slane %v965, 5
        %v968 = vsel %vm738, %v963, %v967
        %v969 = vshrl.u32 %v716, 16
        %v971 = vrot.slane %v969, 4
        %v972 = vor.u32 %v971, %v967
        %v973 = vrot.slane %v972, 4
        %v975 = vshll.u32 %v717, 16
        %v977 = vrot.slane %v975, 5
        %v978 = vsel %vm738, %v973, %v977
        %v980 = vshrl.u32 %v718, 16
        %v982 = vrot.slane %v980, 4
        %v983 = vshll.u32 %v718, 16
        %v985 = vrot.slane %v983, 5
        %v986 = vor.u32 %v982, %v985
        %v987 = vrot.slane %v986, 4
        %v989 = vshll.u32 %v719, 16
        %v991 = vrot.slane %v989, 5
        %v992 = vsel %vm738, %v987, %v991
        %v993 = vshrl.u32 %v719, 16
        %v995 = vrot.slane %v993, 4
        %v996 = vor.u32 %v995, %v991
        %v997 = vrot.slane %v996, 4
        %v999 = vshll.u32 %v720, 16
        %v1001 = vrot.slane %v999, 5
        %v1002 = vsel %vm738, %v997, %v1001
        %v1004 = vshrl.u32 %v721, 16
        %v1006 = vrot.slane %v1004, 4
        %v1007 = vshll.u32 %v721, 16
        %v1009 = vrot.slane %v1007, 5
        %v1010 = vor.u32 %v1006, %v1009
        %v1011 = vrot.slane %v1010, 4
        %v1013 = vshll.u32 %v722, 16
        %v1015 = vrot.slane %v1013, 5
        %v1016 = vsel %vm738, %v1011, %v1015
        %v1017 = vshrl.u32 %v722, 16
        %v1019 = vrot.slane %v1017, 4
        %v1020 = vor.u32 %v1019, %v1015
        %v1021 = vrot.slane %v1020, 4
        %v1023 = vshll.u32 %v723, 16
        %v1025 = vrot.slane %v1023, 5
        %v1026 = vsel %vm738, %v1021, %v1025
        %v1028 = vshrl.u32 %v724, 16
        %v1030 = vrot.slane %v1028, 4
        %v1031 = vshll.u32 %v724, 16
        %v1033 = vrot.slane %v1031, 5
        %v1034 = vor.u32 %v1030, %v1033
        %v1035 = vrot.slane %v1034, 4
        %v1037 = vshll.u32 %v725, 16
        %v1039 = vrot.slane %v1037, 5
        %v1040 = vsel %vm738, %v1035, %v1039
        %v1041 = vshrl.u32 %v725, 16
        %v1043 = vrot.slane %v1041, 4
        %v1044 = vor.u32 %v1043, %v1039
        %v1045 = vrot.slane %v1044, 4
        %v1047 = vshll.u32 %v726, 16
        %v1049 = vrot.slane %v1047, 5
        %v1050 = vsel %vm738, %v1045, %v1049
        %v1052 = vshrl.u32 %v727, 16
        %v1054 = vrot.slane %v1052, 4
        %v1055 = vshll.u32 %v727, 16
        %v1057 = vrot.slane %v1055, 5
        %v1058 = vor.u32 %v1054, %v1057
        %v1059 = vrot.slane %v1058, 4
        %v1061 = vshll.u32 %v728, 16
        %v1063 = vrot.slane %v1061, 5
        %v1064 = vsel %vm738, %v1059, %v1063
        %v1065 = vshrl.u32 %v728, 16
        %v1067 = vrot.slane %v1065, 4
        %v1068 = vor.u32 %v1067, %v1063
        %v1069 = vrot.slane %v1068, 4
        %v1071 = vshll.u32 %v729, 16
        %v1073 = vrot.slane %v1071, 5
        %v1074 = vsel %vm738, %v1069, %v1073
        %v1076 = vshrl.u32 %v730, 16
        %v1078 = vrot.slane %v1076, 4
        %v1079 = vshll.u32 %v730, 16
        %v1081 = vrot.slane %v1079, 5
        %v1082 = vor.u32 %v1078, %v1081
        %v1083 = vrot.slane %v1082, 4
        %v1085 = vshll.u32 %v731, 16
        %v1087 = vrot.slane %v1085, 5
        %v1088 = vsel %vm738, %v1083, %v1087
        %v1089 = vshrl.u32 %v731, 16
        %v1091 = vrot.slane %v1089, 4
        %v1092 = vor.u32 %v1091, %v1087
        %v1093 = vrot.slane %v1092, 4
        %v1095 = vshll.u32 %v732, 16
        %v1097 = vrot.slane %v1095, 5
        %v1098 = vsel %vm738, %v1093, %v1097
        %v1100 = vshrl.u32 %v733, 16
        %v1102 = vrot.slane %v1100, 4
        %v1103 = vshll.u32 %v733, 16
        %v1105 = vrot.slane %v1103, 5
        %v1106 = vor.u32 %v1102, %v1105
        %v1107 = vrot.slane %v1106, 4
        %v1109 = vshll.u32 %v734, 16
        %v1111 = vrot.slane %v1109, 5
        %v1112 = vsel %vm738, %v1107, %v1111
        %v1113 = vshrl.u32 %v734, 16
        %v1115 = vrot.slane %v1113, 4
        %v1116 = vor.u32 %v1115, %v1111
        %v1117 = vrot.slane %v1116, 4
        %v1119 = vshll.u32 %v735, 16
        %v1121 = vrot.slane %v1119, 5
        %v1122 = vsel %vm738, %v1117, %v1121
        %1123 = vrot.lane.b32.xlu0 %v752, 24
        %v1124 = vpop.permute.xlu0 %1123
        %1125 = vrot.lane.b32.xlu0 %v762, 24
        %v1126 = vpop.permute.xlu0 %1125
        %1127 = vrot.lane.b32.xlu0 %v776, 24
        %v1128 = vpop.permute.xlu0 %1127
        %1129 = vrot.lane.b32.xlu0 %v786, 24
        %v1130 = vpop.permute.xlu0 %1129
        %1131 = vrot.lane.b32.xlu0 %v800, 24
        %v1132 = vpop.permute.xlu0 %1131
        %1133 = vrot.lane.b32.xlu0 %v810, 24
        %v1134 = vpop.permute.xlu0 %1133
        %1135 = vrot.lane.b32.xlu0 %v824, 24
        %v1136 = vpop.permute.xlu0 %1135
        %1137 = vrot.lane.b32.xlu0 %v834, 24
        %v1138 = vpop.permute.xlu0 %1137
        %1139 = vrot.lane.b32.xlu0 %v848, 24
        %v1140 = vpop.permute.xlu0 %1139
        %1141 = vrot.lane.b32.xlu0 %v858, 24
        %v1142 = vpop.permute.xlu0 %1141
        %1143 = vrot.lane.b32.xlu0 %v872, 24
        %v1144 = vpop.permute.xlu0 %1143
        %1145 = vrot.lane.b32.xlu0 %v882, 24
        %v1146 = vpop.permute.xlu0 %1145
        %1147 = vrot.lane.b32.xlu0 %v896, 24
        %v1148 = vpop.permute.xlu0 %1147
        %1149 = vrot.lane.b32.xlu0 %v906, 24
        %v1150 = vpop.permute.xlu0 %1149
        %1151 = vrot.lane.b32.xlu0 %v920, 24
        %v1152 = vpop.permute.xlu0 %1151
        %1153 = vrot.lane.b32.xlu0 %v930, 24
        %v1154 = vpop.permute.xlu0 %1153
        %1155 = vrot.lane.b32.xlu0 %v944, 24
        %v1156 = vpop.permute.xlu0 %1155
        %1157 = vrot.lane.b32.xlu0 %v954, 24
        %v1158 = vpop.permute.xlu0 %1157
        %1159 = vrot.lane.b32.xlu0 %v968, 24
        %v1160 = vpop.permute.xlu0 %1159
        %1161 = vrot.lane.b32.xlu0 %v978, 24
        %v1162 = vpop.permute.xlu0 %1161
        %1163 = vrot.lane.b32.xlu0 %v992, 24
        %v1164 = vpop.permute.xlu0 %1163
        %1165 = vrot.lane.b32.xlu0 %v1002, 24
        %v1166 = vpop.permute.xlu0 %1165
        %1167 = vrot.lane.b32.xlu0 %v1016, 24
        %v1168 = vpop.permute.xlu0 %1167
        %1169 = vrot.lane.b32.xlu0 %v1026, 24
        %v1170 = vpop.permute.xlu0 %1169
        %1171 = vrot.lane.b32.xlu0 %v1040, 24
        %v1172 = vpop.permute.xlu0 %1171
        %1173 = vrot.lane.b32.xlu0 %v1050, 24
        %v1174 = vpop.permute.xlu0 %1173
        %1175 = vrot.lane.b32.xlu0 %v1064, 24
        %v1176 = vpop.permute.xlu0 %1175
        %1177 = vrot.lane.b32.xlu0 %v1074, 24
        %v1178 = vpop.permute.xlu0 %1177
        %1179 = vrot.lane.b32.xlu0 %v1088, 24
        %v1180 = vpop.permute.xlu0 %1179
        %1181 = vrot.lane.b32.xlu0 %v1098, 24
        %v1182 = vpop.permute.xlu0 %1181
        %1183 = vrot.lane.b32.xlu0 %v1112, 24
        %v1184 = vpop.permute.xlu0 %1183
        %1185 = vrot.lane.b32.xlu0 %v1122, 24
        %v1186 = vpop.permute.xlu0 %1185
        %vm1219 = vcmask 257216
        %1220 = vst.msk [vmem:[#allocation2] sm:$0xf] %vm1219, %v1124
        %1221 = vst.msk [vmem:[#allocation2 + $0x4] sm:$0xf] %vm1219, %v1126
        %1222 = vst.msk [vmem:[#allocation2 + $0x8] sm:$0xf] %vm1219, %v1128
        %1223 = vst.msk [vmem:[#allocation2 + $0xc] sm:$0xf] %vm1219, %v1130
        %1224 = vst.msk [vmem:[#allocation2 + $0x10] sm:$0xf] %vm1219, %v1132
        %1225 = vst.msk [vmem:[#allocation2 + $0x14] sm:$0xf] %vm1219, %v1134
        %1226 = vst.msk [vmem:[#allocation2 + $0x18] sm:$0xf] %vm1219, %v1136
        %1227 = vst.msk [vmem:[#allocation2 + $0x1c] sm:$0xf] %vm1219, %v1138
        %1228 = vst.msk [vmem:[#allocation2 + $0x20] sm:$0xf] %vm1219, %v1140
        %1229 = vst.msk [vmem:[#allocation2 + $0x24] sm:$0xf] %vm1219, %v1142
        %1230 = vst.msk [vmem:[#allocation2 + $0x28] sm:$0xf] %vm1219, %v1144
        %1231 = vst.msk [vmem:[#allocation2 + $0x2c] sm:$0xf] %vm1219, %v1146
        %1232 = vst.msk [vmem:[#allocation2 + $0x30] sm:$0xf] %vm1219, %v1148
        %1233 = vst.msk [vmem:[#allocation2 + $0x34] sm:$0xf] %vm1219, %v1150
        %1234 = vst.msk [vmem:[#allocation2 + $0x38] sm:$0xf] %vm1219, %v1152
        %1235 = vst.msk [vmem:[#allocation2 + $0x3c] sm:$0xf] %vm1219, %v1154
        %1236 = vst.msk [vmem:[#allocation2 + $0x40] sm:$0xf] %vm1219, %v1156
        %1237 = vst.msk [vmem:[#allocation2 + $0x44] sm:$0xf] %vm1219, %v1158
        %1238 = vst.msk [vmem:[#allocation2 + $0x48] sm:$0xf] %vm1219, %v1160
        %1239 = vst.msk [vmem:[#allocation2 + $0x4c] sm:$0xf] %vm1219, %v1162
        %1240 = vst.msk [vmem:[#allocation2 + $0x50] sm:$0xf] %vm1219, %v1164
        %1241 = vst.msk [vmem:[#allocation2 + $0x54] sm:$0xf] %vm1219, %v1166
        %1242 = vst.msk [vmem:[#allocation2 + $0x58] sm:$0xf] %vm1219, %v1168
        %1243 = vst.msk [vmem:[#allocation2 + $0x5c] sm:$0xf] %vm1219, %v1170
        %1244 = vst.msk [vmem:[#allocation2 + $0x60] sm:$0xf] %vm1219, %v1172
        %1245 = vst.msk [vmem:[#allocation2 + $0x64] sm:$0xf] %vm1219, %v1174
        %1246 = vst.msk [vmem:[#allocation2 + $0x68] sm:$0xf] %vm1219, %v1176
        %1247 = vst.msk [vmem:[#allocation2 + $0x6c] sm:$0xf] %vm1219, %v1178
        %1248 = vst.msk [vmem:[#allocation2 + $0x70] sm:$0xf] %vm1219, %v1180
        %1249 = vst.msk [vmem:[#allocation2 + $0x74] sm:$0xf] %vm1219, %v1182
        %1250 = vst.msk [vmem:[#allocation2 + $0x78] sm:$0xf] %vm1219, %v1184
        %1251 = vst.msk [vmem:[#allocation2 + $0x7c] sm:$0xf] %vm1219, %v1186
        %v1252 = vld [vmem:[%s297] sm:$0xf]
        %v1253 = vld [vmem:[%s297 + $0x4] sm:$0xf]
        %v1254 = vld [vmem:[%s297 + $0x8] sm:$0x1]
        %v1255 = vld [vmem:[%s297 + $0xc] sm:$0xf]
        %v1256 = vld [vmem:[%s297 + $0x10] sm:$0xf]
        %v1257 = vld [vmem:[%s297 + $0x14] sm:$0x1]
        %v1258 = vld [vmem:[%s297 + $0x18] sm:$0xf]
        %v1259 = vld [vmem:[%s297 + $0x1c] sm:$0xf]
        %v1260 = vld [vmem:[%s297 + $0x20] sm:$0x1]
        %v1261 = vld [vmem:[%s297 + $0x24] sm:$0xf]
        %v1262 = vld [vmem:[%s297 + $0x28] sm:$0xf]
        %v1263 = vld [vmem:[%s297 + $0x2c] sm:$0x1]
        %v1264 = vld [vmem:[%s297 + $0x30] sm:$0xf]
        %v1265 = vld [vmem:[%s297 + $0x34] sm:$0xf]
        %v1266 = vld [vmem:[%s297 + $0x38] sm:$0x1]
        %v1267 = vld [vmem:[%s297 + $0x3c] sm:$0xf]
        %v1268 = vld [vmem:[%s297 + $0x40] sm:$0xf]
        %v1269 = vld [vmem:[%s297 + $0x44] sm:$0x1]
        %v1270 = vld [vmem:[%s297 + $0x48] sm:$0xf]
        %v1271 = vld [vmem:[%s297 + $0x4c] sm:$0xf]
        %v1272 = vld [vmem:[%s297 + $0x50] sm:$0x1]
        %v1273 = vld [vmem:[%s297 + $0x54] sm:$0xf]
        %v1274 = vld [vmem:[%s297 + $0x58] sm:$0xf]
        %v1275 = vld [vmem:[%s297 + $0x5c] sm:$0x1]
        %v1276 = vld [vmem:[%s297 + $0x60] sm:$0xf]
        %v1277 = vld [vmem:[%s297 + $0x64] sm:$0xf]
        %v1278 = vld [vmem:[%s297 + $0x68] sm:$0x1]
        %v1279 = vld [vmem:[%s297 + $0x6c] sm:$0xf]
        %v1280 = vld [vmem:[%s297 + $0x70] sm:$0xf]
        %v1281 = vld [vmem:[%s297 + $0x74] sm:$0x1]
        %v1282 = vld [vmem:[%s297 + $0x78] sm:$0xf]
        %v1283 = vld [vmem:[%s297 + $0x7c] sm:$0xf]
        %v1284 = vld [vmem:[%s297 + $0x80] sm:$0x1]
        %v1285 = vld [vmem:[%s297 + $0x84] sm:$0xf]
        %v1286 = vld [vmem:[%s297 + $0x88] sm:$0xf]
        %v1287 = vld [vmem:[%s297 + $0x8c] sm:$0x1]
        %v1288 = vld [vmem:[%s297 + $0x90] sm:$0xf]
        %v1289 = vld [vmem:[%s297 + $0x94] sm:$0xf]
        %v1290 = vld [vmem:[%s297 + $0x98] sm:$0x1]
        %v1291 = vld [vmem:[%s297 + $0x9c] sm:$0xf]
        %v1292 = vld [vmem:[%s297 + $0xa0] sm:$0xf]
        %v1293 = vld [vmem:[%s297 + $0xa4] sm:$0x1]
        %v1294 = vld [vmem:[%s297 + $0xa8] sm:$0xf]
        %v1295 = vld [vmem:[%s297 + $0xac] sm:$0xf]
        %v1296 = vld [vmem:[%s297 + $0xb0] sm:$0x1]
        %v1297 = vld [vmem:[%s297 + $0xb4] sm:$0xf]
        %v1298 = vld [vmem:[%s297 + $0xb8] sm:$0xf]
        %v1299 = vld [vmem:[%s297 + $0xbc] sm:$0x1]
        %v1301 = vshrl.u32 %v1252, 16
        %v1303 = vrot.slane %v1301, 4
        %v1304 = vshll.u32 %v1252, 16
        %v1306 = vrot.slane %v1304, 5
        %v1307 = vor.u32 %v1303, %v1306
        %v1308 = vrot.slane %v1307, 4
        %v1310 = vshll.u32 %v1253, 16
        %v1312 = vrot.slane %v1310, 5
        %v1313 = vsel %vm738, %v1308, %v1312
        %v1314 = vshrl.u32 %v1253, 16
        %v1316 = vrot.slane %v1314, 4
        %v1317 = vor.u32 %v1316, %v1312
        %v1318 = vrot.slane %v1317, 4
        %v1320 = vshll.u32 %v1254, 16
        %v1322 = vrot.slane %v1320, 5
        %v1323 = vsel %vm738, %v1318, %v1322
        %v1325 = vshrl.u32 %v1255, 16
        %v1327 = vrot.slane %v1325, 4
        %v1328 = vshll.u32 %v1255, 16
        %v1330 = vrot.slane %v1328, 5
        %v1331 = vor.u32 %v1327, %v1330
        %v1332 = vrot.slane %v1331, 4
        %v1334 = vshll.u32 %v1256, 16
        %v1336 = vrot.slane %v1334, 5
        %v1337 = vsel %vm738, %v1332, %v1336
        %v1338 = vshrl.u32 %v1256, 16
        %v1340 = vrot.slane %v1338, 4
        %v1341 = vor.u32 %v1340, %v1336
        %v1342 = vrot.slane %v1341, 4
        %v1344 = vshll.u32 %v1257, 16
        %v1346 = vrot.slane %v1344, 5
        %v1347 = vsel %vm738, %v1342, %v1346
        %v1349 = vshrl.u32 %v1258, 16
        %v1351 = vrot.slane %v1349, 4
        %v1352 = vshll.u32 %v1258, 16
        %v1354 = vrot.slane %v1352, 5
        %v1355 = vor.u32 %v1351, %v1354
        %v1356 = vrot.slane %v1355, 4
        %v1358 = vshll.u32 %v1259, 16
        %v1360 = vrot.slane %v1358, 5
        %v1361 = vsel %vm738, %v1356, %v1360
        %v1362 = vshrl.u32 %v1259, 16
        %v1364 = vrot.slane %v1362, 4
        %v1365 = vor.u32 %v1364, %v1360
        %v1366 = vrot.slane %v1365, 4
        %v1368 = vshll.u32 %v1260, 16
        %v1370 = vrot.slane %v1368, 5
        %v1371 = vsel %vm738, %v1366, %v1370
        %v1373 = vshrl.u32 %v1261, 16
        %v1375 = vrot.slane %v1373, 4
        %v1376 = vshll.u32 %v1261, 16
        %v1378 = vrot.slane %v1376, 5
        %v1379 = vor.u32 %v1375, %v1378
        %v1380 = vrot.slane %v1379, 4
        %v1382 = vshll.u32 %v1262, 16
        %v1384 = vrot.slane %v1382, 5
        %v1385 = vsel %vm738, %v1380, %v1384
        %v1386 = vshrl.u32 %v1262, 16
        %v1388 = vrot.slane %v1386, 4
        %v1389 = vor.u32 %v1388, %v1384
        %v1390 = vrot.slane %v1389, 4
        %v1392 = vshll.u32 %v1263, 16
        %v1394 = vrot.slane %v1392, 5
        %v1395 = vsel %vm738, %v1390, %v1394
        %v1397 = vshrl.u32 %v1264, 16
        %v1399 = vrot.slane %v1397, 4
        %v1400 = vshll.u32 %v1264, 16
        %v1402 = vrot.slane %v1400, 5
        %v1403 = vor.u32 %v1399, %v1402
        %v1404 = vrot.slane %v1403, 4
        %v1406 = vshll.u32 %v1265, 16
        %v1408 = vrot.slane %v1406, 5
        %v1409 = vsel %vm738, %v1404, %v1408
        %v1410 = vshrl.u32 %v1265, 16
        %v1412 = vrot.slane %v1410, 4
        %v1413 = vor.u32 %v1412, %v1408
        %v1414 = vrot.slane %v1413, 4
        %v1416 = vshll.u32 %v1266, 16
        %v1418 = vrot.slane %v1416, 5
        %v1419 = vsel %vm738, %v1414, %v1418
        %v1421 = vshrl.u32 %v1267, 16
        %v1423 = vrot.slane %v1421, 4
        %v1424 = vshll.u32 %v1267, 16
        %v1426 = vrot.slane %v1424, 5
        %v1427 = vor.u32 %v1423, %v1426
        %v1428 = vrot.slane %v1427, 4
        %v1430 = vshll.u32 %v1268, 16
        %v1432 = vrot.slane %v1430, 5
        %v1433 = vsel %vm738, %v1428, %v1432
        %v1434 = vshrl.u32 %v1268, 16
        %v1436 = vrot.slane %v1434, 4
        %v1437 = vor.u32 %v1436, %v1432
        %v1438 = vrot.slane %v1437, 4
        %v1440 = vshll.u32 %v1269, 16
        %v1442 = vrot.slane %v1440, 5
        %v1443 = vsel %vm738, %v1438, %v1442
        %v1445 = vshrl.u32 %v1270, 16
        %v1447 = vrot.slane %v1445, 4
        %v1448 = vshll.u32 %v1270, 16
        %v1450 = vrot.slane %v1448, 5
        %v1451 = vor.u32 %v1447, %v1450
        %v1452 = vrot.slane %v1451, 4
        %v1454 = vshll.u32 %v1271, 16
        %v1456 = vrot.slane %v1454, 5
        %v1457 = vsel %vm738, %v1452, %v1456
        %v1458 = vshrl.u32 %v1271, 16
        %v1460 = vrot.slane %v1458, 4
        %v1461 = vor.u32 %v1460, %v1456
        %v1462 = vrot.slane %v1461, 4
        %v1464 = vshll.u32 %v1272, 16
        %v1466 = vrot.slane %v1464, 5
        %v1467 = vsel %vm738, %v1462, %v1466
        %v1469 = vshrl.u32 %v1273, 16
        %v1471 = vrot.slane %v1469, 4
        %v1472 = vshll.u32 %v1273, 16
        %v1474 = vrot.slane %v1472, 5
        %v1475 = vor.u32 %v1471, %v1474
        %v1476 = vrot.slane %v1475, 4
        %v1478 = vshll.u32 %v1274, 16
        %v1480 = vrot.slane %v1478, 5
        %v1481 = vsel %vm738, %v1476, %v1480
        %v1482 = vshrl.u32 %v1274, 16
        %v1484 = vrot.slane %v1482, 4
        %v1485 = vor.u32 %v1484, %v1480
        %v1486 = vrot.slane %v1485, 4
        %v1488 = vshll.u32 %v1275, 16
        %v1490 = vrot.slane %v1488, 5
        %v1491 = vsel %vm738, %v1486, %v1490
        %v1493 = vshrl.u32 %v1276, 16
        %v1495 = vrot.slane %v1493, 4
        %v1496 = vshll.u32 %v1276, 16
        %v1498 = vrot.slane %v1496, 5
        %v1499 = vor.u32 %v1495, %v1498
        %v1500 = vrot.slane %v1499, 4
        %v1502 = vshll.u32 %v1277, 16
        %v1504 = vrot.slane %v1502, 5
        %v1505 = vsel %vm738, %v1500, %v1504
        %v1506 = vshrl.u32 %v1277, 16
        %v1508 = vrot.slane %v1506, 4
        %v1509 = vor.u32 %v1508, %v1504
        %v1510 = vrot.slane %v1509, 4
        %v1512 = vshll.u32 %v1278, 16
        %v1514 = vrot.slane %v1512, 5
        %v1515 = vsel %vm738, %v1510, %v1514
        %v1517 = vshrl.u32 %v1279, 16
        %v1519 = vrot.slane %v1517, 4
        %v1520 = vshll.u32 %v1279, 16
        %v1522 = vrot.slane %v1520, 5
        %v1523 = vor.u32 %v1519, %v1522
        %v1524 = vrot.slane %v1523, 4
        %v1526 = vshll.u32 %v1280, 16
        %v1528 = vrot.slane %v1526, 5
        %v1529 = vsel %vm738, %v1524, %v1528
        %v1530 = vshrl.u32 %v1280, 16
        %v1532 = vrot.slane %v1530, 4
        %v1533 = vor.u32 %v1532, %v1528
        %v1534 = vrot.slane %v1533, 4
        %v1536 = vshll.u32 %v1281, 16
        %v1538 = vrot.slane %v1536, 5
        %v1539 = vsel %vm738, %v1534, %v1538
        %v1541 = vshrl.u32 %v1282, 16
        %v1543 = vrot.slane %v1541, 4
        %v1544 = vshll.u32 %v1282, 16
        %v1546 = vrot.slane %v1544, 5
        %v1547 = vor.u32 %v1543, %v1546
        %v1548 = vrot.slane %v1547, 4
        %v1550 = vshll.u32 %v1283, 16
        %v1552 = vrot.slane %v1550, 5
        %v1553 = vsel %vm738, %v1548, %v1552
        %v1554 = vshrl.u32 %v1283, 16
        %v1556 = vrot.slane %v1554, 4
        %v1557 = vor.u32 %v1556, %v1552
        %v1558 = vrot.slane %v1557, 4
        %v1560 = vshll.u32 %v1284, 16
        %v1562 = vrot.slane %v1560, 5
        %v1563 = vsel %vm738, %v1558, %v1562
        %v1565 = vshrl.u32 %v1285, 16
        %v1567 = vrot.slane %v1565, 4
        %v1568 = vshll.u32 %v1285, 16
        %v1570 = vrot.slane %v1568, 5
        %v1571 = vor.u32 %v1567, %v1570
        %v1572 = vrot.slane %v1571, 4
        %v1574 = vshll.u32 %v1286, 16
        %v1576 = vrot.slane %v1574, 5
        %v1577 = vsel %vm738, %v1572, %v1576
        %v1578 = vshrl.u32 %v1286, 16
        %v1580 = vrot.slane %v1578, 4
        %v1581 = vor.u32 %v1580, %v1576
        %v1582 = vrot.slane %v1581, 4
        %v1584 = vshll.u32 %v1287, 16
        %v1586 = vrot.slane %v1584, 5
        %v1587 = vsel %vm738, %v1582, %v1586
        %v1589 = vshrl.u32 %v1288, 16
        %v1591 = vrot.slane %v1589, 4
        %v1592 = vshll.u32 %v1288, 16
        %v1594 = vrot.slane %v1592, 5
        %v1595 = vor.u32 %v1591, %v1594
        %v1596 = vrot.slane %v1595, 4
        %v1598 = vshll.u32 %v1289, 16
        %v1600 = vrot.slane %v1598, 5
        %v1601 = vsel %vm738, %v1596, %v1600
        %v1602 = vshrl.u32 %v1289, 16
        %v1604 = vrot.slane %v1602, 4
        %v1605 = vor.u32 %v1604, %v1600
        %v1606 = vrot.slane %v1605, 4
        %v1608 = vshll.u32 %v1290, 16
        %v1610 = vrot.slane %v1608, 5
        %v1611 = vsel %vm738, %v1606, %v1610
        %v1613 = vshrl.u32 %v1291, 16
        %v1615 = vrot.slane %v1613, 4
        %v1616 = vshll.u32 %v1291, 16
        %v1618 = vrot.slane %v1616, 5
        %v1619 = vor.u32 %v1615, %v1618
        %v1620 = vrot.slane %v1619, 4
        %v1622 = vshll.u32 %v1292, 16
        %v1624 = vrot.slane %v1622, 5
        %v1625 = vsel %vm738, %v1620, %v1624
        %v1626 = vshrl.u32 %v1292, 16
        %v1628 = vrot.slane %v1626, 4
        %v1629 = vor.u32 %v1628, %v1624
        %v1630 = vrot.slane %v1629, 4
        %v1632 = vshll.u32 %v1293, 16
        %v1634 = vrot.slane %v1632, 5
        %v1635 = vsel %vm738, %v1630, %v1634
        %v1637 = vshrl.u32 %v1294, 16
        %v1639 = vrot.slane %v1637, 4
        %v1640 = vshll.u32 %v1294, 16
        %v1642 = vrot.slane %v1640, 5
        %v1643 = vor.u32 %v1639, %v1642
        %v1644 = vrot.slane %v1643, 4
        %v1646 = vshll.u32 %v1295, 16
        %v1648 = vrot.slane %v1646, 5
        %v1649 = vsel %vm738, %v1644, %v1648
        %v1650 = vshrl.u32 %v1295, 16
        %v1652 = vrot.slane %v1650, 4
        %v1653 = vor.u32 %v1652, %v1648
        %v1654 = vrot.slane %v1653, 4
        %v1656 = vshll.u32 %v1296, 16
        %v1658 = vrot.slane %v1656, 5
        %v1659 = vsel %vm738, %v1654, %v1658
        %v1661 = vshrl.u32 %v1297, 16
        %v1663 = vrot.slane %v1661, 4
        %v1664 = vshll.u32 %v1297, 16
        %v1666 = vrot.slane %v1664, 5
        %v1667 = vor.u32 %v1663, %v1666
        %v1668 = vrot.slane %v1667, 4
        %v1670 = vshll.u32 %v1298, 16
        %v1672 = vrot.slane %v1670, 5
        %v1673 = vsel %vm738, %v1668, %v1672
        %v1674 = vshrl.u32 %v1298, 16
        %v1676 = vrot.slane %v1674, 4
        %v1677 = vor.u32 %v1676, %v1672
        %v1678 = vrot.slane %v1677, 4
        %v1680 = vshll.u32 %v1299, 16
        %v1682 = vrot.slane %v1680, 5
        %v1683 = vsel %vm738, %v1678, %v1682
        %1684 = vrot.lane.b32.xlu0 %v1313, 32
        %v1685 = vpop.permute.xlu0 %1684
        %1686 = vrot.lane.b32.xlu0 %v1323, 32
        %v1687 = vpop.permute.xlu0 %1686
        %1688 = vrot.lane.b32.xlu0 %v1337, 32
        %v1689 = vpop.permute.xlu0 %1688
        %1690 = vrot.lane.b32.xlu0 %v1347, 32
        %v1691 = vpop.permute.xlu0 %1690
        %1692 = vrot.lane.b32.xlu0 %v1361, 32
        %v1693 = vpop.permute.xlu0 %1692
        %1694 = vrot.lane.b32.xlu0 %v1371, 32
        %v1695 = vpop.permute.xlu0 %1694
        %1696 = vrot.lane.b32.xlu0 %v1385, 32
        %v1697 = vpop.permute.xlu0 %1696
        %1698 = vrot.lane.b32.xlu0 %v1395, 32
        %v1699 = vpop.permute.xlu0 %1698
        %1700 = vrot.lane.b32.xlu0 %v1409, 32
        %v1701 = vpop.permute.xlu0 %1700
        %1702 = vrot.lane.b32.xlu0 %v1419, 32
        %v1703 = vpop.permute.xlu0 %1702
        %1704 = vrot.lane.b32.xlu0 %v1433, 32
        %v1705 = vpop.permute.xlu0 %1704
        %1706 = vrot.lane.b32.xlu0 %v1443, 32
        %v1707 = vpop.permute.xlu0 %1706
        %1708 = vrot.lane.b32.xlu0 %v1457, 32
        %v1709 = vpop.permute.xlu0 %1708
        %1710 = vrot.lane.b32.xlu0 %v1467, 32
        %v1711 = vpop.permute.xlu0 %1710
        %1712 = vrot.lane.b32.xlu0 %v1481, 32
        %v1713 = vpop.permute.xlu0 %1712
        %1714 = vrot.lane.b32.xlu0 %v1491, 32
        %v1715 = vpop.permute.xlu0 %1714
        %1716 = vrot.lane.b32.xlu0 %v1505, 32
        %v1717 = vpop.permute.xlu0 %1716
        %1718 = vrot.lane.b32.xlu0 %v1515, 32
        %v1719 = vpop.permute.xlu0 %1718
        %1720 = vrot.lane.b32.xlu0 %v1529, 32
        %v1721 = vpop.permute.xlu0 %1720
        %1722 = vrot.lane.b32.xlu0 %v1539, 32
        %v1723 = vpop.permute.xlu0 %1722
        %1724 = vrot.lane.b32.xlu0 %v1553, 32
        %v1725 = vpop.permute.xlu0 %1724
        %1726 = vrot.lane.b32.xlu0 %v1563, 32
        %v1727 = vpop.permute.xlu0 %1726
        %1728 = vrot.lane.b32.xlu0 %v1577, 32
        %v1729 = vpop.permute.xlu0 %1728
        %1730 = vrot.lane.b32.xlu0 %v1587, 32
        %v1731 = vpop.permute.xlu0 %1730
        %1732 = vrot.lane.b32.xlu0 %v1601, 32
        %v1733 = vpop.permute.xlu0 %1732
        %1734 = vrot.lane.b32.xlu0 %v1611, 32
        %v1735 = vpop.permute.xlu0 %1734
        %1736 = vrot.lane.b32.xlu0 %v1625, 32
        %v1737 = vpop.permute.xlu0 %1736
        %1738 = vrot.lane.b32.xlu0 %v1635, 32
        %v1739 = vpop.permute.xlu0 %1738
        %1740 = vrot.lane.b32.xlu0 %v1649, 32
        %v1741 = vpop.permute.xlu0 %1740
        %1742 = vrot.lane.b32.xlu0 %v1659, 32
        %v1743 = vpop.permute.xlu0 %1742
        %1744 = vrot.lane.b32.xlu0 %v1673, 32
        %v1745 = vpop.permute.xlu0 %1744
        %1746 = vrot.lane.b32.xlu0 %v1683, 32
        %v1747 = vpop.permute.xlu0 %1746
        %vm1780 = vcmask 322816
        %1781 = vst.msk [vmem:[#allocation2] sm:$0xf] %vm1780, %v1685
        %1782 = vst.msk [vmem:[#allocation2 + $0x4] sm:$0xf] %vm1780, %v1687
        %1783 = vst.msk [vmem:[#allocation2 + $0x8] sm:$0xf] %vm1780, %v1689
        %1784 = vst.msk [vmem:[#allocation2 + $0xc] sm:$0xf] %vm1780, %v1691
        %1785 = vst.msk [vmem:[#allocation2 + $0x10] sm:$0xf] %vm1780, %v1693
        %1786 = vst.msk [vmem:[#allocation2 + $0x14] sm:$0xf] %vm1780, %v1695
        %1787 = vst.msk [vmem:[#allocation2 + $0x18] sm:$0xf] %vm1780, %v1697
        %1788 = vst.msk [vmem:[#allocation2 + $0x1c] sm:$0xf] %vm1780, %v1699
        %1789 = vst.msk [vmem:[#allocation2 + $0x20] sm:$0xf] %vm1780, %v1701
        %1790 = vst.msk [vmem:[#allocation2 + $0x24] sm:$0xf] %vm1780, %v1703
        %1791 = vst.msk [vmem:[#allocation2 + $0x28] sm:$0xf] %vm1780, %v1705
        %1792 = vst.msk [vmem:[#allocation2 + $0x2c] sm:$0xf] %vm1780, %v1707
        %1793 = vst.msk [vmem:[#allocation2 + $0x30] sm:$0xf] %vm1780, %v1709
        %1794 = vst.msk [vmem:[#allocation2 + $0x34] sm:$0xf] %vm1780, %v1711
        %1795 = vst.msk [vmem:[#allocation2 + $0x38] sm:$0xf] %vm1780, %v1713
        %1796 = vst.msk [vmem:[#allocation2 + $0x3c] sm:$0xf] %vm1780, %v1715
        %1797 = vst.msk [vmem:[#allocation2 + $0x40] sm:$0xf] %vm1780, %v1717
        %1798 = vst.msk [vmem:[#allocation2 + $0x44] sm:$0xf] %vm1780, %v1719
        %1799 = vst.msk [vmem:[#allocation2 + $0x48] sm:$0xf] %vm1780, %v1721
        %1800 = vst.msk [vmem:[#allocation2 + $0x4c] sm:$0xf] %vm1780, %v1723
        %1801 = vst.msk [vmem:[#allocation2 + $0x50] sm:$0xf] %vm1780, %v1725
        %1802 = vst.msk [vmem:[#allocation2 + $0x54] sm:$0xf] %vm1780, %v1727
        %1803 = vst.msk [vmem:[#allocation2 + $0x58] sm:$0xf] %vm1780, %v1729
        %1804 = vst.msk [vmem:[#allocation2 + $0x5c] sm:$0xf] %vm1780, %v1731
        %1805 = vst.msk [vmem:[#allocation2 + $0x60] sm:$0xf] %vm1780, %v1733
        %1806 = vst.msk [vmem:[#allocation2 + $0x64] sm:$0xf] %vm1780, %v1735
        %1807 = vst.msk [vmem:[#allocation2 + $0x68] sm:$0xf] %vm1780, %v1737
        %1808 = vst.msk [vmem:[#allocation2 + $0x6c] sm:$0xf] %vm1780, %v1739
        %1809 = vst.msk [vmem:[#allocation2 + $0x70] sm:$0xf] %vm1780, %v1741
        %1810 = vst.msk [vmem:[#allocation2 + $0x74] sm:$0xf] %vm1780, %v1743
        %1811 = vst.msk [vmem:[#allocation2 + $0x78] sm:$0xf] %vm1780, %v1745
        %1812 = vst.msk [vmem:[#allocation2 + $0x7c] sm:$0xf] %vm1780, %v1747
        %v1813 = vld [vmem:[%s494] sm:$0xf]
        %v1814 = vld [vmem:[%s494 + $0x4] sm:$0xf]
        %v1815 = vld [vmem:[%s494 + $0x8] sm:$0x1]
        %v1816 = vld [vmem:[%s494 + $0xc] sm:$0xf]
        %v1817 = vld [vmem:[%s494 + $0x10] sm:$0xf]
        %v1818 = vld [vmem:[%s494 + $0x14] sm:$0x1]
        %v1819 = vld [vmem:[%s494 + $0x18] sm:$0xf]
        %v1820 = vld [vmem:[%s494 + $0x1c] sm:$0xf]
        %v1821 = vld [vmem:[%s494 + $0x20] sm:$0x1]
        %v1822 = vld [vmem:[%s494 + $0x24] sm:$0xf]
        %v1823 = vld [vmem:[%s494 + $0x28] sm:$0xf]
        %v1824 = vld [vmem:[%s494 + $0x2c] sm:$0x1]
        %v1825 = vld [vmem:[%s494 + $0x30] sm:$0xf]
        %v1826 = vld [vmem:[%s494 + $0x34] sm:$0xf]
        %v1827 = vld [vmem:[%s494 + $0x38] sm:$0x1]
        %v1828 = vld [vmem:[%s494 + $0x3c] sm:$0xf]
        %v1829 = vld [vmem:[%s494 + $0x40] sm:$0xf]
        %v1830 = vld [vmem:[%s494 + $0x44] sm:$0x1]
        %v1831 = vld [vmem:[%s494 + $0x48] sm:$0xf]
        %v1832 = vld [vmem:[%s494 + $0x4c] sm:$0xf]
        %v1833 = vld [vmem:[%s494 + $0x50] sm:$0x1]
        %v1834 = vld [vmem:[%s494 + $0x54] sm:$0xf]
        %v1835 = vld [vmem:[%s494 + $0x58] sm:$0xf]
        %v1836 = vld [vmem:[%s494 + $0x5c] sm:$0x1]
        %v1837 = vld [vmem:[%s494 + $0x60] sm:$0xf]
        %v1838 = vld [vmem:[%s494 + $0x64] sm:$0xf]
        %v1839 = vld [vmem:[%s494 + $0x68] sm:$0x1]
        %v1840 = vld [vmem:[%s494 + $0x6c] sm:$0xf]
        %v1841 = vld [vmem:[%s494 + $0x70] sm:$0xf]
        %v1842 = vld [vmem:[%s494 + $0x74] sm:$0x1]
        %v1843 = vld [vmem:[%s494 + $0x78] sm:$0xf]
        %v1844 = vld [vmem:[%s494 + $0x7c] sm:$0xf]
        %v1845 = vld [vmem:[%s494 + $0x80] sm:$0x1]
        %v1846 = vld [vmem:[%s494 + $0x84] sm:$0xf]
        %v1847 = vld [vmem:[%s494 + $0x88] sm:$0xf]
        %v1848 = vld [vmem:[%s494 + $0x8c] sm:$0x1]
        %v1849 = vld [vmem:[%s494 + $0x90] sm:$0xf]
        %v1850 = vld [vmem:[%s494 + $0x94] sm:$0xf]
        %v1851 = vld [vmem:[%s494 + $0x98] sm:$0x1]
        %v1852 = vld [vmem:[%s494 + $0x9c] sm:$0xf]
        %v1853 = vld [vmem:[%s494 + $0xa0] sm:$0xf]
        %v1854 = vld [vmem:[%s494 + $0xa4] sm:$0x1]
        %v1855 = vld [vmem:[%s494 + $0xa8] sm:$0xf]
        %v1856 = vld [vmem:[%s494 + $0xac] sm:$0xf]
        %v1857 = vld [vmem:[%s494 + $0xb0] sm:$0x1]
        %v1858 = vld [vmem:[%s494 + $0xb4] sm:$0xf]
        %v1859 = vld [vmem:[%s494 + $0xb8] sm:$0xf]
        %v1860 = vld [vmem:[%s494 + $0xbc] sm:$0x1]
        %v1862 = vshrl.u32 %v1813, 16
        %v1864 = vrot.slane %v1862, 4
        %v1865 = vshll.u32 %v1813, 16
        %v1867 = vrot.slane %v1865, 5
        %v1868 = vor.u32 %v1864, %v1867
        %v1869 = vrot.slane %v1868, 4
        %v1871 = vshll.u32 %v1814, 16
        %v1873 = vrot.slane %v1871, 5
        %v1874 = vsel %vm738, %v1869, %v1873
        %v1875 = vshrl.u32 %v1814, 16
        %v1877 = vrot.slane %v1875, 4
        %v1878 = vor.u32 %v1877, %v1873
        %v1879 = vrot.slane %v1878, 4
        %v1881 = vshll.u32 %v1815, 16
        %v1883 = vrot.slane %v1881, 5
        %v1884 = vsel %vm738, %v1879, %v1883
        %v1886 = vshrl.u32 %v1816, 16
        %v1888 = vrot.slane %v1886, 4
        %v1889 = vshll.u32 %v1816, 16
        %v1891 = vrot.slane %v1889, 5
        %v1892 = vor.u32 %v1888, %v1891
        %v1893 = vrot.slane %v1892, 4
        %v1895 = vshll.u32 %v1817, 16
        %v1897 = vrot.slane %v1895, 5
        %v1898 = vsel %vm738, %v1893, %v1897
        %v1899 = vshrl.u32 %v1817, 16
        %v1901 = vrot.slane %v1899, 4
        %v1902 = vor.u32 %v1901, %v1897
        %v1903 = vrot.slane %v1902, 4
        %v1905 = vshll.u32 %v1818, 16
        %v1907 = vrot.slane %v1905, 5
        %v1908 = vsel %vm738, %v1903, %v1907
        %v1910 = vshrl.u32 %v1819, 16
        %v1912 = vrot.slane %v1910, 4
        %v1913 = vshll.u32 %v1819, 16
        %v1915 = vrot.slane %v1913, 5
        %v1916 = vor.u32 %v1912, %v1915
        %v1917 = vrot.slane %v1916, 4
        %v1919 = vshll.u32 %v1820, 16
        %v1921 = vrot.slane %v1919, 5
        %v1922 = vsel %vm738, %v1917, %v1921
        %v1923 = vshrl.u32 %v1820, 16
        %v1925 = vrot.slane %v1923, 4
        %v1926 = vor.u32 %v1925, %v1921
        %v1927 = vrot.slane %v1926, 4
        %v1929 = vshll.u32 %v1821, 16
        %v1931 = vrot.slane %v1929, 5
        %v1932 = vsel %vm738, %v1927, %v1931
        %v1934 = vshrl.u32 %v1822, 16
        %v1936 = vrot.slane %v1934, 4
        %v1937 = vshll.u32 %v1822, 16
        %v1939 = vrot.slane %v1937, 5
        %v1940 = vor.u32 %v1936, %v1939
        %v1941 = vrot.slane %v1940, 4
        %v1943 = vshll.u32 %v1823, 16
        %v1945 = vrot.slane %v1943, 5
        %v1946 = vsel %vm738, %v1941, %v1945
        %v1947 = vshrl.u32 %v1823, 16
        %v1949 = vrot.slane %v1947, 4
        %v1950 = vor.u32 %v1949, %v1945
        %v1951 = vrot.slane %v1950, 4
        %v1953 = vshll.u32 %v1824, 16
        %v1955 = vrot.slane %v1953, 5
        %v1956 = vsel %vm738, %v1951, %v1955
        %v1958 = vshrl.u32 %v1825, 16
        %v1960 = vrot.slane %v1958, 4
        %v1961 = vshll.u32 %v1825, 16
        %v1963 = vrot.slane %v1961, 5
        %v1964 = vor.u32 %v1960, %v1963
        %v1965 = vrot.slane %v1964, 4
        %v1967 = vshll.u32 %v1826, 16
        %v1969 = vrot.slane %v1967, 5
        %v1970 = vsel %vm738, %v1965, %v1969
        %v1971 = vshrl.u32 %v1826, 16
        %v1973 = vrot.slane %v1971, 4
        %v1974 = vor.u32 %v1973, %v1969
        %v1975 = vrot.slane %v1974, 4
        %v1977 = vshll.u32 %v1827, 16
        %v1979 = vrot.slane %v1977, 5
        %v1980 = vsel %vm738, %v1975, %v1979
        %v1982 = vshrl.u32 %v1828, 16
        %v1984 = vrot.slane %v1982, 4
        %v1985 = vshll.u32 %v1828, 16
        %v1987 = vrot.slane %v1985, 5
        %v1988 = vor.u32 %v1984, %v1987
        %v1989 = vrot.slane %v1988, 4
        %v1991 = vshll.u32 %v1829, 16
        %v1993 = vrot.slane %v1991, 5
        %v1994 = vsel %vm738, %v1989, %v1993
        %v1995 = vshrl.u32 %v1829, 16
        %v1997 = vrot.slane %v1995, 4
        %v1998 = vor.u32 %v1997, %v1993
        %v1999 = vrot.slane %v1998, 4
        %v2001 = vshll.u32 %v1830, 16
        %v2003 = vrot.slane %v2001, 5
        %v2004 = vsel %vm738, %v1999, %v2003
        %v2006 = vshrl.u32 %v1831, 16
        %v2008 = vrot.slane %v2006, 4
        %v2009 = vshll.u32 %v1831, 16
        %v2011 = vrot.slane %v2009, 5
        %v2012 = vor.u32 %v2008, %v2011
        %v2013 = vrot.slane %v2012, 4
        %v2015 = vshll.u32 %v1832, 16
        %v2017 = vrot.slane %v2015, 5
        %v2018 = vsel %vm738, %v2013, %v2017
        %v2019 = vshrl.u32 %v1832, 16
        %v2021 = vrot.slane %v2019, 4
        %v2022 = vor.u32 %v2021, %v2017
        %v2023 = vrot.slane %v2022, 4
        %v2025 = vshll.u32 %v1833, 16
        %v2027 = vrot.slane %v2025, 5
        %v2028 = vsel %vm738, %v2023, %v2027
        %v2030 = vshrl.u32 %v1834, 16
        %v2032 = vrot.slane %v2030, 4
        %v2033 = vshll.u32 %v1834, 16
        %v2035 = vrot.slane %v2033, 5
        %v2036 = vor.u32 %v2032, %v2035
        %v2037 = vrot.slane %v2036, 4
        %v2039 = vshll.u32 %v1835, 16
        %v2041 = vrot.slane %v2039, 5
        %v2042 = vsel %vm738, %v2037, %v2041
        %v2043 = vshrl.u32 %v1835, 16
        %v2045 = vrot.slane %v2043, 4
        %v2046 = vor.u32 %v2045, %v2041
        %v2047 = vrot.slane %v2046, 4
        %v2049 = vshll.u32 %v1836, 16
        %v2051 = vrot.slane %v2049, 5
        %v2052 = vsel %vm738, %v2047, %v2051
        %v2054 = vshrl.u32 %v1837, 16
        %v2056 = vrot.slane %v2054, 4
        %v2057 = vshll.u32 %v1837, 16
        %v2059 = vrot.slane %v2057, 5
        %v2060 = vor.u32 %v2056, %v2059
        %v2061 = vrot.slane %v2060, 4
        %v2063 = vshll.u32 %v1838, 16
        %v2065 = vrot.slane %v2063, 5
        %v2066 = vsel %vm738, %v2061, %v2065
        %v2067 = vshrl.u32 %v1838, 16
        %v2069 = vrot.slane %v2067, 4
        %v2070 = vor.u32 %v2069, %v2065
        %v2071 = vrot.slane %v2070, 4
        %v2073 = vshll.u32 %v1839, 16
        %v2075 = vrot.slane %v2073, 5
        %v2076 = vsel %vm738, %v2071, %v2075
        %v2078 = vshrl.u32 %v1840, 16
        %v2080 = vrot.slane %v2078, 4
        %v2081 = vshll.u32 %v1840, 16
        %v2083 = vrot.slane %v2081, 5
        %v2084 = vor.u32 %v2080, %v2083
        %v2085 = vrot.slane %v2084, 4
        %v2087 = vshll.u32 %v1841, 16
        %v2089 = vrot.slane %v2087, 5
        %v2090 = vsel %vm738, %v2085, %v2089
        %v2091 = vshrl.u32 %v1841, 16
        %v2093 = vrot.slane %v2091, 4
        %v2094 = vor.u32 %v2093, %v2089
        %v2095 = vrot.slane %v2094, 4
        %v2097 = vshll.u32 %v1842, 16
        %v2099 = vrot.slane %v2097, 5
        %v2100 = vsel %vm738, %v2095, %v2099
        %v2102 = vshrl.u32 %v1843, 16
        %v2104 = vrot.slane %v2102, 4
        %v2105 = vshll.u32 %v1843, 16
        %v2107 = vrot.slane %v2105, 5
        %v2108 = vor.u32 %v2104, %v2107
        %v2109 = vrot.slane %v2108, 4
        %v2111 = vshll.u32 %v1844, 16
        %v2113 = vrot.slane %v2111, 5
        %v2114 = vsel %vm738, %v2109, %v2113
        %v2115 = vshrl.u32 %v1844, 16
        %v2117 = vrot.slane %v2115, 4
        %v2118 = vor.u32 %v2117, %v2113
        %v2119 = vrot.slane %v2118, 4
        %v2121 = vshll.u32 %v1845, 16
        %v2123 = vrot.slane %v2121, 5
        %v2124 = vsel %vm738, %v2119, %v2123
        %v2126 = vshrl.u32 %v1846, 16
        %v2128 = vrot.slane %v2126, 4
        %v2129 = vshll.u32 %v1846, 16
        %v2131 = vrot.slane %v2129, 5
        %v2132 = vor.u32 %v2128, %v2131
        %v2133 = vrot.slane %v2132, 4
        %v2135 = vshll.u32 %v1847, 16
        %v2137 = vrot.slane %v2135, 5
        %v2138 = vsel %vm738, %v2133, %v2137
        %v2139 = vshrl.u32 %v1847, 16
        %v2141 = vrot.slane %v2139, 4
        %v2142 = vor.u32 %v2141, %v2137
        %v2143 = vrot.slane %v2142, 4
        %v2145 = vshll.u32 %v1848, 16
        %v2147 = vrot.slane %v2145, 5
        %v2148 = vsel %vm738, %v2143, %v2147
        %v2150 = vshrl.u32 %v1849, 16
        %v2152 = vrot.slane %v2150, 4
        %v2153 = vshll.u32 %v1849, 16
        %v2155 = vrot.slane %v2153, 5
        %v2156 = vor.u32 %v2152, %v2155
        %v2157 = vrot.slane %v2156, 4
        %v2159 = vshll.u32 %v1850, 16
        %v2161 = vrot.slane %v2159, 5
        %v2162 = vsel %vm738, %v2157, %v2161
        %v2163 = vshrl.u32 %v1850, 16
        %v2165 = vrot.slane %v2163, 4
        %v2166 = vor.u32 %v2165, %v2161
        %v2167 = vrot.slane %v2166, 4
        %v2169 = vshll.u32 %v1851, 16
        %v2171 = vrot.slane %v2169, 5
        %v2172 = vsel %vm738, %v2167, %v2171
        %v2174 = vshrl.u32 %v1852, 16
        %v2176 = vrot.slane %v2174, 4
        %v2177 = vshll.u32 %v1852, 16
        %v2179 = vrot.slane %v2177, 5
        %v2180 = vor.u32 %v2176, %v2179
        %v2181 = vrot.slane %v2180, 4
        %v2183 = vshll.u32 %v1853, 16
        %v2185 = vrot.slane %v2183, 5
        %v2186 = vsel %vm738, %v2181, %v2185
        %v2187 = vshrl.u32 %v1853, 16
        %v2189 = vrot.slane %v2187, 4
        %v2190 = vor.u32 %v2189, %v2185
        %v2191 = vrot.slane %v2190, 4
        %v2193 = vshll.u32 %v1854, 16
        %v2195 = vrot.slane %v2193, 5
        %v2196 = vsel %vm738, %v2191, %v2195
        %v2198 = vshrl.u32 %v1855, 16
        %v2200 = vrot.slane %v2198, 4
        %v2201 = vshll.u32 %v1855, 16
        %v2203 = vrot.slane %v2201, 5
        %v2204 = vor.u32 %v2200, %v2203
        %v2205 = vrot.slane %v2204, 4
        %v2207 = vshll.u32 %v1856, 16
        %v2209 = vrot.slane %v2207, 5
        %v2210 = vsel %vm738, %v2205, %v2209
        %v2211 = vshrl.u32 %v1856, 16
        %v2213 = vrot.slane %v2211, 4
        %v2214 = vor.u32 %v2213, %v2209
        %v2215 = vrot.slane %v2214, 4
        %v2217 = vshll.u32 %v1857, 16
        %v2219 = vrot.slane %v2217, 5
        %v2220 = vsel %vm738, %v2215, %v2219
        %v2222 = vshrl.u32 %v1858, 16
        %v2224 = vrot.slane %v2222, 4
        %v2225 = vshll.u32 %v1858, 16
        %v2227 = vrot.slane %v2225, 5
        %v2228 = vor.u32 %v2224, %v2227
        %v2229 = vrot.slane %v2228, 4
        %v2231 = vshll.u32 %v1859, 16
        %v2233 = vrot.slane %v2231, 5
        %v2234 = vsel %vm738, %v2229, %v2233
        %v2235 = vshrl.u32 %v1859, 16
        %v2237 = vrot.slane %v2235, 4
        %v2238 = vor.u32 %v2237, %v2233
        %v2239 = vrot.slane %v2238, 4
        %v2241 = vshll.u32 %v1860, 16
        %v2243 = vrot.slane %v2241, 5
        %v2244 = vsel %vm738, %v2239, %v2243
        %2245 = vrot.lane.b32.xlu0 %v1874, 40
        %v2246 = vpop.permute.xlu0 %2245
        %2247 = vrot.lane.b32.xlu0 %v1884, 40
        %v2248 = vpop.permute.xlu0 %2247
        %2249 = vrot.lane.b32.xlu0 %v1898, 40
        %v2250 = vpop.permute.xlu0 %2249
        %2251 = vrot.lane.b32.xlu0 %v1908, 40
        %v2252 = vpop.permute.xlu0 %2251
        %2253 = vrot.lane.b32.xlu0 %v1922, 40
        %v2254 = vpop.permute.xlu0 %2253
        %2255 = vrot.lane.b32.xlu0 %v1932, 40
        %v2256 = vpop.permute.xlu0 %2255
        %2257 = vrot.lane.b32.xlu0 %v1946, 40
        %v2258 = vpop.permute.xlu0 %2257
        %2259 = vrot.lane.b32.xlu0 %v1956, 40
        %v2260 = vpop.permute.xlu0 %2259
        %2261 = vrot.lane.b32.xlu0 %v1970, 40
        %v2262 = vpop.permute.xlu0 %2261
        %2263 = vrot.lane.b32.xlu0 %v1980, 40
        %v2264 = vpop.permute.xlu0 %2263
        %2265 = vrot.lane.b32.xlu0 %v1994, 40
        %v2266 = vpop.permute.xlu0 %2265
        %2267 = vrot.lane.b32.xlu0 %v2004, 40
        %v2268 = vpop.permute.xlu0 %2267
        %2269 = vrot.lane.b32.xlu0 %v2018, 40
        %v2270 = vpop.permute.xlu0 %2269
        %2271 = vrot.lane.b32.xlu0 %v2028, 40
        %v2272 = vpop.permute.xlu0 %2271
        %2273 = vrot.lane.b32.xlu0 %v2042, 40
        %v2274 = vpop.permute.xlu0 %2273
        %2275 = vrot.lane.b32.xlu0 %v2052, 40
        %v2276 = vpop.permute.xlu0 %2275
        %2277 = vrot.lane.b32.xlu0 %v2066, 40
        %v2278 = vpop.permute.xlu0 %2277
        %2279 = vrot.lane.b32.xlu0 %v2076, 40
        %v2280 = vpop.permute.xlu0 %2279
        %2281 = vrot.lane.b32.xlu0 %v2090, 40
        %v2282 = vpop.permute.xlu0 %2281
        %2283 = vrot.lane.b32.xlu0 %v2100, 40
        %v2284 = vpop.permute.xlu0 %2283
        %2285 = vrot.lane.b32.xlu0 %v2114, 40
        %v2286 = vpop.permute.xlu0 %2285
        %2287 = vrot.lane.b32.xlu0 %v2124, 40
        %v2288 = vpop.permute.xlu0 %2287
        %2289 = vrot.lane.b32.xlu0 %v2138, 40
        %v2290 = vpop.permute.xlu0 %2289
        %2291 = vrot.lane.b32.xlu0 %v2148, 40
        %v2292 = vpop.permute.xlu0 %2291
        %2293 = vrot.lane.b32.xlu0 %v2162, 40
        %v2294 = vpop.permute.xlu0 %2293
        %2295 = vrot.lane.b32.xlu0 %v2172, 40
        %v2296 = vpop.permute.xlu0 %2295
        %2297 = vrot.lane.b32.xlu0 %v2186, 40
        %v2298 = vpop.permute.xlu0 %2297
        %2299 = vrot.lane.b32.xlu0 %v2196, 40
        %v2300 = vpop.permute.xlu0 %2299
        %2301 = vrot.lane.b32.xlu0 %v2210, 40
        %v2302 = vpop.permute.xlu0 %2301
        %2303 = vrot.lane.b32.xlu0 %v2220, 40
        %v2304 = vpop.permute.xlu0 %2303
        %2305 = vrot.lane.b32.xlu0 %v2234, 40
        %v2306 = vpop.permute.xlu0 %2305
        %2307 = vrot.lane.b32.xlu0 %v2244, 40
        %v2308 = vpop.permute.xlu0 %2307
        %vm2341 = vcmask 388416
        %2342 = vst.msk [vmem:[#allocation2] sm:$0xf] %vm2341, %v2246
        %2343 = vst.msk [vmem:[#allocation2 + $0x4] sm:$0xf] %vm2341, %v2248
        %2344 = vst.msk [vmem:[#allocation2 + $0x8] sm:$0xf] %vm2341, %v2250
        %2345 = vst.msk [vmem:[#allocation2 + $0xc] sm:$0xf] %vm2341, %v2252
        %2346 = vst.msk [vmem:[#allocation2 + $0x10] sm:$0xf] %vm2341, %v2254
        %2347 = vst.msk [vmem:[#allocation2 + $0x14] sm:$0xf] %vm2341, %v2256
        %2348 = vst.msk [vmem:[#allocation2 + $0x18] sm:$0xf] %vm2341, %v2258
        %2349 = vst.msk [vmem:[#allocation2 + $0x1c] sm:$0xf] %vm2341, %v2260
        %2350 = vst.msk [vmem:[#allocation2 + $0x20] sm:$0xf] %vm2341, %v2262
        %2351 = vst.msk [vmem:[#allocation2 + $0x24] sm:$0xf] %vm2341, %v2264
        %2352 = vst.msk [vmem:[#allocation2 + $0x28] sm:$0xf] %vm2341, %v2266
        %2353 = vst.msk [vmem:[#allocation2 + $0x2c] sm:$0xf] %vm2341, %v2268
        %2354 = vst.msk [vmem:[#allocation2 + $0x30] sm:$0xf] %vm2341, %v2270
        %2355 = vst.msk [vmem:[#allocation2 + $0x34] sm:$0xf] %vm2341, %v2272
        %2356 = vst.msk [vmem:[#allocation2 + $0x38] sm:$0xf] %vm2341, %v2274
        %2357 = vst.msk [vmem:[#allocation2 + $0x3c] sm:$0xf] %vm2341, %v2276
        %2358 = vst.msk [vmem:[#allocation2 + $0x40] sm:$0xf] %vm2341, %v2278
        %2359 = vst.msk [vmem:[#allocation2 + $0x44] sm:$0xf] %vm2341, %v2280
        %2360 = vst.msk [vmem:[#allocation2 + $0x48] sm:$0xf] %vm2341, %v2282
        %2361 = vst.msk [vmem:[#allocation2 + $0x4c] sm:$0xf] %vm2341, %v2284
        %2362 = vst.msk [vmem:[#allocation2 + $0x50] sm:$0xf] %vm2341, %v2286
        %2363 = vst.msk [vmem:[#allocation2 + $0x54] sm:$0xf] %vm2341, %v2288
        %2364 = vst.msk [vmem:[#allocation2 + $0x58] sm:$0xf] %vm2341, %v2290
        %2365 = vst.msk [vmem:[#allocation2 + $0x5c] sm:$0xf] %vm2341, %v2292
        %2366 = vst.msk [vmem:[#allocation2 + $0x60] sm:$0xf] %vm2341, %v2294
        %2367 = vst.msk [vmem:[#allocation2 + $0x64] sm:$0xf] %vm2341, %v2296
        %2368 = vst.msk [vmem:[#allocation2 + $0x68] sm:$0xf] %vm2341, %v2298
        %2369 = vst.msk [vmem:[#allocation2 + $0x6c] sm:$0xf] %vm2341, %v2300
        %2370 = vst.msk [vmem:[#allocation2 + $0x70] sm:$0xf] %vm2341, %v2302
        %2371 = vst.msk [vmem:[#allocation2 + $0x74] sm:$0xf] %vm2341, %v2304
        %2372 = vst.msk [vmem:[#allocation2 + $0x78] sm:$0xf] %vm2341, %v2306
        %2373 = vst.msk [vmem:[#allocation2 + $0x7c] sm:$0xf] %vm2341, %v2308
        %v2374 = vld [vmem:[%s228] sm:$0xe]
        %v2375 = vld [vmem:[%s228 + $0x4] sm:$0xf]
        %v2376 = vld [vmem:[%s228 + $0x8] sm:$0x1]
        %v2377 = vld [vmem:[%s228 + $0xc] sm:$0xe]
        %v2378 = vld [vmem:[%s228 + $0x10] sm:$0xf]
        %v2379 = vld [vmem:[%s228 + $0x14] sm:$0x1]
        %v2380 = vld [vmem:[%s228 + $0x18] sm:$0xe]
        %v2381 = vld [vmem:[%s228 + $0x1c] sm:$0xf]
        %v2382 = vld [vmem:[%s228 + $0x20] sm:$0x1]
        %v2383 = vld [vmem:[%s228 + $0x24] sm:$0xe]
        %v2384 = vld [vmem:[%s228 + $0x28] sm:$0xf]
        %v2385 = vld [vmem:[%s228 + $0x2c] sm:$0x1]
        %v2386 = vld [vmem:[%s228 + $0x30] sm:$0xe]
        %v2387 = vld [vmem:[%s228 + $0x34] sm:$0xf]
        %v2388 = vld [vmem:[%s228 + $0x38] sm:$0x1]
        %v2389 = vld [vmem:[%s228 + $0x3c] sm:$0xe]
        %v2390 = vld [vmem:[%s228 + $0x40] sm:$0xf]
        %v2391 = vld [vmem:[%s228 + $0x44] sm:$0x1]
        %v2392 = vld [vmem:[%s228 + $0x48] sm:$0xe]
        %v2393 = vld [vmem:[%s228 + $0x4c] sm:$0xf]
        %v2394 = vld [vmem:[%s228 + $0x50] sm:$0x1]
        %v2395 = vld [vmem:[%s228 + $0x54] sm:$0xe]
        %v2396 = vld [vmem:[%s228 + $0x58] sm:$0xf]
        %v2397 = vld [vmem:[%s228 + $0x5c] sm:$0x1]
        %v2398 = vld [vmem:[%s228 + $0x60] sm:$0xe]
        %v2399 = vld [vmem:[%s228 + $0x64] sm:$0xf]
        %v2400 = vld [vmem:[%s228 + $0x68] sm:$0x1]
        %v2401 = vld [vmem:[%s228 + $0x6c] sm:$0xe]
        %v2402 = vld [vmem:[%s228 + $0x70] sm:$0xf]
        %v2403 = vld [vmem:[%s228 + $0x74] sm:$0x1]
        %v2404 = vld [vmem:[%s228 + $0x78] sm:$0xe]
        %v2405 = vld [vmem:[%s228 + $0x7c] sm:$0xf]
        %v2406 = vld [vmem:[%s228 + $0x80] sm:$0x1]
        %v2407 = vld [vmem:[%s228 + $0x84] sm:$0xe]
        %v2408 = vld [vmem:[%s228 + $0x88] sm:$0xf]
        %v2409 = vld [vmem:[%s228 + $0x8c] sm:$0x1]
        %v2410 = vld [vmem:[%s228 + $0x90] sm:$0xe]
        %v2411 = vld [vmem:[%s228 + $0x94] sm:$0xf]
        %v2412 = vld [vmem:[%s228 + $0x98] sm:$0x1]
        %v2413 = vld [vmem:[%s228 + $0x9c] sm:$0xe]
        %v2414 = vld [vmem:[%s228 + $0xa0] sm:$0xf]
        %v2415 = vld [vmem:[%s228 + $0xa4] sm:$0x1]
        %v2416 = vld [vmem:[%s228 + $0xa8] sm:$0xe]
        %v2417 = vld [vmem:[%s228 + $0xac] sm:$0xf]
        %v2418 = vld [vmem:[%s228 + $0xb0] sm:$0x1]
        %v2419 = vld [vmem:[%s228 + $0xb4] sm:$0xe]
        %v2420 = vld [vmem:[%s228 + $0xb8] sm:$0xf]
        %v2421 = vld [vmem:[%s228 + $0xbc] sm:$0x1]
        %vm2470 = vcmask 1042432
        %vm2471 = vcmask 1046532
        %vm2472 = vmor %vm2470, %vm2471
        %v2473 = vrot.slane %v2374, 5
        %v2474 = vrot.slane %v2473, 4
        %v2475 = vrot.slane %v2375, 5
        %v2476 = vsel %vm2472, %v2474, %v2475
        %v2477 = vrot.slane %v2475, 4
        %v2478 = vrot.slane %v2376, 5
        %v2479 = vsel %vm2472, %v2477, %v2478
        %v2480 = vrot.slane %v2377, 5
        %v2481 = vrot.slane %v2480, 4
        %v2482 = vrot.slane %v2378, 5
        %v2483 = vsel %vm2472, %v2481, %v2482
        %v2484 = vrot.slane %v2482, 4
        %v2485 = vrot.slane %v2379, 5
        %v2486 = vsel %vm2472, %v2484, %v2485
        %v2487 = vrot.slane %v2380, 5
        %v2488 = vrot.slane %v2487, 4
        %v2489 = vrot.slane %v2381, 5
        %v2490 = vsel %vm2472, %v2488, %v2489
        %v2491 = vrot.slane %v2489, 4
        %v2492 = vrot.slane %v2382, 5
        %v2493 = vsel %vm2472, %v2491, %v2492
        %v2494 = vrot.slane %v2383, 5
        %v2495 = vrot.slane %v2494, 4
        %v2496 = vrot.slane %v2384, 5
        %v2497 = vsel %vm2472, %v2495, %v2496
        %v2498 = vrot.slane %v2496, 4
        %v2499 = vrot.slane %v2385, 5
        %v2500 = vsel %vm2472, %v2498, %v2499
        %v2501 = vrot.slane %v2386, 5
        %v2502 = vrot.slane %v2501, 4
        %v2503 = vrot.slane %v2387, 5
        %v2504 = vsel %vm2472, %v2502, %v2503
        %v2505 = vrot.slane %v2503, 4
        %v2506 = vrot.slane %v2388, 5
        %v2507 = vsel %vm2472, %v2505, %v2506
        %v2508 = vrot.slane %v2389, 5
        %v2509 = vrot.slane %v2508, 4
        %v2510 = vrot.slane %v2390, 5
        %v2511 = vsel %vm2472, %v2509, %v2510
        %v2512 = vrot.slane %v2510, 4
        %v2513 = vrot.slane %v2391, 5
        %v2514 = vsel %vm2472, %v2512, %v2513
        %v2515 = vrot.slane %v2392, 5
        %v2516 = vrot.slane %v2515, 4
        %v2517 = vrot.slane %v2393, 5
        %v2518 = vsel %vm2472, %v2516, %v2517
        %v2519 = vrot.slane %v2517, 4
        %v2520 = vrot.slane %v2394, 5
        %v2521 = vsel %vm2472, %v2519, %v2520
        %v2522 = vrot.slane %v2395, 5
        %v2523 = vrot.slane %v2522, 4
        %v2524 = vrot.slane %v2396, 5
        %v2525 = vsel %vm2472, %v2523, %v2524
        %v2526 = vrot.slane %v2524, 4
        %v2527 = vrot.slane %v2397, 5
        %v2528 = vsel %vm2472, %v2526, %v2527
        %v2529 = vrot.slane %v2398, 5
        %v2530 = vrot.slane %v2529, 4
        %v2531 = vrot.slane %v2399, 5
        %v2532 = vsel %vm2472, %v2530, %v2531
        %v2533 = vrot.slane %v2531, 4
        %v2534 = vrot.slane %v2400, 5
        %v2535 = vsel %vm2472, %v2533, %v2534
        %v2536 = vrot.slane %v2401, 5
        %v2537 = vrot.slane %v2536, 4
        %v2538 = vrot.slane %v2402, 5
        %v2539 = vsel %vm2472, %v2537, %v2538
        %v2540 = vrot.slane %v2538, 4
        %v2541 = vrot.slane %v2403, 5
        %v2542 = vsel %vm2472, %v2540, %v2541
        %v2543 = vrot.slane %v2404, 5
        %v2544 = vrot.slane %v2543, 4
        %v2545 = vrot.slane %v2405, 5
        %v2546 = vsel %vm2472, %v2544, %v2545
        %v2547 = vrot.slane %v2545, 4
        %v2548 = vrot.slane %v2406, 5
        %v2549 = vsel %vm2472, %v2547, %v2548
        %v2550 = vrot.slane %v2407, 5
        %v2551 = vrot.slane %v2550, 4
        %v2552 = vrot.slane %v2408, 5
        %v2553 = vsel %vm2472, %v2551, %v2552
        %v2554 = vrot.slane %v2552, 4
        %v2555 = vrot.slane %v2409, 5
        %v2556 = vsel %vm2472, %v2554, %v2555
        %v2557 = vrot.slane %v2410, 5
        %v2558 = vrot.slane %v2557, 4
        %v2559 = vrot.slane %v2411, 5
        %v2560 = vsel %vm2472, %v2558, %v2559
        %v2561 = vrot.slane %v2559, 4
        %v2562 = vrot.slane %v2412, 5
        %v2563 = vsel %vm2472, %v2561, %v2562
        %v2564 = vrot.slane %v2413, 5
        %v2565 = vrot.slane %v2564, 4
        %v2566 = vrot.slane %v2414, 5
        %v2567 = vsel %vm2472, %v2565, %v2566
        %v2568 = vrot.slane %v2566, 4
        %v2569 = vrot.slane %v2415, 5
        %v2570 = vsel %vm2472, %v2568, %v2569
        %v2571 = vrot.slane %v2416, 5
        %v2572 = vrot.slane %v2571, 4
        %v2573 = vrot.slane %v2417, 5
        %v2574 = vsel %vm2472, %v2572, %v2573
        %v2575 = vrot.slane %v2573, 4
        %v2576 = vrot.slane %v2418, 5
        %v2577 = vsel %vm2472, %v2575, %v2576
        %v2578 = vrot.slane %v2419, 5
        %v2579 = vrot.slane %v2578, 4
        %v2580 = vrot.slane %v2420, 5
        %v2581 = vsel %vm2472, %v2579, %v2580
        %v2582 = vrot.slane %v2580, 4
        %v2583 = vrot.slane %v2421, 5
        %v2584 = vsel %vm2472, %v2582, %v2583
        %2585 = vrot.lane.b32.xlu0 %v2476, 48
        %v2586 = vpop.permute.xlu0 %2585
        %2587 = vrot.lane.b32.xlu0 %v2479, 48
        %v2588 = vpop.permute.xlu0 %2587
        %2589 = vrot.lane.b32.xlu0 %v2483, 48
        %v2590 = vpop.permute.xlu0 %2589
        %2591 = vrot.lane.b32.xlu0 %v2486, 48
        %v2592 = vpop.permute.xlu0 %2591
        %2593 = vrot.lane.b32.xlu0 %v2490, 48
        %v2594 = vpop.permute.xlu0 %2593
        %2595 = vrot.lane.b32.xlu0 %v2493, 48
        %v2596 = vpop.permute.xlu0 %2595
        %2597 = vrot.lane.b32.xlu0 %v2497, 48
        %v2598 = vpop.permute.xlu0 %2597
        %2599 = vrot.lane.b32.xlu0 %v2500, 48
        %v2600 = vpop.permute.xlu0 %2599
        %2601 = vrot.lane.b32.xlu0 %v2504, 48
        %v2602 = vpop.permute.xlu0 %2601
        %2603 = vrot.lane.b32.xlu0 %v2507, 48
        %v2604 = vpop.permute.xlu0 %2603
        %2605 = vrot.lane.b32.xlu0 %v2511, 48
        %v2606 = vpop.permute.xlu0 %2605
        %2607 = vrot.lane.b32.xlu0 %v2514, 48
        %v2608 = vpop.permute.xlu0 %2607
        %2609 = vrot.lane.b32.xlu0 %v2518, 48
        %v2610 = vpop.permute.xlu0 %2609
        %2611 = vrot.lane.b32.xlu0 %v2521, 48
        %v2612 = vpop.permute.xlu0 %2611
        %2613 = vrot.lane.b32.xlu0 %v2525, 48
        %v2614 = vpop.permute.xlu0 %2613
        %2615 = vrot.lane.b32.xlu0 %v2528, 48
        %v2616 = vpop.permute.xlu0 %2615
        %2617 = vrot.lane.b32.xlu0 %v2532, 48
        %v2618 = vpop.permute.xlu0 %2617
        %2619 = vrot.lane.b32.xlu0 %v2535, 48
        %v2620 = vpop.permute.xlu0 %2619
        %2621 = vrot.lane.b32.xlu0 %v2539, 48
        %v2622 = vpop.permute.xlu0 %2621
        %2623 = vrot.lane.b32.xlu0 %v2542, 48
        %v2624 = vpop.permute.xlu0 %2623
        %2625 = vrot.lane.b32.xlu0 %v2546, 48
        %v2626 = vpop.permute.xlu0 %2625
        %2627 = vrot.lane.b32.xlu0 %v2549, 48
        %v2628 = vpop.permute.xlu0 %2627
        %2629 = vrot.lane.b32.xlu0 %v2553, 48
        %v2630 = vpop.permute.xlu0 %2629
        %2631 = vrot.lane.b32.xlu0 %v2556, 48
        %v2632 = vpop.permute.xlu0 %2631
        %2633 = vrot.lane.b32.xlu0 %v2560, 48
        %v2634 = vpop.permute.xlu0 %2633
        %2635 = vrot.lane.b32.xlu0 %v2563, 48
        %v2636 = vpop.permute.xlu0 %2635
        %2637 = vrot.lane.b32.xlu0 %v2567, 48
        %v2638 = vpop.permute.xlu0 %2637
        %2639 = vrot.lane.b32.xlu0 %v2570, 48
        %v2640 = vpop.permute.xlu0 %2639
        %2641 = vrot.lane.b32.xlu0 %v2574, 48
        %v2642 = vpop.permute.xlu0 %2641
        %2643 = vrot.lane.b32.xlu0 %v2577, 48
        %v2644 = vpop.permute.xlu0 %2643
        %2645 = vrot.lane.b32.xlu0 %v2581, 48
        %v2646 = vpop.permute.xlu0 %2645
        %2647 = vrot.lane.b32.xlu0 %v2584, 48
        %v2648 = vpop.permute.xlu0 %2647
        %vm2681 = vcmask 454016
        %2682 = vst.msk [vmem:[#allocation2] sm:$0xf] %vm2681, %v2586
        %2683 = vst.msk [vmem:[#allocation2 + $0x4] sm:$0xf] %vm2681, %v2588
        %2684 = vst.msk [vmem:[#allocation2 + $0x8] sm:$0xf] %vm2681, %v2590
        %2685 = vst.msk [vmem:[#allocation2 + $0xc] sm:$0xf] %vm2681, %v2592
        %2686 = vst.msk [vmem:[#allocation2 + $0x10] sm:$0xf] %vm2681, %v2594
        %2687 = vst.msk [vmem:[#allocation2 + $0x14] sm:$0xf] %vm2681, %v2596
        %2688 = vst.msk [vmem:[#allocation2 + $0x18] sm:$0xf] %vm2681, %v2598
        %2689 = vst.msk [vmem:[#allocation2 + $0x1c] sm:$0xf] %vm2681, %v2600
        %2690 = vst.msk [vmem:[#allocation2 + $0x20] sm:$0xf] %vm2681, %v2602
        %2691 = vst.msk [vmem:[#allocation2 + $0x24] sm:$0xf] %vm2681, %v2604
        %2692 = vst.msk [vmem:[#allocation2 + $0x28] sm:$0xf] %vm2681, %v2606
        %2693 = vst.msk [vmem:[#allocation2 + $0x2c] sm:$0xf] %vm2681, %v2608
        %2694 = vst.msk [vmem:[#allocation2 + $0x30] sm:$0xf] %vm2681, %v2610
        %2695 = vst.msk [vmem:[#allocation2 + $0x34] sm:$0xf] %vm2681, %v2612
        %2696 = vst.msk [vmem:[#allocation2 + $0x38] sm:$0xf] %vm2681, %v2614
        %2697 = vst.msk [vmem:[#allocation2 + $0x3c] sm:$0xf] %vm2681, %v2616
        %2698 = vst.msk [vmem:[#allocation2 + $0x40] sm:$0xf] %vm2681, %v2618
        %2699 = vst.msk [vmem:[#allocation2 + $0x44] sm:$0xf] %vm2681, %v2620
        %2700 = vst.msk [vmem:[#allocation2 + $0x48] sm:$0xf] %vm2681, %v2622
        %2701 = vst.msk [vmem:[#allocation2 + $0x4c] sm:$0xf] %vm2681, %v2624
        %2702 = vst.msk [vmem:[#allocation2 + $0x50] sm:$0xf] %vm2681, %v2626
        %2703 = vst.msk [vmem:[#allocation2 + $0x54] sm:$0xf] %vm2681, %v2628
        %2704 = vst.msk [vmem:[#allocation2 + $0x58] sm:$0xf] %vm2681, %v2630
        %2705 = vst.msk [vmem:[#allocation2 + $0x5c] sm:$0xf] %vm2681, %v2632
        %2706 = vst.msk [vmem:[#allocation2 + $0x60] sm:$0xf] %vm2681, %v2634
        %2707 = vst.msk [vmem:[#allocation2 + $0x64] sm:$0xf] %vm2681, %v2636
        %2708 = vst.msk [vmem:[#allocation2 + $0x68] sm:$0xf] %vm2681, %v2638
        %2709 = vst.msk [vmem:[#allocation2 + $0x6c] sm:$0xf] %vm2681, %v2640
        %2710 = vst.msk [vmem:[#allocation2 + $0x70] sm:$0xf] %vm2681, %v2642
        %2711 = vst.msk [vmem:[#allocation2 + $0x74] sm:$0xf] %vm2681, %v2644
        %2712 = vst.msk [vmem:[#allocation2 + $0x78] sm:$0xf] %vm2681, %v2646
        %2713 = vst.msk [vmem:[#allocation2 + $0x7c] sm:$0xf] %vm2681, %v2648
        %v2714 = vld [vmem:[%s297] sm:$0xe]
        %v2715 = vld [vmem:[%s297 + $0x4] sm:$0xf]
        %v2716 = vld [vmem:[%s297 + $0x8] sm:$0x1]
        %v2717 = vld [vmem:[%s297 + $0xc] sm:$0xe]
        %v2718 = vld [vmem:[%s297 + $0x10] sm:$0xf]
        %v2719 = vld [vmem:[%s297 + $0x14] sm:$0x1]
        %v2720 = vld [vmem:[%s297 + $0x18] sm:$0xe]
        %v2721 = vld [vmem:[%s297 + $0x1c] sm:$0xf]
        %v2722 = vld [vmem:[%s297 + $0x20] sm:$0x1]
        %v2723 = vld [vmem:[%s297 + $0x24] sm:$0xe]
        %v2724 = vld [vmem:[%s297 + $0x28] sm:$0xf]
        %v2725 = vld [vmem:[%s297 + $0x2c] sm:$0x1]
        %v2726 = vld [vmem:[%s297 + $0x30] sm:$0xe]
        %v2727 = vld [vmem:[%s297 + $0x34] sm:$0xf]
        %v2728 = vld [vmem:[%s297 + $0x38] sm:$0x1]
        %v2729 = vld [vmem:[%s297 + $0x3c] sm:$0xe]
        %v2730 = vld [vmem:[%s297 + $0x40] sm:$0xf]
        %v2731 = vld [vmem:[%s297 + $0x44] sm:$0x1]
        %v2732 = vld [vmem:[%s297 + $0x48] sm:$0xe]
        %v2733 = vld [vmem:[%s297 + $0x4c] sm:$0xf]
        %v2734 = vld [vmem:[%s297 + $0x50] sm:$0x1]
        %v2735 = vld [vmem:[%s297 + $0x54] sm:$0xe]
        %v2736 = vld [vmem:[%s297 + $0x58] sm:$0xf]
        %v2737 = vld [vmem:[%s297 + $0x5c] sm:$0x1]
        %v2738 = vld [vmem:[%s297 + $0x60] sm:$0xe]
        %v2739 = vld [vmem:[%s297 + $0x64] sm:$0xf]
        %v2740 = vld [vmem:[%s297 + $0x68] sm:$0x1]
        %v2741 = vld [vmem:[%s297 + $0x6c] sm:$0xe]
        %v2742 = vld [vmem:[%s297 + $0x70] sm:$0xf]
        %v2743 = vld [vmem:[%s297 + $0x74] sm:$0x1]
        %v2744 = vld [vmem:[%s297 + $0x78] sm:$0xe]
        %v2745 = vld [vmem:[%s297 + $0x7c] sm:$0xf]
        %v2746 = vld [vmem:[%s297 + $0x80] sm:$0x1]
        %v2747 = vld [vmem:[%s297 + $0x84] sm:$0xe]
        %v2748 = vld [vmem:[%s297 + $0x88] sm:$0xf]
        %v2749 = vld [vmem:[%s297 + $0x8c] sm:$0x1]
        %v2750 = vld [vmem:[%s297 + $0x90] sm:$0xe]
        %v2751 = vld [vmem:[%s297 + $0x94] sm:$0xf]
        %v2752 = vld [vmem:[%s297 + $0x98] sm:$0x1]
        %v2753 = vld [vmem:[%s297 + $0x9c] sm:$0xe]
        %v2754 = vld [vmem:[%s297 + $0xa0] sm:$0xf]
        %v2755 = vld [vmem:[%s297 + $0xa4] sm:$0x1]
        %v2756 = vld [vmem:[%s297 + $0xa8] sm:$0xe]
        %v2757 = vld [vmem:[%s297 + $0xac] sm:$0xf]
        %v2758 = vld [vmem:[%s297 + $0xb0] sm:$0x1]
        %v2759 = vld [vmem:[%s297 + $0xb4] sm:$0xe]
        %v2760 = vld [vmem:[%s297 + $0xb8] sm:$0xf]
        %v2761 = vld [vmem:[%s297 + $0xbc] sm:$0x1]
        %v2810 = vrot.slane %v2714, 5
        %v2811 = vrot.slane %v2810, 4
        %v2812 = vrot.slane %v2715, 5
        %v2813 = vsel %vm2472, %v2811, %v2812
        %v2814 = vrot.slane %v2812, 4
        %v2815 = vrot.slane %v2716, 5
        %v2816 = vsel %vm2472, %v2814, %v2815
        %v2817 = vrot.slane %v2717, 5
        %v2818 = vrot.slane %v2817, 4
        %v2819 = vrot.slane %v2718, 5
        %v2820 = vsel %vm2472, %v2818, %v2819
        %v2821 = vrot.slane %v2819, 4
        %v2822 = vrot.slane %v2719, 5
        %v2823 = vsel %vm2472, %v2821, %v2822
        %v2824 = vrot.slane %v2720, 5
        %v2825 = vrot.slane %v2824, 4
        %v2826 = vrot.slane %v2721, 5
        %v2827 = vsel %vm2472, %v2825, %v2826
        %v2828 = vrot.slane %v2826, 4
        %v2829 = vrot.slane %v2722, 5
        %v2830 = vsel %vm2472, %v2828, %v2829
        %v2831 = vrot.slane %v2723, 5
        %v2832 = vrot.slane %v2831, 4
        %v2833 = vrot.slane %v2724, 5
        %v2834 = vsel %vm2472, %v2832, %v2833
        %v2835 = vrot.slane %v2833, 4
        %v2836 = vrot.slane %v2725, 5
        %v2837 = vsel %vm2472, %v2835, %v2836
        %v2838 = vrot.slane %v2726, 5
        %v2839 = vrot.slane %v2838, 4
        %v2840 = vrot.slane %v2727, 5
        %v2841 = vsel %vm2472, %v2839, %v2840
        %v2842 = vrot.slane %v2840, 4
        %v2843 = vrot.slane %v2728, 5
        %v2844 = vsel %vm2472, %v2842, %v2843
        %v2845 = vrot.slane %v2729, 5
        %v2846 = vrot.slane %v2845, 4
        %v2847 = vrot.slane %v2730, 5
        %v2848 = vsel %vm2472, %v2846, %v2847
        %v2849 = vrot.slane %v2847, 4
        %v2850 = vrot.slane %v2731, 5
        %v2851 = vsel %vm2472, %v2849, %v2850
        %v2852 = vrot.slane %v2732, 5
        %v2853 = vrot.slane %v2852, 4
        %v2854 = vrot.slane %v2733, 5
        %v2855 = vsel %vm2472, %v2853, %v2854
        %v2856 = vrot.slane %v2854, 4
        %v2857 = vrot.slane %v2734, 5
        %v2858 = vsel %vm2472, %v2856, %v2857
        %v2859 = vrot.slane %v2735, 5
        %v2860 = vrot.slane %v2859, 4
        %v2861 = vrot.slane %v2736, 5
        %v2862 = vsel %vm2472, %v2860, %v2861
        %v2863 = vrot.slane %v2861, 4
        %v2864 = vrot.slane %v2737, 5
        %v2865 = vsel %vm2472, %v2863, %v2864
        %v2866 = vrot.slane %v2738, 5
        %v2867 = vrot.slane %v2866, 4
        %v2868 = vrot.slane %v2739, 5
        %v2869 = vsel %vm2472, %v2867, %v2868
        %v2870 = vrot.slane %v2868, 4
        %v2871 = vrot.slane %v2740, 5
        %v2872 = vsel %vm2472, %v2870, %v2871
        %v2873 = vrot.slane %v2741, 5
        %v2874 = vrot.slane %v2873, 4
        %v2875 = vrot.slane %v2742, 5
        %v2876 = vsel %vm2472, %v2874, %v2875
        %v2877 = vrot.slane %v2875, 4
        %v2878 = vrot.slane %v2743, 5
        %v2879 = vsel %vm2472, %v2877, %v2878
        %v2880 = vrot.slane %v2744, 5
        %v2881 = vrot.slane %v2880, 4
        %v2882 = vrot.slane %v2745, 5
        %v2883 = vsel %vm2472, %v2881, %v2882
        %v2884 = vrot.slane %v2882, 4
        %v2885 = vrot.slane %v2746, 5
        %v2886 = vsel %vm2472, %v2884, %v2885
        %v2887 = vrot.slane %v2747, 5
        %v2888 = vrot.slane %v2887, 4
        %v2889 = vrot.slane %v2748, 5
        %v2890 = vsel %vm2472, %v2888, %v2889
        %v2891 = vrot.slane %v2889, 4
        %v2892 = vrot.slane %v2749, 5
        %v2893 = vsel %vm2472, %v2891, %v2892
        %v2894 = vrot.slane %v2750, 5
        %v2895 = vrot.slane %v2894, 4
        %v2896 = vrot.slane %v2751, 5
        %v2897 = vsel %vm2472, %v2895, %v2896
        %v2898 = vrot.slane %v2896, 4
        %v2899 = vrot.slane %v2752, 5
        %v2900 = vsel %vm2472, %v2898, %v2899
        %v2901 = vrot.slane %v2753, 5
        %v2902 = vrot.slane %v2901, 4
        %v2903 = vrot.slane %v2754, 5
        %v2904 = vsel %vm2472, %v2902, %v2903
        %v2905 = vrot.slane %v2903, 4
        %v2906 = vrot.slane %v2755, 5
        %v2907 = vsel %vm2472, %v2905, %v2906
        %v2908 = vrot.slane %v2756, 5
        %v2909 = vrot.slane %v2908, 4
        %v2910 = vrot.slane %v2757, 5
        %v2911 = vsel %vm2472, %v2909, %v2910
        %v2912 = vrot.slane %v2910, 4
        %v2913 = vrot.slane %v2758, 5
        %v2914 = vsel %vm2472, %v2912, %v2913
        %v2915 = vrot.slane %v2759, 5
        %v2916 = vrot.slane %v2915, 4
        %v2917 = vrot.slane %v2760, 5
        %v2918 = vsel %vm2472, %v2916, %v2917
        %v2919 = vrot.slane %v2917, 4
        %v2920 = vrot.slane %v2761, 5
        %v2921 = vsel %vm2472, %v2919, %v2920
        %2922 = vrot.lane.b32.xlu0 %v2813, 56
        %v2923 = vpop.permute.xlu0 %2922
        %2924 = vrot.lane.b32.xlu0 %v2816, 56
        %v2925 = vpop.permute.xlu0 %2924
        %2926 = vrot.lane.b32.xlu0 %v2820, 56
        %v2927 = vpop.permute.xlu0 %2926
        %2928 = vrot.lane.b32.xlu0 %v2823, 56
        %v2929 = vpop.permute.xlu0 %2928
        %2930 = vrot.lane.b32.xlu0 %v2827, 56
        %v2931 = vpop.permute.xlu0 %2930
        %2932 = vrot.lane.b32.xlu0 %v2830, 56
        %v2933 = vpop.permute.xlu0 %2932
        %2934 = vrot.lane.b32.xlu0 %v2834, 56
        %v2935 = vpop.permute.xlu0 %2934
        %2936 = vrot.lane.b32.xlu0 %v2837, 56
        %v2937 = vpop.permute.xlu0 %2936
        %2938 = vrot.lane.b32.xlu0 %v2841, 56
        %v2939 = vpop.permute.xlu0 %2938
        %2940 = vrot.lane.b32.xlu0 %v2844, 56
        %v2941 = vpop.permute.xlu0 %2940
        %2942 = vrot.lane.b32.xlu0 %v2848, 56
        %v2943 = vpop.permute.xlu0 %2942
        %2944 = vrot.lane.b32.xlu0 %v2851, 56
        %v2945 = vpop.permute.xlu0 %2944
        %2946 = vrot.lane.b32.xlu0 %v2855, 56
        %v2947 = vpop.permute.xlu0 %2946
        %2948 = vrot.lane.b32.xlu0 %v2858, 56
        %v2949 = vpop.permute.xlu0 %2948
        %2950 = vrot.lane.b32.xlu0 %v2862, 56
        %v2951 = vpop.permute.xlu0 %2950
        %2952 = vrot.lane.b32.xlu0 %v2865, 56
        %v2953 = vpop.permute.xlu0 %2952
        %2954 = vrot.lane.b32.xlu0 %v2869, 56
        %v2955 = vpop.permute.xlu0 %2954
        %2956 = vrot.lane.b32.xlu0 %v2872, 56
        %v2957 = vpop.permute.xlu0 %2956
        %2958 = vrot.lane.b32.xlu0 %v2876, 56
        %v2959 = vpop.permute.xlu0 %2958
        %2960 = vrot.lane.b32.xlu0 %v2879, 56
        %v2961 = vpop.permute.xlu0 %2960
        %2962 = vrot.lane.b32.xlu0 %v2883, 56
        %v2963 = vpop.permute.xlu0 %2962
        %2964 = vrot.lane.b32.xlu0 %v2886, 56
        %v2965 = vpop.permute.xlu0 %2964
        %2966 = vrot.lane.b32.xlu0 %v2890, 56
        %v2967 = vpop.permute.xlu0 %2966
        %2968 = vrot.lane.b32.xlu0 %v2893, 56
        %v2969 = vpop.permute.xlu0 %2968
        %2970 = vrot.lane.b32.xlu0 %v2897, 56
        %v2971 = vpop.permute.xlu0 %2970
        %2972 = vrot.lane.b32.xlu0 %v2900, 56
        %v2973 = vpop.permute.xlu0 %2972
        %2974 = vrot.lane.b32.xlu0 %v2904, 56
        %v2975 = vpop.permute.xlu0 %2974
        %2976 = vrot.lane.b32.xlu0 %v2907, 56
        %v2977 = vpop.permute.xlu0 %2976
        %2978 = vrot.lane.b32.xlu0 %v2911, 56
        %v2979 = vpop.permute.xlu0 %2978
        %2980 = vrot.lane.b32.xlu0 %v2914, 56
        %v2981 = vpop.permute.xlu0 %2980
        %2982 = vrot.lane.b32.xlu0 %v2918, 56
        %v2983 = vpop.permute.xlu0 %2982
        %2984 = vrot.lane.b32.xlu0 %v2921, 56
        %v2985 = vpop.permute.xlu0 %2984
        %vm3018 = vcmask 519616
        %3019 = vst.msk [vmem:[#allocation2] sm:$0xf] %vm3018, %v2923
        %3020 = vst.msk [vmem:[#allocation2 + $0x4] sm:$0xf] %vm3018, %v2925
        %3021 = vst.msk [vmem:[#allocation2 + $0x8] sm:$0xf] %vm3018, %v2927
        %3022 = vst.msk [vmem:[#allocation2 + $0xc] sm:$0xf] %vm3018, %v2929
        %3023 = vst.msk [vmem:[#allocation2 + $0x10] sm:$0xf] %vm3018, %v2931
        %3024 = vst.msk [vmem:[#allocation2 + $0x14] sm:$0xf] %vm3018, %v2933
        %3025 = vst.msk [vmem:[#allocation2 + $0x18] sm:$0xf] %vm3018, %v2935
        %3026 = vst.msk [vmem:[#allocation2 + $0x1c] sm:$0xf] %vm3018, %v2937
        %3027 = vst.msk [vmem:[#allocation2 + $0x20] sm:$0xf] %vm3018, %v2939
        %3028 = vst.msk [vmem:[#allocation2 + $0x24] sm:$0xf] %vm3018, %v2941
        %3029 = vst.msk [vmem:[#allocation2 + $0x28] sm:$0xf] %vm3018, %v2943
        %3030 = vst.msk [vmem:[#allocation2 + $0x2c] sm:$0xf] %vm3018, %v2945
        %3031 = vst.msk [vmem:[#allocation2 + $0x30] sm:$0xf] %vm3018, %v2947
        %3032 = vst.msk [vmem:[#allocation2 + $0x34] sm:$0xf] %vm3018, %v2949
        %3033 = vst.msk [vmem:[#allocation2 + $0x38] sm:$0xf] %vm3018, %v2951
        %3034 = vst.msk [vmem:[#allocation2 + $0x3c] sm:$0xf] %vm3018, %v2953
        %3035 = vst.msk [vmem:[#allocation2 + $0x40] sm:$0xf] %vm3018, %v2955
        %3036 = vst.msk [vmem:[#allocation2 + $0x44] sm:$0xf] %vm3018, %v2957
        %3037 = vst.msk [vmem:[#allocation2 + $0x48] sm:$0xf] %vm3018, %v2959
        %3038 = vst.msk [vmem:[#allocation2 + $0x4c] sm:$0xf] %vm3018, %v2961
        %3039 = vst.msk [vmem:[#allocation2 + $0x50] sm:$0xf] %vm3018, %v2963
        %3040 = vst.msk [vmem:[#allocation2 + $0x54] sm:$0xf] %vm3018, %v2965
        %3041 = vst.msk [vmem:[#allocation2 + $0x58] sm:$0xf] %vm3018, %v2967
        %3042 = vst.msk [vmem:[#allocation2 + $0x5c] sm:$0xf] %vm3018, %v2969
        %3043 = vst.msk [vmem:[#allocation2 + $0x60] sm:$0xf] %vm3018, %v2971
        %3044 = vst.msk [vmem:[#allocation2 + $0x64] sm:$0xf] %vm3018, %v2973
        %3045 = vst.msk [vmem:[#allocation2 + $0x68] sm:$0xf] %vm3018, %v2975
        %3046 = vst.msk [vmem:[#allocation2 + $0x6c] sm:$0xf] %vm3018, %v2977
        %3047 = vst.msk [vmem:[#allocation2 + $0x70] sm:$0xf] %vm3018, %v2979
        %3048 = vst.msk [vmem:[#allocation2 + $0x74] sm:$0xf] %vm3018, %v2981
        %3049 = vst.msk [vmem:[#allocation2 + $0x78] sm:$0xf] %vm3018, %v2983
        %3050 = vst.msk [vmem:[#allocation2 + $0x7c] sm:$0xf] %vm3018, %v2985
        %v3051 = vld [vmem:[%s494] sm:$0xe]
        %v3052 = vld [vmem:[%s494 + $0x4] sm:$0xf]
        %v3053 = vld [vmem:[%s494 + $0x8] sm:$0x1]
        %v3054 = vld [vmem:[%s494 + $0xc] sm:$0xe]
        %v3055 = vld [vmem:[%s494 + $0x10] sm:$0xf]
        %v3056 = vld [vmem:[%s494 + $0x14] sm:$0x1]
        %v3057 = vld [vmem:[%s494 + $0x18] sm:$0xe]
        %v3058 = vld [vmem:[%s494 + $0x1c] sm:$0xf]
        %v3059 = vld [vmem:[%s494 + $0x20] sm:$0x1]
        %v3060 = vld [vmem:[%s494 + $0x24] sm:$0xe]
        %v3061 = vld [vmem:[%s494 + $0x28] sm:$0xf]
        %v3062 = vld [vmem:[%s494 + $0x2c] sm:$0x1]
        %v3063 = vld [vmem:[%s494 + $0x30] sm:$0xe]
        %v3064 = vld [vmem:[%s494 + $0x34] sm:$0xf]
        %v3065 = vld [vmem:[%s494 + $0x38] sm:$0x1]
        %v3066 = vld [vmem:[%s494 + $0x3c] sm:$0xe]
        %v3067 = vld [vmem:[%s494 + $0x40] sm:$0xf]
        %v3068 = vld [vmem:[%s494 + $0x44] sm:$0x1]
        %v3069 = vld [vmem:[%s494 + $0x48] sm:$0xe]
        %v3070 = vld [vmem:[%s494 + $0x4c] sm:$0xf]
        %v3071 = vld [vmem:[%s494 + $0x50] sm:$0x1]
        %v3072 = vld [vmem:[%s494 + $0x54] sm:$0xe]
        %v3073 = vld [vmem:[%s494 + $0x58] sm:$0xf]
        %v3074 = vld [vmem:[%s494 + $0x5c] sm:$0x1]
        %v3075 = vld [vmem:[%s494 + $0x60] sm:$0xe]
        %v3076 = vld [vmem:[%s494 + $0x64] sm:$0xf]
        %v3077 = vld [vmem:[%s494 + $0x68] sm:$0x1]
        %v3078 = vld [vmem:[%s494 + $0x6c] sm:$0xe]
        %v3079 = vld [vmem:[%s494 + $0x70] sm:$0xf]
        %v3080 = vld [vmem:[%s494 + $0x74] sm:$0x1]
        %v3081 = vld [vmem:[%s494 + $0x78] sm:$0xe]
        %v3082 = vld [vmem:[%s494 + $0x7c] sm:$0xf]
        %v3083 = vld [vmem:[%s494 + $0x80] sm:$0x1]
        %v3084 = vld [vmem:[%s494 + $0x84] sm:$0xe]
        %v3085 = vld [vmem:[%s494 + $0x88] sm:$0xf]
        %v3086 = vld [vmem:[%s494 + $0x8c] sm:$0x1]
        %v3087 = vld [vmem:[%s494 + $0x90] sm:$0xe]
        %v3088 = vld [vmem:[%s494 + $0x94] sm:$0xf]
        %v3089 = vld [vmem:[%s494 + $0x98] sm:$0x1]
        %v3090 = vld [vmem:[%s494 + $0x9c] sm:$0xe]
        %v3091 = vld [vmem:[%s494 + $0xa0] sm:$0xf]
        %v3092 = vld [vmem:[%s494 + $0xa4] sm:$0x1]
        %v3093 = vld [vmem:[%s494 + $0xa8] sm:$0xe]
        %v3094 = vld [vmem:[%s494 + $0xac] sm:$0xf]
        %v3095 = vld [vmem:[%s494 + $0xb0] sm:$0x1]
        %v3096 = vld [vmem:[%s494 + $0xb4] sm:$0xe]
        %v3097 = vld [vmem:[%s494 + $0xb8] sm:$0xf]
        %v3098 = vld [vmem:[%s494 + $0xbc] sm:$0x1]
        %v3147 = vrot.slane %v3051, 5
        %v3148 = vrot.slane %v3147, 4
        %v3149 = vrot.slane %v3052, 5
        %v3150 = vsel %vm2472, %v3148, %v3149
        %v3151 = vrot.slane %v3149, 4
        %v3152 = vrot.slane %v3053, 5
        %v3153 = vsel %vm2472, %v3151, %v3152
        %v3154 = vrot.slane %v3054, 5
        %v3155 = vrot.slane %v3154, 4
        %v3156 = vrot.slane %v3055, 5
        %v3157 = vsel %vm2472, %v3155, %v3156
        %v3158 = vrot.slane %v3156, 4
        %v3159 = vrot.slane %v3056, 5
        %v3160 = vsel %vm2472, %v3158, %v3159
        %v3161 = vrot.slane %v3057, 5
        %v3162 = vrot.slane %v3161, 4
        %v3163 = vrot.slane %v3058, 5
        %v3164 = vsel %vm2472, %v3162, %v3163
        %v3165 = vrot.slane %v3163, 4
        %v3166 = vrot.slane %v3059, 5
        %v3167 = vsel %vm2472, %v3165, %v3166
        %v3168 = vrot.slane %v3060, 5
        %v3169 = vrot.slane %v3168, 4
        %v3170 = vrot.slane %v3061, 5
        %v3171 = vsel %vm2472, %v3169, %v3170
        %v3172 = vrot.slane %v3170, 4
        %v3173 = vrot.slane %v3062, 5
        %v3174 = vsel %vm2472, %v3172, %v3173
        %v3175 = vrot.slane %v3063, 5
        %v3176 = vrot.slane %v3175, 4
        %v3177 = vrot.slane %v3064, 5
        %v3178 = vsel %vm2472, %v3176, %v3177
        %v3179 = vrot.slane %v3177, 4
        %v3180 = vrot.slane %v3065, 5
        %v3181 = vsel %vm2472, %v3179, %v3180
        %v3182 = vrot.slane %v3066, 5
        %v3183 = vrot.slane %v3182, 4
        %v3184 = vrot.slane %v3067, 5
        %v3185 = vsel %vm2472, %v3183, %v3184
        %v3186 = vrot.slane %v3184, 4
        %v3187 = vrot.slane %v3068, 5
        %v3188 = vsel %vm2472, %v3186, %v3187
        %v3189 = vrot.slane %v3069, 5
        %v3190 = vrot.slane %v3189, 4
        %v3191 = vrot.slane %v3070, 5
        %v3192 = vsel %vm2472, %v3190, %v3191
        %v3193 = vrot.slane %v3191, 4
        %v3194 = vrot.slane %v3071, 5
        %v3195 = vsel %vm2472, %v3193, %v3194
        %v3196 = vrot.slane %v3072, 5
        %v3197 = vrot.slane %v3196, 4
        %v3198 = vrot.slane %v3073, 5
        %v3199 = vsel %vm2472, %v3197, %v3198
        %v3200 = vrot.slane %v3198, 4
        %v3201 = vrot.slane %v3074, 5
        %v3202 = vsel %vm2472, %v3200, %v3201
        %v3203 = vrot.slane %v3075, 5
        %v3204 = vrot.slane %v3203, 4
        %v3205 = vrot.slane %v3076, 5
        %v3206 = vsel %vm2472, %v3204, %v3205
        %v3207 = vrot.slane %v3205, 4
        %v3208 = vrot.slane %v3077, 5
        %v3209 = vsel %vm2472, %v3207, %v3208
        %v3210 = vrot.slane %v3078, 5
        %v3211 = vrot.slane %v3210, 4
        %v3212 = vrot.slane %v3079, 5
        %v3213 = vsel %vm2472, %v3211, %v3212
        %v3214 = vrot.slane %v3212, 4
        %v3215 = vrot.slane %v3080, 5
        %v3216 = vsel %vm2472, %v3214, %v3215
        %v3217 = vrot.slane %v3081, 5
        %v3218 = vrot.slane %v3217, 4
        %v3219 = vrot.slane %v3082, 5
        %v3220 = vsel %vm2472, %v3218, %v3219
        %v3221 = vrot.slane %v3219, 4
        %v3222 = vrot.slane %v3083, 5
        %v3223 = vsel %vm2472, %v3221, %v3222
        %v3224 = vrot.slane %v3084, 5
        %v3225 = vrot.slane %v3224, 4
        %v3226 = vrot.slane %v3085, 5
        %v3227 = vsel %vm2472, %v3225, %v3226
        %v3228 = vrot.slane %v3226, 4
        %v3229 = vrot.slane %v3086, 5
        %v3230 = vsel %vm2472, %v3228, %v3229
        %v3231 = vrot.slane %v3087, 5
        %v3232 = vrot.slane %v3231, 4
        %v3233 = vrot.slane %v3088, 5
        %v3234 = vsel %vm2472, %v3232, %v3233
        %v3235 = vrot.slane %v3233, 4
        %v3236 = vrot.slane %v3089, 5
        %v3237 = vsel %vm2472, %v3235, %v3236
        %v3238 = vrot.slane %v3090, 5
        %v3239 = vrot.slane %v3238, 4
        %v3240 = vrot.slane %v3091, 5
        %v3241 = vsel %vm2472, %v3239, %v3240
        %v3242 = vrot.slane %v3240, 4
        %v3243 = vrot.slane %v3092, 5
        %v3244 = vsel %vm2472, %v3242, %v3243
        %v3245 = vrot.slane %v3093, 5
        %v3246 = vrot.slane %v3245, 4
        %v3247 = vrot.slane %v3094, 5
        %v3248 = vsel %vm2472, %v3246, %v3247
        %v3249 = vrot.slane %v3247, 4
        %v3250 = vrot.slane %v3095, 5
        %v3251 = vsel %vm2472, %v3249, %v3250
        %v3252 = vrot.slane %v3096, 5
        %v3253 = vrot.slane %v3252, 4
        %v3254 = vrot.slane %v3097, 5
        %v3255 = vsel %vm2472, %v3253, %v3254
        %v3256 = vrot.slane %v3254, 4
        %v3257 = vrot.slane %v3098, 5
        %v3258 = vsel %vm2472, %v3256, %v3257
        %3259 = vrot.lane.b32.xlu0 %v3150, 64
        %v3260 = vpop.permute.xlu0 %3259
        %3261 = vrot.lane.b32.xlu0 %v3153, 64
        %v3262 = vpop.permute.xlu0 %3261
        %3263 = vrot.lane.b32.xlu0 %v3157, 64
        %v3264 = vpop.permute.xlu0 %3263
        %3265 = vrot.lane.b32.xlu0 %v3160, 64
        %v3266 = vpop.permute.xlu0 %3265
        %3267 = vrot.lane.b32.xlu0 %v3164, 64
        %v3268 = vpop.permute.xlu0 %3267
        %3269 = vrot.lane.b32.xlu0 %v3167, 64
        %v3270 = vpop.permute.xlu0 %3269
        %3271 = vrot.lane.b32.xlu0 %v3171, 64
        %v3272 = vpop.permute.xlu0 %3271
        %3273 = vrot.lane.b32.xlu0 %v3174, 64
        %v3274 = vpop.permute.xlu0 %3273
        %3275 = vrot.lane.b32.xlu0 %v3178, 64
        %v3276 = vpop.permute.xlu0 %3275
        %3277 = vrot.lane.b32.xlu0 %v3181, 64
        %v3278 = vpop.permute.xlu0 %3277
        %3279 = vrot.lane.b32.xlu0 %v3185, 64
        %v3280 = vpop.permute.xlu0 %3279
        %3281 = vrot.lane.b32.xlu0 %v3188, 64
        %v3282 = vpop.permute.xlu0 %3281
        %3283 = vrot.lane.b32.xlu0 %v3192, 64
        %v3284 = vpop.permute.xlu0 %3283
        %3285 = vrot.lane.b32.xlu0 %v3195, 64
        %v3286 = vpop.permute.xlu0 %3285
        %3287 = vrot.lane.b32.xlu0 %v3199, 64
        %v3288 = vpop.permute.xlu0 %3287
        %3289 = vrot.lane.b32.xlu0 %v3202, 64
        %v3290 = vpop.permute.xlu0 %3289
        %3291 = vrot.lane.b32.xlu0 %v3206, 64
        %v3292 = vpop.permute.xlu0 %3291
        %3293 = vrot.lane.b32.xlu0 %v3209, 64
        %v3294 = vpop.permute.xlu0 %3293
        %3295 = vrot.lane.b32.xlu0 %v3213, 64
        %v3296 = vpop.permute.xlu0 %3295
        %3297 = vrot.lane.b32.xlu0 %v3216, 64
        %v3298 = vpop.permute.xlu0 %3297
        %3299 = vrot.lane.b32.xlu0 %v3220, 64
        %v3300 = vpop.permute.xlu0 %3299
        %3301 = vrot.lane.b32.xlu0 %v3223, 64
        %v3302 = vpop.permute.xlu0 %3301
        %3303 = vrot.lane.b32.xlu0 %v3227, 64
        %v3304 = vpop.permute.xlu0 %3303
        %3305 = vrot.lane.b32.xlu0 %v3230, 64
        %v3306 = vpop.permute.xlu0 %3305
        %3307 = vrot.lane.b32.xlu0 %v3234, 64
        %v3308 = vpop.permute.xlu0 %3307
        %3309 = vrot.lane.b32.xlu0 %v3237, 64
        %v3310 = vpop.permute.xlu0 %3309
        %3311 = vrot.lane.b32.xlu0 %v3241, 64
        %v3312 = vpop.permute.xlu0 %3311
        %3313 = vrot.lane.b32.xlu0 %v3244, 64
        %v3314 = vpop.permute.xlu0 %3313
        %3315 = vrot.lane.b32.xlu0 %v3248, 64
        %v3316 = vpop.permute.xlu0 %3315
        %3317 = vrot.lane.b32.xlu0 %v3251, 64
        %v3318 = vpop.permute.xlu0 %3317
        %3319 = vrot.lane.b32.xlu0 %v3255, 64
        %v3320 = vpop.permute.xlu0 %3319
        %3321 = vrot.lane.b32.xlu0 %v3258, 64
        %v3322 = vpop.permute.xlu0 %3321
        %vm3355 = vcmask 585216
        %3356 = vst.msk [vmem:[#allocation2] sm:$0xf] %vm3355, %v3260
        %3357 = vst.msk [vmem:[#allocation2 + $0x4] sm:$0xf] %vm3355, %v3262
        %3358 = vst.msk [vmem:[#allocation2 + $0x8] sm:$0xf] %vm3355, %v3264
        %3359 = vst.msk [vmem:[#allocation2 + $0xc] sm:$0xf] %vm3355, %v3266
        %3360 = vst.msk [vmem:[#allocation2 + $0x10] sm:$0xf] %vm3355, %v3268
        %3361 = vst.msk [vmem:[#allocation2 + $0x14] sm:$0xf] %vm3355, %v3270
        %3362 = vst.msk [vmem:[#allocation2 + $0x18] sm:$0xf] %vm3355, %v3272
        %3363 = vst.msk [vmem:[#allocation2 + $0x1c] sm:$0xf] %vm3355, %v3274
        %3364 = vst.msk [vmem:[#allocation2 + $0x20] sm:$0xf] %vm3355, %v3276
        %3365 = vst.msk [vmem:[#allocation2 + $0x24] sm:$0xf] %vm3355, %v3278
        %3366 = vst.msk [vmem:[#allocation2 + $0x28] sm:$0xf] %vm3355, %v3280
        %3367 = vst.msk [vmem:[#allocation2 + $0x2c] sm:$0xf] %vm3355, %v3282
        %3368 = vst.msk [vmem:[#allocation2 + $0x30] sm:$0xf] %vm3355, %v3284
        %3369 = vst.msk [vmem:[#allocation2 + $0x34] sm:$0xf] %vm3355, %v3286
        %3370 = vst.msk [vmem:[#allocation2 + $0x38] sm:$0xf] %vm3355, %v3288
        %3371 = vst.msk [vmem:[#allocation2 + $0x3c] sm:$0xf] %vm3355, %v3290
        %3372 = vst.msk [vmem:[#allocation2 + $0x40] sm:$0xf] %vm3355, %v3292
        %3373 = vst.msk [vmem:[#allocation2 + $0x44] sm:$0xf] %vm3355, %v3294
        %3374 = vst.msk [vmem:[#allocation2 + $0x48] sm:$0xf] %vm3355, %v3296
        %3375 = vst.msk [vmem:[#allocation2 + $0x4c] sm:$0xf] %vm3355, %v3298
        %3376 = vst.msk [vmem:[#allocation2 + $0x50] sm:$0xf] %vm3355, %v3300
        %3377 = vst.msk [vmem:[#allocation2 + $0x54] sm:$0xf] %vm3355, %v3302
        %3378 = vst.msk [vmem:[#allocation2 + $0x58] sm:$0xf] %vm3355, %v3304
        %3379 = vst.msk [vmem:[#allocation2 + $0x5c] sm:$0xf] %vm3355, %v3306
        %3380 = vst.msk [vmem:[#allocation2 + $0x60] sm:$0xf] %vm3355, %v3308
        %3381 = vst.msk [vmem:[#allocation2 + $0x64] sm:$0xf] %vm3355, %v3310
        %3382 = vst.msk [vmem:[#allocation2 + $0x68] sm:$0xf] %vm3355, %v3312
        %3383 = vst.msk [vmem:[#allocation2 + $0x6c] sm:$0xf] %vm3355, %v3314
        %3384 = vst.msk [vmem:[#allocation2 + $0x70] sm:$0xf] %vm3355, %v3316
        %3385 = vst.msk [vmem:[#allocation2 + $0x74] sm:$0xf] %vm3355, %v3318
        %3386 = vst.msk [vmem:[#allocation2 + $0x78] sm:$0xf] %vm3355, %v3320
        %3387 = vst.msk [vmem:[#allocation2 + $0x7c] sm:$0xf] %vm3355, %v3322
        %v3388 = vld [vmem:[#allocation2] sm:$0xf]
        %v3389 = vld [vmem:[#allocation2 + $0x4] sm:$0xf]
        %v3390 = vld [vmem:[#allocation2 + $0x8] sm:$0xf]
        %v3391 = vld [vmem:[#allocation2 + $0xc] sm:$0xf]
        %v3392 = vld [vmem:[#allocation2 + $0x10] sm:$0xf]
        %v3393 = vld [vmem:[#allocation2 + $0x14] sm:$0xf]
        %v3394 = vld [vmem:[#allocation2 + $0x18] sm:$0xf]
        %v3395 = vld [vmem:[#allocation2 + $0x1c] sm:$0xf]
        %v3396 = vld [vmem:[#allocation2 + $0x20] sm:$0xf]
        %v3397 = vld [vmem:[#allocation2 + $0x24] sm:$0xf]
        %v3398 = vld [vmem:[#allocation2 + $0x28] sm:$0xf]
        %v3399 = vld [vmem:[#allocation2 + $0x2c] sm:$0xf]
        %v3400 = vld [vmem:[#allocation2 + $0x30] sm:$0xf]
        %v3401 = vld [vmem:[#allocation2 + $0x34] sm:$0xf]
        %v3402 = vld [vmem:[#allocation2 + $0x38] sm:$0xf]
        %v3403 = vld [vmem:[#allocation2 + $0x3c] sm:$0xf]
        %v3404 = vld [vmem:[#allocation2 + $0x40] sm:$0xf]
        %v3405 = vld [vmem:[#allocation2 + $0x44] sm:$0xf]
        %v3406 = vld [vmem:[#allocation2 + $0x48] sm:$0xf]
        %v3407 = vld [vmem:[#allocation2 + $0x4c] sm:$0xf]
        %v3408 = vld [vmem:[#allocation2 + $0x50] sm:$0xf]
        %v3409 = vld [vmem:[#allocation2 + $0x54] sm:$0xf]
        %v3410 = vld [vmem:[#allocation2 + $0x58] sm:$0xf]
        %v3411 = vld [vmem:[#allocation2 + $0x5c] sm:$0xf]
        %v3412 = vld [vmem:[#allocation2 + $0x60] sm:$0xf]
        %v3413 = vld [vmem:[#allocation2 + $0x64] sm:$0xf]
        %v3414 = vld [vmem:[#allocation2 + $0x68] sm:$0xf]
        %v3415 = vld [vmem:[#allocation2 + $0x6c] sm:$0xf]
        %v3416 = vld [vmem:[#allocation2 + $0x70] sm:$0xf]
        %v3417 = vld [vmem:[#allocation2 + $0x74] sm:$0xf]
        %v3418 = vld [vmem:[#allocation2 + $0x78] sm:$0xf]
        %v3419 = vld [vmem:[#allocation2 + $0x7c] sm:$0xf]
        %v3420 = vld [vmem:[%s219] sm:$0xf]
        %v3421 = vld [vmem:[%s219 + $0x4] sm:$0xf]
        %v3422 = vld [vmem:[%s219 + $0x8] sm:$0xf]
        %v3423 = vld [vmem:[%s219 + $0xc] sm:$0xf]
        %v3424 = vld [vmem:[%s219 + $0x10] sm:$0xf]
        %v3425 = vld [vmem:[%s219 + $0x14] sm:$0xf]
        %v3426 = vld [vmem:[%s219 + $0x18] sm:$0xf]
        %v3427 = vld [vmem:[%s219 + $0x1c] sm:$0xf]
        %v3428 = vld [vmem:[%s219 + $0x20] sm:$0xf]
        %v3429 = vld [vmem:[%s222] sm:$0x1]
        %v3431 = vlaneseq
        %v3432 = vshrl.u32 %v3431, 7
        %v3433 = vsub.s32 0, %v3432
        %v3434 = vrot.slane %v3429, %v3433
        %v3468 = vunpack.c.l.b16 %v3388
        %v3469 = vunpack.c.l.b16 %v3389
        %v3470 = vunpack.c.l.b16 %v3390
        %v3471 = vunpack.c.l.b16 %v3391
        %v3472 = vunpack.c.l.b16 %v3392
        %v3473 = vunpack.c.l.b16 %v3393
        %v3474 = vunpack.c.l.b16 %v3394
        %v3475 = vunpack.c.l.b16 %v3395
        %v3476 = vunpack.c.l.b16 %v3396
        %v3477 = vunpack.c.l.b16 %v3397
        %v3478 = vunpack.c.l.b16 %v3398
        %v3479 = vunpack.c.l.b16 %v3399
        %v3480 = vunpack.c.l.b16 %v3400
        %v3481 = vunpack.c.l.b16 %v3401
        %v3482 = vunpack.c.l.b16 %v3402
        %v3483 = vunpack.c.l.b16 %v3403
        %v3484 = vunpack.c.l.b16 %v3404
        %v3485 = vunpack.c.l.b16 %v3405
        %v3486 = vunpack.c.l.b16 %v3406
        %v3487 = vunpack.c.l.b16 %v3407
        %v3488 = vunpack.c.l.b16 %v3408
        %v3489 = vunpack.c.l.b16 %v3409
        %v3490 = vunpack.c.l.b16 %v3410
        %v3491 = vunpack.c.l.b16 %v3411
        %v3492 = vunpack.c.l.b16 %v3412
        %v3493 = vunpack.c.l.b16 %v3413
        %v3494 = vunpack.c.l.b16 %v3414
        %v3495 = vunpack.c.l.b16 %v3415
        %v3496 = vunpack.c.l.b16 %v3416
        %v3497 = vunpack.c.l.b16 %v3417
        %v3498 = vunpack.c.l.b16 %v3418
        %v3499 = vunpack.c.l.b16 %v3419
        %v3500 = vpack.c.b16 %v3469, %v3468
        %v3501 = vpack.c.b16 %v3471, %v3470
        %v3502 = vpack.c.b16 %v3473, %v3472
        %v3503 = vpack.c.b16 %v3475, %v3474
        %v3504 = vpack.c.b16 %v3477, %v3476
        %v3505 = vpack.c.b16 %v3479, %v3478
        %v3506 = vpack.c.b16 %v3481, %v3480
        %v3507 = vpack.c.b16 %v3483, %v3482
        %v3508 = vpack.c.b16 %v3485, %v3484
        %v3509 = vpack.c.b16 %v3487, %v3486
        %v3510 = vpack.c.b16 %v3489, %v3488
        %v3511 = vpack.c.b16 %v3491, %v3490
        %v3512 = vpack.c.b16 %v3493, %v3492
        %v3513 = vpack.c.b16 %v3495, %v3494
        %v3514 = vpack.c.b16 %v3497, %v3496
        %v3515 = vpack.c.b16 %v3499, %v3498
        %v3525 = vunpack.c.l.b16 %v3420
        %v3526 = vunpack.c.l.b16 %v3421
        %v3527 = vunpack.c.l.b16 %v3422
        %v3528 = vunpack.c.l.b16 %v3423
        %v3529 = vunpack.c.l.b16 %v3424
        %v3530 = vunpack.c.l.b16 %v3425
        %v3531 = vunpack.c.l.b16 %v3426
        %v3532 = vunpack.c.l.b16 %v3427
        %v3533 = vunpack.c.l.b16 %v3428
        %v3534 = vpack.c.b16 %v3526, %v3525
        %v3535 = vpack.c.b16 %v3528, %v3527
        %v3536 = vpack.c.b16 %v3530, %v3529
        %v3537 = vpack.c.b16 %v3532, %v3531
        %v3538 = vpack.c.b16 %v3533, %v3533
        %vm3543 = vcmask 588800
        %v3545 = vsel %vm3543, %v3500, 0
        %v3548 = vsel %vm3543, %v3501, 0
        %v3551 = vsel %vm3543, %v3502, 0
        %v3554 = vsel %vm3543, %v3503, 0
        %v3557 = vsel %vm3543, %v3504, 0
        %v3560 = vsel %vm3543, %v3505, 0
        %v3563 = vsel %vm3543, %v3506, 0
        %v3566 = vsel %vm3543, %v3507, 0
        %v3569 = vsel %vm3543, %v3508, 0
        %v3572 = vsel %vm3543, %v3509, 0
        %v3575 = vsel %vm3543, %v3510, 0
        %v3578 = vsel %vm3543, %v3511, 0
        %v3581 = vsel %vm3543, %v3512, 0
        %v3584 = vsel %vm3543, %v3513, 0
        %v3587 = vsel %vm3543, %v3514, 0
        %v3590 = vsel %vm3543, %v3515, 0
        %vm3592 = vcmask 1043456
        %v3594 = vsel %vm3592, %v3538, 0
        %3596 = vmatprep.subr.bf16.mxu0 0
        %3597 = vmatpush1.bf16.msra.mxu0 0
        %3598 = vmatprep.subr.bf16.mxu0 0
        %3599 = vmatpush1.bf16.msra.mxu0 0
        %3600 = vmatprep.subr.bf16.mxu0 0
        %3601 = vmatpush1.bf16.msra.mxu0 0
        %3602 = vmatprep.subr.bf16.mxu0 0
        %3603 = vmatpush1.bf16.msra.mxu0 %v3594
        %3604 = vmatprep.subr.bf16.mxu0 0
        %3605 = vmatpush1.bf16.msra.mxu0 %v3537
        %3606 = vmatprep.subr.bf16.mxu0 0
        %3607 = vmatpush1.bf16.msra.mxu0 %v3536
        %3608 = vmatprep.subr.bf16.mxu0 0
        %3609 = vmatpush1.bf16.msra.mxu0 %v3535
        %3610 = vmatprep.subr.bf16.mxu0 0
        %3611 = vmatpush1.bf16.msra.mxu0 %v3534
        %3612 = vmatprep.subr.bf16.mxu0 0
        %3613 = vmatpush2.bf16.msra.mxu0 0
        %3614 = vmatprep.subr.bf16.mxu0 0
        %3615 = vmatpush2.bf16.msra.mxu0 0
        %3616 = vmatprep.subr.bf16.mxu0 0
        %3617 = vmatpush2.bf16.msra.mxu0 0
        %3618 = vmatprep.subr.bf16.mxu0 0
        %3619 = vmatpush2.bf16.msra.mxu0 0
        %3620 = vmatprep.subr.bf16.mxu0 0
        %3621 = vmatpush2.bf16.msra.mxu0 0
        %3622 = vmatprep.subr.bf16.mxu0 0
        %3623 = vmatpush2.bf16.msra.mxu0 0
        %3624 = vmatprep.subr.bf16.mxu0 0
        %3625 = vmatpush2.bf16.msra.mxu0 0
        %3626 = vmatprep.subr.bf16.mxu0 0
        %3627 = vmatpush2.bf16.msra.mxu0 0
        %3628 = vmatprep.mubr.bf16.mxu0 0
        %3629 = vmatmul.mubr.bf16.gmra.mxu0 %v3545
        %v3630 = vpop.f32.mrf.mxu0
        %v3631 = vadd.f32 %v3434, %v3630
        %v3632 = vpop.f32.mrf.mxu0
        %v3633 = vpop.f32.mrf.mxu0
        %v3634 = vadd.f32 %v3434, %v3633
        %v3635 = vpop.f32.mrf.mxu0
        %3636 = vmatprep.mubr.bf16.mxu0 0
        %3637 = vmatmul.mubr.bf16.gmra.mxu0 %v3548
        %v3638 = vpop.f32.mrf.mxu0
        %v3639 = vadd.f32 %v3434, %v3638
        %v3640 = vpop.f32.mrf.mxu0
        %v3641 = vpop.f32.mrf.mxu0
        %v3642 = vadd.f32 %v3434, %v3641
        %v3643 = vpop.f32.mrf.mxu0
        %3644 = vmatprep.mubr.bf16.mxu0 0
        %3645 = vmatmul.mubr.bf16.gmra.mxu0 %v3551
        %v3646 = vpop.f32.mrf.mxu0
        %v3647 = vadd.f32 %v3434, %v3646
        %v3648 = vpop.f32.mrf.mxu0
        %v3649 = vpop.f32.mrf.mxu0
        %v3650 = vadd.f32 %v3434, %v3649
        %v3651 = vpop.f32.mrf.mxu0
        %3652 = vmatprep.mubr.bf16.mxu0 0
        %3653 = vmatmul.mubr.bf16.gmra.mxu0 %v3554
        %v3654 = vpop.f32.mrf.mxu0
        %v3655 = vadd.f32 %v3434, %v3654
        %v3656 = vpop.f32.mrf.mxu0
        %v3657 = vpop.f32.mrf.mxu0
        %v3658 = vadd.f32 %v3434, %v3657
        %v3659 = vpop.f32.mrf.mxu0
        %3660 = vmatprep.mubr.bf16.mxu0 0
        %3661 = vmatmul.mubr.bf16.gmra.mxu0 %v3557
        %v3662 = vpop.f32.mrf.mxu0
        %v3663 = vadd.f32 %v3434, %v3662
        %v3664 = vpop.f32.mrf.mxu0
        %v3665 = vpop.f32.mrf.mxu0
        %v3666 = vadd.f32 %v3434, %v3665
        %v3667 = vpop.f32.mrf.mxu0
        %3668 = vmatprep.mubr.bf16.mxu0 0
        %3669 = vmatmul.mubr.bf16.gmra.mxu0 %v3560
        %v3670 = vpop.f32.mrf.mxu0
        %v3671 = vadd.f32 %v3434, %v3670
        %v3672 = vpop.f32.mrf.mxu0
        %v3673 = vpop.f32.mrf.mxu0
        %v3674 = vadd.f32 %v3434, %v3673
        %v3675 = vpop.f32.mrf.mxu0
        %3676 = vmatprep.mubr.bf16.mxu0 0
        %3677 = vmatmul.mubr.bf16.gmra.mxu0 %v3563
        %v3678 = vpop.f32.mrf.mxu0
        %v3679 = vadd.f32 %v3434, %v3678
        %v3680 = vpop.f32.mrf.mxu0
        %v3681 = vpop.f32.mrf.mxu0
        %v3682 = vadd.f32 %v3434, %v3681
        %v3683 = vpop.f32.mrf.mxu0
        %3684 = vmatprep.mubr.bf16.mxu0 0
        %3685 = vmatmul.mubr.bf16.gmra.mxu0 %v3566
        %v3686 = vpop.f32.mrf.mxu0
        %v3687 = vadd.f32 %v3434, %v3686
        %v3688 = vpop.f32.mrf.mxu0
        %v3689 = vpop.f32.mrf.mxu0
        %v3690 = vadd.f32 %v3434, %v3689
        %v3691 = vpop.f32.mrf.mxu0
        %3692 = vmatprep.mubr.bf16.mxu0 0
        %3693 = vmatmul.mubr.bf16.gmra.mxu0 %v3569
        %v3694 = vpop.f32.mrf.mxu0
        %v3695 = vadd.f32 %v3434, %v3694
        %v3696 = vpop.f32.mrf.mxu0
        %v3697 = vpop.f32.mrf.mxu0
        %v3698 = vadd.f32 %v3434, %v3697
        %v3699 = vpop.f32.mrf.mxu0
        %3700 = vmatprep.mubr.bf16.mxu0 0
        %3701 = vmatmul.mubr.bf16.gmra.mxu0 %v3572
        %v3702 = vpop.f32.mrf.mxu0
        %v3703 = vadd.f32 %v3434, %v3702
        %v3704 = vpop.f32.mrf.mxu0
        %v3705 = vpop.f32.mrf.mxu0
        %v3706 = vadd.f32 %v3434, %v3705
        %v3707 = vpop.f32.mrf.mxu0
        %3708 = vmatprep.mubr.bf16.mxu0 0
        %3709 = vmatmul.mubr.bf16.gmra.mxu0 %v3575
        %v3710 = vpop.f32.mrf.mxu0
        %v3711 = vadd.f32 %v3434, %v3710
        %v3712 = vpop.f32.mrf.mxu0
        %v3713 = vpop.f32.mrf.mxu0
        %v3714 = vadd.f32 %v3434, %v3713
        %v3715 = vpop.f32.mrf.mxu0
        %3716 = vmatprep.mubr.bf16.mxu0 0
        %3717 = vmatmul.mubr.bf16.gmra.mxu0 %v3578
        %v3718 = vpop.f32.mrf.mxu0
        %v3719 = vadd.f32 %v3434, %v3718
        %v3720 = vpop.f32.mrf.mxu0
        %v3721 = vpop.f32.mrf.mxu0
        %v3722 = vadd.f32 %v3434, %v3721
        %v3723 = vpop.f32.mrf.mxu0
        %3724 = vmatprep.mubr.bf16.mxu0 0
        %3725 = vmatmul.mubr.bf16.gmra.mxu0 %v3581
        %v3726 = vpop.f32.mrf.mxu0
        %v3727 = vadd.f32 %v3434, %v3726
        %v3728 = vpop.f32.mrf.mxu0
        %v3729 = vpop.f32.mrf.mxu0
        %v3730 = vadd.f32 %v3434, %v3729
        %v3731 = vpop.f32.mrf.mxu0
        %3732 = vmatprep.mubr.bf16.mxu0 0
        %3733 = vmatmul.mubr.bf16.gmra.mxu0 %v3584
        %v3734 = vpop.f32.mrf.mxu0
        %v3735 = vadd.f32 %v3434, %v3734
        %v3736 = vpop.f32.mrf.mxu0
        %v3737 = vpop.f32.mrf.mxu0
        %v3738 = vadd.f32 %v3434, %v3737
        %v3739 = vpop.f32.mrf.mxu0
        %3740 = vmatprep.mubr.bf16.mxu0 0
        %3741 = vmatmul.mubr.bf16.gmra.mxu0 %v3587
        %v3742 = vpop.f32.mrf.mxu0
        %v3743 = vadd.f32 %v3434, %v3742
        %v3744 = vpop.f32.mrf.mxu0
        %v3745 = vpop.f32.mrf.mxu0
        %v3746 = vadd.f32 %v3434, %v3745
        %v3747 = vpop.f32.mrf.mxu0
        %3748 = vmatprep.mubr.bf16.mxu0 0
        %3749 = vmatmul.mubr.bf16.gmra.mxu0 %v3590
        %v3750 = vpop.f32.mrf.mxu0
        %v3751 = vadd.f32 %v3434, %v3750
        %v3752 = vpop.f32.mrf.mxu0
        %v3753 = vpop.f32.mrf.mxu0
        %v3754 = vadd.f32 %v3434, %v3753
        %v3755 = vpop.f32.mrf.mxu0
        %3756 = vdwg.mxu0
        %v3757 = vmax.f32 %v3631, 0.0
        %v3758 = vmax.f32 %v3634, 0.0
        %v3759 = vmax.f32 %v3639, 0.0
        %v3760 = vmax.f32 %v3642, 0.0
        %v3761 = vmax.f32 %v3647, 0.0
        %v3762 = vmax.f32 %v3650, 0.0
        %v3763 = vmax.f32 %v3655, 0.0
        %v3764 = vmax.f32 %v3658, 0.0
        %v3765 = vmax.f32 %v3663, 0.0
        %v3766 = vmax.f32 %v3666, 0.0
        %v3767 = vmax.f32 %v3671, 0.0
        %v3768 = vmax.f32 %v3674, 0.0
        %v3769 = vmax.f32 %v3679, 0.0
        %v3770 = vmax.f32 %v3682, 0.0
        %v3771 = vmax.f32 %v3687, 0.0
        %v3772 = vmax.f32 %v3690, 0.0
        %v3773 = vmax.f32 %v3695, 0.0
        %v3774 = vmax.f32 %v3698, 0.0
        %v3775 = vmax.f32 %v3703, 0.0
        %v3776 = vmax.f32 %v3706, 0.0
        %v3777 = vmax.f32 %v3711, 0.0
        %v3778 = vmax.f32 %v3714, 0.0
        %v3779 = vmax.f32 %v3719, 0.0
        %v3780 = vmax.f32 %v3722, 0.0
        %v3781 = vmax.f32 %v3727, 0.0
        %v3782 = vmax.f32 %v3730, 0.0
        %v3783 = vmax.f32 %v3735, 0.0
        %v3784 = vmax.f32 %v3738, 0.0
        %v3785 = vmax.f32 %v3743, 0.0
        %v3786 = vmax.f32 %v3746, 0.0
        %v3787 = vmax.f32 %v3751, 0.0
        %v3788 = vmax.f32 %v3754, 0.0
        %v3789 = vpack.c.bf16 %v3758, %v3757
        %v3790 = vpack.c.bf16 %v3760, %v3759
        %v3791 = vpack.c.bf16 %v3762, %v3761
        %v3792 = vpack.c.bf16 %v3764, %v3763
        %v3793 = vpack.c.bf16 %v3766, %v3765
        %v3794 = vpack.c.bf16 %v3768, %v3767
        %v3795 = vpack.c.bf16 %v3770, %v3769
        %v3796 = vpack.c.bf16 %v3772, %v3771
        %v3797 = vpack.c.bf16 %v3774, %v3773
        %v3798 = vpack.c.bf16 %v3776, %v3775
        %v3799 = vpack.c.bf16 %v3778, %v3777
        %v3800 = vpack.c.bf16 %v3780, %v3779
        %v3801 = vpack.c.bf16 %v3782, %v3781
        %v3802 = vpack.c.bf16 %v3784, %v3783
        %v3803 = vpack.c.bf16 %v3786, %v3785
        %v3804 = vpack.c.bf16 %v3788, %v3787
        %v3821 = vunpack.c.l.b16 %v3789
        %v3822 = vunpack.c.h.b16 %v3789
        %v3823 = vunpack.c.l.b16 %v3790
        %v3824 = vunpack.c.h.b16 %v3790
        %v3825 = vunpack.c.l.b16 %v3791
        %v3826 = vunpack.c.h.b16 %v3791
        %v3827 = vunpack.c.l.b16 %v3792
        %v3828 = vunpack.c.h.b16 %v3792
        %v3829 = vunpack.c.l.b16 %v3793
        %v3830 = vunpack.c.h.b16 %v3793
        %v3831 = vunpack.c.l.b16 %v3794
        %v3832 = vunpack.c.h.b16 %v3794
        %v3833 = vunpack.c.l.b16 %v3795
        %v3834 = vunpack.c.h.b16 %v3795
        %v3835 = vunpack.c.l.b16 %v3796
        %v3836 = vunpack.c.h.b16 %v3796
        %v3837 = vunpack.c.l.b16 %v3797
        %v3838 = vunpack.c.h.b16 %v3797
        %v3839 = vunpack.c.l.b16 %v3798
        %v3840 = vunpack.c.h.b16 %v3798
        %v3841 = vunpack.c.l.b16 %v3799
        %v3842 = vunpack.c.h.b16 %v3799
        %v3843 = vunpack.c.l.b16 %v3800
        %v3844 = vunpack.c.h.b16 %v3800
        %v3845 = vunpack.c.l.b16 %v3801
        %v3846 = vunpack.c.h.b16 %v3801
        %v3847 = vunpack.c.l.b16 %v3802
        %v3848 = vunpack.c.h.b16 %v3802
        %v3849 = vunpack.c.l.b16 %v3803
        %v3850 = vunpack.c.h.b16 %v3803
        %v3851 = vunpack.c.l.b16 %v3804
        %v3852 = vunpack.c.h.b16 %v3804
        %v3853 = vpack.c.b16 %v3821, %v3821
        %v3854 = vpack.c.b16 %v3822, %v3822
        %v3855 = vpack.c.b16 %v3823, %v3823
        %v3856 = vpack.c.b16 %v3824, %v3824
        %v3857 = vpack.c.b16 %v3825, %v3825
        %v3858 = vpack.c.b16 %v3826, %v3826
        %v3859 = vpack.c.b16 %v3827, %v3827
        %v3860 = vpack.c.b16 %v3828, %v3828
        %v3861 = vpack.c.b16 %v3829, %v3829
        %v3862 = vpack.c.b16 %v3830, %v3830
        %v3863 = vpack.c.b16 %v3831, %v3831
        %v3864 = vpack.c.b16 %v3832, %v3832
        %v3865 = vpack.c.b16 %v3833, %v3833
        %v3866 = vpack.c.b16 %v3834, %v3834
        %v3867 = vpack.c.b16 %v3835, %v3835
        %v3868 = vpack.c.b16 %v3836, %v3836
        %v3869 = vpack.c.b16 %v3837, %v3837
        %v3870 = vpack.c.b16 %v3838, %v3838
        %v3871 = vpack.c.b16 %v3839, %v3839
        %v3872 = vpack.c.b16 %v3840, %v3840
        %v3873 = vpack.c.b16 %v3841, %v3841
        %v3874 = vpack.c.b16 %v3842, %v3842
        %v3875 = vpack.c.b16 %v3843, %v3843
        %v3876 = vpack.c.b16 %v3844, %v3844
        %v3877 = vpack.c.b16 %v3845, %v3845
        %v3878 = vpack.c.b16 %v3846, %v3846
        %v3879 = vpack.c.b16 %v3847, %v3847
        %v3880 = vpack.c.b16 %v3848, %v3848
        %v3881 = vpack.c.b16 %v3849, %v3849
        %v3882 = vpack.c.b16 %v3850, %v3850
        %v3883 = vpack.c.b16 %v3851, %v3851
        %v3884 = vpack.c.b16 %v3852, %v3852
        %3917 = vst [vmem:[%s210] sm:$0xf] %v3853
        %3918 = vst [vmem:[%s210 + $0x4] sm:$0xf] %v3854
        %3919 = vst [vmem:[%s210 + $0x8] sm:$0xf] %v3855
        %3920 = vst [vmem:[%s210 + $0xc] sm:$0xf] %v3856
        %3921 = vst [vmem:[%s210 + $0x10] sm:$0xf] %v3857
        %3922 = vst [vmem:[%s210 + $0x14] sm:$0xf] %v3858
        %3923 = vst [vmem:[%s210 + $0x18] sm:$0xf] %v3859
        %3924 = vst [vmem:[%s210 + $0x1c] sm:$0xf] %v3860
        %3925 = vst [vmem:[%s210 + $0x20] sm:$0xf] %v3861
        %3926 = vst [vmem:[%s210 + $0x24] sm:$0xf] %v3862
        %3927 = vst [vmem:[%s210 + $0x28] sm:$0xf] %v3863
        %3928 = vst [vmem:[%s210 + $0x2c] sm:$0xf] %v3864
        %3929 = vst [vmem:[%s210 + $0x30] sm:$0xf] %v3865
        %3930 = vst [vmem:[%s210 + $0x34] sm:$0xf] %v3866
        %3931 = vst [vmem:[%s210 + $0x38] sm:$0xf] %v3867
        %3932 = vst [vmem:[%s210 + $0x3c] sm:$0xf] %v3868
        %3933 = vst [vmem:[%s210 + $0x40] sm:$0xf] %v3869
        %3934 = vst [vmem:[%s210 + $0x44] sm:$0xf] %v3870
        %3935 = vst [vmem:[%s210 + $0x48] sm:$0xf] %v3871
        %3936 = vst [vmem:[%s210 + $0x4c] sm:$0xf] %v3872
        %3937 = vst [vmem:[%s210 + $0x50] sm:$0xf] %v3873
        %3938 = vst [vmem:[%s210 + $0x54] sm:$0xf] %v3874
        %3939 = vst [vmem:[%s210 + $0x58] sm:$0xf] %v3875
        %3940 = vst [vmem:[%s210 + $0x5c] sm:$0xf] %v3876
        %3941 = vst [vmem:[%s210 + $0x60] sm:$0xf] %v3877
        %3942 = vst [vmem:[%s210 + $0x64] sm:$0xf] %v3878
        %3943 = vst [vmem:[%s210 + $0x68] sm:$0xf] %v3879
        %3944 = vst [vmem:[%s210 + $0x6c] sm:$0xf] %v3880
        %3945 = vst [vmem:[%s210 + $0x70] sm:$0xf] %v3881
        %3946 = vst [vmem:[%s210 + $0x74] sm:$0xf] %v3882
        %3947 = vst [vmem:[%s210 + $0x78] sm:$0xf] %v3883
        %3948 = vst [vmem:[%s210 + $0x7c] sm:$0xf] %v3884
        %s3949 = sand.u32 %s126, 1
        %s3950 = scalar_lea.sflag [#allocation4], %s3949
        %s3951 = sand.u32 %s126, 1
        %s3952 = smul.addr %s3951, 128
        %s3953 = scalar_lea.vmem [#allocation3], %s3952
        // Predicated region
        $region33: #{tpu_custom_call.1} parent=31 // pred_check
          %p3954 = pneg %p136
        $region34: #{tpu_custom_call.1} parent=31 // pred_check_branch
          %3956 = sbr.rel (%p3954) target = $region36
        $region35: #{tpu_custom_call.1} parent=31 // pred_region
          %s3957 = smul.u32 16, %s24
          %s3959 = ssub.s32 2048, 2048
          %3960 = vsyncadd %s3950, %s3959
          %s3961 = smul.addr %s3957, 2
          %s3962 = sadd.s32 %s23, %s3961
          %s3963 = smul.addr %s22, 32
          %s3964 = sadd.s32 %s3962, %s3963
          %s3965 = smul.addr %s3964, 64
          %s3966 = scalar_lea.hbm %s3, %s3965
          %s3967 = sshll.u32 %s3953, 4
          %s3968 = int_to_ptr.vmem [resolvable:$true] %s3967
          %3973 = dma.vmem_to_hbm [thread:$0]  %s3968, 2048, %s3966, %s3950, 64, 64, 4
        $region36: #{tpu_custom_call.1} parent=31 // pred_fallthru
          _
      $region32: #{tpu_custom_call.1} parent=5 // pred_fallthru
        _
      %p3974 = scmp.le.s32.totalorder 2, %s12
      // Predicated region
      $region37: #{tpu_custom_call.1} parent=5 // pred_check
        %p3975 = pneg %p3974
      $region38: #{tpu_custom_call.1} parent=5 // pred_check_branch
        %3977 = sbr.rel (%p3975) target = $region40
      $region39: #{tpu_custom_call.1} parent=5 // pred_region
        %s3978 = ssub.s32 %s12, 2
        // Predicated region
        $region41: #{tpu_custom_call.1} parent=39 // pred_check
          %p3979 = pneg %p142
        $region42: #{tpu_custom_call.1} parent=39 // pred_check_branch
          %3981 = sbr.rel (%p3979) target = $region44
        $region43: #{tpu_custom_call.1} parent=39 // pred_region
          %s3982 = sand.u32 %s127, 1
          %s3983 = scalar_lea.sflag [#allocation4], %s3982
          %s3984 = sand.u32 %s127, 1
          %s3985 = smul.addr %s3984, 128
          %s3986 = scalar_lea.vmem [#allocation3], %s3985
          %3987 = dma.done %s3983, 2048
        $region44: #{tpu_custom_call.1} parent=39 // pred_fallthru
          _
      $region40: #{tpu_custom_call.1} parent=5 // pred_fallthru
        _
    $region6: #{tpu_custom_call.1} parent=1 // loop_footer
      %s16 = sadd.s32 1, %s12
    $region7: #{tpu_custom_call.1} parent=1 // loop_footer_branch
      %11 = sbr.rel target = $region3
    $region8: #{tpu_custom_call.1} parent=1 // loop_exit
      _
    %3988 = vsyncpa [#allocation4], 1
    %s3989 = scalar_lea.sflag [#allocation4], 1
    %3990 = vsyncpa %s3989, 1

// kernel: tpu_custom_call.1
$region0: #{tpu_custom_call.1}
  #allocation0 [shape = 'u32[]', space=smem, size = 0x4, offset = 0x4, fixed_abs, tag = 'smem constant byte address 0x4 - core index']
  #allocation1 [shape = 'u32[144,128]{1,0:T(1,128)}', space=vmem, size = 0x12000, scoped, tag = 'internal scratch']
  #allocation2 [shape = 'bf16[16,16,72]{2,1,0:T(8,128)(2,1)}', space=vmem, size = 0x10000, scoped, tag = 'scratch operand']
  %s0 = inlined_call_operand.vmem [shape: bf16[2,18,18,8], index: 0, kind: input, shape index: {}]
  %s1 = inlined_call_operand.vmem [shape: bf16[72,128], index: 1, kind: input, shape index: {}]
  %s2 = inlined_call_operand.vmem [shape: f32[1,128], index: 2, kind: input, shape index: {}]
  %s3 = inlined_call_operand.hbm [shape: bf16[2,16,16,128], index: 3, kind: output, shape index: {}]
  %s4 = sld [smem:[#allocation0]]
  $region45: #{tpu_custom_call.1} parent=0
    _
  %s6 = ssub.s32 1, %s4
  %s7 = scalar_select 0, %s6, %s4
  $region1: #{tpu_custom_call.1} parent=0
    #allocation3 [shape = 'u8[131072]{0}', space=vmem, size = 0x20000, scoped, tag = 'output window, operand 0']
    #allocation4 [shape = 's32[2]{0}', space=sflag, size = 0x8, scoped, tag = 'scoped memory for tpu_custom_call.1']
    %8 = vsyncpa [#allocation4], 0
    %s9 = scalar_lea.sflag [#allocation4], 1
    %10 = vsyncpa %s9, 0
    loop: start=0, step=1, limit=4
    $region2: #{tpu_custom_call.1} parent=1 // loop_pre_header
      _
    $region3: #{tpu_custom_call.1} parent=1 // loop_header
      %s12 = sphi 0, %s16
      %p13 = scmp.ge.s32.totalorder %s12, 4
      %s19 = sphi 0, %s38
      %s20 = sphi 0, %s34
      %s21 = sphi 0, %s30
      %s22 = sphi 0, %s19
      %s23 = sphi 0, %s20
      %s24 = sphi 0, %s21
      %s25 = sphi 0, %s22
      %s26 = sphi 0, %s23
      %s27 = sphi 0, %s24
      %s41 = sphi 0, %s43
      %s44 = sphi 0, %s41
      %s45 = sphi 0, %s44
      %s61 = sphi 0, %s45
      %s67 = sphi 0, %s69
      %s70 = sphi 0, %s67
      %s71 = sphi 0, %s70
      %s87 = sphi 0, %s71
      %s93 = sphi 0, %s95
      %s96 = sphi 0, %s93
      %s97 = sphi 0, %s96
      %s113 = sphi 0, %s97
      %s123 = sphi 0, %s125
      %s126 = sphi 0, %s123
      %s127 = sphi 0, %s126
      %s143 = sphi 0, %s127
    $region4: #{tpu_custom_call.1} parent=1 // loop_header_branch
      %15 = sbr.rel (%p13) target = $region8
    $region5: #{tpu_custom_call.1} parent=1 // loop_body
      %s17 = ssub.s32 %s12, 1
      %s18 = ssub.s32 %s12, 2
      %s28 = sadd.s32 1, %s21
      %p29 = scmp.ge.s32.totalorder %s28, 1
      %s30 = scalar_select %p29, 0, %s28
      %s31 = sadd.s32 1, %s20
      %s32 = scalar_select %p29, %s31, %s20
      %p33 = scmp.ge.s32.totalorder %s32, 1
      %s34 = scalar_select %p33, 0, %s32
      %s35 = sadd.s32 1, %s19
      %s36 = scalar_select %p33, %s35, %s19
      %p37 = scmp.ge.s32.totalorder %s36, 2
      %s38 = scalar_select %p37, 0, %s36
      %s39 = ssub.s32 %s19, %s38
      %p40 = scmp.eq.s32.totalorder %s39, 0
      %s42 = sadd.s32 %s41, 1
      %s43 = scalar_select %p40, %s41, %s42
      %p46 = pneg %p40
      %p47 = scmp.eq.s32.totalorder %s12, 1
      %p48 = por %p46, %p47
      %p49 = scmp.ne.s32.totalorder %s41, %s44
      %p50 = scmp.eq.s32.totalorder %s12, 0
      %p51 = por %p49, %p50
      %p52 = scmp.ne.s32.totalorder %s41, %s44
      %p53 = scmp.eq.s32.totalorder %s17, 1
      %p54 = por %p52, %p53
      %p55 = scmp.ne.s32.totalorder %s44, %s45
      %p56 = scmp.eq.s32.totalorder %s17, 0
      %p57 = por %p55, %p56
      %p58 = scmp.ne.s32.totalorder %s44, %s45
      %p59 = scmp.eq.s32.totalorder %s18, 1
      %p60 = por %p58, %p59
      %p62 = scmp.ne.s32.totalorder %s45, %s61
      %p63 = scmp.eq.s32.totalorder %s18, 0
      %p64 = por %p62, %p63
      %s65 = ssub.s32 %s20, %s34
      %p66 = scmp.eq.s32.totalorder %s65, 0
      %s68 = sadd.s32 %s67, 1
      %s69 = scalar_select %p66, %s67, %s68
      %p72 = pneg %p66
      %p73 = scmp.eq.s32.totalorder %s12, 1
      %p74 = por %p72, %p73
      %p75 = scmp.ne.s32.totalorder %s67, %s70
      %p76 = scmp.eq.s32.totalorder %s12, 0
      %p77 = por %p75, %p76
      %p78 = scmp.ne.s32.totalorder %s67, %s70
      %p79 = scmp.eq.s32.totalorder %s17, 1
      %p80 = por %p78, %p79
      %p81 = scmp.ne.s32.totalorder %s70, %s71
      %p82 = scmp.eq.s32.totalorder %s17, 0
      %p83 = por %p81, %p82
      %p84 = scmp.ne.s32.totalorder %s70, %s71
      %p85 = scmp.eq.s32.totalorder %s18, 1
      %p86 = por %p84, %p85
      %p88 = scmp.ne.s32.totalorder %s71, %s87
      %p89 = scmp.eq.s32.totalorder %s18, 0
      %p90 = por %p88, %p89
      %s91 = ssub.s32 %s20, %s34
      %p92 = scmp.eq.s32.totalorder %s91, 0
      %s94 = sadd.s32 %s93, 1
      %s95 = scalar_select %p92, %s93, %s94
      %p98 = pneg %p92
      %p99 = scmp.eq.s32.totalorder %s12, 1
      %p100 = por %p98, %p99
      %p101 = scmp.ne.s32.totalorder %s93, %s96
      %p102 = scmp.eq.s32.totalorder %s12, 0
      %p103 = por %p101, %p102
      %p104 = scmp.ne.s32.totalorder %s93, %s96
      %p105 = scmp.eq.s32.totalorder %s17, 1
      %p106 = por %p104, %p105
      %p107 = scmp.ne.s32.totalorder %s96, %s97
      %p108 = scmp.eq.s32.totalorder %s17, 0
      %p109 = por %p107, %p108
      %p110 = scmp.ne.s32.totalorder %s96, %s97
      %p111 = scmp.eq.s32.totalorder %s18, 1
      %p112 = por %p110, %p111
      %p114 = scmp.ne.s32.totalorder %s97, %s113
      %p115 = scmp.eq.s32.totalorder %s18, 0
      %p116 = por %p114, %p115
      %s117 = ssub.s32 %s19, %s38
      %s118 = ssub.s32 %s21, %s30
      %s119 = sor.u32 %s117, %s118
      %s120 = ssub.s32 %s20, %s34
      %s121 = sor.u32 %s119, %s120
      %p122 = scmp.eq.s32.totalorder %s121, 0
      %s124 = sadd.s32 %s123, 1
      %s125 = scalar_select %p122, %s123, %s124
      %p128 = pneg %p122
      %p129 = scmp.eq.s32.totalorder %s12, 1
      %p130 = por %p128, %p129
      %p131 = scmp.ne.s32.totalorder %s123, %s126
      %p132 = scmp.eq.s32.totalorder %s12, 0
      %p133 = por %p131, %p132
      %p134 = scmp.ne.s32.totalorder %s123, %s126
      %p135 = scmp.eq.s32.totalorder %s17, 1
      %p136 = por %p134, %p135
      %p137 = scmp.ne.s32.totalorder %s126, %s127
      %p138 = scmp.eq.s32.totalorder %s17, 0
      %p139 = por %p137, %p138
      %p140 = scmp.ne.s32.totalorder %s126, %s127
      %p141 = scmp.eq.s32.totalorder %s18, 1
      %p142 = por %p140, %p141
      %p144 = scmp.ne.s32.totalorder %s127, %s143
      %p145 = scmp.eq.s32.totalorder %s18, 0
      %p146 = por %p144, %p145
      %p147 = scmp.le.s32.totalorder 1, %s12
      %p148 = scmp.lt.s32.totalorder %s12, 3
      %p149 = pnand %p147, %p148
      %p150 = pneg %p149
      // Predicated region
      $region9: #{tpu_custom_call.1} parent=5 // pred_check
        _
      $region10: #{tpu_custom_call.1} parent=5 // pred_check_branch
        %152 = sbr.rel (%p149) target = $region12
      $region11: #{tpu_custom_call.1} parent=5 // pred_region
        %s153 = ssub.s32 %s12, 1
        // Predicated region
        $region13: #{tpu_custom_call.1} parent=11 // pred_check
          %p154 = pneg %p83
        $region14: #{tpu_custom_call.1} parent=11 // pred_check_branch
          %156 = sbr.rel (%p154) target = $region16
        $region15: #{tpu_custom_call.1} parent=11 // pred_region
          %p157 = scmp.lt.s32.totalorder %s23, 0
          %s158 = scalar_select %p157, %s23, 0
          %s159 = smul.addr %s158, 4
          %s160 = scalar_lea.vmem %s1, %s159
        $region16: #{tpu_custom_call.1} parent=11 // pred_fallthru
          _
        // Predicated region
        $region17: #{tpu_custom_call.1} parent=11 // pred_check
          %p161 = pneg %p109
        $region18: #{tpu_custom_call.1} parent=11 // pred_check_branch
          %163 = sbr.rel (%p161) target = $region20
        $region19: #{tpu_custom_call.1} parent=11 // pred_region
          %p164 = scmp.lt.s32.totalorder %s23, 0
          %s165 = scalar_select %p164, %s23, 0
          %s166 = scalar_lea.vmem %s2, %s165
        $region20: #{tpu_custom_call.1} parent=11 // pred_fallthru
          _
      $region12: #{tpu_custom_call.1} parent=5 // pred_fallthru
        _
      %p167 = scmp.lt.s32.totalorder %s12, 2
      // Predicated region
      $region21: #{tpu_custom_call.1} parent=5 // pred_check
        %p168 = pneg %p167
      $region22: #{tpu_custom_call.1} parent=5 // pred_check_branch
        %170 = sbr.rel (%p168) target = $region24
      $region23: #{tpu_custom_call.1} parent=5 // pred_region
        // Predicated region
        $region25: #{tpu_custom_call.1} parent=23 // pred_check
          %p171 = pneg %p51
        $region26: #{tpu_custom_call.1} parent=23 // pred_check_branch
          %173 = sbr.rel (%p171) target = $region28
        $region27: #{tpu_custom_call.1} parent=23 // pred_region
          %p174 = scmp.lt.s32.totalorder %s19, 1
          %s175 = scalar_select %p174, %s19, 1
          %s176 = smul.addr %s175, 54
          %s177 = smul.addr %s176, 4
          %s178 = scalar_lea.vmem %s0, %s177
        $region28: #{tpu_custom_call.1} parent=23 // pred_fallthru
          _
      $region24: #{tpu_custom_call.1} parent=5 // pred_fallthru
        _
      %p179 = scmp.le.s32.totalorder 1, %s12
      %p180 = scmp.lt.s32.totalorder %s12, 3
      %p181 = pnand %p179, %p180
      %p182 = pneg %p181
      // Predicated region
      $region29: #{tpu_custom_call.1} parent=5 // pred_check
        _
      $region30: #{tpu_custom_call.1} parent=5 // pred_check_branch
        %184 = sbr.rel (%p181) target = $region32
      $region31: #{tpu_custom_call.1} parent=5 // pred_region
        %s185 = ssub.s32 %s12, 1
        %p186 = scmp.lt.s32.totalorder %s22, 1
        %s187 = scalar_select %p186, %s22, 1
        %s188 = smul.addr %s187, 54
        %s189 = smul.addr %s188, 4
        %s190 = scalar_lea.vmem %s0, %s189
        %p191 = pneg %p57
        %p192 = pneg %p54
        %p193 = scmp.lt.s32.totalorder %s23, 0
        %s194 = scalar_select %p193, %s23, 0
        %s195 = smul.addr %s194, 4
        %s196 = scalar_lea.vmem %s1, %s195
        %p197 = pneg %p83
        %p198 = pneg %p80
        %p199 = scmp.lt.s32.totalorder %s23, 0
        %s200 = scalar_select %p199, %s23, 0
        %s201 = scalar_lea.vmem %s2, %s200
        %p202 = pneg %p109
        %p203 = pneg %p106
        %p204 = pneg %p139
        %p205 = pneg %p136
        %s206 = sand.u32 %s126, 1
        %s207 = scalar_lea.sflag [#allocation4], %s206
        %s208 = sand.u32 %s126, 1
        %s209 = smul.addr %s208, 128
        %s210 = scalar_lea.vmem [#allocation3], %s209
        %p211 = scmp.lt.s32.totalorder %s22, 1
        %s212 = scalar_select %p211, %s22, 1
        %s213 = smul.addr %s212, 54
        %s214 = smul.addr %s213, 4
        %s215 = scalar_lea.vmem %s0, %s214
        %p216 = scmp.lt.s32.totalorder %s23, 0
        %s217 = scalar_select %p216, %s23, 0
        %s218 = smul.addr %s217, 4
        %s219 = scalar_lea.vmem %s1, %s218
        %p220 = scmp.lt.s32.totalorder %s23, 0
        %s221 = scalar_select %p220, %s23, 0
        %s222 = scalar_lea.vmem %s2, %s221
        %s223 = smul.u32 16, %s24
        %s225 = smul.u32 %s24, 16
        %s226 = smul.u32 %s225, 3
        %s227 = smul.addr %s226, 4
        %s228 = scalar_lea.vmem %s215, %s227
        %v229 = vld [vmem:[%s228] sm:$0xf]
        %v230 = vld [vmem:[%s228 + $0x4] sm:$0xf]
        %v231 = vld [vmem:[%s228 + $0xc] sm:$0xf]
        %v232 = vld [vmem:[%s228 + $0x10] sm:$0xf]
        %v233 = vld [vmem:[%s228 + $0x18] sm:$0xf]
        %v234 = vld [vmem:[%s228 + $0x1c] sm:$0xf]
        %v235 = vld [vmem:[%s228 + $0x24] sm:$0xf]
        %v236 = vld [vmem:[%s228 + $0x28] sm:$0xf]
        %v237 = vld [vmem:[%s228 + $0x30] sm:$0xf]
        %v238 = vld [vmem:[%s228 + $0x34] sm:$0xf]
        %v239 = vld [vmem:[%s228 + $0x3c] sm:$0xf]
        %v240 = vld [vmem:[%s228 + $0x40] sm:$0xf]
        %v241 = vld [vmem:[%s228 + $0x48] sm:$0xf]
        %v242 = vld [vmem:[%s228 + $0x4c] sm:$0xf]
        %v243 = vld [vmem:[%s228 + $0x54] sm:$0xf]
        %v244 = vld [vmem:[%s228 + $0x58] sm:$0xf]
        %v245 = vld [vmem:[%s228 + $0x60] sm:$0xf]
        %v246 = vld [vmem:[%s228 + $0x64] sm:$0xf]
        %v247 = vld [vmem:[%s228 + $0x6c] sm:$0xf]
        %v248 = vld [vmem:[%s228 + $0x70] sm:$0xf]
        %v249 = vld [vmem:[%s228 + $0x78] sm:$0xf]
        %v250 = vld [vmem:[%s228 + $0x7c] sm:$0xf]
        %v251 = vld [vmem:[%s228 + $0x84] sm:$0xf]
        %v252 = vld [vmem:[%s228 + $0x88] sm:$0xf]
        %v253 = vld [vmem:[%s228 + $0x90] sm:$0xf]
        %v254 = vld [vmem:[%s228 + $0x94] sm:$0xf]
        %v255 = vld [vmem:[%s228 + $0x9c] sm:$0xf]
        %v256 = vld [vmem:[%s228 + $0xa0] sm:$0xf]
        %v257 = vld [vmem:[%s228 + $0xa8] sm:$0xf]
        %v258 = vld [vmem:[%s228 + $0xac] sm:$0xf]
        %v259 = vld [vmem:[%s228 + $0xb4] sm:$0xf]
        %v260 = vld [vmem:[%s228 + $0xb8] sm:$0xf]
        %vm261 = vcmask 60416
        %262 = vst.msk [vmem:[#allocation2] sm:$0xf] %vm261, %v229
        %263 = vst.msk [vmem:[#allocation2 + $0x4] sm:$0xf] %vm261, %v230
        %264 = vst.msk [vmem:[#allocation2 + $0x8] sm:$0xf] %vm261, %v231
        %265 = vst.msk [vmem:[#allocation2 + $0xc] sm:$0xf] %vm261, %v232
        %266 = vst.msk [vmem:[#allocation2 + $0x10] sm:$0xf] %vm261, %v233
        %267 = vst.msk [vmem:[#allocation2 + $0x14] sm:$0xf] %vm261, %v234
        %268 = vst.msk [vmem:[#allocation2 + $0x18] sm:$0xf] %vm261, %v235
        %269 = vst.msk [vmem:[#allocation2 + $0x1c] sm:$0xf] %vm261, %v236
        %270 = vst.msk [vmem:[#allocation2 + $0x20] sm:$0xf] %vm261, %v237
        %271 = vst.msk [vmem:[#allocation2 + $0x24] sm:$0xf] %vm261, %v238
        %272 = vst.msk [vmem:[#allocation2 + $0x28] sm:$0xf] %vm261, %v239
        %273 = vst.msk [vmem:[#allocation2 + $0x2c] sm:$0xf] %vm261, %v240
        %274 = vst.msk [vmem:[#allocation2 + $0x30] sm:$0xf] %vm261, %v241
        %275 = vst.msk [vmem:[#allocation2 + $0x34] sm:$0xf] %vm261, %v242
        %276 = vst.msk [vmem:[#allocation2 + $0x38] sm:$0xf] %vm261, %v243
        %277 = vst.msk [vmem:[#allocation2 + $0x3c] sm:$0xf] %vm261, %v244
        %278 = vst.msk [vmem:[#allocation2 + $0x40] sm:$0xf] %vm261, %v245
        %279 = vst.msk [vmem:[#allocation2 + $0x44] sm:$0xf] %vm261, %v246
        %280 = vst.msk [vmem:[#allocation2 + $0x48] sm:$0xf] %vm261, %v247
        %281 = vst.msk [vmem:[#allocation2 + $0x4c] sm:$0xf] %vm261, %v248
        %282 = vst.msk [vmem:[#allocation2 + $0x50] sm:$0xf] %vm261, %v249
        %283 = vst.msk [vmem:[#allocation2 + $0x54] sm:$0xf] %vm261, %v250
        %284 = vst.msk [vmem:[#allocation2 + $0x58] sm:$0xf] %vm261, %v251
        %285 = vst.msk [vmem:[#allocation2 + $0x5c] sm:$0xf] %vm261, %v252
        %286 = vst.msk [vmem:[#allocation2 + $0x60] sm:$0xf] %vm261, %v253
        %287 = vst.msk [vmem:[#allocation2 + $0x64] sm:$0xf] %vm261, %v254
        %288 = vst.msk [vmem:[#allocation2 + $0x68] sm:$0xf] %vm261, %v255
        %289 = vst.msk [vmem:[#allocation2 + $0x6c] sm:$0xf] %vm261, %v256
        %290 = vst.msk [vmem:[#allocation2 + $0x70] sm:$0xf] %vm261, %v257
        %291 = vst.msk [vmem:[#allocation2 + $0x74] sm:$0xf] %vm261, %v258
        %292 = vst.msk [vmem:[#allocation2 + $0x78] sm:$0xf] %vm261, %v259
        %293 = vst.msk [vmem:[#allocation2 + $0x7c] sm:$0xf] %vm261, %v260
        %s294 = sadd.s32 %s225, 1
        %s295 = smul.u32 %s294, 3
        %s296 = smul.addr %s295, 4
        %s297 = scalar_lea.vmem %s215, %s296
        %v298 = vld [vmem:[%s297] sm:$0xf]
        %v299 = vld [vmem:[%s297 + $0x4] sm:$0xf]
        %v300 = vld [vmem:[%s297 + $0xc] sm:$0xf]
        %v301 = vld [vmem:[%s297 + $0x10] sm:$0xf]
        %v302 = vld [vmem:[%s297 + $0x18] sm:$0xf]
        %v303 = vld [vmem:[%s297 + $0x1c] sm:$0xf]
        %v304 = vld [vmem:[%s297 + $0x24] sm:$0xf]
        %v305 = vld [vmem:[%s297 + $0x28] sm:$0xf]
        %v306 = vld [vmem:[%s297 + $0x30] sm:$0xf]
        %v307 = vld [vmem:[%s297 + $0x34] sm:$0xf]
        %v308 = vld [vmem:[%s297 + $0x3c] sm:$0xf]
        %v309 = vld [vmem:[%s297 + $0x40] sm:$0xf]
        %v310 = vld [vmem:[%s297 + $0x48] sm:$0xf]
        %v311 = vld [vmem:[%s297 + $0x4c] sm:$0xf]
        %v312 = vld [vmem:[%s297 + $0x54] sm:$0xf]
        %v313 = vld [vmem:[%s297 + $0x58] sm:$0xf]
        %v314 = vld [vmem:[%s297 + $0x60] sm:$0xf]
        %v315 = vld [vmem:[%s297 + $0x64] sm:$0xf]
        %v316 = vld [vmem:[%s297 + $0x6c] sm:$0xf]
        %v317 = vld [vmem:[%s297 + $0x70] sm:$0xf]
        %v318 = vld [vmem:[%s297 + $0x78] sm:$0xf]
        %v319 = vld [vmem:[%s297 + $0x7c] sm:$0xf]
        %v320 = vld [vmem:[%s297 + $0x84] sm:$0xf]
        %v321 = vld [vmem:[%s297 + $0x88] sm:$0xf]
        %v322 = vld [vmem:[%s297 + $0x90] sm:$0xf]
        %v323 = vld [vmem:[%s297 + $0x94] sm:$0xf]
        %v324 = vld [vmem:[%s297 + $0x9c] sm:$0xf]
        %v325 = vld [vmem:[%s297 + $0xa0] sm:$0xf]
        %v326 = vld [vmem:[%s297 + $0xa8] sm:$0xf]
        %v327 = vld [vmem:[%s297 + $0xac] sm:$0xf]
        %v328 = vld [vmem:[%s297 + $0xb4] sm:$0xf]
        %v329 = vld [vmem:[%s297 + $0xb8] sm:$0xf]
        %362 = vrot.lane.b32.xlu0 %v298, 8
        %v363 = vpop.permute.xlu0 %362
        %364 = vrot.lane.b32.xlu0 %v299, 8
        %v365 = vpop.permute.xlu0 %364
        %366 = vrot.lane.b32.xlu0 %v300, 8
        %v367 = vpop.permute.xlu0 %366
        %368 = vrot.lane.b32.xlu0 %v301, 8
        %v369 = vpop.permute.xlu0 %368
        %370 = vrot.lane.b32.xlu0 %v302, 8
        %v371 = vpop.permute.xlu0 %370
        %372 = vrot.lane.b32.xlu0 %v303, 8
        %v373 = vpop.permute.xlu0 %372
        %374 = vrot.lane.b32.xlu0 %v304, 8
        %v375 = vpop.permute.xlu0 %374
        %376 = vrot.lane.b32.xlu0 %v305, 8
        %v377 = vpop.permute.xlu0 %376
        %378 = vrot.lane.b32.xlu0 %v306, 8
        %v379 = vpop.permute.xlu0 %378
        %380 = vrot.lane.b32.xlu0 %v307, 8
        %v381 = vpop.permute.xlu0 %380
        %382 = vrot.lane.b32.xlu0 %v308, 8
        %v383 = vpop.permute.xlu0 %382
        %384 = vrot.lane.b32.xlu0 %v309, 8
        %v385 = vpop.permute.xlu0 %384
        %386 = vrot.lane.b32.xlu0 %v310, 8
        %v387 = vpop.permute.xlu0 %386
        %388 = vrot.lane.b32.xlu0 %v311, 8
        %v389 = vpop.permute.xlu0 %388
        %390 = vrot.lane.b32.xlu0 %v312, 8
        %v391 = vpop.permute.xlu0 %390
        %392 = vrot.lane.b32.xlu0 %v313, 8
        %v393 = vpop.permute.xlu0 %392
        %394 = vrot.lane.b32.xlu0 %v314, 8
        %v395 = vpop.permute.xlu0 %394
        %396 = vrot.lane.b32.xlu0 %v315, 8
        %v397 = vpop.permute.xlu0 %396
        %398 = vrot.lane.b32.xlu0 %v316, 8
        %v399 = vpop.permute.xlu0 %398
        %400 = vrot.lane.b32.xlu0 %v317, 8
        %v401 = vpop.permute.xlu0 %400
        %402 = vrot.lane.b32.xlu0 %v318, 8
        %v403 = vpop.permute.xlu0 %402
        %404 = vrot.lane.b32.xlu0 %v319, 8
        %v405 = vpop.permute.xlu0 %404
        %406 = vrot.lane.b32.xlu0 %v320, 8
        %v407 = vpop.permute.xlu0 %406
        %408 = vrot.lane.b32.xlu0 %v321, 8
        %v409 = vpop.permute.xlu0 %408
        %410 = vrot.lane.b32.xlu0 %v322, 8
        %v411 = vpop.permute.xlu0 %410
        %412 = vrot.lane.b32.xlu0 %v323, 8
        %v413 = vpop.permute.xlu0 %412
        %414 = vrot.lane.b32.xlu0 %v324, 8
        %v415 = vpop.permute.xlu0 %414
        %416 = vrot.lane.b32.xlu0 %v325, 8
        %v417 = vpop.permute.xlu0 %416
        %418 = vrot.lane.b32.xlu0 %v326, 8
        %v419 = vpop.permute.xlu0 %418
        %420 = vrot.lane.b32.xlu0 %v327, 8
        %v421 = vpop.permute.xlu0 %420
        %422 = vrot.lane.b32.xlu0 %v328, 8
        %v423 = vpop.permute.xlu0 %422
        %424 = vrot.lane.b32.xlu0 %v329, 8
        %v425 = vpop.permute.xlu0 %424
        %vm458 = vcmask 126016
        %459 = vst.msk [vmem:[#allocation2] sm:$0xf] %vm458, %v363
        %460 = vst.msk [vmem:[#allocation2 + $0x4] sm:$0xf] %vm458, %v365
        %461 = vst.msk [vmem:[#allocation2 + $0x8] sm:$0xf] %vm458, %v367
        %462 = vst.msk [vmem:[#allocation2 + $0xc] sm:$0xf] %vm458, %v369
        %463 = vst.msk [vmem:[#allocation2 + $0x10] sm:$0xf] %vm458, %v371
        %464 = vst.msk [vmem:[#allocation2 + $0x14] sm:$0xf] %vm458, %v373
        %465 = vst.msk [vmem:[#allocation2 + $0x18] sm:$0xf] %vm458, %v375
        %466 = vst.msk [vmem:[#allocation2 + $0x1c] sm:$0xf] %vm458, %v377
        %467 = vst.msk [vmem:[#allocation2 + $0x20] sm:$0xf] %vm458, %v379
        %468 = vst.msk [vmem:[#allocation2 + $0x24] sm:$0xf] %vm458, %v381
        %469 = vst.msk [vmem:[#allocation2 + $0x28] sm:$0xf] %vm458, %v383
        %470 = vst.msk [vmem:[#allocation2 + $0x2c] sm:$0xf] %vm458, %v385
        %471 = vst.msk [vmem:[#allocation2 + $0x30] sm:$0xf] %vm458, %v387
        %472 = vst.msk [vmem:[#allocation2 + $0x34] sm:$0xf] %vm458, %v389
        %473 = vst.msk [vmem:[#allocation2 + $0x38] sm:$0xf] %vm458, %v391
        %474 = vst.msk [vmem:[#allocation2 + $0x3c] sm:$0xf] %vm458, %v393
        %475 = vst.msk [vmem:[#allocation2 + $0x40] sm:$0xf] %vm458, %v395
        %476 = vst.msk [vmem:[#allocation2 + $0x44] sm:$0xf] %vm458, %v397
        %477 = vst.msk [vmem:[#allocation2 + $0x48] sm:$0xf] %vm458, %v399
        %478 = vst.msk [vmem:[#allocation2 + $0x4c] sm:$0xf] %vm458, %v401
        %479 = vst.msk [vmem:[#allocation2 + $0x50] sm:$0xf] %vm458, %v403
        %480 = vst.msk [vmem:[#allocation2 + $0x54] sm:$0xf] %vm458, %v405
        %481 = vst.msk [vmem:[#allocation2 + $0x58] sm:$0xf] %vm458, %v407
        %482 = vst.msk [vmem:[#allocation2 + $0x5c] sm:$0xf] %vm458, %v409
        %483 = vst.msk [vmem:[#allocation2 + $0x60] sm:$0xf] %vm458, %v411
        %484 = vst.msk [vmem:[#allocation2 + $0x64] sm:$0xf] %vm458, %v413
        %485 = vst.msk [vmem:[#allocation2 + $0x68] sm:$0xf] %vm458, %v415
        %486 = vst.msk [vmem:[#allocation2 + $0x6c] sm:$0xf] %vm458, %v417
        %487 = vst.msk [vmem:[#allocation2 + $0x70] sm:$0xf] %vm458, %v419
        %488 = vst.msk [vmem:[#allocation2 + $0x74] sm:$0xf] %vm458, %v421
        %489 = vst.msk [vmem:[#allocation2 + $0x78] sm:$0xf] %vm458, %v423
        %490 = vst.msk [vmem:[#allocation2 + $0x7c] sm:$0xf] %vm458, %v425
        %s491 = sadd.s32 %s225, 2
        %s492 = smul.u32 %s491, 3
        %s493 = smul.addr %s492, 4
        %s494 = scalar_lea.vmem %s215, %s493
        %v495 = vld [vmem:[%s494] sm:$0xf]
        %v496 = vld [vmem:[%s494 + $0x4] sm:$0xf]
        %v497 = vld [vmem:[%s494 + $0xc] sm:$0xf]
        %v498 = vld [vmem:[%s494 + $0x10] sm:$0xf]
        %v499 = vld [vmem:[%s494 + $0x18] sm:$0xf]
        %v500 = vld [vmem:[%s494 + $0x1c] sm:$0xf]
        %v501 = vld [vmem:[%s494 + $0x24] sm:$0xf]
        %v502 = vld [vmem:[%s494 + $0x28] sm:$0xf]
        %v503 = vld [vmem:[%s494 + $0x30] sm:$0xf]
        %v504 = vld [vmem:[%s494 + $0x34] sm:$0xf]
        %v505 = vld [vmem:[%s494 + $0x3c] sm:$0xf]
        %v506 = vld [vmem:[%s494 + $0x40] sm:$0xf]
        %v507 = vld [vmem:[%s494 + $0x48] sm:$0xf]
        %v508 = vld [vmem:[%s494 + $0x4c] sm:$0xf]
        %v509 = vld [vmem:[%s494 + $0x54] sm:$0xf]
        %v510 = vld [vmem:[%s494 + $0x58] sm:$0xf]
        %v511 = vld [vmem:[%s494 + $0x60] sm:$0xf]
        %v512 = vld [vmem:[%s494 + $0x64] sm:$0xf]
        %v513 = vld [vmem:[%s494 + $0x6c] sm:$0xf]
        %v514 = vld [vmem:[%s494 + $0x70] sm:$0xf]
        %v515 = vld [vmem:[%s494 + $0x78] sm:$0xf]
        %v516 = vld [vmem:[%s494 + $0x7c] sm:$0xf]
        %v517 = vld [vmem:[%s494 + $0x84] sm:$0xf]
        %v518 = vld [vmem:[%s494 + $0x88] sm:$0xf]
        %v519 = vld [vmem:[%s494 + $0x90] sm:$0xf]
        %v520 = vld [vmem:[%s494 + $0x94] sm:$0xf]
        %v521 = vld [vmem:[%s494 + $0x9c] sm:$0xf]
        %v522 = vld [vmem:[%s494 + $0xa0] sm:$0xf]
        %v523 = vld [vmem:[%s494 + $0xa8] sm:$0xf]
        %v524 = vld [vmem:[%s494 + $0xac] sm:$0xf]
        %v525 = vld [vmem:[%s494 + $0xb4] sm:$0xf]
        %v526 = vld [vmem:[%s494 + $0xb8] sm:$0xf]
        %559 = vrot.lane.b32.xlu0 %v495, 16
        %v560 = vpop.permute.xlu0 %559
        %561 = vrot.lane.b32.xlu0 %v496, 16
        %v562 = vpop.permute.xlu0 %561
        %563 = vrot.lane.b32.xlu0 %v497, 16
        %v564 = vpop.permute.xlu0 %563
        %565 = vrot.lane.b32.xlu0 %v498, 16
        %v566 = vpop.permute.xlu0 %565
        %567 = vrot.lane.b32.xlu0 %v499, 16
        %v568 = vpop.permute.xlu0 %567
        %569 = vrot.lane.b32.xlu0 %v500, 16
        %v570 = vpop.permute.xlu0 %569
        %571 = vrot.lane.b32.xlu0 %v501, 16
        %v572 = vpop.permute.xlu0 %571
        %573 = vrot.lane.b32.xlu0 %v502, 16
        %v574 = vpop.permute.xlu0 %573
        %575 = vrot.lane.b32.xlu0 %v503, 16
        %v576 = vpop.permute.xlu0 %575
        %577 = vrot.lane.b32.xlu0 %v504, 16
        %v578 = vpop.permute.xlu0 %577
        %579 = vrot.lane.b32.xlu0 %v505, 16
        %v580 = vpop.permute.xlu0 %579
        %581 = vrot.lane.b32.xlu0 %v506, 16
        %v582 = vpop.permute.xlu0 %581
        %583 = vrot.lane.b32.xlu0 %v507, 16
        %v584 = vpop.permute.xlu0 %583
        %585 = vrot.lane.b32.xlu0 %v508, 16
        %v586 = vpop.permute.xlu0 %585
        %587 = vrot.lane.b32.xlu0 %v509, 16
        %v588 = vpop.permute.xlu0 %587
        %589 = vrot.lane.b32.xlu0 %v510, 16
        %v590 = vpop.permute.xlu0 %589
        %591 = vrot.lane.b32.xlu0 %v511, 16
        %v592 = vpop.permute.xlu0 %591
        %593 = vrot.lane.b32.xlu0 %v512, 16
        %v594 = vpop.permute.xlu0 %593
        %595 = vrot.lane.b32.xlu0 %v513, 16
        %v596 = vpop.permute.xlu0 %595
        %597 = vrot.lane.b32.xlu0 %v514, 16
        %v598 = vpop.permute.xlu0 %597
        %599 = vrot.lane.b32.xlu0 %v515, 16
        %v600 = vpop.permute.xlu0 %599
        %601 = vrot.lane.b32.xlu0 %v516, 16
        %v602 = vpop.permute.xlu0 %601
        %603 = vrot.lane.b32.xlu0 %v517, 16
        %v604 = vpop.permute.xlu0 %603
        %605 = vrot.lane.b32.xlu0 %v518, 16
        %v606 = vpop.permute.xlu0 %605
        %607 = vrot.lane.b32.xlu0 %v519, 16
        %v608 = vpop.permute.xlu0 %607
        %609 = vrot.lane.b32.xlu0 %v520, 16
        %v610 = vpop.permute.xlu0 %609
        %611 = vrot.lane.b32.xlu0 %v521, 16
        %v612 = vpop.permute.xlu0 %611
        %613 = vrot.lane.b32.xlu0 %v522, 16
        %v614 = vpop.permute.xlu0 %613
        %615 = vrot.lane.b32.xlu0 %v523, 16
        %v616 = vpop.permute.xlu0 %615
        %617 = vrot.lane.b32.xlu0 %v524, 16
        %v618 = vpop.permute.xlu0 %617
        %619 = vrot.lane.b32.xlu0 %v525, 16
        %v620 = vpop.permute.xlu0 %619
        %621 = vrot.lane.b32.xlu0 %v526, 16
        %v622 = vpop.permute.xlu0 %621
        %vm655 = vcmask 191616
        %656 = vst.msk [vmem:[#allocation2] sm:$0xf] %vm655, %v560
        %657 = vst.msk [vmem:[#allocation2 + $0x4] sm:$0xf] %vm655, %v562
        %658 = vst.msk [vmem:[#allocation2 + $0x8] sm:$0xf] %vm655, %v564
        %659 = vst.msk [vmem:[#allocation2 + $0xc] sm:$0xf] %vm655, %v566
        %660 = vst.msk [vmem:[#allocation2 + $0x10] sm:$0xf] %vm655, %v568
        %661 = vst.msk [vmem:[#allocation2 + $0x14] sm:$0xf] %vm655, %v570
        %662 = vst.msk [vmem:[#allocation2 + $0x18] sm:$0xf] %vm655, %v572
        %663 = vst.msk [vmem:[#allocation2 + $0x1c] sm:$0xf] %vm655, %v574
        %664 = vst.msk [vmem:[#allocation2 + $0x20] sm:$0xf] %vm655, %v576
        %665 = vst.msk [vmem:[#allocation2 + $0x24] sm:$0xf] %vm655, %v578
        %666 = vst.msk [vmem:[#allocation2 + $0x28] sm:$0xf] %vm655, %v580
        %667 = vst.msk [vmem:[#allocation2 + $0x2c] sm:$0xf] %vm655, %v582
        %668 = vst.msk [vmem:[#allocation2 + $0x30] sm:$0xf] %vm655, %v584
        %669 = vst.msk [vmem:[#allocation2 + $0x34] sm:$0xf] %vm655, %v586
        %670 = vst.msk [vmem:[#allocation2 + $0x38] sm:$0xf] %vm655, %v588
        %671 = vst.msk [vmem:[#allocation2 + $0x3c] sm:$0xf] %vm655, %v590
        %672 = vst.msk [vmem:[#allocation2 + $0x40] sm:$0xf] %vm655, %v592
        %673 = vst.msk [vmem:[#allocation2 + $0x44] sm:$0xf] %vm655, %v594
        %674 = vst.msk [vmem:[#allocation2 + $0x48] sm:$0xf] %vm655, %v596
        %675 = vst.msk [vmem:[#allocation2 + $0x4c] sm:$0xf] %vm655, %v598
        %676 = vst.msk [vmem:[#allocation2 + $0x50] sm:$0xf] %vm655, %v600
        %677 = vst.msk [vmem:[#allocation2 + $0x54] sm:$0xf] %vm655, %v602
        %678 = vst.msk [vmem:[#allocation2 + $0x58] sm:$0xf] %vm655, %v604
        %679 = vst.msk [vmem:[#allocation2 + $0x5c] sm:$0xf] %vm655, %v606
        %680 = vst.msk [vmem:[#allocation2 + $0x60] sm:$0xf] %vm655, %v608
        %681 = vst.msk [vmem:[#allocation2 + $0x64] sm:$0xf] %vm655, %v610
        %682 = vst.msk [vmem:[#allocation2 + $0x68] sm:$0xf] %vm655, %v612
        %683 = vst.msk [vmem:[#allocation2 + $0x6c] sm:$0xf] %vm655, %v614
        %684 = vst.msk [vmem:[#allocation2 + $0x70] sm:$0xf] %vm655, %v616
        %685 = vst.msk [vmem:[#allocation2 + $0x74] sm:$0xf] %vm655, %v618
        %686 = vst.msk [vmem:[#allocation2 + $0x78] sm:$0xf] %vm655, %v620
        %687 = vst.msk [vmem:[#allocation2 + $0x7c] sm:$0xf] %vm655, %v622
        %v688 = vld [vmem:[%s228] sm:$0xf]
        %v689 = vld [vmem:[%s228 + $0x4] sm:$0xf]
        %v690 = vld [vmem:[%s228 + $0x8] sm:$0x1]
        %v691 = vld [vmem:[%s228 + $0xc] sm:$0xf]
        %v692 = vld [vmem:[%s228 + $0x10] sm:$0xf]
        %v693 = vld [vmem:[%s228 + $0x14] sm:$0x1]
        %v694 = vld [vmem:[%s228 + $0x18] sm:$0xf]
        %v695 = vld [vmem:[%s228 + $0x1c] sm:$0xf]
        %v696 = vld [vmem:[%s228 + $0x20] sm:$0x1]
        %v697 = vld [vmem:[%s228 + $0x24] sm:$0xf]
        %v698 = vld [vmem:[%s228 + $0x28] sm:$0xf]
        %v699 = vld [vmem:[%s228 + $0x2c] sm:$0x1]
        %v700 = vld [vmem:[%s228 + $0x30] sm:$0xf]
        %v701 = vld [vmem:[%s228 + $0x34] sm:$0xf]
        %v702 = vld [vmem:[%s228 + $0x38] sm:$0x1]
        %v703 = vld [vmem:[%s228 + $0x3c] sm:$0xf]
        %v704 = vld [vmem:[%s228 + $0x40] sm:$0xf]
        %v705 = vld [vmem:[%s228 + $0x44] sm:$0x1]
        %v706 = vld [vmem:[%s228 + $0x48] sm:$0xf]
        %v707 = vld [vmem:[%s228 + $0x4c] sm:$0xf]
        %v708 = vld [vmem:[%s228 + $0x50] sm:$0x1]
        %v709 = vld [vmem:[%s228 + $0x54] sm:$0xf]
        %v710 = vld [vmem:[%s228 + $0x58] sm:$0xf]
        %v711 = vld [vmem:[%s228 + $0x5c] sm:$0x1]
        %v712 = vld [vmem:[%s228 + $0x60] sm:$0xf]
        %v713 = vld [vmem:[%s228 + $0x64] sm:$0xf]
        %v714 = vld [vmem:[%s228 + $0x68] sm:$0x1]
        %v715 = vld [vmem:[%s228 + $0x6c] sm:$0xf]
        %v716 = vld [vmem:[%s228 + $0x70] sm:$0xf]
        %v717 = vld [vmem:[%s228 + $0x74] sm:$0x1]
        %v718 = vld [vmem:[%s228 + $0x78] sm:$0xf]
        %v719 = vld [vmem:[%s228 + $0x7c] sm:$0xf]
        %v720 = vld [vmem:[%s228 + $0x80] sm:$0x1]
        %v721 = vld [vmem:[%s228 + $0x84] sm:$0xf]
        %v722 = vld [vmem:[%s228 + $0x88] sm:$0xf]
        %v723 = vld [vmem:[%s228 + $0x8c] sm:$0x1]
        %v724 = vld [vmem:[%s228 + $0x90] sm:$0xf]
        %v725 = vld [vmem:[%s228 + $0x94] sm:$0xf]
        %v726 = vld [vmem:[%s228 + $0x98] sm:$0x1]
        %v727 = vld [vmem:[%s228 + $0x9c] sm:$0xf]
        %v728 = vld [vmem:[%s228 + $0xa0] sm:$0xf]
        %v729 = vld [vmem:[%s228 + $0xa4] sm:$0x1]
        %v730 = vld [vmem:[%s228 + $0xa8] sm:$0xf]
        %v731 = vld [vmem:[%s228 + $0xac] sm:$0xf]
        %v732 = vld [vmem:[%s228 + $0xb0] sm:$0x1]
        %v733 = vld [vmem:[%s228 + $0xb4] sm:$0xf]
        %v734 = vld [vmem:[%s228 + $0xb8] sm:$0xf]
        %v735 = vld [vmem:[%s228 + $0xbc] sm:$0x1]
        %vm736 = vsmask.f32 3328
        %vm737 = vsmask.f32 7440
        %vm738 = vmor %vm736, %vm737
        %v740 = vshrl.u32 %v688, 16
        %v742 = vrot.slane %v740, 4
        %v743 = vshll.u32 %v688, 16
        %v745 = vrot.slane %v743, 5
        %v746 = vor.u32 %v742, %v745
        %v747 = vrot.slane %v746, 4
        %v749 = vshll.u32 %v689, 16
        %v751 = vrot.slane %v749, 5
        %v752 = vsel %vm738, %v747, %v751
        %v753 = vshrl.u32 %v689, 16
        %v755 = vrot.slane %v753, 4
        %v756 = vor.u32 %v755, %v751
        %v757 = vrot.slane %v756, 4
        %v759 = vshll.u32 %v690, 16
        %v761 = vrot.slane %v759, 5
        %v762 = vsel %vm738, %v757, %v761
        %v764 = vshrl.u32 %v691, 16
        %v766 = vrot.slane %v764, 4
        %v767 = vshll.u32 %v691, 16
        %v769 = vrot.slane %v767, 5
        %v770 = vor.u32 %v766, %v769
        %v771 = vrot.slane %v770, 4
        %v773 = vshll.u32 %v692, 16
        %v775 = vrot.slane %v773, 5
        %v776 = vsel %vm738, %v771, %v775
        %v777 = vshrl.u32 %v692, 16
        %v779 = vrot.slane %v777, 4
        %v780 = vor.u32 %v779, %v775
        %v781 = vrot.slane %v780, 4
        %v783 = vshll.u32 %v693, 16
        %v785 = vrot.slane %v783, 5
        %v786 = vsel %vm738, %v781, %v785
        %v788 = vshrl.u32 %v694, 16
        %v790 = vrot.slane %v788, 4
        %v791 = vshll.u32 %v694, 16
        %v793 = vrot.slane %v791, 5
        %v794 = vor.u32 %v790, %v793
        %v795 = vrot.slane %v794, 4
        %v797 = vshll.u32 %v695, 16
        %v799 = vrot.slane %v797, 5
        %v800 = vsel %vm738, %v795, %v799
        %v801 = vshrl.u32 %v695, 16
        %v803 = vrot.slane %v801, 4
        %v804 = vor.u32 %v803, %v799
        %v805 = vrot.slane %v804, 4
        %v807 = vshll.u32 %v696, 16
        %v809 = vrot.slane %v807, 5
        %v810 = vsel %vm738, %v805, %v809
        %v812 = vshrl.u32 %v697, 16
        %v814 = vrot.slane %v812, 4
        %v815 = vshll.u32 %v697, 16
        %v817 = vrot.slane %v815, 5
        %v818 = vor.u32 %v814, %v817
        %v819 = vrot.slane %v818, 4
        %v821 = vshll.u32 %v698, 16
        %v823 = vrot.slane %v821, 5
        %v824 = vsel %vm738, %v819, %v823
        %v825 = vshrl.u32 %v698, 16
        %v827 = vrot.slane %v825, 4
        %v828 = vor.u32 %v827, %v823
        %v829 = vrot.slane %v828, 4
        %v831 = vshll.u32 %v699, 16
        %v833 = vrot.slane %v831, 5
        %v834 = vsel %vm738, %v829, %v833
        %v836 = vshrl.u32 %v700, 16
        %v838 = vrot.slane %v836, 4
        %v839 = vshll.u32 %v700, 16
        %v841 = vrot.slane %v839, 5
        %v842 = vor.u32 %v838, %v841
        %v843 = vrot.slane %v842, 4
        %v845 = vshll.u32 %v701, 16
        %v847 = vrot.slane %v845, 5
        %v848 = vsel %vm738, %v843, %v847
        %v849 = vshrl.u32 %v701, 16
        %v851 = vrot.slane %v849, 4
        %v852 = vor.u32 %v851, %v847
        %v853 = vrot.slane %v852, 4
        %v855 = vshll.u32 %v702, 16
        %v857 = vrot.slane %v855, 5
        %v858 = vsel %vm738, %v853, %v857
        %v860 = vshrl.u32 %v703, 16
        %v862 = vrot.slane %v860, 4
        %v863 = vshll.u32 %v703, 16
        %v865 = vrot.slane %v863, 5
        %v866 = vor.u32 %v862, %v865
        %v867 = vrot.slane %v866, 4
        %v869 = vshll.u32 %v704, 16
        %v871 = vrot.slane %v869, 5
        %v872 = vsel %vm738, %v867, %v871
        %v873 = vshrl.u32 %v704, 16
        %v875 = vrot.slane %v873, 4
        %v876 = vor.u32 %v875, %v871
        %v877 = vrot.slane %v876, 4
        %v879 = vshll.u32 %v705, 16
        %v881 = vrot.slane %v879, 5
        %v882 = vsel %vm738, %v877, %v881
        %v884 = vshrl.u32 %v706, 16
        %v886 = vrot.slane %v884, 4
        %v887 = vshll.u32 %v706, 16
        %v889 = vrot.slane %v887, 5
        %v890 = vor.u32 %v886, %v889
        %v891 = vrot.slane %v890, 4
        %v893 = vshll.u32 %v707, 16
        %v895 = vrot.slane %v893, 5
        %v896 = vsel %vm738, %v891, %v895
        %v897 = vshrl.u32 %v707, 16
        %v899 = vrot.slane %v897, 4
        %v900 = vor.u32 %v899, %v895
        %v901 = vrot.slane %v900, 4
        %v903 = vshll.u32 %v708, 16
        %v905 = vrot.slane %v903, 5
        %v906 = vsel %vm738, %v901, %v905
        %v908 = vshrl.u32 %v709, 16
        %v910 = vrot.slane %v908, 4
        %v911 = vshll.u32 %v709, 16
        %v913 = vrot.slane %v911, 5
        %v914 = vor.u32 %v910, %v913
        %v915 = vrot.slane %v914, 4
        %v917 = vshll.u32 %v710, 16
        %v919 = vrot.slane %v917, 5
        %v920 = vsel %vm738, %v915, %v919
        %v921 = vshrl.u32 %v710, 16
        %v923 = vrot.slane %v921, 4
        %v924 = vor.u32 %v923, %v919
        %v925 = vrot.slane %v924, 4
        %v927 = vshll.u32 %v711, 16
        %v929 = vrot.slane %v927, 5
        %v930 = vsel %vm738, %v925, %v929
        %v932 = vshrl.u32 %v712, 16
        %v934 = vrot.slane %v932, 4
        %v935 = vshll.u32 %v712, 16
        %v937 = vrot.slane %v935, 5
        %v938 = vor.u32 %v934, %v937
        %v939 = vrot.slane %v938, 4
        %v941 = vshll.u32 %v713, 16
        %v943 = vrot.slane %v941, 5
        %v944 = vsel %vm738, %v939, %v943
        %v945 = vshrl.u32 %v713, 16
        %v947 = vrot.slane %v945, 4
        %v948 = vor.u32 %v947, %v943
        %v949 = vrot.slane %v948, 4
        %v951 = vshll.u32 %v714, 16
        %v953 = vrot.slane %v951, 5
        %v954 = vsel %vm738, %v949, %v953
        %v956 = vshrl.u32 %v715, 16
        %v958 = vrot.slane %v956, 4
        %v959 = vshll.u32 %v715, 16
        %v961 = vrot.slane %v959, 5
        %v962 = vor.u32 %v958, %v961
        %v963 = vrot.slane %v962, 4
        %v965 = vshll.u32 %v716, 16
        %v967 = vrot.slane %v965, 5
        %v968 = vsel %vm738, %v963, %v967
        %v969 = vshrl.u32 %v716, 16
        %v971 = vrot.slane %v969, 4
        %v972 = vor.u32 %v971, %v967
        %v973 = vrot.slane %v972, 4
        %v975 = vshll.u32 %v717, 16
        %v977 = vrot.slane %v975, 5
        %v978 = vsel %vm738, %v973, %v977
        %v980 = vshrl.u32 %v718, 16
        %v982 = vrot.slane %v980, 4
        %v983 = vshll.u32 %v718, 16
        %v985 = vrot.slane %v983, 5
        %v986 = vor.u32 %v982, %v985
        %v987 = vrot.slane %v986, 4
        %v989 = vshll.u32 %v719, 16
        %v991 = vrot.slane %v989, 5
        %v992 = vsel %vm738, %v987, %v991
        %v993 = vshrl.u32 %v719, 16
        %v995 = vrot.slane %v993, 4
        %v996 = vor.u32 %v995, %v991
        %v997 = vrot.slane %v996, 4
        %v999 = vshll.u32 %v720, 16
        %v1001 = vrot.slane %v999, 5
        %v1002 = vsel %vm738, %v997, %v1001
        %v1004 = vshrl.u32 %v721, 16
        %v1006 = vrot.slane %v1004, 4
        %v1007 = vshll.u32 %v721, 16
        %v1009 = vrot.slane %v1007, 5
        %v1010 = vor.u32 %v1006, %v1009
        %v1011 = vrot.slane %v1010, 4
        %v1013 = vshll.u32 %v722, 16
        %v1015 = vrot.slane %v1013, 5
        %v1016 = vsel %vm738, %v1011, %v1015
        %v1017 = vshrl.u32 %v722, 16
        %v1019 = vrot.slane %v1017, 4
        %v1020 = vor.u32 %v1019, %v1015
        %v1021 = vrot.slane %v1020, 4
        %v1023 = vshll.u32 %v723, 16
        %v1025 = vrot.slane %v1023, 5
        %v1026 = vsel %vm738, %v1021, %v1025
        %v1028 = vshrl.u32 %v724, 16
        %v1030 = vrot.slane %v1028, 4
        %v1031 = vshll.u32 %v724, 16
        %v1033 = vrot.slane %v1031, 5
        %v1034 = vor.u32 %v1030, %v1033
        %v1035 = vrot.slane %v1034, 4
        %v1037 = vshll.u32 %v725, 16
        %v1039 = vrot.slane %v1037, 5
        %v1040 = vsel %vm738, %v1035, %v1039
        %v1041 = vshrl.u32 %v725, 16
        %v1043 = vrot.slane %v1041, 4
        %v1044 = vor.u32 %v1043, %v1039
        %v1045 = vrot.slane %v1044, 4
        %v1047 = vshll.u32 %v726, 16
        %v1049 = vrot.slane %v1047, 5
        %v1050 = vsel %vm738, %v1045, %v1049
        %v1052 = vshrl.u32 %v727, 16
        %v1054 = vrot.slane %v1052, 4
        %v1055 = vshll.u32 %v727, 16
        %v1057 = vrot.slane %v1055, 5
        %v1058 = vor.u32 %v1054, %v1057
        %v1059 = vrot.slane %v1058, 4
        %v1061 = vshll.u32 %v728, 16
        %v1063 = vrot.slane %v1061, 5
        %v1064 = vsel %vm738, %v1059, %v1063
        %v1065 = vshrl.u32 %v728, 16
        %v1067 = vrot.slane %v1065, 4
        %v1068 = vor.u32 %v1067, %v1063
        %v1069 = vrot.slane %v1068, 4
        %v1071 = vshll.u32 %v729, 16
        %v1073 = vrot.slane %v1071, 5
        %v1074 = vsel %vm738, %v1069, %v1073
        %v1076 = vshrl.u32 %v730, 16
        %v1078 = vrot.slane %v1076, 4
        %v1079 = vshll.u32 %v730, 16
        %v1081 = vrot.slane %v1079, 5
        %v1082 = vor.u32 %v1078, %v1081
        %v1083 = vrot.slane %v1082, 4
        %v1085 = vshll.u32 %v731, 16
        %v1087 = vrot.slane %v1085, 5
        %v1088 = vsel %vm738, %v1083, %v1087
        %v1089 = vshrl.u32 %v731, 16
        %v1091 = vrot.slane %v1089, 4
        %v1092 = vor.u32 %v1091, %v1087
        %v1093 = vrot.slane %v1092, 4
        %v1095 = vshll.u32 %v732, 16
        %v1097 = vrot.slane %v1095, 5
        %v1098 = vsel %vm738, %v1093, %v1097
        %v1100 = vshrl.u32 %v733, 16
        %v1102 = vrot.slane %v1100, 4
        %v1103 = vshll.u32 %v733, 16
        %v1105 = vrot.slane %v1103, 5
        %v1106 = vor.u32 %v1102, %v1105
        %v1107 = vrot.slane %v1106, 4
        %v1109 = vshll.u32 %v734, 16
        %v1111 = vrot.slane %v1109, 5
        %v1112 = vsel %vm738, %v1107, %v1111
        %v1113 = vshrl.u32 %v734, 16
        %v1115 = vrot.slane %v1113, 4
        %v1116 = vor.u32 %v1115, %v1111
        %v1117 = vrot.slane %v1116, 4
        %v1119 = vshll.u32 %v735, 16
        %v1121 = vrot.slane %v1119, 5
        %v1122 = vsel %vm738, %v1117, %v1121
        %1123 = vrot.lane.b32.xlu0 %v752, 24
        %v1124 = vpop.permute.xlu0 %1123
        %1125 = vrot.lane.b32.xlu0 %v762, 24
        %v1126 = vpop.permute.xlu0 %1125
        %1127 = vrot.lane.b32.xlu0 %v776, 24
        %v1128 = vpop.permute.xlu0 %1127
        %1129 = vrot.lane.b32.xlu0 %v786, 24
        %v1130 = vpop.permute.xlu0 %1129
        %1131 = vrot.lane.b32.xlu0 %v800, 24
        %v1132 = vpop.permute.xlu0 %1131
        %1133 = vrot.lane.b32.xlu0 %v810, 24
        %v1134 = vpop.permute.xlu0 %1133
        %1135 = vrot.lane.b32.xlu0 %v824, 24
        %v1136 = vpop.permute.xlu0 %1135
        %1137 = vrot.lane.b32.xlu0 %v834, 24
        %v1138 = vpop.permute.xlu0 %1137
        %1139 = vrot.lane.b32.xlu0 %v848, 24
        %v1140 = vpop.permute.xlu0 %1139
        %1141 = vrot.lane.b32.xlu0 %v858, 24
        %v1142 = vpop.permute.xlu0 %1141
        %1143 = vrot.lane.b32.xlu0 %v872, 24
        %v1144 = vpop.permute.xlu0 %1143
        %1145 = vrot.lane.b32.xlu0 %v882, 24
        %v1146 = vpop.permute.xlu0 %1145
        %1147 = vrot.lane.b32.xlu0 %v896, 24
        %v1148 = vpop.permute.xlu0 %1147
        %1149 = vrot.lane.b32.xlu0 %v906, 24
        %v1150 = vpop.permute.xlu0 %1149
        %1151 = vrot.lane.b32.xlu0 %v920, 24
        %v1152 = vpop.permute.xlu0 %1151
        %1153 = vrot.lane.b32.xlu0 %v930, 24
        %v1154 = vpop.permute.xlu0 %1153
        %1155 = vrot.lane.b32.xlu0 %v944, 24
        %v1156 = vpop.permute.xlu0 %1155
        %1157 = vrot.lane.b32.xlu0 %v954, 24
        %v1158 = vpop.permute.xlu0 %1157
        %1159 = vrot.lane.b32.xlu0 %v968, 24
        %v1160 = vpop.permute.xlu0 %1159
        %1161 = vrot.lane.b32.xlu0 %v978, 24
        %v1162 = vpop.permute.xlu0 %1161
        %1163 = vrot.lane.b32.xlu0 %v992, 24
        %v1164 = vpop.permute.xlu0 %1163
        %1165 = vrot.lane.b32.xlu0 %v1002, 24
        %v1166 = vpop.permute.xlu0 %1165
        %1167 = vrot.lane.b32.xlu0 %v1016, 24
        %v1168 = vpop.permute.xlu0 %1167
        %1169 = vrot.lane.b32.xlu0 %v1026, 24
        %v1170 = vpop.permute.xlu0 %1169
        %1171 = vrot.lane.b32.xlu0 %v1040, 24
        %v1172 = vpop.permute.xlu0 %1171
        %1173 = vrot.lane.b32.xlu0 %v1050, 24
        %v1174 = vpop.permute.xlu0 %1173
        %1175 = vrot.lane.b32.xlu0 %v1064, 24
        %v1176 = vpop.permute.xlu0 %1175
        %1177 = vrot.lane.b32.xlu0 %v1074, 24
        %v1178 = vpop.permute.xlu0 %1177
        %1179 = vrot.lane.b32.xlu0 %v1088, 24
        %v1180 = vpop.permute.xlu0 %1179
        %1181 = vrot.lane.b32.xlu0 %v1098, 24
        %v1182 = vpop.permute.xlu0 %1181
        %1183 = vrot.lane.b32.xlu0 %v1112, 24
        %v1184 = vpop.permute.xlu0 %1183
        %1185 = vrot.lane.b32.xlu0 %v1122, 24
        %v1186 = vpop.permute.xlu0 %1185
        %vm1219 = vcmask 257216
        %1220 = vst.msk [vmem:[#allocation2] sm:$0xf] %vm1219, %v1124
        %1221 = vst.msk [vmem:[#allocation2 + $0x4] sm:$0xf] %vm1219, %v1126
        %1222 = vst.msk [vmem:[#allocation2 + $0x8] sm:$0xf] %vm1219, %v1128
        %1223 = vst.msk [vmem:[#allocation2 + $0xc] sm:$0xf] %vm1219, %v1130
        %1224 = vst.msk [vmem:[#allocation2 + $0x10] sm:$0xf] %vm1219, %v1132
        %1225 = vst.msk [vmem:[#allocation2 + $0x14] sm:$0xf] %vm1219, %v1134
        %1226 = vst.msk [vmem:[#allocation2 + $0x18] sm:$0xf] %vm1219, %v1136
        %1227 = vst.msk [vmem:[#allocation2 + $0x1c] sm:$0xf] %vm1219, %v1138
        %1228 = vst.msk [vmem:[#allocation2 + $0x20] sm:$0xf] %vm1219, %v1140
        %1229 = vst.msk [vmem:[#allocation2 + $0x24] sm:$0xf] %vm1219, %v1142
        %1230 = vst.msk [vmem:[#allocation2 + $0x28] sm:$0xf] %vm1219, %v1144
        %1231 = vst.msk [vmem:[#allocation2 + $0x2c] sm:$0xf] %vm1219, %v1146
        %1232 = vst.msk [vmem:[#allocation2 + $0x30] sm:$0xf] %vm1219, %v1148
        %1233 = vst.msk [vmem:[#allocation2 + $0x34] sm:$0xf] %vm1219, %v1150
        %1234 = vst.msk [vmem:[#allocation2 + $0x38] sm:$0xf] %vm1219, %v1152
        %1235 = vst.msk [vmem:[#allocation2 + $0x3c] sm:$0xf] %vm1219, %v1154
        %1236 = vst.msk [vmem:[#allocation2 + $0x40] sm:$0xf] %vm1219, %v1156
        %1237 = vst.msk [vmem:[#allocation2 + $0x44] sm:$0xf] %vm1219, %v1158
        %1238 = vst.msk [vmem:[#allocation2 + $0x48] sm:$0xf] %vm1219, %v1160
        %1239 = vst.msk [vmem:[#allocation2 + $0x4c] sm:$0xf] %vm1219, %v1162
        %1240 = vst.msk [vmem:[#allocation2 + $0x50] sm:$0xf] %vm1219, %v1164
        %1241 = vst.msk [vmem:[#allocation2 + $0x54] sm:$0xf] %vm1219, %v1166
        %1242 = vst.msk [vmem:[#allocation2 + $0x58] sm:$0xf] %vm1219, %v1168
        %1243 = vst.msk [vmem:[#allocation2 + $0x5c] sm:$0xf] %vm1219, %v1170
        %1244 = vst.msk [vmem:[#allocation2 + $0x60] sm:$0xf] %vm1219, %v1172
        %1245 = vst.msk [vmem:[#allocation2 + $0x64] sm:$0xf] %vm1219, %v1174
        %1246 = vst.msk [vmem:[#allocation2 + $0x68] sm:$0xf] %vm1219, %v1176
        %1247 = vst.msk [vmem:[#allocation2 + $0x6c] sm:$0xf] %vm1219, %v1178
        %1248 = vst.msk [vmem:[#allocation2 + $0x70] sm:$0xf] %vm1219, %v1180
        %1249 = vst.msk [vmem:[#allocation2 + $0x74] sm:$0xf] %vm1219, %v1182
        %1250 = vst.msk [vmem:[#allocation2 + $0x78] sm:$0xf] %vm1219, %v1184
        %1251 = vst.msk [vmem:[#allocation2 + $0x7c] sm:$0xf] %vm1219, %v1186
        %v1252 = vld [vmem:[%s297] sm:$0xf]
        %v1253 = vld [vmem:[%s297 + $0x4] sm:$0xf]
        %v1254 = vld [vmem:[%s297 + $0x8] sm:$0x1]
        %v1255 = vld [vmem:[%s297 + $0xc] sm:$0xf]
        %v1256 = vld [vmem:[%s297 + $0x10] sm:$0xf]
        %v1257 = vld [vmem:[%s297 + $0x14] sm:$0x1]
        %v1258 = vld [vmem:[%s297 + $0x18] sm:$0xf]
        %v1259 = vld [vmem:[%s297 + $0x1c] sm:$0xf]
        %v1260 = vld [vmem:[%s297 + $0x20] sm:$0x1]
        %v1261 = vld [vmem:[%s297 + $0x24] sm:$0xf]
        %v1262 = vld [vmem:[%s297 + $0x28] sm:$0xf]
        %v1263 = vld [vmem:[%s297 + $0x2c] sm:$0x1]
        %v1264 = vld [vmem:[%s297 + $0x30] sm:$0xf]
        %v1265 = vld [vmem:[%s297 + $0x34] sm:$0xf]
        %v1266 = vld [vmem:[%s297 + $0x38] sm:$0x1]
        %v1267 = vld [vmem:[%s297 + $0x3c] sm:$0xf]
        %v1268 = vld [vmem:[%s297 + $0x40] sm:$0xf]
        %v1269 = vld [vmem:[%s297 + $0x44] sm:$0x1]
        %v1270 = vld [vmem:[%s297 + $0x48] sm:$0xf]
        %v1271 = vld [vmem:[%s297 + $0x4c] sm:$0xf]
        %v1272 = vld [vmem:[%s297 + $0x50] sm:$0x1]
        %v1273 = vld [vmem:[%s297 + $0x54] sm:$0xf]
        %v1274 = vld [vmem:[%s297 + $0x58] sm:$0xf]
        %v1275 = vld [vmem:[%s297 + $0x5c] sm:$0x1]
        %v1276 = vld [vmem:[%s297 + $0x60] sm:$0xf]
        %v1277 = vld [vmem:[%s297 + $0x64] sm:$0xf]
        %v1278 = vld [vmem:[%s297 + $0x68] sm:$0x1]
        %v1279 = vld [vmem:[%s297 + $0x6c] sm:$0xf]
        %v1280 = vld [vmem:[%s297 + $0x70] sm:$0xf]
        %v1281 = vld [vmem:[%s297 + $0x74] sm:$0x1]
        %v1282 = vld [vmem:[%s297 + $0x78] sm:$0xf]
        %v1283 = vld [vmem:[%s297 + $0x7c] sm:$0xf]
        %v1284 = vld [vmem:[%s297 + $0x80] sm:$0x1]
        %v1285 = vld [vmem:[%s297 + $0x84] sm:$0xf]
        %v1286 = vld [vmem:[%s297 + $0x88] sm:$0xf]
        %v1287 = vld [vmem:[%s297 + $0x8c] sm:$0x1]
        %v1288 = vld [vmem:[%s297 + $0x90] sm:$0xf]
        %v1289 = vld [vmem:[%s297 + $0x94] sm:$0xf]
        %v1290 = vld [vmem:[%s297 + $0x98] sm:$0x1]
        %v1291 = vld [vmem:[%s297 + $0x9c] sm:$0xf]
        %v1292 = vld [vmem:[%s297 + $0xa0] sm:$0xf]
        %v1293 = vld [vmem:[%s297 + $0xa4] sm:$0x1]
        %v1294 = vld [vmem:[%s297 + $0xa8] sm:$0xf]
        %v1295 = vld [vmem:[%s297 + $0xac] sm:$0xf]
        %v1296 = vld [vmem:[%s297 + $0xb0] sm:$0x1]
        %v1297 = vld [vmem:[%s297 + $0xb4] sm:$0xf]
        %v1298 = vld [vmem:[%s297 + $0xb8] sm:$0xf]
        %v1299 = vld [vmem:[%s297 + $0xbc] sm:$0x1]
        %v1301 = vshrl.u32 %v1252, 16
        %v1303 = vrot.slane %v1301, 4
        %v1304 = vshll.u32 %v1252, 16
        %v1306 = vrot.slane %v1304, 5
        %v1307 = vor.u32 %v1303, %v1306
        %v1308 = vrot.slane %v1307, 4
        %v1310 = vshll.u32 %v1253, 16
        %v1312 = vrot.slane %v1310, 5
        %v1313 = vsel %vm738, %v1308, %v1312
        %v1314 = vshrl.u32 %v1253, 16
        %v1316 = vrot.slane %v1314, 4
        %v1317 = vor.u32 %v1316, %v1312
        %v1318 = vrot.slane %v1317, 4
        %v1320 = vshll.u32 %v1254, 16
        %v1322 = vrot.slane %v1320, 5
        %v1323 = vsel %vm738, %v1318, %v1322
        %v1325 = vshrl.u32 %v1255, 16
        %v1327 = vrot.slane %v1325, 4
        %v1328 = vshll.u32 %v1255, 16
        %v1330 = vrot.slane %v1328, 5
        %v1331 = vor.u32 %v1327, %v1330
        %v1332 = vrot.slane %v1331, 4
        %v1334 = vshll.u32 %v1256, 16
        %v1336 = vrot.slane %v1334, 5
        %v1337 = vsel %vm738, %v1332, %v1336
        %v1338 = vshrl.u32 %v1256, 16
        %v1340 = vrot.slane %v1338, 4
        %v1341 = vor.u32 %v1340, %v1336
        %v1342 = vrot.slane %v1341, 4
        %v1344 = vshll.u32 %v1257, 16
        %v1346 = vrot.slane %v1344, 5
        %v1347 = vsel %vm738, %v1342, %v1346
        %v1349 = vshrl.u32 %v1258, 16
        %v1351 = vrot.slane %v1349, 4
        %v1352 = vshll.u32 %v1258, 16
        %v1354 = vrot.slane %v1352, 5
        %v1355 = vor.u32 %v1351, %v1354
        %v1356 = vrot.slane %v1355, 4
        %v1358 = vshll.u32 %v1259, 16
        %v1360 = vrot.slane %v1358, 5
        %v1361 = vsel %vm738, %v1356, %v1360
        %v1362 = vshrl.u32 %v1259, 16
        %v1364 = vrot.slane %v1362, 4
        %v1365 = vor.u32 %v1364, %v1360
        %v1366 = vrot.slane %v1365, 4
        %v1368 = vshll.u32 %v1260, 16
        %v1370 = vrot.slane %v1368, 5
        %v1371 = vsel %vm738, %v1366, %v1370
        %v1373 = vshrl.u32 %v1261, 16
        %v1375 = vrot.slane %v1373, 4
        %v1376 = vshll.u32 %v1261, 16
        %v1378 = vrot.slane %v1376, 5
        %v1379 = vor.u32 %v1375, %v1378
        %v1380 = vrot.slane %v1379, 4
        %v1382 = vshll.u32 %v1262, 16
        %v1384 = vrot.slane %v1382, 5
        %v1385 = vsel %vm738, %v1380, %v1384
        %v1386 = vshrl.u32 %v1262, 16
        %v1388 = vrot.slane %v1386, 4
        %v1389 = vor.u32 %v1388, %v1384
        %v1390 = vrot.slane %v1389, 4
        %v1392 = vshll.u32 %v1263, 16
        %v1394 = vrot.slane %v1392, 5
        %v1395 = vsel %vm738, %v1390, %v1394
        %v1397 = vshrl.u32 %v1264, 16
        %v1399 = vrot.slane %v1397, 4
        %v1400 = vshll.u32 %v1264, 16
        %v1402 = vrot.slane %v1400, 5
        %v1403 = vor.u32 %v1399, %v1402
        %v1404 = vrot.slane %v1403, 4
        %v1406 = vshll.u32 %v1265, 16
        %v1408 = vrot.slane %v1406, 5
        %v1409 = vsel %vm738, %v1404, %v1408
        %v1410 = vshrl.u32 %v1265, 16
        %v1412 = vrot.slane %v1410, 4
        %v1413 = vor.u32 %v1412, %v1408
        %v1414 = vrot.slane %v1413, 4
        %v1416 = vshll.u32 %v1266, 16
        %v1418 = vrot.slane %v1416, 5
        %v1419 = vsel %vm738, %v1414, %v1418
        %v1421 = vshrl.u32 %v1267, 16
        %v1423 = vrot.slane %v1421, 4
        %v1424 = vshll.u32 %v1267, 16
        %v1426 = vrot.slane %v1424, 5
        %v1427 = vor.u32 %v1423, %v1426
        %v1428 = vrot.slane %v1427, 4
        %v1430 = vshll.u32 %v1268, 16
        %v1432 = vrot.slane %v1430, 5
        %v1433 = vsel %vm738, %v1428, %v1432
        %v1434 = vshrl.u32 %v1268, 16
        %v1436 = vrot.slane %v1434, 4
        %v1437 = vor.u32 %v1436, %v1432
        %v1438 = vrot.slane %v1437, 4
        %v1440 = vshll.u32 %v1269, 16
        %v1442 = vrot.slane %v1440, 5
        %v1443 = vsel %vm738, %v1438, %v1442
        %v1445 = vshrl.u32 %v1270, 16
        %v1447 = vrot.slane %v1445, 4
        %v1448 = vshll.u32 %v1270, 16
        %v1450 = vrot.slane %v1448, 5
        %v1451 = vor.u32 %v1447, %v1450
        %v1452 = vrot.slane %v1451, 4
        %v1454 = vshll.u32 %v1271, 16
        %v1456 = vrot.slane %v1454, 5
        %v1457 = vsel %vm738, %v1452, %v1456
        %v1458 = vshrl.u32 %v1271, 16
        %v1460 = vrot.slane %v1458, 4
        %v1461 = vor.u32 %v1460, %v1456
        %v1462 = vrot.slane %v1461, 4
        %v1464 = vshll.u32 %v1272, 16
        %v1466 = vrot.slane %v1464, 5
        %v1467 = vsel %vm738, %v1462, %v1466
        %v1469 = vshrl.u32 %v1273, 16
        %v1471 = vrot.slane %v1469, 4
        %v1472 = vshll.u32 %v1273, 16
        %v1474 = vrot.slane %v1472, 5
        %v1475 = vor.u32 %v1471, %v1474
        %v1476 = vrot.slane %v1475, 4
        %v1478 = vshll.u32 %v1274, 16
        %v1480 = vrot.slane %v1478, 5
        %v1481 = vsel %vm738, %v1476, %v1480
        %v1482 = vshrl.u32 %v1274, 16
        %v1484 = vrot.slane %v1482, 4
        %v1485 = vor.u32 %v1484, %v1480
        %v1486 = vrot.slane %v1485, 4
        %v1488 = vshll.u32 %v1275, 16
        %v1490 = vrot.slane %v1488, 5
        %v1491 = vsel %vm738, %v1486, %v1490
        %v1493 = vshrl.u32 %v1276, 16
        %v1495 = vrot.slane %v1493, 4
        %v1496 = vshll.u32 %v1276, 16
        %v1498 = vrot.slane %v1496, 5
        %v1499 = vor.u32 %v1495, %v1498
        %v1500 = vrot.slane %v1499, 4
        %v1502 = vshll.u32 %v1277, 16
        %v1504 = vrot.slane %v1502, 5
        %v1505 = vsel %vm738, %v1500, %v1504
        %v1506 = vshrl.u32 %v1277, 16
        %v1508 = vrot.slane %v1506, 4
        %v1509 = vor.u32 %v1508, %v1504
        %v1510 = vrot.slane %v1509, 4
        %v1512 = vshll.u32 %v1278, 16
        %v1514 = vrot.slane %v1512, 5
        %v1515 = vsel %vm738, %v1510, %v1514
        %v1517 = vshrl.u32 %v1279, 16
        %v1519 = vrot.slane %v1517, 4
        %v1520 = vshll.u32 %v1279, 16
        %v1522 = vrot.slane %v1520, 5
        %v1523 = vor.u32 %v1519, %v1522
        %v1524 = vrot.slane %v1523, 4
        %v1526 = vshll.u32 %v1280, 16
        %v1528 = vrot.slane %v1526, 5
        %v1529 = vsel %vm738, %v1524, %v1528
        %v1530 = vshrl.u32 %v1280, 16
        %v1532 = vrot.slane %v1530, 4
        %v1533 = vor.u32 %v1532, %v1528
        %v1534 = vrot.slane %v1533, 4
        %v1536 = vshll.u32 %v1281, 16
        %v1538 = vrot.slane %v1536, 5
        %v1539 = vsel %vm738, %v1534, %v1538
        %v1541 = vshrl.u32 %v1282, 16
        %v1543 = vrot.slane %v1541, 4
        %v1544 = vshll.u32 %v1282, 16
        %v1546 = vrot.slane %v1544, 5
        %v1547 = vor.u32 %v1543, %v1546
        %v1548 = vrot.slane %v1547, 4
        %v1550 = vshll.u32 %v1283, 16
        %v1552 = vrot.slane %v1550, 5
        %v1553 = vsel %vm738, %v1548, %v1552
        %v1554 = vshrl.u32 %v1283, 16
        %v1556 = vrot.slane %v1554, 4
        %v1557 = vor.u32 %v1556, %v1552
        %v1558 = vrot.slane %v1557, 4
        %v1560 = vshll.u32 %v1284, 16
        %v1562 = vrot.slane %v1560, 5
        %v1563 = vsel %vm738, %v1558, %v1562
        %v1565 = vshrl.u32 %v1285, 16
        %v1567 = vrot.slane %v1565, 4
        %v1568 = vshll.u32 %v1285, 16
        %v1570 = vrot.slane %v1568, 5
        %v1571 = vor.u32 %v1567, %v1570
        %v1572 = vrot.slane %v1571, 4
        %v1574 = vshll.u32 %v1286, 16
        %v1576 = vrot.slane %v1574, 5
        %v1577 = vsel %vm738, %v1572, %v1576
        %v1578 = vshrl.u32 %v1286, 16
        %v1580 = vrot.slane %v1578, 4
        %v1581 = vor.u32 %v1580, %v1576
        %v1582 = vrot.slane %v1581, 4
        %v1584 = vshll.u32 %v1287, 16
        %v1586 = vrot.slane %v1584, 5
        %v1587 = vsel %vm738, %v1582, %v1586
        %v1589 = vshrl.u32 %v1288, 16
        %v1591 = vrot.slane %v1589, 4
        %v1592 = vshll.u32 %v1288, 16
        %v1594 = vrot.slane %v1592, 5
        %v1595 = vor.u32 %v1591, %v1594
        %v1596 = vrot.slane %v1595, 4
        %v1598 = vshll.u32 %v1289, 16
        %v1600 = vrot.slane %v1598, 5
        %v1601 = vsel %vm738, %v1596, %v1600
        %v1602 = vshrl.u32 %v1289, 16
        %v1604 = vrot.slane %v1602, 4
        %v1605 = vor.u32 %v1604, %v1600
        %v1606 = vrot.slane %v1605, 4
        %v1608 = vshll.u32 %v1290, 16
        %v1610 = vrot.slane %v1608, 5
        %v1611 = vsel %vm738, %v1606, %v1610
        %v1613 = vshrl.u32 %v1291, 16
        %v1615 = vrot.slane %v1613, 4
        %v1616 = vshll.u32 %v1291, 16
        %v1618 = vrot.slane %v1616, 5
        %v1619 = vor.u32 %v1615, %v1618
        %v1620 = vrot.slane %v1619, 4
        %v1622 = vshll.u32 %v1292, 16
        %v1624 = vrot.slane %v1622, 5
        %v1625 = vsel %vm738, %v1620, %v1624
        %v1626 = vshrl.u32 %v1292, 16
        %v1628 = vrot.slane %v1626, 4
        %v1629 = vor.u32 %v1628, %v1624
        %v1630 = vrot.slane %v1629, 4
        %v1632 = vshll.u32 %v1293, 16
        %v1634 = vrot.slane %v1632, 5
        %v1635 = vsel %vm738, %v1630, %v1634
        %v1637 = vshrl.u32 %v1294, 16
        %v1639 = vrot.slane %v1637, 4
        %v1640 = vshll.u32 %v1294, 16
        %v1642 = vrot.slane %v1640, 5
        %v1643 = vor.u32 %v1639, %v1642
        %v1644 = vrot.slane %v1643, 4
        %v1646 = vshll.u32 %v1295, 16
        %v1648 = vrot.slane %v1646, 5
        %v1649 = vsel %vm738, %v1644, %v1648
        %v1650 = vshrl.u32 %v1295, 16
        %v1652 = vrot.slane %v1650, 4
        %v1653 = vor.u32 %v1652, %v1648
        %v1654 = vrot.slane %v1653, 4
        %v1656 = vshll.u32 %v1296, 16
        %v1658 = vrot.slane %v1656, 5
        %v1659 = vsel %vm738, %v1654, %v1658
        %v1661 = vshrl.u32 %v1297, 16
        %v1663 = vrot.slane %v1661, 4
        %v1664 = vshll.u32 %v1297, 16
        %v1666 = vrot.slane %v1664, 5
        %v1667 = vor.u32 %v1663, %v1666
        %v1668 = vrot.slane %v1667, 4
        %v1670 = vshll.u32 %v1298, 16
        %v1672 = vrot.slane %v1670, 5
        %v1673 = vsel %vm738, %v1668, %v1672
        %v1674 = vshrl.u32 %v1298, 16
        %v1676 = vrot.slane %v1674, 4
        %v1677 = vor.u32 %v1676, %v1672
        %v1678 = vrot.slane %v1677, 4
        %v1680 = vshll.u32 %v1299, 16
        %v1682 = vrot.slane %v1680, 5
        %v1683 = vsel %vm738, %v1678, %v1682
        %1684 = vrot.lane.b32.xlu0 %v1313, 32
        %v1685 = vpop.permute.xlu0 %1684
        %1686 = vrot.lane.b32.xlu0 %v1323, 32
        %v1687 = vpop.permute.xlu0 %1686
        %1688 = vrot.lane.b32.xlu0 %v1337, 32
        %v1689 = vpop.permute.xlu0 %1688
        %1690 = vrot.lane.b32.xlu0 %v1347, 32
        %v1691 = vpop.permute.xlu0 %1690
        %1692 = vrot.lane.b32.xlu0 %v1361, 32
        %v1693 = vpop.permute.xlu0 %1692
        %1694 = vrot.lane.b32.xlu0 %v1371, 32
        %v1695 = vpop.permute.xlu0 %1694
        %1696 = vrot.lane.b32.xlu0 %v1385, 32
        %v1697 = vpop.permute.xlu0 %1696
        %1698 = vrot.lane.b32.xlu0 %v1395, 32
        %v1699 = vpop.permute.xlu0 %1698
        %1700 = vrot.lane.b32.xlu0 %v1409, 32
        %v1701 = vpop.permute.xlu0 %1700
        %1702 = vrot.lane.b32.xlu0 %v1419, 32
        %v1703 = vpop.permute.xlu0 %1702
        %1704 = vrot.lane.b32.xlu0 %v1433, 32
        %v1705 = vpop.permute.xlu0 %1704
        %1706 = vrot.lane.b32.xlu0 %v1443, 32
        %v1707 = vpop.permute.xlu0 %1706
        %1708 = vrot.lane.b32.xlu0 %v1457, 32
        %v1709 = vpop.permute.xlu0 %1708
        %1710 = vrot.lane.b32.xlu0 %v1467, 32
        %v1711 = vpop.permute.xlu0 %1710
        %1712 = vrot.lane.b32.xlu0 %v1481, 32
        %v1713 = vpop.permute.xlu0 %1712
        %1714 = vrot.lane.b32.xlu0 %v1491, 32
        %v1715 = vpop.permute.xlu0 %1714
        %1716 = vrot.lane.b32.xlu0 %v1505, 32
        %v1717 = vpop.permute.xlu0 %1716
        %1718 = vrot.lane.b32.xlu0 %v1515, 32
        %v1719 = vpop.permute.xlu0 %1718
        %1720 = vrot.lane.b32.xlu0 %v1529, 32
        %v1721 = vpop.permute.xlu0 %1720
        %1722 = vrot.lane.b32.xlu0 %v1539, 32
        %v1723 = vpop.permute.xlu0 %1722
        %1724 = vrot.lane.b32.xlu0 %v1553, 32
        %v1725 = vpop.permute.xlu0 %1724
        %1726 = vrot.lane.b32.xlu0 %v1563, 32
        %v1727 = vpop.permute.xlu0 %1726
        %1728 = vrot.lane.b32.xlu0 %v1577, 32
        %v1729 = vpop.permute.xlu0 %1728
        %1730 = vrot.lane.b32.xlu0 %v1587, 32
        %v1731 = vpop.permute.xlu0 %1730
        %1732 = vrot.lane.b32.xlu0 %v1601, 32
        %v1733 = vpop.permute.xlu0 %1732
        %1734 = vrot.lane.b32.xlu0 %v1611, 32
        %v1735 = vpop.permute.xlu0 %1734
        %1736 = vrot.lane.b32.xlu0 %v1625, 32
        %v1737 = vpop.permute.xlu0 %1736
        %1738 = vrot.lane.b32.xlu0 %v1635, 32
        %v1739 = vpop.permute.xlu0 %1738
        %1740 = vrot.lane.b32.xlu0 %v1649, 32
        %v1741 = vpop.permute.xlu0 %1740
        %1742 = vrot.lane.b32.xlu0 %v1659, 32
        %v1743 = vpop.permute.xlu0 %1742
        %1744 = vrot.lane.b32.xlu0 %v1673, 32
        %v1745 = vpop.permute.xlu0 %1744
        %1746 = vrot.lane.b32.xlu0 %v1683, 32
        %v1747 = vpop.permute.xlu0 %1746
        %vm1780 = vcmask 322816
        %1781 = vst.msk [vmem:[#allocation2] sm:$0xf] %vm1780, %v1685
        %1782 = vst.msk [vmem:[#allocation2 + $0x4] sm:$0xf] %vm1780, %v1687
        %1783 = vst.msk [vmem:[#allocation2 + $0x8] sm:$0xf] %vm1780, %v1689
        %1784 = vst.msk [vmem:[#allocation2 + $0xc] sm:$0xf] %vm1780, %v1691
        %1785 = vst.msk [vmem:[#allocation2 + $0x10] sm:$0xf] %vm1780, %v1693
        %1786 = vst.msk [vmem:[#allocation2 + $0x14] sm:$0xf] %vm1780, %v1695
        %1787 = vst.msk [vmem:[#allocation2 + $0x18] sm:$0xf] %vm1780, %v1697
        %1788 = vst.msk [vmem:[#allocation2 + $0x1c] sm:$0xf] %vm1780, %v1699
        %1789 = vst.msk [vmem:[#allocation2 + $0x20] sm:$0xf] %vm1780, %v1701
        %1790 = vst.msk [vmem:[#allocation2 + $0x24] sm:$0xf] %vm1780, %v1703
        %1791 = vst.msk [vmem:[#allocation2 + $0x28] sm:$0xf] %vm1780, %v1705
        %1792 = vst.msk [vmem:[#allocation2 + $0x2c] sm:$0xf] %vm1780, %v1707
        %1793 = vst.msk [vmem:[#allocation2 + $0x30] sm:$0xf] %vm1780, %v1709
        %1794 = vst.msk [vmem:[#allocation2 + $0x34] sm:$0xf] %vm1780, %v1711
        %1795 = vst.msk [vmem:[#allocation2 + $0x38] sm:$0xf] %vm1780, %v1713
        %1796 = vst.msk [vmem:[#allocation2 + $0x3c] sm:$0xf] %vm1780, %v1715
        %1797 = vst.msk [vmem:[#allocation2 + $0x40] sm:$0xf] %vm1780, %v1717
        %1798 = vst.msk [vmem:[#allocation2 + $0x44] sm:$0xf] %vm1780, %v1719
        %1799 = vst.msk [vmem:[#allocation2 + $0x48] sm:$0xf] %vm1780, %v1721
        %1800 = vst.msk [vmem:[#allocation2 + $0x4c] sm:$0xf] %vm1780, %v1723
        %1801 = vst.msk [vmem:[#allocation2 + $0x50] sm:$0xf] %vm1780, %v1725
        %1802 = vst.msk [vmem:[#allocation2 + $0x54] sm:$0xf] %vm1780, %v1727
        %1803 = vst.msk [vmem:[#allocation2 + $0x58] sm:$0xf] %vm1780, %v1729
        %1804 = vst.msk [vmem:[#allocation2 + $0x5c] sm:$0xf] %vm1780, %v1731
        %1805 = vst.msk [vmem:[#allocation2 + $0x60] sm:$0xf] %vm1780, %v1733
        %1806 = vst.msk [vmem:[#allocation2 + $0x64] sm:$0xf] %vm1780, %v1735
        %1807 = vst.msk [vmem:[#allocation2 + $0x68] sm:$0xf] %vm1780, %v1737
        %1808 = vst.msk [vmem:[#allocation2 + $0x6c] sm:$0xf] %vm1780, %v1739
        %1809 = vst.msk [vmem:[#allocation2 + $0x70] sm:$0xf] %vm1780, %v1741
        %1810 = vst.msk [vmem:[#allocation2 + $0x74] sm:$0xf] %vm1780, %v1743
        %1811 = vst.msk [vmem:[#allocation2 + $0x78] sm:$0xf] %vm1780, %v1745
        %1812 = vst.msk [vmem:[#allocation2 + $0x7c] sm:$0xf] %vm1780, %v1747
        %v1813 = vld [vmem:[%s494] sm:$0xf]
        %v1814 = vld [vmem:[%s494 + $0x4] sm:$0xf]
        %v1815 = vld [vmem:[%s494 + $0x8] sm:$0x1]
        %v1816 = vld [vmem:[%s494 + $0xc] sm:$0xf]
        %v1817 = vld [vmem:[%s494 + $0x10] sm:$0xf]
        %v1818 = vld [vmem:[%s494 + $0x14] sm:$0x1]
        %v1819 = vld [vmem:[%s494 + $0x18] sm:$0xf]
        %v1820 = vld [vmem:[%s494 + $0x1c] sm:$0xf]
        %v1821 = vld [vmem:[%s494 + $0x20] sm:$0x1]
        %v1822 = vld [vmem:[%s494 + $0x24] sm:$0xf]
        %v1823 = vld [vmem:[%s494 + $0x28] sm:$0xf]
        %v1824 = vld [vmem:[%s494 + $0x2c] sm:$0x1]
        %v1825 = vld [vmem:[%s494 + $0x30] sm:$0xf]
        %v1826 = vld [vmem:[%s494 + $0x34] sm:$0xf]
        %v1827 = vld [vmem:[%s494 + $0x38] sm:$0x1]
        %v1828 = vld [vmem:[%s494 + $0x3c] sm:$0xf]
        %v1829 = vld [vmem:[%s494 + $0x40] sm:$0xf]
        %v1830 = vld [vmem:[%s494 + $0x44] sm:$0x1]
        %v1831 = vld [vmem:[%s494 + $0x48] sm:$0xf]
        %v1832 = vld [vmem:[%s494 + $0x4c] sm:$0xf]
        %v1833 = vld [vmem:[%s494 + $0x50] sm:$0x1]
        %v1834 = vld [vmem:[%s494 + $0x54] sm:$0xf]
        %v1835 = vld [vmem:[%s494 + $0x58] sm:$0xf]
        %v1836 = vld [vmem:[%s494 + $0x5c] sm:$0x1]
        %v1837 = vld [vmem:[%s494 + $0x60] sm:$0xf]
        %v1838 = vld [vmem:[%s494 + $0x64] sm:$0xf]
        %v1839 = vld [vmem:[%s494 + $0x68] sm:$0x1]
        %v1840 = vld [vmem:[%s494 + $0x6c] sm:$0xf]
        %v1841 = vld [vmem:[%s494 + $0x70] sm:$0xf]
        %v1842 = vld [vmem:[%s494 + $0x74] sm:$0x1]
        %v1843 = vld [vmem:[%s494 + $0x78] sm:$0xf]
        %v1844 = vld [vmem:[%s494 + $0x7c] sm:$0xf]
        %v1845 = vld [vmem:[%s494 + $0x80] sm:$0x1]
        %v1846 = vld [vmem:[%s494 + $0x84] sm:$0xf]
        %v1847 = vld [vmem:[%s494 + $0x88] sm:$0xf]
        %v1848 = vld [vmem:[%s494 + $0x8c] sm:$0x1]
        %v1849 = vld [vmem:[%s494 + $0x90] sm:$0xf]
        %v1850 = vld [vmem:[%s494 + $0x94] sm:$0xf]
        %v1851 = vld [vmem:[%s494 + $0x98] sm:$0x1]
        %v1852 = vld [vmem:[%s494 + $0x9c] sm:$0xf]
        %v1853 = vld [vmem:[%s494 + $0xa0] sm:$0xf]
        %v1854 = vld [vmem:[%s494 + $0xa4] sm:$0x1]
        %v1855 = vld [vmem:[%s494 + $0xa8] sm:$0xf]
        %v1856 = vld [vmem:[%s494 + $0xac] sm:$0xf]
        %v1857 = vld [vmem:[%s494 + $0xb0] sm:$0x1]
        %v1858 = vld [vmem:[%s494 + $0xb4] sm:$0xf]
        %v1859 = vld [vmem:[%s494 + $0xb8] sm:$0xf]
        %v1860 = vld [vmem:[%s494 + $0xbc] sm:$0x1]
        %v1862 = vshrl.u32 %v1813, 16
        %v1864 = vrot.slane %v1862, 4
        %v1865 = vshll.u32 %v1813, 16
        %v1867 = vrot.slane %v1865, 5
        %v1868 = vor.u32 %v1864, %v1867
        %v1869 = vrot.slane %v1868, 4
        %v1871 = vshll.u32 %v1814, 16
        %v1873 = vrot.slane %v1871, 5
        %v1874 = vsel %vm738, %v1869, %v1873
        %v1875 = vshrl.u32 %v1814, 16
        %v1877 = vrot.slane %v1875, 4
        %v1878 = vor.u32 %v1877, %v1873
        %v1879 = vrot.slane %v1878, 4
        %v1881 = vshll.u32 %v1815, 16
        %v1883 = vrot.slane %v1881, 5
        %v1884 = vsel %vm738, %v1879, %v1883
        %v1886 = vshrl.u32 %v1816, 16
        %v1888 = vrot.slane %v1886, 4
        %v1889 = vshll.u32 %v1816, 16
        %v1891 = vrot.slane %v1889, 5
        %v1892 = vor.u32 %v1888, %v1891
        %v1893 = vrot.slane %v1892, 4
        %v1895 = vshll.u32 %v1817, 16
        %v1897 = vrot.slane %v1895, 5
        %v1898 = vsel %vm738, %v1893, %v1897
        %v1899 = vshrl.u32 %v1817, 16
        %v1901 = vrot.slane %v1899, 4
        %v1902 = vor.u32 %v1901, %v1897
        %v1903 = vrot.slane %v1902, 4
        %v1905 = vshll.u32 %v1818, 16
        %v1907 = vrot.slane %v1905, 5
        %v1908 = vsel %vm738, %v1903, %v1907
        %v1910 = vshrl.u32 %v1819, 16
        %v1912 = vrot.slane %v1910, 4
        %v1913 = vshll.u32 %v1819, 16
        %v1915 = vrot.slane %v1913, 5
        %v1916 = vor.u32 %v1912, %v1915
        %v1917 = vrot.slane %v1916, 4
        %v1919 = vshll.u32 %v1820, 16
        %v1921 = vrot.slane %v1919, 5
        %v1922 = vsel %vm738, %v1917, %v1921
        %v1923 = vshrl.u32 %v1820, 16
        %v1925 = vrot.slane %v1923, 4
        %v1926 = vor.u32 %v1925, %v1921
        %v1927 = vrot.slane %v1926, 4
        %v1929 = vshll.u32 %v1821, 16
        %v1931 = vrot.slane %v1929, 5
        %v1932 = vsel %vm738, %v1927, %v1931
        %v1934 = vshrl.u32 %v1822, 16
        %v1936 = vrot.slane %v1934, 4
        %v1937 = vshll.u32 %v1822, 16
        %v1939 = vrot.slane %v1937, 5
        %v1940 = vor.u32 %v1936, %v1939
        %v1941 = vrot.slane %v1940, 4
        %v1943 = vshll.u32 %v1823, 16
        %v1945 = vrot.slane %v1943, 5
        %v1946 = vsel %vm738, %v1941, %v1945
        %v1947 = vshrl.u32 %v1823, 16
        %v1949 = vrot.slane %v1947, 4
        %v1950 = vor.u32 %v1949, %v1945
        %v1951 = vrot.slane %v1950, 4
        %v1953 = vshll.u32 %v1824, 16
        %v1955 = vrot.slane %v1953, 5
        %v1956 = vsel %vm738, %v1951, %v1955
        %v1958 = vshrl.u32 %v1825, 16
        %v1960 = vrot.slane %v1958, 4
        %v1961 = vshll.u32 %v1825, 16
        %v1963 = vrot.slane %v1961, 5
        %v1964 = vor.u32 %v1960, %v1963
        %v1965 = vrot.slane %v1964, 4
        %v1967 = vshll.u32 %v1826, 16
        %v1969 = vrot.slane %v1967, 5
        %v1970 = vsel %vm738, %v1965, %v1969
        %v1971 = vshrl.u32 %v1826, 16
        %v1973 = vrot.slane %v1971, 4
        %v1974 = vor.u32 %v1973, %v1969
        %v1975 = vrot.slane %v1974, 4
        %v1977 = vshll.u32 %v1827, 16
        %v1979 = vrot.slane %v1977, 5
        %v1980 = vsel %vm738, %v1975, %v1979
        %v1982 = vshrl.u32 %v1828, 16
        %v1984 = vrot.slane %v1982, 4
        %v1985 = vshll.u32 %v1828, 16
        %v1987 = vrot.slane %v1985, 5
        %v1988 = vor.u32 %v1984, %v1987
        %v1989 = vrot.slane %v1988, 4
        %v1991 = vshll.u32 %v1829, 16
        %v1993 = vrot.slane %v1991, 5
        %v1994 = vsel %vm738, %v1989, %v1993
        %v1995 = vshrl.u32 %v1829, 16
        %v1997 = vrot.slane %v1995, 4
        %v1998 = vor.u32 %v1997, %v1993
        %v1999 = vrot.slane %v1998, 4
        %v2001 = vshll.u32 %v1830, 16
        %v2003 = vrot.slane %v2001, 5
        %v2004 = vsel %vm738, %v1999, %v2003
        %v2006 = vshrl.u32 %v1831, 16
        %v2008 = vrot.slane %v2006, 4
        %v2009 = vshll.u32 %v1831, 16
        %v2011 = vrot.slane %v2009, 5
        %v2012 = vor.u32 %v2008, %v2011
        %v2013 = vrot.slane %v2012, 4
        %v2015 = vshll.u32 %v1832, 16
        %v2017 = vrot.slane %v2015, 5
        %v2018 = vsel %vm738, %v2013, %v2017
        %v2019 = vshrl.u32 %v1832, 16
        %v2021 = vrot.slane %v2019, 4
        %v2022 = vor.u32 %v2021, %v2017
        %v2023 = vrot.slane %v2022, 4
        %v2025 = vshll.u32 %v1833, 16
        %v2027 = vrot.slane %v2025, 5
        %v2028 = vsel %vm738, %v2023, %v2027
        %v2030 = vshrl.u32 %v1834, 16
        %v2032 = vrot.slane %v2030, 4
        %v2033 = vshll.u32 %v1834, 16
        %v2035 = vrot.slane %v2033, 5
        %v2036 = vor.u32 %v2032, %v2035
        %v2037 = vrot.slane %v2036, 4
        %v2039 = vshll.u32 %v1835, 16
        %v2041 = vrot.slane %v2039, 5
        %v2042 = vsel %vm738, %v2037, %v2041
        %v2043 = vshrl.u32 %v1835, 16
        %v2045 = vrot.slane %v2043, 4
        %v2046 = vor.u32 %v2045, %v2041
        %v2047 = vrot.slane %v2046, 4
        %v2049 = vshll.u32 %v1836, 16
        %v2051 = vrot.slane %v2049, 5
        %v2052 = vsel %vm738, %v2047, %v2051
        %v2054 = vshrl.u32 %v1837, 16
        %v2056 = vrot.slane %v2054, 4
        %v2057 = vshll.u32 %v1837, 16
        %v2059 = vrot.slane %v2057, 5
        %v2060 = vor.u32 %v2056, %v2059
        %v2061 = vrot.slane %v2060, 4
        %v2063 = vshll.u32 %v1838, 16
        %v2065 = vrot.slane %v2063, 5
        %v2066 = vsel %vm738, %v2061, %v2065
        %v2067 = vshrl.u32 %v1838, 16
        %v2069 = vrot.slane %v2067, 4
        %v2070 = vor.u32 %v2069, %v2065
        %v2071 = vrot.slane %v2070, 4
        %v2073 = vshll.u32 %v1839, 16
        %v2075 = vrot.slane %v2073, 5
        %v2076 = vsel %vm738, %v2071, %v2075
        %v2078 = vshrl.u32 %v1840, 16
        %v2080 = vrot.slane %v2078, 4
        %v2081 = vshll.u32 %v1840, 16
        %v2083 = vrot.slane %v2081, 5
        %v2084 = vor.u32 %v2080, %v2083
        %v2085 = vrot.slane %v2084, 4
        %v2087 = vshll.u32 %v1841, 16
        %v2089 = vrot.slane %v2087, 5
        %v2090 = vsel %vm738, %v2085, %v2089
        %v2091 = vshrl.u32 %v1841, 16
        %v2093 = vrot.slane %v2091, 4
        %v2094 = vor.u32 %v2093, %v2089
        %v2095 = vrot.slane %v2094, 4
        %v2097 = vshll.u32 %v1842, 16
        %v2099 = vrot.slane %v2097, 5
        %v2100 = vsel %vm738, %v2095, %v2099
        %v2102 = vshrl.u32 %v1843, 16
        %v2104 = vrot.slane %v2102, 4
        %v2105 = vshll.u32 %v1843, 16
        %v2107 = vrot.slane %v2105, 5
        %v2108 = vor.u32 %v2104, %v2107
        %v2109 = vrot.slane %v2108, 4
        %v2111 = vshll.u32 %v1844, 16
        %v2113 = vrot.slane %v2111, 5
        %v2114 = vsel %vm738, %v2109, %v2113
        %v2115 = vshrl.u32 %v1844, 16
        %v2117 = vrot.slane %v2115, 4
        %v2118 = vor.u32 %v2117, %v2113
        %v2119 = vrot.slane %v2118, 4
        %v2121 = vshll.u32 %v1845, 16
        %v2123 = vrot.slane %v2121, 5
        %v2124 = vsel %vm738, %v2119, %v2123
        %v2126 = vshrl.u32 %v1846, 16
        %v2128 = vrot.slane %v2126, 4
        %v2129 = vshll.u32 %v1846, 16
        %v2131 = vrot.slane %v2129, 5
        %v2132 = vor.u32 %v2128, %v2131
        %v2133 = vrot.slane %v2132, 4
        %v2135 = vshll.u32 %v1847, 16
        %v2137 = vrot.slane %v2135, 5
        %v2138 = vsel %vm738, %v2133, %v2137
        %v2139 = vshrl.u32 %v1847, 16
        %v2141 = vrot.slane %v2139, 4
        %v2142 = vor.u32 %v2141, %v2137
        %v2143 = vrot.slane %v2142, 4
        %v2145 = vshll.u32 %v1848, 16
        %v2147 = vrot.slane %v2145, 5
        %v2148 = vsel %vm738, %v2143, %v2147
        %v2150 = vshrl.u32 %v1849, 16
        %v2152 = vrot.slane %v2150, 4
        %v2153 = vshll.u32 %v1849, 16
        %v2155 = vrot.slane %v2153, 5
        %v2156 = vor.u32 %v2152, %v2155
        %v2157 = vrot.slane %v2156, 4
        %v2159 = vshll.u32 %v1850, 16
        %v2161 = vrot.slane %v2159, 5
        %v2162 = vsel %vm738, %v2157, %v2161
        %v2163 = vshrl.u32 %v1850, 16
        %v2165 = vrot.slane %v2163, 4
        %v2166 = vor.u32 %v2165, %v2161
        %v2167 = vrot.slane %v2166, 4
        %v2169 = vshll.u32 %v1851, 16
        %v2171 = vrot.slane %v2169, 5
        %v2172 = vsel %vm738, %v2167, %v2171
        %v2174 = vshrl.u32 %v1852, 16
        %v2176 = vrot.slane %v2174, 4
        %v2177 = vshll.u32 %v1852, 16
        %v2179 = vrot.slane %v2177, 5
        %v2180 = vor.u32 %v2176, %v2179
        %v2181 = vrot.slane %v2180, 4
        %v2183 = vshll.u32 %v1853, 16
        %v2185 = vrot.slane %v2183, 5
        %v2186 = vsel %vm738, %v2181, %v2185
        %v2187 = vshrl.u32 %v1853, 16
        %v2189 = vrot.slane %v2187, 4
        %v2190 = vor.u32 %v2189, %v2185
        %v2191 = vrot.slane %v2190, 4
        %v2193 = vshll.u32 %v1854, 16
        %v2195 = vrot.slane %v2193, 5
        %v2196 = vsel %vm738, %v2191, %v2195
        %v2198 = vshrl.u32 %v1855, 16
        %v2200 = vrot.slane %v2198, 4
        %v2201 = vshll.u32 %v1855, 16
        %v2203 = vrot.slane %v2201, 5
        %v2204 = vor.u32 %v2200, %v2203
        %v2205 = vrot.slane %v2204, 4
        %v2207 = vshll.u32 %v1856, 16
        %v2209 = vrot.slane %v2207, 5
        %v2210 = vsel %vm738, %v2205, %v2209
        %v2211 = vshrl.u32 %v1856, 16
        %v2213 = vrot.slane %v2211, 4
        %v2214 = vor.u32 %v2213, %v2209
        %v2215 = vrot.slane %v2214, 4
        %v2217 = vshll.u32 %v1857, 16
        %v2219 = vrot.slane %v2217, 5
        %v2220 = vsel %vm738, %v2215, %v2219
        %v2222 = vshrl.u32 %v1858, 16
        %v2224 = vrot.slane %v2222, 4
        %v2225 = vshll.u32 %v1858, 16
        %v2227 = vrot.slane %v2225, 5
        %v2228 = vor.u32 %v2224, %v2227
        %v2229 = vrot.slane %v2228, 4
        %v2231 = vshll.u32 %v1859, 16
        %v2233 = vrot.slane %v2231, 5
        %v2234 = vsel %vm738, %v2229, %v2233
        %v2235 = vshrl.u32 %v1859, 16
        %v2237 = vrot.slane %v2235, 4
        %v2238 = vor.u32 %v2237, %v2233
        %v2239 = vrot.slane %v2238, 4
        %v2241 = vshll.u32 %v1860, 16
        %v2243 = vrot.slane %v2241, 5
        %v2244 = vsel %vm738, %v2239, %v2243
        %2245 = vrot.lane.b32.xlu0 %v1874, 40
        %v2246 = vpop.permute.xlu0 %2245
        %2247 = vrot.lane.b32.xlu0 %v1884, 40
        %v2248 = vpop.permute.xlu0 %2247
        %2249 = vrot.lane.b32.xlu0 %v1898, 40
        %v2250 = vpop.permute.xlu0 %2249
        %2251 = vrot.lane.b32.xlu0 %v1908, 40
        %v2252 = vpop.permute.xlu0 %2251
        %2253 = vrot.lane.b32.xlu0 %v1922, 40
        %v2254 = vpop.permute.xlu0 %2253
        %2255 = vrot.lane.b32.xlu0 %v1932, 40
        %v2256 = vpop.permute.xlu0 %2255
        %2257 = vrot.lane.b32.xlu0 %v1946, 40
        %v2258 = vpop.permute.xlu0 %2257
        %2259 = vrot.lane.b32.xlu0 %v1956, 40
        %v2260 = vpop.permute.xlu0 %2259
        %2261 = vrot.lane.b32.xlu0 %v1970, 40
        %v2262 = vpop.permute.xlu0 %2261
        %2263 = vrot.lane.b32.xlu0 %v1980, 40
        %v2264 = vpop.permute.xlu0 %2263
        %2265 = vrot.lane.b32.xlu0 %v1994, 40
        %v2266 = vpop.permute.xlu0 %2265
        %2267 = vrot.lane.b32.xlu0 %v2004, 40
        %v2268 = vpop.permute.xlu0 %2267
        %2269 = vrot.lane.b32.xlu0 %v2018, 40
        %v2270 = vpop.permute.xlu0 %2269
        %2271 = vrot.lane.b32.xlu0 %v2028, 40
        %v2272 = vpop.permute.xlu0 %2271
        %2273 = vrot.lane.b32.xlu0 %v2042, 40
        %v2274 = vpop.permute.xlu0 %2273
        %2275 = vrot.lane.b32.xlu0 %v2052, 40
        %v2276 = vpop.permute.xlu0 %2275
        %2277 = vrot.lane.b32.xlu0 %v2066, 40
        %v2278 = vpop.permute.xlu0 %2277
        %2279 = vrot.lane.b32.xlu0 %v2076, 40
        %v2280 = vpop.permute.xlu0 %2279
        %2281 = vrot.lane.b32.xlu0 %v2090, 40
        %v2282 = vpop.permute.xlu0 %2281
        %2283 = vrot.lane.b32.xlu0 %v2100, 40
        %v2284 = vpop.permute.xlu0 %2283
        %2285 = vrot.lane.b32.xlu0 %v2114, 40
        %v2286 = vpop.permute.xlu0 %2285
        %2287 = vrot.lane.b32.xlu0 %v2124, 40
        %v2288 = vpop.permute.xlu0 %2287
        %2289 = vrot.lane.b32.xlu0 %v2138, 40
        %v2290 = vpop.permute.xlu0 %2289
        %2291 = vrot.lane.b32.xlu0 %v2148, 40
        %v2292 = vpop.permute.xlu0 %2291
        %2293 = vrot.lane.b32.xlu0 %v2162, 40
        %v2294 = vpop.permute.xlu0 %2293
        %2295 = vrot.lane.b32.xlu0 %v2172, 40
        %v2296 = vpop.permute.xlu0 %2295
        %2297 = vrot.lane.b32.xlu0 %v2186, 40
        %v2298 = vpop.permute.xlu0 %2297
        %2299 = vrot.lane.b32.xlu0 %v2196, 40
        %v2300 = vpop.permute.xlu0 %2299
        %2301 = vrot.lane.b32.xlu0 %v2210, 40
        %v2302 = vpop.permute.xlu0 %2301
        %2303 = vrot.lane.b32.xlu0 %v2220, 40
        %v2304 = vpop.permute.xlu0 %2303
        %2305 = vrot.lane.b32.xlu0 %v2234, 40
        %v2306 = vpop.permute.xlu0 %2305
        %2307 = vrot.lane.b32.xlu0 %v2244, 40
        %v2308 = vpop.permute.xlu0 %2307
        %vm2341 = vcmask 388416
        %2342 = vst.msk [vmem:[#allocation2] sm:$0xf] %vm2341, %v2246
        %2343 = vst.msk [vmem:[#allocation2 + $0x4] sm:$0xf] %vm2341, %v2248
        %2344 = vst.msk [vmem:[#allocation2 + $0x8] sm:$0xf] %vm2341, %v2250
        %2345 = vst.msk [vmem:[#allocation2 + $0xc] sm:$0xf] %vm2341, %v2252
        %2346 = vst.msk [vmem:[#allocation2 + $0x10] sm:$0xf] %vm2341, %v2254
        %2347 = vst.msk [vmem:[#allocation2 + $0x14] sm:$0xf] %vm2341, %v2256
        %2348 = vst.msk [vmem:[#allocation2 + $0x18] sm:$0xf] %vm2341, %v2258
        %2349 = vst.msk [vmem:[#allocation2 + $0x1c] sm:$0xf] %vm2341, %v2260
        %2350 = vst.msk [vmem:[#allocation2 + $0x20] sm:$0xf] %vm2341, %v2262
        %2351 = vst.msk [vmem:[#allocation2 + $0x24] sm:$0xf] %vm2341, %v2264
        %2352 = vst.msk [vmem:[#allocation2 + $0x28] sm:$0xf] %vm2341, %v2266
        %2353 = vst.msk [vmem:[#allocation2 + $0x2c] sm:$0xf] %vm2341, %v2268
        %2354 = vst.msk [vmem:[#allocation2 + $0x30] sm:$0xf] %vm2341, %v2270
        %2355 = vst.msk [vmem:[#allocation2 + $0x34] sm:$0xf] %vm2341, %v2272
        %2356 = vst.msk [vmem:[#allocation2 + $0x38] sm:$0xf] %vm2341, %v2274
        %2357 = vst.msk [vmem:[#allocation2 + $0x3c] sm:$0xf] %vm2341, %v2276
        %2358 = vst.msk [vmem:[#allocation2 + $0x40] sm:$0xf] %vm2341, %v2278
        %2359 = vst.msk [vmem:[#allocation2 + $0x44] sm:$0xf] %vm2341, %v2280
        %2360 = vst.msk [vmem:[#allocation2 + $0x48] sm:$0xf] %vm2341, %v2282
        %2361 = vst.msk [vmem:[#allocation2 + $0x4c] sm:$0xf] %vm2341, %v2284
        %2362 = vst.msk [vmem:[#allocation2 + $0x50] sm:$0xf] %vm2341, %v2286
        %2363 = vst.msk [vmem:[#allocation2 + $0x54] sm:$0xf] %vm2341, %v2288
        %2364 = vst.msk [vmem:[#allocation2 + $0x58] sm:$0xf] %vm2341, %v2290
        %2365 = vst.msk [vmem:[#allocation2 + $0x5c] sm:$0xf] %vm2341, %v2292
        %2366 = vst.msk [vmem:[#allocation2 + $0x60] sm:$0xf] %vm2341, %v2294
        %2367 = vst.msk [vmem:[#allocation2 + $0x64] sm:$0xf] %vm2341, %v2296
        %2368 = vst.msk [vmem:[#allocation2 + $0x68] sm:$0xf] %vm2341, %v2298
        %2369 = vst.msk [vmem:[#allocation2 + $0x6c] sm:$0xf] %vm2341, %v2300
        %2370 = vst.msk [vmem:[#allocation2 + $0x70] sm:$0xf] %vm2341, %v2302
        %2371 = vst.msk [vmem:[#allocation2 + $0x74] sm:$0xf] %vm2341, %v2304
        %2372 = vst.msk [vmem:[#allocation2 + $0x78] sm:$0xf] %vm2341, %v2306
        %2373 = vst.msk [vmem:[#allocation2 + $0x7c] sm:$0xf] %vm2341, %v2308
        %v2374 = vld [vmem:[%s228] sm:$0xe]
        %v2375 = vld [vmem:[%s228 + $0x4] sm:$0xf]
        %v2376 = vld [vmem:[%s228 + $0x8] sm:$0x1]
        %v2377 = vld [vmem:[%s228 + $0xc] sm:$0xe]
        %v2378 = vld [vmem:[%s228 + $0x10] sm:$0xf]
        %v2379 = vld [vmem:[%s228 + $0x14] sm:$0x1]
        %v2380 = vld [vmem:[%s228 + $0x18] sm:$0xe]
        %v2381 = vld [vmem:[%s228 + $0x1c] sm:$0xf]
        %v2382 = vld [vmem:[%s228 + $0x20] sm:$0x1]
        %v2383 = vld [vmem:[%s228 + $0x24] sm:$0xe]
        %v2384 = vld [vmem:[%s228 + $0x28] sm:$0xf]
        %v2385 = vld [vmem:[%s228 + $0x2c] sm:$0x1]
        %v2386 = vld [vmem:[%s228 + $0x30] sm:$0xe]
        %v2387 = vld [vmem:[%s228 + $0x34] sm:$0xf]
        %v2388 = vld [vmem:[%s228 + $0x38] sm:$0x1]
        %v2389 = vld [vmem:[%s228 + $0x3c] sm:$0xe]
        %v2390 = vld [vmem:[%s228 + $0x40] sm:$0xf]
        %v2391 = vld [vmem:[%s228 + $0x44] sm:$0x1]
        %v2392 = vld [vmem:[%s228 + $0x48] sm:$0xe]
        %v2393 = vld [vmem:[%s228 + $0x4c] sm:$0xf]
        %v2394 = vld [vmem:[%s228 + $0x50] sm:$0x1]
        %v2395 = vld [vmem:[%s228 + $0x54] sm:$0xe]
        %v2396 = vld [vmem:[%s228 + $0x58] sm:$0xf]
        %v2397 = vld [vmem:[%s228 + $0x5c] sm:$0x1]
        %v2398 = vld [vmem:[%s228 + $0x60] sm:$0xe]
        %v2399 = vld [vmem:[%s228 + $0x64] sm:$0xf]
        %v2400 = vld [vmem:[%s228 + $0x68] sm:$0x1]
        %v2401 = vld [vmem:[%s228 + $0x6c] sm:$0xe]
        %v2402 = vld [vmem:[%s228 + $0x70] sm:$0xf]
        %v2403 = vld [vmem:[%s228 + $0x74] sm:$0x1]
        %v2404 = vld [vmem:[%s228 + $0x78] sm:$0xe]
        %v2405 = vld [vmem:[%s228 + $0x7c] sm:$0xf]
        %v2406 = vld [vmem:[%s228 + $0x80] sm:$0x1]
        %v2407 = vld [vmem:[%s228 + $0x84] sm:$0xe]
        %v2408 = vld [vmem:[%s228 + $0x88] sm:$0xf]
        %v2409 = vld [vmem:[%s228 + $0x8c] sm:$0x1]
        %v2410 = vld [vmem:[%s228 + $0x90] sm:$0xe]
        %v2411 = vld [vmem:[%s228 + $0x94] sm:$0xf]
        %v2412 = vld [vmem:[%s228 + $0x98] sm:$0x1]
        %v2413 = vld [vmem:[%s228 + $0x9c] sm:$0xe]
        %v2414 = vld [vmem:[%s228 + $0xa0] sm:$0xf]
        %v2415 = vld [vmem:[%s228 + $0xa4] sm:$0x1]
        %v2416 = vld [vmem:[%s228 + $0xa8] sm:$0xe]
        %v2417 = vld [vmem:[%s228 + $0xac] sm:$0xf]
        %v2418 = vld [vmem:[%s228 + $0xb0] sm:$0x1]
        %v2419 = vld [vmem:[%s228 + $0xb4] sm:$0xe]
        %v2420 = vld [vmem:[%s228 + $0xb8] sm:$0xf]
        %v2421 = vld [vmem:[%s228 + $0xbc] sm:$0x1]
        %vm2470 = vcmask 1042432
        %vm2471 = vcmask 1046532
        %vm2472 = vmor %vm2470, %vm2471
        %v2473 = vrot.slane %v2374, 5
        %v2474 = vrot.slane %v2473, 4
        %v2475 = vrot.slane %v2375, 5
        %v2476 = vsel %vm2472, %v2474, %v2475
        %v2477 = vrot.slane %v2475, 4
        %v2478 = vrot.slane %v2376, 5
        %v2479 = vsel %vm2472, %v2477, %v2478
        %v2480 = vrot.slane %v2377, 5
        %v2481 = vrot.slane %v2480, 4
        %v2482 = vrot.slane %v2378, 5
        %v2483 = vsel %vm2472, %v2481, %v2482
        %v2484 = vrot.slane %v2482, 4
        %v2485 = vrot.slane %v2379, 5
        %v2486 = vsel %vm2472, %v2484, %v2485
        %v2487 = vrot.slane %v2380, 5
        %v2488 = vrot.slane %v2487, 4
        %v2489 = vrot.slane %v2381, 5
        %v2490 = vsel %vm2472, %v2488, %v2489
        %v2491 = vrot.slane %v2489, 4
        %v2492 = vrot.slane %v2382, 5
        %v2493 = vsel %vm2472, %v2491, %v2492
        %v2494 = vrot.slane %v2383, 5
        %v2495 = vrot.slane %v2494, 4
        %v2496 = vrot.slane %v2384, 5
        %v2497 = vsel %vm2472, %v2495, %v2496
        %v2498 = vrot.slane %v2496, 4
        %v2499 = vrot.slane %v2385, 5
        %v2500 = vsel %vm2472, %v2498, %v2499
        %v2501 = vrot.slane %v2386, 5
        %v2502 = vrot.slane %v2501, 4
        %v2503 = vrot.slane %v2387, 5
        %v2504 = vsel %vm2472, %v2502, %v2503
        %v2505 = vrot.slane %v2503, 4
        %v2506 = vrot.slane %v2388, 5
        %v2507 = vsel %vm2472, %v2505, %v2506
        %v2508 = vrot.slane %v2389, 5
        %v2509 = vrot.slane %v2508, 4
        %v2510 = vrot.slane %v2390, 5
        %v2511 = vsel %vm2472, %v2509, %v2510
        %v2512 = vrot.slane %v2510, 4
        %v2513 = vrot.slane %v2391, 5
        %v2514 = vsel %vm2472, %v2512, %v2513
        %v2515 = vrot.slane %v2392, 5
        %v2516 = vrot.slane %v2515, 4
        %v2517 = vrot.slane %v2393, 5
        %v2518 = vsel %vm2472, %v2516, %v2517
        %v2519 = vrot.slane %v2517, 4
        %v2520 = vrot.slane %v2394, 5
        %v2521 = vsel %vm2472, %v2519, %v2520
        %v2522 = vrot.slane %v2395, 5
        %v2523 = vrot.slane %v2522, 4
        %v2524 = vrot.slane %v2396, 5
        %v2525 = vsel %vm2472, %v2523, %v2524
        %v2526 = vrot.slane %v2524, 4
        %v2527 = vrot.slane %v2397, 5
        %v2528 = vsel %vm2472, %v2526, %v2527
        %v2529 = vrot.slane %v2398, 5
        %v2530 = vrot.slane %v2529, 4
        %v2531 = vrot.slane %v2399, 5
        %v2532 = vsel %vm2472, %v2530, %v2531
        %v2533 = vrot.slane %v2531, 4
        %v2534 = vrot.slane %v2400, 5
        %v2535 = vsel %vm2472, %v2533, %v2534
        %v2536 = vrot.slane %v2401, 5
        %v2537 = vrot.slane %v2536, 4
        %v2538 = vrot.slane %v2402, 5
        %v2539 = vsel %vm2472, %v2537, %v2538
        %v2540 = vrot.slane %v2538, 4
        %v2541 = vrot.slane %v2403, 5
        %v2542 = vsel %vm2472, %v2540, %v2541
        %v2543 = vrot.slane %v2404, 5
        %v2544 = vrot.slane %v2543, 4
        %v2545 = vrot.slane %v2405, 5
        %v2546 = vsel %vm2472, %v2544, %v2545
        %v2547 = vrot.slane %v2545, 4
        %v2548 = vrot.slane %v2406, 5
        %v2549 = vsel %vm2472, %v2547, %v2548
        %v2550 = vrot.slane %v2407, 5
        %v2551 = vrot.slane %v2550, 4
        %v2552 = vrot.slane %v2408, 5
        %v2553 = vsel %vm2472, %v2551, %v2552
        %v2554 = vrot.slane %v2552, 4
        %v2555 = vrot.slane %v2409, 5
        %v2556 = vsel %vm2472, %v2554, %v2555
        %v2557 = vrot.slane %v2410, 5
        %v2558 = vrot.slane %v2557, 4
        %v2559 = vrot.slane %v2411, 5
        %v2560 = vsel %vm2472, %v2558, %v2559
        %v2561 = vrot.slane %v2559, 4
        %v2562 = vrot.slane %v2412, 5
        %v2563 = vsel %vm2472, %v2561, %v2562
        %v2564 = vrot.slane %v2413, 5
        %v2565 = vrot.slane %v2564, 4
        %v2566 = vrot.slane %v2414, 5
        %v2567 = vsel %vm2472, %v2565, %v2566
        %v2568 = vrot.slane %v2566, 4
        %v2569 = vrot.slane %v2415, 5
        %v2570 = vsel %vm2472, %v2568, %v2569
        %v2571 = vrot.slane %v2416, 5
        %v2572 = vrot.slane %v2571, 4
        %v2573 = vrot.slane %v2417, 5
        %v2574 = vsel %vm2472, %v2572, %v2573
        %v2575 = vrot.slane %v2573, 4
        %v2576 = vrot.slane %v2418, 5
        %v2577 = vsel %vm2472, %v2575, %v2576
        %v2578 = vrot.slane %v2419, 5
        %v2579 = vrot.slane %v2578, 4
        %v2580 = vrot.slane %v2420, 5
        %v2581 = vsel %vm2472, %v2579, %v2580
        %v2582 = vrot.slane %v2580, 4
        %v2583 = vrot.slane %v2421, 5
        %v2584 = vsel %vm2472, %v2582, %v2583
        %2585 = vrot.lane.b32.xlu0 %v2476, 48
        %v2586 = vpop.permute.xlu0 %2585
        %2587 = vrot.lane.b32.xlu0 %v2479, 48
        %v2588 = vpop.permute.xlu0 %2587
        %2589 = vrot.lane.b32.xlu0 %v2483, 48
        %v2590 = vpop.permute.xlu0 %2589
        %2591 = vrot.lane.b32.xlu0 %v2486, 48
        %v2592 = vpop.permute.xlu0 %2591
        %2593 = vrot.lane.b32.xlu0 %v2490, 48
        %v2594 = vpop.permute.xlu0 %2593
        %2595 = vrot.lane.b32.xlu0 %v2493, 48
        %v2596 = vpop.permute.xlu0 %2595
        %2597 = vrot.lane.b32.xlu0 %v2497, 48
        %v2598 = vpop.permute.xlu0 %2597
        %2599 = vrot.lane.b32.xlu0 %v2500, 48
        %v2600 = vpop.permute.xlu0 %2599
        %2601 = vrot.lane.b32.xlu0 %v2504, 48
        %v2602 = vpop.permute.xlu0 %2601
        %2603 = vrot.lane.b32.xlu0 %v2507, 48
        %v2604 = vpop.permute.xlu0 %2603
        %2605 = vrot.lane.b32.xlu0 %v2511, 48
        %v2606 = vpop.permute.xlu0 %2605
        %2607 = vrot.lane.b32.xlu0 %v2514, 48
        %v2608 = vpop.permute.xlu0 %2607
        %2609 = vrot.lane.b32.xlu0 %v2518, 48
        %v2610 = vpop.permute.xlu0 %2609
        %2611 = vrot.lane.b32.xlu0 %v2521, 48
        %v2612 = vpop.permute.xlu0 %2611
        %2613 = vrot.lane.b32.xlu0 %v2525, 48
        %v2614 = vpop.permute.xlu0 %2613
        %2615 = vrot.lane.b32.xlu0 %v2528, 48
        %v2616 = vpop.permute.xlu0 %2615
        %2617 = vrot.lane.b32.xlu0 %v2532, 48
        %v2618 = vpop.permute.xlu0 %2617
        %2619 = vrot.lane.b32.xlu0 %v2535, 48
        %v2620 = vpop.permute.xlu0 %2619
        %2621 = vrot.lane.b32.xlu0 %v2539, 48
        %v2622 = vpop.permute.xlu0 %2621
        %2623 = vrot.lane.b32.xlu0 %v2542, 48
        %v2624 = vpop.permute.xlu0 %2623
        %2625 = vrot.lane.b32.xlu0 %v2546, 48
        %v2626 = vpop.permute.xlu0 %2625
        %2627 = vrot.lane.b32.xlu0 %v2549, 48
        %v2628 = vpop.permute.xlu0 %2627
        %2629 = vrot.lane.b32.xlu0 %v2553, 48
        %v2630 = vpop.permute.xlu0 %2629
        %2631 = vrot.lane.b32.xlu0 %v2556, 48
        %v2632 = vpop.permute.xlu0 %2631
        %2633 = vrot.lane.b32.xlu0 %v2560, 48
        %v2634 = vpop.permute.xlu0 %2633
        %2635 = vrot.lane.b32.xlu0 %v2563, 48
        %v2636 = vpop.permute.xlu0 %2635
        %2637 = vrot.lane.b32.xlu0 %v2567, 48
        %v2638 = vpop.permute.xlu0 %2637
        %2639 = vrot.lane.b32.xlu0 %v2570, 48
        %v2640 = vpop.permute.xlu0 %2639
        %2641 = vrot.lane.b32.xlu0 %v2574, 48
        %v2642 = vpop.permute.xlu0 %2641
        %2643 = vrot.lane.b32.xlu0 %v2577, 48
        %v2644 = vpop.permute.xlu0 %2643
        %2645 = vrot.lane.b32.xlu0 %v2581, 48
        %v2646 = vpop.permute.xlu0 %2645
        %2647 = vrot.lane.b32.xlu0 %v2584, 48
        %v2648 = vpop.permute.xlu0 %2647
        %vm2681 = vcmask 454016
        %2682 = vst.msk [vmem:[#allocation2] sm:$0xf] %vm2681, %v2586
        %2683 = vst.msk [vmem:[#allocation2 + $0x4] sm:$0xf] %vm2681, %v2588
        %2684 = vst.msk [vmem:[#allocation2 + $0x8] sm:$0xf] %vm2681, %v2590
        %2685 = vst.msk [vmem:[#allocation2 + $0xc] sm:$0xf] %vm2681, %v2592
        %2686 = vst.msk [vmem:[#allocation2 + $0x10] sm:$0xf] %vm2681, %v2594
        %2687 = vst.msk [vmem:[#allocation2 + $0x14] sm:$0xf] %vm2681, %v2596
        %2688 = vst.msk [vmem:[#allocation2 + $0x18] sm:$0xf] %vm2681, %v2598
        %2689 = vst.msk [vmem:[#allocation2 + $0x1c] sm:$0xf] %vm2681, %v2600
        %2690 = vst.msk [vmem:[#allocation2 + $0x20] sm:$0xf] %vm2681, %v2602
        %2691 = vst.msk [vmem:[#allocation2 + $0x24] sm:$0xf] %vm2681, %v2604
        %2692 = vst.msk [vmem:[#allocation2 + $0x28] sm:$0xf] %vm2681, %v2606
        %2693 = vst.msk [vmem:[#allocation2 + $0x2c] sm:$0xf] %vm2681, %v2608
        %2694 = vst.msk [vmem:[#allocation2 + $0x30] sm:$0xf] %vm2681, %v2610
        %2695 = vst.msk [vmem:[#allocation2 + $0x34] sm:$0xf] %vm2681, %v2612
        %2696 = vst.msk [vmem:[#allocation2 + $0x38] sm:$0xf] %vm2681, %v2614
        %2697 = vst.msk [vmem:[#allocation2 + $0x3c] sm:$0xf] %vm2681, %v2616
        %2698 = vst.msk [vmem:[#allocation2 + $0x40] sm:$0xf] %vm2681, %v2618
        %2699 = vst.msk [vmem:[#allocation2 + $0x44] sm:$0xf] %vm2681, %v2620
        %2700 = vst.msk [vmem:[#allocation2 + $0x48] sm:$0xf] %vm2681, %v2622
        %2701 = vst.msk [vmem:[#allocation2 + $0x4c] sm:$0xf] %vm2681, %v2624
        %2702 = vst.msk [vmem:[#allocation2 + $0x50] sm:$0xf] %vm2681, %v2626
        %2703 = vst.msk [vmem:[#allocation2 + $0x54] sm:$0xf] %vm2681, %v2628
        %2704 = vst.msk [vmem:[#allocation2 + $0x58] sm:$0xf] %vm2681, %v2630
        %2705 = vst.msk [vmem:[#allocation2 + $0x5c] sm:$0xf] %vm2681, %v2632
        %2706 = vst.msk [vmem:[#allocation2 + $0x60] sm:$0xf] %vm2681, %v2634
        %2707 = vst.msk [vmem:[#allocation2 + $0x64] sm:$0xf] %vm2681, %v2636
        %2708 = vst.msk [vmem:[#allocation2 + $0x68] sm:$0xf] %vm2681, %v2638
        %2709 = vst.msk [vmem:[#allocation2 + $0x6c] sm:$0xf] %vm2681, %v2640
        %2710 = vst.msk [vmem:[#allocation2 + $0x70] sm:$0xf] %vm2681, %v2642
        %2711 = vst.msk [vmem:[#allocation2 + $0x74] sm:$0xf] %vm2681, %v2644
        %2712 = vst.msk [vmem:[#allocation2 + $0x78] sm:$0xf] %vm2681, %v2646
        %2713 = vst.msk [vmem:[#allocation2 + $0x7c] sm:$0xf] %vm2681, %v2648
        %v2714 = vld [vmem:[%s297] sm:$0xe]
        %v2715 = vld [vmem:[%s297 + $0x4] sm:$0xf]
        %v2716 = vld [vmem:[%s297 + $0x8] sm:$0x1]
        %v2717 = vld [vmem:[%s297 + $0xc] sm:$0xe]
        %v2718 = vld [vmem:[%s297 + $0x10] sm:$0xf]
        %v2719 = vld [vmem:[%s297 + $0x14] sm:$0x1]
        %v2720 = vld [vmem:[%s297 + $0x18] sm:$0xe]
        %v2721 = vld [vmem:[%s297 + $0x1c] sm:$0xf]
        %v2722 = vld [vmem:[%s297 + $0x20] sm:$0x1]
        %v2723 = vld [vmem:[%s297 + $0x24] sm:$0xe]
        %v2724 = vld [vmem:[%s297 + $0x28] sm:$0xf]
        %v2725 = vld [vmem:[%s297 + $0x2c] sm:$0x1]
        %v2726 = vld [vmem:[%s297 + $0x30] sm:$0xe]
        %v2727 = vld [vmem:[%s297 + $0x34] sm:$0xf]
        %v2728 = vld [vmem:[%s297 + $0x38] sm:$0x1]
        %v2729 = vld [vmem:[%s297 + $0x3c] sm:$0xe]
        %v2730 = vld [vmem:[%s297 + $0x40] sm:$0xf]
        %v2731 = vld [vmem:[%s297 + $0x44] sm:$0x1]
        %v2732 = vld [vmem:[%s297 + $0x48] sm:$0xe]
        %v2733 = vld [vmem:[%s297 + $0x4c] sm:$0xf]
        %v2734 = vld [vmem:[%s297 + $0x50] sm:$0x1]
        %v2735 = vld [vmem:[%s297 + $0x54] sm:$0xe]
        %v2736 = vld [vmem:[%s297 + $0x58] sm:$0xf]
        %v2737 = vld [vmem:[%s297 + $0x5c] sm:$0x1]
        %v2738 = vld [vmem:[%s297 + $0x60] sm:$0xe]
        %v2739 = vld [vmem:[%s297 + $0x64] sm:$0xf]
        %v2740 = vld [vmem:[%s297 + $0x68] sm:$0x1]
        %v2741 = vld [vmem:[%s297 + $0x6c] sm:$0xe]
        %v2742 = vld [vmem:[%s297 + $0x70] sm:$0xf]
        %v2743 = vld [vmem:[%s297 + $0x74] sm:$0x1]
        %v2744 = vld [vmem:[%s297 + $0x78] sm:$0xe]
        %v2745 = vld [vmem:[%s297 + $0x7c] sm:$0xf]
        %v2746 = vld [vmem:[%s297 + $0x80] sm:$0x1]
        %v2747 = vld [vmem:[%s297 + $0x84] sm:$0xe]
        %v2748 = vld [vmem:[%s297 + $0x88] sm:$0xf]
        %v2749 = vld [vmem:[%s297 + $0x8c] sm:$0x1]
        %v2750 = vld [vmem:[%s297 + $0x90] sm:$0xe]
        %v2751 = vld [vmem:[%s297 + $0x94] sm:$0xf]
        %v2752 = vld [vmem:[%s297 + $0x98] sm:$0x1]
        %v2753 = vld [vmem:[%s297 + $0x9c] sm:$0xe]
        %v2754 = vld [vmem:[%s297 + $0xa0] sm:$0xf]
        %v2755 = vld [vmem:[%s297 + $0xa4] sm:$0x1]
        %v2756 = vld [vmem:[%s297 + $0xa8] sm:$0xe]
        %v2757 = vld [vmem:[%s297 + $0xac] sm:$0xf]
        %v2758 = vld [vmem:[%s297 + $0xb0] sm:$0x1]
        %v2759 = vld [vmem:[%s297 + $0xb4] sm:$0xe]
        %v2760 = vld [vmem:[%s297 + $0xb8] sm:$0xf]
        %v2761 = vld [vmem:[%s297 + $0xbc] sm:$0x1]
        %v2810 = vrot.slane %v2714, 5
        %v2811 = vrot.slane %v2810, 4
        %v2812 = vrot.slane %v2715, 5
        %v2813 = vsel %vm2472, %v2811, %v2812
        %v2814 = vrot.slane %v2812, 4
        %v2815 = vrot.slane %v2716, 5
        %v2816 = vsel %vm2472, %v2814, %v2815
        %v2817 = vrot.slane %v2717, 5
        %v2818 = vrot.slane %v2817, 4
        %v2819 = vrot.slane %v2718, 5
        %v2820 = vsel %vm2472, %v2818, %v2819
        %v2821 = vrot.slane %v2819, 4
        %v2822 = vrot.slane %v2719, 5
        %v2823 = vsel %vm2472, %v2821, %v2822
        %v2824 = vrot.slane %v2720, 5
        %v2825 = vrot.slane %v2824, 4
        %v2826 = vrot.slane %v2721, 5
        %v2827 = vsel %vm2472, %v2825, %v2826
        %v2828 = vrot.slane %v2826, 4
        %v2829 = vrot.slane %v2722, 5
        %v2830 = vsel %vm2472, %v2828, %v2829
        %v2831 = vrot.slane %v2723, 5
        %v2832 = vrot.slane %v2831, 4
        %v2833 = vrot.slane %v2724, 5
        %v2834 = vsel %vm2472, %v2832, %v2833
        %v2835 = vrot.slane %v2833, 4
        %v2836 = vrot.slane %v2725, 5
        %v2837 = vsel %vm2472, %v2835, %v2836
        %v2838 = vrot.slane %v2726, 5
        %v2839 = vrot.slane %v2838, 4
        %v2840 = vrot.slane %v2727, 5
        %v2841 = vsel %vm2472, %v2839, %v2840
        %v2842 = vrot.slane %v2840, 4
        %v2843 = vrot.slane %v2728, 5
        %v2844 = vsel %vm2472, %v2842, %v2843
        %v2845 = vrot.slane %v2729, 5
        %v2846 = vrot.slane %v2845, 4
        %v2847 = vrot.slane %v2730, 5
        %v2848 = vsel %vm2472, %v2846, %v2847
        %v2849 = vrot.slane %v2847, 4
        %v2850 = vrot.slane %v2731, 5
        %v2851 = vsel %vm2472, %v2849, %v2850
        %v2852 = vrot.slane %v2732, 5
        %v2853 = vrot.slane %v2852, 4
        %v2854 = vrot.slane %v2733, 5
        %v2855 = vsel %vm2472, %v2853, %v2854
        %v2856 = vrot.slane %v2854, 4
        %v2857 = vrot.slane %v2734, 5
        %v2858 = vsel %vm2472, %v2856, %v2857
        %v2859 = vrot.slane %v2735, 5
        %v2860 = vrot.slane %v2859, 4
        %v2861 = vrot.slane %v2736, 5
        %v2862 = vsel %vm2472, %v2860, %v2861
        %v2863 = vrot.slane %v2861, 4
        %v2864 = vrot.slane %v2737, 5
        %v2865 = vsel %vm2472, %v2863, %v2864
        %v2866 = vrot.slane %v2738, 5
        %v2867 = vrot.slane %v2866, 4
        %v2868 = vrot.slane %v2739, 5
        %v2869 = vsel %vm2472, %v2867, %v2868
        %v2870 = vrot.slane %v2868, 4
        %v2871 = vrot.slane %v2740, 5
        %v2872 = vsel %vm2472, %v2870, %v2871
        %v2873 = vrot.slane %v2741, 5
        %v2874 = vrot.slane %v2873, 4
        %v2875 = vrot.slane %v2742, 5
        %v2876 = vsel %vm2472, %v2874, %v2875
        %v2877 = vrot.slane %v2875, 4
        %v2878 = vrot.slane %v2743, 5
        %v2879 = vsel %vm2472, %v2877, %v2878
        %v2880 = vrot.slane %v2744, 5
        %v2881 = vrot.slane %v2880, 4
        %v2882 = vrot.slane %v2745, 5
        %v2883 = vsel %vm2472, %v2881, %v2882
        %v2884 = vrot.slane %v2882, 4
        %v2885 = vrot.slane %v2746, 5
        %v2886 = vsel %vm2472, %v2884, %v2885
        %v2887 = vrot.slane %v2747, 5
        %v2888 = vrot.slane %v2887, 4
        %v2889 = vrot.slane %v2748, 5
        %v2890 = vsel %vm2472, %v2888, %v2889
        %v2891 = vrot.slane %v2889, 4
        %v2892 = vrot.slane %v2749, 5
        %v2893 = vsel %vm2472, %v2891, %v2892
        %v2894 = vrot.slane %v2750, 5
        %v2895 = vrot.slane %v2894, 4
        %v2896 = vrot.slane %v2751, 5
        %v2897 = vsel %vm2472, %v2895, %v2896
        %v2898 = vrot.slane %v2896, 4
        %v2899 = vrot.slane %v2752, 5
        %v2900 = vsel %vm2472, %v2898, %v2899
        %v2901 = vrot.slane %v2753, 5
        %v2902 = vrot.slane %v2901, 4
        %v2903 = vrot.slane %v2754, 5
        %v2904 = vsel %vm2472, %v2902, %v2903
        %v2905 = vrot.slane %v2903, 4
        %v2906 = vrot.slane %v2755, 5
        %v2907 = vsel %vm2472, %v2905, %v2906
        %v2908 = vrot.slane %v2756, 5
        %v2909 = vrot.slane %v2908, 4
        %v2910 = vrot.slane %v2757, 5
        %v2911 = vsel %vm2472, %v2909, %v2910
        %v2912 = vrot.slane %v2910, 4
        %v2913 = vrot.slane %v2758, 5
        %v2914 = vsel %vm2472, %v2912, %v2913
        %v2915 = vrot.slane %v2759, 5
        %v2916 = vrot.slane %v2915, 4
        %v2917 = vrot.slane %v2760, 5
        %v2918 = vsel %vm2472, %v2916, %v2917
        %v2919 = vrot.slane %v2917, 4
        %v2920 = vrot.slane %v2761, 5
        %v2921 = vsel %vm2472, %v2919, %v2920
        %2922 = vrot.lane.b32.xlu0 %v2813, 56
        %v2923 = vpop.permute.xlu0 %2922
        %2924 = vrot.lane.b32.xlu0 %v2816, 56
        %v2925 = vpop.permute.xlu0 %2924
        %2926 = vrot.lane.b32.xlu0 %v2820, 56
        %v2927 = vpop.permute.xlu0 %2926
        %2928 = vrot.lane.b32.xlu0 %v2823, 56
        %v2929 = vpop.permute.xlu0 %2928
        %2930 = vrot.lane.b32.xlu0 %v2827, 56
        %v2931 = vpop.permute.xlu0 %2930
        %2932 = vrot.lane.b32.xlu0 %v2830, 56
        %v2933 = vpop.permute.xlu0 %2932
        %2934 = vrot.lane.b32.xlu0 %v2834, 56
        %v2935 = vpop.permute.xlu0 %2934
        %2936 = vrot.lane.b32.xlu0 %v2837, 56
        %v2937 = vpop.permute.xlu0 %2936
        %2938 = vrot.lane.b32.xlu0 %v2841, 56
        %v2939 = vpop.permute.xlu0 %2938
        %2940 = vrot.lane.b32.xlu0 %v2844, 56
        %v2941 = vpop.permute.xlu0 %2940
        %2942 = vrot.lane.b32.xlu0 %v2848, 56
        %v2943 = vpop.permute.xlu0 %2942
        %2944 = vrot.lane.b32.xlu0 %v2851, 56
        %v2945 = vpop.permute.xlu0 %2944
        %2946 = vrot.lane.b32.xlu0 %v2855, 56
        %v2947 = vpop.permute.xlu0 %2946
        %2948 = vrot.lane.b32.xlu0 %v2858, 56
        %v2949 = vpop.permute.xlu0 %2948
        %2950 = vrot.lane.b32.xlu0 %v2862, 56
        %v2951 = vpop.permute.xlu0 %2950
        %2952 = vrot.lane.b32.xlu0 %v2865, 56
        %v2953 = vpop.permute.xlu0 %2952
        %2954 = vrot.lane.b32.xlu0 %v2869, 56
        %v2955 = vpop.permute.xlu0 %2954
        %2956 = vrot.lane.b32.xlu0 %v2872, 56
        %v2957 = vpop.permute.xlu0 %2956
        %2958 = vrot.lane.b32.xlu0 %v2876, 56
        %v2959 = vpop.permute.xlu0 %2958
        %2960 = vrot.lane.b32.xlu0 %v2879, 56
        %v2961 = vpop.permute.xlu0 %2960
        %2962 = vrot.lane.b32.xlu0 %v2883, 56
        %v2963 = vpop.permute.xlu0 %2962
        %2964 = vrot.lane.b32.xlu0 %v2886, 56
        %v2965 = vpop.permute.xlu0 %2964
        %2966 = vrot.lane.b32.xlu0 %v2890, 56
        %v2967 = vpop.permute.xlu0 %2966
        %2968 = vrot.lane.b32.xlu0 %v2893, 56
        %v2969 = vpop.permute.xlu0 %2968
        %2970 = vrot.lane.b32.xlu0 %v2897, 56
        %v2971 = vpop.permute.xlu0 %2970
        %2972 = vrot.lane.b32.xlu0 %v2900, 56
        %v2973 = vpop.permute.xlu0 %2972
        %2974 = vrot.lane.b32.xlu0 %v2904, 56
        %v2975 = vpop.permute.xlu0 %2974
        %2976 = vrot.lane.b32.xlu0 %v2907, 56
        %v2977 = vpop.permute.xlu0 %2976
        %2978 = vrot.lane.b32.xlu0 %v2911, 56
        %v2979 = vpop.permute.xlu0 %2978
        %2980 = vrot.lane.b32.xlu0 %v2914, 56
        %v2981 = vpop.permute.xlu0 %2980
        %2982 = vrot.lane.b32.xlu0 %v2918, 56
        %v2983 = vpop.permute.xlu0 %2982
        %2984 = vrot.lane.b32.xlu0 %v2921, 56
        %v2985 = vpop.permute.xlu0 %2984
        %vm3018 = vcmask 519616
        %3019 = vst.msk [vmem:[#allocation2] sm:$0xf] %vm3018, %v2923
        %3020 = vst.msk [vmem:[#allocation2 + $0x4] sm:$0xf] %vm3018, %v2925
        %3021 = vst.msk [vmem:[#allocation2 + $0x8] sm:$0xf] %vm3018, %v2927
        %3022 = vst.msk [vmem:[#allocation2 + $0xc] sm:$0xf] %vm3018, %v2929
        %3023 = vst.msk [vmem:[#allocation2 + $0x10] sm:$0xf] %vm3018, %v2931
        %3024 = vst.msk [vmem:[#allocation2 + $0x14] sm:$0xf] %vm3018, %v2933
        %3025 = vst.msk [vmem:[#allocation2 + $0x18] sm:$0xf] %vm3018, %v2935
        %3026 = vst.msk [vmem:[#allocation2 + $0x1c] sm:$0xf] %vm3018, %v2937
        %3027 = vst.msk [vmem:[#allocation2 + $0x20] sm:$0xf] %vm3018, %v2939
        %3028 = vst.msk [vmem:[#allocation2 + $0x24] sm:$0xf] %vm3018, %v2941
        %3029 = vst.msk [vmem:[#allocation2 + $0x28] sm:$0xf] %vm3018, %v2943
        %3030 = vst.msk [vmem:[#allocation2 + $0x2c] sm:$0xf] %vm3018, %v2945
        %3031 = vst.msk [vmem:[#allocation2 + $0x30] sm:$0xf] %vm3018, %v2947
        %3032 = vst.msk [vmem:[#allocation2 + $0x34] sm:$0xf] %vm3018, %v2949
        %3033 = vst.msk [vmem:[#allocation2 + $0x38] sm:$0xf] %vm3018, %v2951
        %3034 = vst.msk [vmem:[#allocation2 + $0x3c] sm:$0xf] %vm3018, %v2953
        %3035 = vst.msk [vmem:[#allocation2 + $0x40] sm:$0xf] %vm3018, %v2955
        %3036 = vst.msk [vmem:[#allocation2 + $0x44] sm:$0xf] %vm3018, %v2957
        %3037 = vst.msk [vmem:[#allocation2 + $0x48] sm:$0xf] %vm3018, %v2959
        %3038 = vst.msk [vmem:[#allocation2 + $0x4c] sm:$0xf] %vm3018, %v2961
        %3039 = vst.msk [vmem:[#allocation2 + $0x50] sm:$0xf] %vm3018, %v2963
        %3040 = vst.msk [vmem:[#allocation2 + $0x54] sm:$0xf] %vm3018, %v2965
        %3041 = vst.msk [vmem:[#allocation2 + $0x58] sm:$0xf] %vm3018, %v2967
        %3042 = vst.msk [vmem:[#allocation2 + $0x5c] sm:$0xf] %vm3018, %v2969
        %3043 = vst.msk [vmem:[#allocation2 + $0x60] sm:$0xf] %vm3018, %v2971
        %3044 = vst.msk [vmem:[#allocation2 + $0x64] sm:$0xf] %vm3018, %v2973
        %3045 = vst.msk [vmem:[#allocation2 + $0x68] sm:$0xf] %vm3018, %v2975
        %3046 = vst.msk [vmem:[#allocation2 + $0x6c] sm:$0xf] %vm3018, %v2977
        %3047 = vst.msk [vmem:[#allocation2 + $0x70] sm:$0xf] %vm3018, %v2979
        %3048 = vst.msk [vmem:[#allocation2 + $0x74] sm:$0xf] %vm3018, %v2981
        %3049 = vst.msk [vmem:[#allocation2 + $0x78] sm:$0xf] %vm3018, %v2983
        %3050 = vst.msk [vmem:[#allocation2 + $0x7c] sm:$0xf] %vm3018, %v2985
        %v3051 = vld [vmem:[%s494] sm:$0xe]
        %v3052 = vld [vmem:[%s494 + $0x4] sm:$0xf]
        %v3053 = vld [vmem:[%s494 + $0x8] sm:$0x1]
        %v3054 = vld [vmem:[%s494 + $0xc] sm:$0xe]
        %v3055 = vld [vmem:[%s494 + $0x10] sm:$0xf]
        %v3056 = vld [vmem:[%s494 + $0x14] sm:$0x1]
        %v3057 = vld [vmem:[%s494 + $0x18] sm:$0xe]
        %v3058 = vld [vmem:[%s494 + $0x1c] sm:$0xf]
        %v3059 = vld [vmem:[%s494 + $0x20] sm:$0x1]
        %v3060 = vld [vmem:[%s494 + $0x24] sm:$0xe]
        %v3061 = vld [vmem:[%s494 + $0x28] sm:$0xf]
        %v3062 = vld [vmem:[%s494 + $0x2c] sm:$0x1]
        %v3063 = vld [vmem:[%s494 + $0x30] sm:$0xe]
        %v3064 = vld [vmem:[%s494 + $0x34] sm:$0xf]
        %v3065 = vld [vmem:[%s494 + $0x38] sm:$0x1]
        %v3066 = vld [vmem:[%s494 + $0x3c] sm:$0xe]
        %v3067 = vld [vmem:[%s494 + $0x40] sm:$0xf]
        %v3068 = vld [vmem:[%s494 + $0x44] sm:$0x1]
        %v3069 = vld [vmem:[%s494 + $0x48] sm:$0xe]
        %v3070 = vld [vmem:[%s494 + $0x4c] sm:$0xf]
        %v3071 = vld [vmem:[%s494 + $0x50] sm:$0x1]
        %v3072 = vld [vmem:[%s494 + $0x54] sm:$0xe]
        %v3073 = vld [vmem:[%s494 + $0x58] sm:$0xf]
        %v3074 = vld [vmem:[%s494 + $0x5c] sm:$0x1]
        %v3075 = vld [vmem:[%s494 + $0x60] sm:$0xe]
        %v3076 = vld [vmem:[%s494 + $0x64] sm:$0xf]
        %v3077 = vld [vmem:[%s494 + $0x68] sm:$0x1]
        %v3078 = vld [vmem:[%s494 + $0x6c] sm:$0xe]
        %v3079 = vld [vmem:[%s494 + $0x70] sm:$0xf]
        %v3080 = vld [vmem:[%s494 + $0x74] sm:$0x1]
        %v3081 = vld [vmem:[%s494 + $0x78] sm:$0xe]
        %v3082 = vld [vmem:[%s494 + $0x7c] sm:$0xf]
        %v3083 = vld [vmem:[%s494 + $0x80] sm:$0x1]
        %v3084 = vld [vmem:[%s494 + $0x84] sm:$0xe]
        %v3085 = vld [vmem:[%s494 + $0x88] sm:$0xf]
        %v3086 = vld [vmem:[%s494 + $0x8c] sm:$0x1]
        %v3087 = vld [vmem:[%s494 + $0x90] sm:$0xe]
        %v3088 = vld [vmem:[%s494 + $0x94] sm:$0xf]
        %v3089 = vld [vmem:[%s494 + $0x98] sm:$0x1]
        %v3090 = vld [vmem:[%s494 + $0x9c] sm:$0xe]
        %v3091 = vld [vmem:[%s494 + $0xa0] sm:$0xf]
        %v3092 = vld [vmem:[%s494 + $0xa4] sm:$0x1]
        %v3093 = vld [vmem:[%s494 + $0xa8] sm:$0xe]
        %v3094 = vld [vmem:[%s494 + $0xac] sm:$0xf]
        %v3095 = vld [vmem:[%s494 + $0xb0] sm:$0x1]
        %v3096 = vld [vmem:[%s494 + $0xb4] sm:$0xe]
        %v3097 = vld [vmem:[%s494 + $0xb8] sm:$0xf]
        %v3098 = vld [vmem:[%s494 + $0xbc] sm:$0x1]
        %v3147 = vrot.slane %v3051, 5
        %v3148 = vrot.slane %v3147, 4
        %v3149 = vrot.slane %v3052, 5
        %v3150 = vsel %vm2472, %v3148, %v3149
        %v3151 = vrot.slane %v3149, 4
        %v3152 = vrot.slane %v3053, 5
        %v3153 = vsel %vm2472, %v3151, %v3152
        %v3154 = vrot.slane %v3054, 5
        %v3155 = vrot.slane %v3154, 4
        %v3156 = vrot.slane %v3055, 5
        %v3157 = vsel %vm2472, %v3155, %v3156
        %v3158 = vrot.slane %v3156, 4
        %v3159 = vrot.slane %v3056, 5
        %v3160 = vsel %vm2472, %v3158, %v3159
        %v3161 = vrot.slane %v3057, 5
        %v3162 = vrot.slane %v3161, 4
        %v3163 = vrot.slane %v3058, 5
        %v3164 = vsel %vm2472, %v3162, %v3163
        %v3165 = vrot.slane %v3163, 4
        %v3166 = vrot.slane %v3059, 5
        %v3167 = vsel %vm2472, %v3165, %v3166
        %v3168 = vrot.slane %v3060, 5
        %v3169 = vrot.slane %v3168, 4
        %v3170 = vrot.slane %v3061, 5
        %v3171 = vsel %vm2472, %v3169, %v3170
        %v3172 = vrot.slane %v3170, 4
        %v3173 = vrot.slane %v3062, 5
        %v3174 = vsel %vm2472, %v3172, %v3173
        %v3175 = vrot.slane %v3063, 5
        %v3176 = vrot.slane %v3175, 4
        %v3177 = vrot.slane %v3064, 5
        %v3178 = vsel %vm2472, %v3176, %v3177
        %v3179 = vrot.slane %v3177, 4
        %v3180 = vrot.slane %v3065, 5
        %v3181 = vsel %vm2472, %v3179, %v3180
        %v3182 = vrot.slane %v3066, 5
        %v3183 = vrot.slane %v3182, 4
        %v3184 = vrot.slane %v3067, 5
        %v3185 = vsel %vm2472, %v3183, %v3184
        %v3186 = vrot.slane %v3184, 4
        %v3187 = vrot.slane %v3068, 5
        %v3188 = vsel %vm2472, %v3186, %v3187
        %v3189 = vrot.slane %v3069, 5
        %v3190 = vrot.slane %v3189, 4
        %v3191 = vrot.slane %v3070, 5
        %v3192 = vsel %vm2472, %v3190, %v3191
        %v3193 = vrot.slane %v3191, 4
        %v3194 = vrot.slane %v3071, 5
        %v3195 = vsel %vm2472, %v3193, %v3194
        %v3196 = vrot.slane %v3072, 5
        %v3197 = vrot.slane %v3196, 4
        %v3198 = vrot.slane %v3073, 5
        %v3199 = vsel %vm2472, %v3197, %v3198
        %v3200 = vrot.slane %v3198, 4
        %v3201 = vrot.slane %v3074, 5
        %v3202 = vsel %vm2472, %v3200, %v3201
        %v3203 = vrot.slane %v3075, 5
        %v3204 = vrot.slane %v3203, 4
        %v3205 = vrot.slane %v3076, 5
        %v3206 = vsel %vm2472, %v3204, %v3205
        %v3207 = vrot.slane %v3205, 4
        %v3208 = vrot.slane %v3077, 5
        %v3209 = vsel %vm2472, %v3207, %v3208
        %v3210 = vrot.slane %v3078, 5
        %v3211 = vrot.slane %v3210, 4
        %v3212 = vrot.slane %v3079, 5
        %v3213 = vsel %vm2472, %v3211, %v3212
        %v3214 = vrot.slane %v3212, 4
        %v3215 = vrot.slane %v3080, 5
        %v3216 = vsel %vm2472, %v3214, %v3215
        %v3217 = vrot.slane %v3081, 5
        %v3218 = vrot.slane %v3217, 4
        %v3219 = vrot.slane %v3082, 5
        %v3220 = vsel %vm2472, %v3218, %v3219
        %v3221 = vrot.slane %v3219, 4
        %v3222 = vrot.slane %v3083, 5
        %v3223 = vsel %vm2472, %v3221, %v3222
        %v3224 = vrot.slane %v3084, 5
        %v3225 = vrot.slane %v3224, 4
        %v3226 = vrot.slane %v3085, 5
        %v3227 = vsel %vm2472, %v3225, %v3226
        %v3228 = vrot.slane %v3226, 4
        %v3229 = vrot.slane %v3086, 5
        %v3230 = vsel %vm2472, %v3228, %v3229
        %v3231 = vrot.slane %v3087, 5
        %v3232 = vrot.slane %v3231, 4
        %v3233 = vrot.slane %v3088, 5
        %v3234 = vsel %vm2472, %v3232, %v3233
        %v3235 = vrot.slane %v3233, 4
        %v3236 = vrot.slane %v3089, 5
        %v3237 = vsel %vm2472, %v3235, %v3236
        %v3238 = vrot.slane %v3090, 5
        %v3239 = vrot.slane %v3238, 4
        %v3240 = vrot.slane %v3091, 5
        %v3241 = vsel %vm2472, %v3239, %v3240
        %v3242 = vrot.slane %v3240, 4
        %v3243 = vrot.slane %v3092, 5
        %v3244 = vsel %vm2472, %v3242, %v3243
        %v3245 = vrot.slane %v3093, 5
        %v3246 = vrot.slane %v3245, 4
        %v3247 = vrot.slane %v3094, 5
        %v3248 = vsel %vm2472, %v3246, %v3247
        %v3249 = vrot.slane %v3247, 4
        %v3250 = vrot.slane %v3095, 5
        %v3251 = vsel %vm2472, %v3249, %v3250
        %v3252 = vrot.slane %v3096, 5
        %v3253 = vrot.slane %v3252, 4
        %v3254 = vrot.slane %v3097, 5
        %v3255 = vsel %vm2472, %v3253, %v3254
        %v3256 = vrot.slane %v3254, 4
        %v3257 = vrot.slane %v3098, 5
        %v3258 = vsel %vm2472, %v3256, %v3257
        %3259 = vrot.lane.b32.xlu0 %v3150, 64
        %v3260 = vpop.permute.xlu0 %3259
        %3261 = vrot.lane.b32.xlu0 %v3153, 64
        %v3262 = vpop.permute.xlu0 %3261
        %3263 = vrot.lane.b32.xlu0 %v3157, 64
        %v3264 = vpop.permute.xlu0 %3263
        %3265 = vrot.lane.b32.xlu0 %v3160, 64
        %v3266 = vpop.permute.xlu0 %3265
        %3267 = vrot.lane.b32.xlu0 %v3164, 64
        %v3268 = vpop.permute.xlu0 %3267
        %3269 = vrot.lane.b32.xlu0 %v3167, 64
        %v3270 = vpop.permute.xlu0 %3269
        %3271 = vrot.lane.b32.xlu0 %v3171, 64
        %v3272 = vpop.permute.xlu0 %3271
        %3273 = vrot.lane.b32.xlu0 %v3174, 64
        %v3274 = vpop.permute.xlu0 %3273
        %3275 = vrot.lane.b32.xlu0 %v3178, 64
        %v3276 = vpop.permute.xlu0 %3275
        %3277 = vrot.lane.b32.xlu0 %v3181, 64
        %v3278 = vpop.permute.xlu0 %3277
        %3279 = vrot.lane.b32.xlu0 %v3185, 64
        %v3280 = vpop.permute.xlu0 %3279
        %3281 = vrot.lane.b32.xlu0 %v3188, 64
        %v3282 = vpop.permute.xlu0 %3281
        %3283 = vrot.lane.b32.xlu0 %v3192, 64
        %v3284 = vpop.permute.xlu0 %3283
        %3285 = vrot.lane.b32.xlu0 %v3195, 64
        %v3286 = vpop.permute.xlu0 %3285
        %3287 = vrot.lane.b32.xlu0 %v3199, 64
        %v3288 = vpop.permute.xlu0 %3287
        %3289 = vrot.lane.b32.xlu0 %v3202, 64
        %v3290 = vpop.permute.xlu0 %3289
        %3291 = vrot.lane.b32.xlu0 %v3206, 64
        %v3292 = vpop.permute.xlu0 %3291
        %3293 = vrot.lane.b32.xlu0 %v3209, 64
        %v3294 = vpop.permute.xlu0 %3293
        %3295 = vrot.lane.b32.xlu0 %v3213, 64
        %v3296 = vpop.permute.xlu0 %3295
        %3297 = vrot.lane.b32.xlu0 %v3216, 64
        %v3298 = vpop.permute.xlu0 %3297
        %3299 = vrot.lane.b32.xlu0 %v3220, 64
        %v3300 = vpop.permute.xlu0 %3299
        %3301 = vrot.lane.b32.xlu0 %v3223, 64
        %v3302 = vpop.permute.xlu0 %3301
        %3303 = vrot.lane.b32.xlu0 %v3227, 64
        %v3304 = vpop.permute.xlu0 %3303
        %3305 = vrot.lane.b32.xlu0 %v3230, 64
        %v3306 = vpop.permute.xlu0 %3305
        %3307 = vrot.lane.b32.xlu0 %v3234, 64
        %v3308 = vpop.permute.xlu0 %3307
        %3309 = vrot.lane.b32.xlu0 %v3237, 64
        %v3310 = vpop.permute.xlu0 %3309
        %3311 = vrot.lane.b32.xlu0 %v3241, 64
        %v3312 = vpop.permute.xlu0 %3311
        %3313 = vrot.lane.b32.xlu0 %v3244, 64
        %v3314 = vpop.permute.xlu0 %3313
        %3315 = vrot.lane.b32.xlu0 %v3248, 64
        %v3316 = vpop.permute.xlu0 %3315
        %3317 = vrot.lane.b32.xlu0 %v3251, 64
        %v3318 = vpop.permute.xlu0 %3317
        %3319 = vrot.lane.b32.xlu0 %v3255, 64
        %v3320 = vpop.permute.xlu0 %3319
        %3321 = vrot.lane.b32.xlu0 %v3258, 64
        %v3322 = vpop.permute.xlu0 %3321
        %vm3355 = vcmask 585216
        %3356 = vst.msk [vmem:[#allocation2] sm:$0xf] %vm3355, %v3260
        %3357 = vst.msk [vmem:[#allocation2 + $0x4] sm:$0xf] %vm3355, %v3262
        %3358 = vst.msk [vmem:[#allocation2 + $0x8] sm:$0xf] %vm3355, %v3264
        %3359 = vst.msk [vmem:[#allocation2 + $0xc] sm:$0xf] %vm3355, %v3266
        %3360 = vst.msk [vmem:[#allocation2 + $0x10] sm:$0xf] %vm3355, %v3268
        %3361 = vst.msk [vmem:[#allocation2 + $0x14] sm:$0xf] %vm3355, %v3270
        %3362 = vst.msk [vmem:[#allocation2 + $0x18] sm:$0xf] %vm3355, %v3272
        %3363 = vst.msk [vmem:[#allocation2 + $0x1c] sm:$0xf] %vm3355, %v3274
        %3364 = vst.msk [vmem:[#allocation2 + $0x20] sm:$0xf] %vm3355, %v3276
        %3365 = vst.msk [vmem:[#allocation2 + $0x24] sm:$0xf] %vm3355, %v3278
        %3366 = vst.msk [vmem:[#allocation2 + $0x28] sm:$0xf] %vm3355, %v3280
        %3367 = vst.msk [vmem:[#allocation2 + $0x2c] sm:$0xf] %vm3355, %v3282
        %3368 = vst.msk [vmem:[#allocation2 + $0x30] sm:$0xf] %vm3355, %v3284
        %3369 = vst.msk [vmem:[#allocation2 + $0x34] sm:$0xf] %vm3355, %v3286
        %3370 = vst.msk [vmem:[#allocation2 + $0x38] sm:$0xf] %vm3355, %v3288
        %3371 = vst.msk [vmem:[#allocation2 + $0x3c] sm:$0xf] %vm3355, %v3290
        %3372 = vst.msk [vmem:[#allocation2 + $0x40] sm:$0xf] %vm3355, %v3292
        %3373 = vst.msk [vmem:[#allocation2 + $0x44] sm:$0xf] %vm3355, %v3294
        %3374 = vst.msk [vmem:[#allocation2 + $0x48] sm:$0xf] %vm3355, %v3296
        %3375 = vst.msk [vmem:[#allocation2 + $0x4c] sm:$0xf] %vm3355, %v3298
        %3376 = vst.msk [vmem:[#allocation2 + $0x50] sm:$0xf] %vm3355, %v3300
        %3377 = vst.msk [vmem:[#allocation2 + $0x54] sm:$0xf] %vm3355, %v3302
        %3378 = vst.msk [vmem:[#allocation2 + $0x58] sm:$0xf] %vm3355, %v3304
        %3379 = vst.msk [vmem:[#allocation2 + $0x5c] sm:$0xf] %vm3355, %v3306
        %3380 = vst.msk [vmem:[#allocation2 + $0x60] sm:$0xf] %vm3355, %v3308
        %3381 = vst.msk [vmem:[#allocation2 + $0x64] sm:$0xf] %vm3355, %v3310
        %3382 = vst.msk [vmem:[#allocation2 + $0x68] sm:$0xf] %vm3355, %v3312
        %3383 = vst.msk [vmem:[#allocation2 + $0x6c] sm:$0xf] %vm3355, %v3314
        %3384 = vst.msk [vmem:[#allocation2 + $0x70] sm:$0xf] %vm3355, %v3316
        %3385 = vst.msk [vmem:[#allocation2 + $0x74] sm:$0xf] %vm3355, %v3318
        %3386 = vst.msk [vmem:[#allocation2 + $0x78] sm:$0xf] %vm3355, %v3320
        %3387 = vst.msk [vmem:[#allocation2 + $0x7c] sm:$0xf] %vm3355, %v3322
        %v3388 = vld [vmem:[#allocation2] sm:$0xf]
        %v3389 = vld [vmem:[#allocation2 + $0x4] sm:$0xf]
        %v3390 = vld [vmem:[#allocation2 + $0x8] sm:$0xf]
        %v3391 = vld [vmem:[#allocation2 + $0xc] sm:$0xf]
        %v3392 = vld [vmem:[#allocation2 + $0x10] sm:$0xf]
        %v3393 = vld [vmem:[#allocation2 + $0x14] sm:$0xf]
        %v3394 = vld [vmem:[#allocation2 + $0x18] sm:$0xf]
        %v3395 = vld [vmem:[#allocation2 + $0x1c] sm:$0xf]
        %v3396 = vld [vmem:[#allocation2 + $0x20] sm:$0xf]
        %v3397 = vld [vmem:[#allocation2 + $0x24] sm:$0xf]
        %v3398 = vld [vmem:[#allocation2 + $0x28] sm:$0xf]
        %v3399 = vld [vmem:[#allocation2 + $0x2c] sm:$0xf]
        %v3400 = vld [vmem:[#allocation2 + $0x30] sm:$0xf]
        %v3401 = vld [vmem:[#allocation2 + $0x34] sm:$0xf]
        %v3402 = vld [vmem:[#allocation2 + $0x38] sm:$0xf]
        %v3403 = vld [vmem:[#allocation2 + $0x3c] sm:$0xf]
        %v3404 = vld [vmem:[#allocation2 + $0x40] sm:$0xf]
        %v3405 = vld [vmem:[#allocation2 + $0x44] sm:$0xf]
        %v3406 = vld [vmem:[#allocation2 + $0x48] sm:$0xf]
        %v3407 = vld [vmem:[#allocation2 + $0x4c] sm:$0xf]
        %v3408 = vld [vmem:[#allocation2 + $0x50] sm:$0xf]
        %v3409 = vld [vmem:[#allocation2 + $0x54] sm:$0xf]
        %v3410 = vld [vmem:[#allocation2 + $0x58] sm:$0xf]
        %v3411 = vld [vmem:[#allocation2 + $0x5c] sm:$0xf]
        %v3412 = vld [vmem:[#allocation2 + $0x60] sm:$0xf]
        %v3413 = vld [vmem:[#allocation2 + $0x64] sm:$0xf]
        %v3414 = vld [vmem:[#allocation2 + $0x68] sm:$0xf]
        %v3415 = vld [vmem:[#allocation2 + $0x6c] sm:$0xf]
        %v3416 = vld [vmem:[#allocation2 + $0x70] sm:$0xf]
        %v3417 = vld [vmem:[#allocation2 + $0x74] sm:$0xf]
        %v3418 = vld [vmem:[#allocation2 + $0x78] sm:$0xf]
        %v3419 = vld [vmem:[#allocation2 + $0x7c] sm:$0xf]
        %v3420 = vld [vmem:[%s219] sm:$0xf]
        %v3421 = vld [vmem:[%s219 + $0x4] sm:$0xf]
        %v3422 = vld [vmem:[%s219 + $0x8] sm:$0xf]
        %v3423 = vld [vmem:[%s219 + $0xc] sm:$0xf]
        %v3424 = vld [vmem:[%s219 + $0x10] sm:$0xf]
        %v3425 = vld [vmem:[%s219 + $0x14] sm:$0xf]
        %v3426 = vld [vmem:[%s219 + $0x18] sm:$0xf]
        %v3427 = vld [vmem:[%s219 + $0x1c] sm:$0xf]
        %v3428 = vld [vmem:[%s219 + $0x20] sm:$0xf]
        %v3429 = vld [vmem:[%s222] sm:$0x1]
        %v3431 = vlaneseq
        %v3432 = vshrl.u32 %v3431, 7
        %v3433 = vsub.s32 0, %v3432
        %v3434 = vrot.slane %v3429, %v3433
        %v3468 = vunpack.c.l.b16 %v3388
        %v3469 = vunpack.c.l.b16 %v3389
        %v3470 = vunpack.c.l.b16 %v3390
        %v3471 = vunpack.c.l.b16 %v3391
        %v3472 = vunpack.c.l.b16 %v3392
        %v3473 = vunpack.c.l.b16 %v3393
        %v3474 = vunpack.c.l.b16 %v3394
        %v3475 = vunpack.c.l.b16 %v3395
        %v3476 = vunpack.c.l.b16 %v3396
        %v3477 = vunpack.c.l.b16 %v3397
        %v3478 = vunpack.c.l.b16 %v3398
        %v3479 = vunpack.c.l.b16 %v3399
        %v3480 = vunpack.c.l.b16 %v3400
        %v3481 = vunpack.c.l.b16 %v3401
        %v3482 = vunpack.c.l.b16 %v3402
        %v3483 = vunpack.c.l.b16 %v3403
        %v3484 = vunpack.c.l.b16 %v3404
        %v3485 = vunpack.c.l.b16 %v3405
        %v3486 = vunpack.c.l.b16 %v3406
        %v3487 = vunpack.c.l.b16 %v3407
        %v3488 = vunpack.c.l.b16 %v3408
        %v3489 = vunpack.c.l.b16 %v3409
        %v3490 = vunpack.c.l.b16 %v3410
        %v3491 = vunpack.c.l.b16 %v3411
        %v3492 = vunpack.c.l.b16 %v3412
        %v3493 = vunpack.c.l.b16 %v3413
        %v3494 = vunpack.c.l.b16 %v3414
        %v3495 = vunpack.c.l.b16 %v3415
        %v3496 = vunpack.c.l.b16 %v3416
        %v3497 = vunpack.c.l.b16 %v3417
        %v3498 = vunpack.c.l.b16 %v3418
        %v3499 = vunpack.c.l.b16 %v3419
        %v3500 = vpack.c.b16 %v3469, %v3468
        %v3501 = vpack.c.b16 %v3471, %v3470
        %v3502 = vpack.c.b16 %v3473, %v3472
        %v3503 = vpack.c.b16 %v3475, %v3474
        %v3504 = vpack.c.b16 %v3477, %v3476
        %v3505 = vpack.c.b16 %v3479, %v3478
        %v3506 = vpack.c.b16 %v3481, %v3480
        %v3507 = vpack.c.b16 %v3483, %v3482
        %v3508 = vpack.c.b16 %v3485, %v3484
        %v3509 = vpack.c.b16 %v3487, %v3486
        %v3510 = vpack.c.b16 %v3489, %v3488
        %v3511 = vpack.c.b16 %v3491, %v3490
        %v3512 = vpack.c.b16 %v3493, %v3492
        %v3513 = vpack.c.b16 %v3495, %v3494
        %v3514 = vpack.c.b16 %v3497, %v3496
        %v3515 = vpack.c.b16 %v3499, %v3498
        %v3525 = vunpack.c.l.b16 %v3420
        %v3526 = vunpack.c.l.b16 %v3421
        %v3527 = vunpack.c.l.b16 %v3422
        %v3528 = vunpack.c.l.b16 %v3423
        %v3529 = vunpack.c.l.b16 %v3424
        %v3530 = vunpack.c.l.b16 %v3425
        %v3531 = vunpack.c.l.b16 %v3426
        %v3532 = vunpack.c.l.b16 %v3427
        %v3533 = vunpack.c.l.b16 %v3428
        %v3534 = vpack.c.b16 %v3526, %v3525
        %v3535 = vpack.c.b16 %v3528, %v3527
        %v3536 = vpack.c.b16 %v3530, %v3529
        %v3537 = vpack.c.b16 %v3532, %v3531
        %v3538 = vpack.c.b16 %v3533, %v3533
        %vm3543 = vcmask 588800
        %v3545 = vsel %vm3543, %v3500, 0
        %v3548 = vsel %vm3543, %v3501, 0
        %v3551 = vsel %vm3543, %v3502, 0
        %v3554 = vsel %vm3543, %v3503, 0
        %v3557 = vsel %vm3543, %v3504, 0
        %v3560 = vsel %vm3543, %v3505, 0
        %v3563 = vsel %vm3543, %v3506, 0
        %v3566 = vsel %vm3543, %v3507, 0
        %v3569 = vsel %vm3543, %v3508, 0
        %v3572 = vsel %vm3543, %v3509, 0
        %v3575 = vsel %vm3543, %v3510, 0
        %v3578 = vsel %vm3543, %v3511, 0
        %v3581 = vsel %vm3543, %v3512, 0
        %v3584 = vsel %vm3543, %v3513, 0
        %v3587 = vsel %vm3543, %v3514, 0
        %v3590 = vsel %vm3543, %v3515, 0
        %vm3592 = vcmask 1043456
        %v3594 = vsel %vm3592, %v3538, 0
        %3596 = vmatprep.subr.bf16.mxu0 0
        %3597 = vmatpush1.bf16.msra.mxu0 0
        %3598 = vmatprep.subr.bf16.mxu0 0
        %3599 = vmatpush1.bf16.msra.mxu0 0
        %3600 = vmatprep.subr.bf16.mxu0 0
        %3601 = vmatpush1.bf16.msra.mxu0 0
        %3602 = vmatprep.subr.bf16.mxu0 0
        %3603 = vmatpush1.bf16.msra.mxu0 %v3594
        %3604 = vmatprep.subr.bf16.mxu0 0
        %3605 = vmatpush1.bf16.msra.mxu0 %v3537
        %3606 = vmatprep.subr.bf16.mxu0 0
        %3607 = vmatpush1.bf16.msra.mxu0 %v3536
        %3608 = vmatprep.subr.bf16.mxu0 0
        %3609 = vmatpush1.bf16.msra.mxu0 %v3535
        %3610 = vmatprep.subr.bf16.mxu0 0
        %3611 = vmatpush1.bf16.msra.mxu0 %v3534
        %3612 = vmatprep.subr.bf16.mxu0 0
        %3613 = vmatpush2.bf16.msra.mxu0 0
        %3614 = vmatprep.subr.bf16.mxu0 0
        %3615 = vmatpush2.bf16.msra.mxu0 0
        %3616 = vmatprep.subr.bf16.mxu0 0
        %3617 = vmatpush2.bf16.msra.mxu0 0
        %3618 = vmatprep.subr.bf16.mxu0 0
        %3619 = vmatpush2.bf16.msra.mxu0 0
        %3620 = vmatprep.subr.bf16.mxu0 0
        %3621 = vmatpush2.bf16.msra.mxu0 0
        %3622 = vmatprep.subr.bf16.mxu0 0
        %3623 = vmatpush2.bf16.msra.mxu0 0
        %3624 = vmatprep.subr.bf16.mxu0 0
        %3625 = vmatpush2.bf16.msra.mxu0 0
        %3626 = vmatprep.subr.bf16.mxu0 0
        %3627 = vmatpush2.bf16.msra.mxu0 0
        %3628 = vmatprep.mubr.bf16.mxu0 0
        %3629 = vmatmul.mubr.bf16.gmra.mxu0 %v3545
        %v3630 = vpop.f32.mrf.mxu0
        %v3631 = vadd.f32 %v3434, %v3630
        %v3632 = vpop.f32.mrf.mxu0
        %v3633 = vpop.f32.mrf.mxu0
        %v3634 = vadd.f32 %v3434, %v3633
        %v3635 = vpop.f32.mrf.mxu0
        %3636 = vmatprep.mubr.bf16.mxu0 0
        %3637 = vmatmul.mubr.bf16.gmra.mxu0 %v3548
        %v3638 = vpop.f32.mrf.mxu0
        %v3639 = vadd.f32 %v3434, %v3638
        %v3640 = vpop.f32.mrf.mxu0
        %v3641 = vpop.f32.mrf.mxu0
        %v3642 = vadd.f32 %v3434, %v3641
        %v3643 = vpop.f32.mrf.mxu0
        %3644 = vmatprep.mubr.bf16.mxu0 0
        %3645 = vmatmul.mubr.bf16.gmra.mxu0 %v3551
        %v3646 = vpop.f32.mrf.mxu0
        %v3647 = vadd.f32 %v3434, %v3646
        %v3648 = vpop.f32.mrf.mxu0
        %v3649 = vpop.f32.mrf.mxu0
        %v3650 = vadd.f32 %v3434, %v3649
        %v3651 = vpop.f32.mrf.mxu0
        %3652 = vmatprep.mubr.bf16.mxu0 0
        %3653 = vmatmul.mubr.bf16.gmra.mxu0 %v3554
        %v3654 = vpop.f32.mrf.mxu0
        %v3655 = vadd.f32 %v3434, %v3654
        %v3656 = vpop.f32.mrf.mxu0
        %v3657 = vpop.f32.mrf.mxu0
        %v3658 = vadd.f32 %v3434, %v3657
        %v3659 = vpop.f32.mrf.mxu0
        %3660 = vmatprep.mubr.bf16.mxu0 0
        %3661 = vmatmul.mubr.bf16.gmra.mxu0 %v3557
        %v3662 = vpop.f32.mrf.mxu0
        %v3663 = vadd.f32 %v3434, %v3662
        %v3664 = vpop.f32.mrf.mxu0
        %v3665 = vpop.f32.mrf.mxu0
        %v3666 = vadd.f32 %v3434, %v3665
        %v3667 = vpop.f32.mrf.mxu0
        %3668 = vmatprep.mubr.bf16.mxu0 0
        %3669 = vmatmul.mubr.bf16.gmra.mxu0 %v3560
        %v3670 = vpop.f32.mrf.mxu0
        %v3671 = vadd.f32 %v3434, %v3670
        %v3672 = vpop.f32.mrf.mxu0
        %v3673 = vpop.f32.mrf.mxu0
        %v3674 = vadd.f32 %v3434, %v3673
        %v3675 = vpop.f32.mrf.mxu0
        %3676 = vmatprep.mubr.bf16.mxu0 0
        %3677 = vmatmul.mubr.bf16.gmra.mxu0 %v3563
        %v3678 = vpop.f32.mrf.mxu0
        %v3679 = vadd.f32 %v3434, %v3678
        %v3680 = vpop.f32.mrf.mxu0
        %v3681 = vpop.f32.mrf.mxu0
        %v3682 = vadd.f32 %v3434, %v3681
        %v3683 = vpop.f32.mrf.mxu0
        %3684 = vmatprep.mubr.bf16.mxu0 0
        %3685 = vmatmul.mubr.bf16.gmra.mxu0 %v3566
        %v3686 = vpop.f32.mrf.mxu0
        %v3687 = vadd.f32 %v3434, %v3686
        %v3688 = vpop.f32.mrf.mxu0
        %v3689 = vpop.f32.mrf.mxu0
        %v3690 = vadd.f32 %v3434, %v3689
        %v3691 = vpop.f32.mrf.mxu0
        %3692 = vmatprep.mubr.bf16.mxu0 0
        %3693 = vmatmul.mubr.bf16.gmra.mxu0 %v3569
        %v3694 = vpop.f32.mrf.mxu0
        %v3695 = vadd.f32 %v3434, %v3694
        %v3696 = vpop.f32.mrf.mxu0
        %v3697 = vpop.f32.mrf.mxu0
        %v3698 = vadd.f32 %v3434, %v3697
        %v3699 = vpop.f32.mrf.mxu0
        %3700 = vmatprep.mubr.bf16.mxu0 0
        %3701 = vmatmul.mubr.bf16.gmra.mxu0 %v3572
        %v3702 = vpop.f32.mrf.mxu0
        %v3703 = vadd.f32 %v3434, %v3702
        %v3704 = vpop.f32.mrf.mxu0
        %v3705 = vpop.f32.mrf.mxu0
        %v3706 = vadd.f32 %v3434, %v3705
        %v3707 = vpop.f32.mrf.mxu0
        %3708 = vmatprep.mubr.bf16.mxu0 0
        %3709 = vmatmul.mubr.bf16.gmra.mxu0 %v3575
        %v3710 = vpop.f32.mrf.mxu0
        %v3711 = vadd.f32 %v3434, %v3710
        %v3712 = vpop.f32.mrf.mxu0
        %v3713 = vpop.f32.mrf.mxu0
        %v3714 = vadd.f32 %v3434, %v3713
        %v3715 = vpop.f32.mrf.mxu0
        %3716 = vmatprep.mubr.bf16.mxu0 0
        %3717 = vmatmul.mubr.bf16.gmra.mxu0 %v3578
        %v3718 = vpop.f32.mrf.mxu0
        %v3719 = vadd.f32 %v3434, %v3718
        %v3720 = vpop.f32.mrf.mxu0
        %v3721 = vpop.f32.mrf.mxu0
        %v3722 = vadd.f32 %v3434, %v3721
        %v3723 = vpop.f32.mrf.mxu0
        %3724 = vmatprep.mubr.bf16.mxu0 0
        %3725 = vmatmul.mubr.bf16.gmra.mxu0 %v3581
        %v3726 = vpop.f32.mrf.mxu0
        %v3727 = vadd.f32 %v3434, %v3726
        %v3728 = vpop.f32.mrf.mxu0
        %v3729 = vpop.f32.mrf.mxu0
        %v3730 = vadd.f32 %v3434, %v3729
        %v3731 = vpop.f32.mrf.mxu0
        %3732 = vmatprep.mubr.bf16.mxu0 0
        %3733 = vmatmul.mubr.bf16.gmra.mxu0 %v3584
        %v3734 = vpop.f32.mrf.mxu0
        %v3735 = vadd.f32 %v3434, %v3734
        %v3736 = vpop.f32.mrf.mxu0
        %v3737 = vpop.f32.mrf.mxu0
        %v3738 = vadd.f32 %v3434, %v3737
        %v3739 = vpop.f32.mrf.mxu0
        %3740 = vmatprep.mubr.bf16.mxu0 0
        %3741 = vmatmul.mubr.bf16.gmra.mxu0 %v3587
        %v3742 = vpop.f32.mrf.mxu0
        %v3743 = vadd.f32 %v3434, %v3742
        %v3744 = vpop.f32.mrf.mxu0
        %v3745 = vpop.f32.mrf.mxu0
        %v3746 = vadd.f32 %v3434, %v3745
        %v3747 = vpop.f32.mrf.mxu0
        %3748 = vmatprep.mubr.bf16.mxu0 0
        %3749 = vmatmul.mubr.bf16.gmra.mxu0 %v3590
        %v3750 = vpop.f32.mrf.mxu0
        %v3751 = vadd.f32 %v3434, %v3750
        %v3752 = vpop.f32.mrf.mxu0
        %v3753 = vpop.f32.mrf.mxu0
        %v3754 = vadd.f32 %v3434, %v3753
        %v3755 = vpop.f32.mrf.mxu0
        %3756 = vdwg.mxu0
        %v3757 = vmax.f32 %v3631, 0.0
        %v3758 = vmax.f32 %v3634, 0.0
        %v3759 = vmax.f32 %v3639, 0.0
        %v3760 = vmax.f32 %v3642, 0.0
        %v3761 = vmax.f32 %v3647, 0.0
        %v3762 = vmax.f32 %v3650, 0.0
        %v3763 = vmax.f32 %v3655, 0.0
        %v3764 = vmax.f32 %v3658, 0.0
        %v3765 = vmax.f32 %v3663, 0.0
        %v3766 = vmax.f32 %v3666, 0.0
        %v3767 = vmax.f32 %v3671, 0.0
        %v3768 = vmax.f32 %v3674, 0.0
        %v3769 = vmax.f32 %v3679, 0.0
        %v3770 = vmax.f32 %v3682, 0.0
        %v3771 = vmax.f32 %v3687, 0.0
        %v3772 = vmax.f32 %v3690, 0.0
        %v3773 = vmax.f32 %v3695, 0.0
        %v3774 = vmax.f32 %v3698, 0.0
        %v3775 = vmax.f32 %v3703, 0.0
        %v3776 = vmax.f32 %v3706, 0.0
        %v3777 = vmax.f32 %v3711, 0.0
        %v3778 = vmax.f32 %v3714, 0.0
        %v3779 = vmax.f32 %v3719, 0.0
        %v3780 = vmax.f32 %v3722, 0.0
        %v3781 = vmax.f32 %v3727, 0.0
        %v3782 = vmax.f32 %v3730, 0.0
        %v3783 = vmax.f32 %v3735, 0.0
        %v3784 = vmax.f32 %v3738, 0.0
        %v3785 = vmax.f32 %v3743, 0.0
        %v3786 = vmax.f32 %v3746, 0.0
        %v3787 = vmax.f32 %v3751, 0.0
        %v3788 = vmax.f32 %v3754, 0.0
        %v3789 = vpack.c.bf16 %v3758, %v3757
        %v3790 = vpack.c.bf16 %v3760, %v3759
        %v3791 = vpack.c.bf16 %v3762, %v3761
        %v3792 = vpack.c.bf16 %v3764, %v3763
        %v3793 = vpack.c.bf16 %v3766, %v3765
        %v3794 = vpack.c.bf16 %v3768, %v3767
        %v3795 = vpack.c.bf16 %v3770, %v3769
        %v3796 = vpack.c.bf16 %v3772, %v3771
        %v3797 = vpack.c.bf16 %v3774, %v3773
        %v3798 = vpack.c.bf16 %v3776, %v3775
        %v3799 = vpack.c.bf16 %v3778, %v3777
        %v3800 = vpack.c.bf16 %v3780, %v3779
        %v3801 = vpack.c.bf16 %v3782, %v3781
        %v3802 = vpack.c.bf16 %v3784, %v3783
        %v3803 = vpack.c.bf16 %v3786, %v3785
        %v3804 = vpack.c.bf16 %v3788, %v3787
        %v3821 = vunpack.c.l.b16 %v3789
        %v3822 = vunpack.c.h.b16 %v3789
        %v3823 = vunpack.c.l.b16 %v3790
        %v3824 = vunpack.c.h.b16 %v3790
        %v3825 = vunpack.c.l.b16 %v3791
        %v3826 = vunpack.c.h.b16 %v3791
        %v3827 = vunpack.c.l.b16 %v3792
        %v3828 = vunpack.c.h.b16 %v3792
        %v3829 = vunpack.c.l.b16 %v3793
        %v3830 = vunpack.c.h.b16 %v3793
        %v3831 = vunpack.c.l.b16 %v3794
        %v3832 = vunpack.c.h.b16 %v3794
        %v3833 = vunpack.c.l.b16 %v3795
        %v3834 = vunpack.c.h.b16 %v3795
        %v3835 = vunpack.c.l.b16 %v3796
        %v3836 = vunpack.c.h.b16 %v3796
        %v3837 = vunpack.c.l.b16 %v3797
        %v3838 = vunpack.c.h.b16 %v3797
        %v3839 = vunpack.c.l.b16 %v3798
        %v3840 = vunpack.c.h.b16 %v3798
        %v3841 = vunpack.c.l.b16 %v3799
        %v3842 = vunpack.c.h.b16 %v3799
        %v3843 = vunpack.c.l.b16 %v3800
        %v3844 = vunpack.c.h.b16 %v3800
        %v3845 = vunpack.c.l.b16 %v3801
        %v3846 = vunpack.c.h.b16 %v3801
        %v3847 = vunpack.c.l.b16 %v3802
        %v3848 = vunpack.c.h.b16 %v3802
        %v3849 = vunpack.c.l.b16 %v3803
        %v3850 = vunpack.c.h.b16 %v3803
        %v3851 = vunpack.c.l.b16 %v3804
        %v3852 = vunpack.c.h.b16 %v3804
        %v3853 = vpack.c.b16 %v3821, %v3821
        %v3854 = vpack.c.b16 %v3822, %v3822
        %v3855 = vpack.c.b16 %v3823, %v3823
        %v3856 = vpack.c.b16 %v3824, %v3824
        %v3857 = vpack.c.b16 %v3825, %v3825
        %v3858 = vpack.c.b16 %v3826, %v3826
        %v3859 = vpack.c.b16 %v3827, %v3827
        %v3860 = vpack.c.b16 %v3828, %v3828
        %v3861 = vpack.c.b16 %v3829, %v3829
        %v3862 = vpack.c.b16 %v3830, %v3830
        %v3863 = vpack.c.b16 %v3831, %v3831
        %v3864 = vpack.c.b16 %v3832, %v3832
        %v3865 = vpack.c.b16 %v3833, %v3833
        %v3866 = vpack.c.b16 %v3834, %v3834
        %v3867 = vpack.c.b16 %v3835, %v3835
        %v3868 = vpack.c.b16 %v3836, %v3836
        %v3869 = vpack.c.b16 %v3837, %v3837
        %v3870 = vpack.c.b16 %v3838, %v3838
        %v3871 = vpack.c.b16 %v3839, %v3839
        %v3872 = vpack.c.b16 %v3840, %v3840
        %v3873 = vpack.c.b16 %v3841, %v3841
        %v3874 = vpack.c.b16 %v3842, %v3842
        %v3875 = vpack.c.b16 %v3843, %v3843
        %v3876 = vpack.c.b16 %v3844, %v3844
        %v3877 = vpack.c.b16 %v3845, %v3845
        %v3878 = vpack.c.b16 %v3846, %v3846
        %v3879 = vpack.c.b16 %v3847, %v3847
        %v3880 = vpack.c.b16 %v3848, %v3848
        %v3881 = vpack.c.b16 %v3849, %v3849
        %v3882 = vpack.c.b16 %v3850, %v3850
        %v3883 = vpack.c.b16 %v3851, %v3851
        %v3884 = vpack.c.b16 %v3852, %v3852
        %3917 = vst [vmem:[%s210] sm:$0xf] %v3853
        %3918 = vst [vmem:[%s210 + $0x4] sm:$0xf] %v3854
        %3919 = vst [vmem:[%s210 + $0x8] sm:$0xf] %v3855
        %3920 = vst [vmem:[%s210 + $0xc] sm:$0xf] %v3856
        %3921 = vst [vmem:[%s210 + $0x10] sm:$0xf] %v3857
        %3922 = vst [vmem:[%s210 + $0x14] sm:$0xf] %v3858
        %3923 = vst [vmem:[%s210 + $0x18] sm:$0xf] %v3859
        %3924 = vst [vmem:[%s210 + $0x1c] sm:$0xf] %v3860
        %3925 = vst [vmem:[%s210 + $0x20] sm:$0xf] %v3861
        %3926 = vst [vmem:[%s210 + $0x24] sm:$0xf] %v3862
        %3927 = vst [vmem:[%s210 + $0x28] sm:$0xf] %v3863
        %3928 = vst [vmem:[%s210 + $0x2c] sm:$0xf] %v3864
        %3929 = vst [vmem:[%s210 + $0x30] sm:$0xf] %v3865
        %3930 = vst [vmem:[%s210 + $0x34] sm:$0xf] %v3866
        %3931 = vst [vmem:[%s210 + $0x38] sm:$0xf] %v3867
        %3932 = vst [vmem:[%s210 + $0x3c] sm:$0xf] %v3868
        %3933 = vst [vmem:[%s210 + $0x40] sm:$0xf] %v3869
        %3934 = vst [vmem:[%s210 + $0x44] sm:$0xf] %v3870
        %3935 = vst [vmem:[%s210 + $0x48] sm:$0xf] %v3871
        %3936 = vst [vmem:[%s210 + $0x4c] sm:$0xf] %v3872
        %3937 = vst [vmem:[%s210 + $0x50] sm:$0xf] %v3873
        %3938 = vst [vmem:[%s210 + $0x54] sm:$0xf] %v3874
        %3939 = vst [vmem:[%s210 + $0x58] sm:$0xf] %v3875
        %3940 = vst [vmem:[%s210 + $0x5c] sm:$0xf] %v3876
        %3941 = vst [vmem:[%s210 + $0x60] sm:$0xf] %v3877
        %3942 = vst [vmem:[%s210 + $0x64] sm:$0xf] %v3878
        %3943 = vst [vmem:[%s210 + $0x68] sm:$0xf] %v3879
        %3944 = vst [vmem:[%s210 + $0x6c] sm:$0xf] %v3880
        %3945 = vst [vmem:[%s210 + $0x70] sm:$0xf] %v3881
        %3946 = vst [vmem:[%s210 + $0x74] sm:$0xf] %v3882
        %3947 = vst [vmem:[%s210 + $0x78] sm:$0xf] %v3883
        %3948 = vst [vmem:[%s210 + $0x7c] sm:$0xf] %v3884
        %s3949 = sand.u32 %s126, 1
        %s3950 = scalar_lea.sflag [#allocation4], %s3949
        %s3951 = sand.u32 %s126, 1
        %s3952 = smul.addr %s3951, 128
        %s3953 = scalar_lea.vmem [#allocation3], %s3952
        // Predicated region
        $region33: #{tpu_custom_call.1} parent=31 // pred_check
          %p3954 = pneg %p136
        $region34: #{tpu_custom_call.1} parent=31 // pred_check_branch
          %3956 = sbr.rel (%p3954) target = $region36
        $region35: #{tpu_custom_call.1} parent=31 // pred_region
          %s3957 = smul.u32 16, %s24
          %s3959 = ssub.s32 2048, 2048
          %3960 = vsyncadd %s3950, %s3959
          %s3961 = smul.addr %s3957, 2
          %s3962 = sadd.s32 %s23, %s3961
          %s3963 = smul.addr %s22, 32
          %s3964 = sadd.s32 %s3962, %s3963
          %s3965 = smul.addr %s3964, 64
          %s3966 = scalar_lea.hbm %s3, %s3965
          %s3967 = sshll.u32 %s3953, 4
          %s3968 = int_to_ptr.vmem [resolvable:$true] %s3967
          %3973 = dma.vmem_to_hbm [thread:$0]  %s3968, 2048, %s3966, %s3950, 64, 64, 4
        $region36: #{tpu_custom_call.1} parent=31 // pred_fallthru
          _
      $region32: #{tpu_custom_call.1} parent=5 // pred_fallthru
        _
      %p3974 = scmp.le.s32.totalorder 2, %s12
      // Predicated region
      $region37: #{tpu_custom_call.1} parent=5 // pred_check
        %p3975 = pneg %p3974
      $region38: #{tpu_custom_call.1} parent=5 // pred_check_branch
        %3977 = sbr.rel (%p3975) target = $region40
      $region39: #{tpu_custom_call.1} parent=5 // pred_region
        %s3978 = ssub.s32 %s12, 2
        // Predicated region
        $region41: #{tpu_custom_call.1} parent=39 // pred_check
          %p3979 = pneg %p142
        $region42: #{tpu_custom_call.1} parent=39 // pred_check_branch
          %3981 = sbr.rel (%p3979) target = $region44
        $region43: #{tpu_custom_call.1} parent=39 // pred_region
          %s3982 = sand.u32 %s127, 1
          %s3983 = scalar_lea.sflag [#allocation4], %s3982
          %s3984 = sand.u32 %s127, 1
          %s3985 = smul.addr %s3984, 128
          %s3986 = scalar_lea.vmem [#allocation3], %s3985
          %3987 = dma.done %s3983, 2048
        $region44: #{tpu_custom_call.1} parent=39 // pred_fallthru
          _
      $region40: #{tpu_custom_call.1} parent=5 // pred_fallthru
        _
    $region6: #{tpu_custom_call.1} parent=1 // loop_footer
      %s16 = sadd.s32 1, %s12
    $region7: #{tpu_custom_call.1} parent=1 // loop_footer_branch
      %11 = sbr.rel target = $region3
    $region8: #{tpu_custom_call.1} parent=1 // loop_exit
      _
    %3988 = vsyncpa [#allocation4], 1
    %s3989 = scalar_lea.sflag [#allocation4], 1
    %3990 = vsyncpa %s3989, 1

</llo_original>
